<compile_context>
chip_gen: v5e
topology: v5e:2x2
jax: 0.10.0
libtpu: 0.0.40
codegen_flags: <defaults>
</compile_context>

<pallas_src>
import functools

import jax
import jax.numpy as jnp
from jax import lax
from jax.experimental import pallas as pl
from jax.experimental.pallas import tpu as pltpu


# --------------------------------------------------------------------------
# One-time capability probe for pltpu.roll on the running backend.
# --------------------------------------------------------------------------
_SHIFT_MODE = None


def _probe_roll_mode():
  """Returns 'roll' (numpy convention), 'roll_rev' (reversed), or 'slice'."""
  def k(x_ref, o_ref):
    o_ref[...] = pltpu.roll(x_ref[...], shift=3, axis=1)

  x = jnp.arange(8 * 256, dtype=jnp.float32).reshape(8, 256)
  try:
    out = pl.pallas_call(
        k, out_shape=jax.ShapeDtypeStruct((8, 256), jnp.float32))(x)
    out = jax.block_until_ready(out)
    if bool(jnp.array_equal(out, jnp.roll(x, 3, axis=1))):
      return "roll"
    if bool(jnp.array_equal(out, jnp.roll(x, -3, axis=1))):
      return "roll_rev"
  except Exception:
    pass
  return "slice"


def _shift_mode():
  global _SHIFT_MODE
  if _SHIFT_MODE is None:
    _SHIFT_MODE = _probe_roll_mode()
  return _SHIFT_MODE


# --------------------------------------------------------------------------
# Fused kernel (one sample per grid step)
# --------------------------------------------------------------------------
def _res_double_conv_kernel(
    x_ref,                                   # (1, Cin, S)
    masks_ref,                               # (27, S) f32 boundary masks
    gn1_g_ref, gn1_b_ref, minv_in_ref,       # (Cin,1), (Cin,1), (Cin,Cin)
    w1_ref, b1_ref,                          # (3, Cout, 9*Cin), (Cout,1)
    gn2_g_ref, gn2_b_ref, minv_out_ref,      # (Cout,1), (Cout,1), (Cout,Cout)
    w2_ref, b2_ref,                          # (3, Cout, 9*Cout), (Cout,1)
    ws_ref, bs_ref,                          # (3, Cout, 9*Cin), (Cout,1)
    gns_g_ref, gns_b_ref,                    # (Cout,1), (Cout,1)
    o_ref,                                   # (1, Cout, S)
    patch_ref,                               # VMEM scratch: (9*Cmax, S) f32
    *, D, H, W, eps, neg_slope, mm_dtype, shift_mode):
  f32 = jnp.float32
  S = D * H * W
  HW = H * W

  x = x_ref[0].astype(f32)                   # (Cin, S)

  def shifted(a, delta):
    """out[:, j] = a[:, (j + delta) mod S]; wrap-around is zeroed by the masks."""
    if delta == 0:
      return a
    if shift_mode == "roll":
      return pltpu.roll(a, shift=(-delta) % S, axis=1)
    if shift_mode == "roll_rev":
      return pltpu.roll(a, shift=delta % S, axis=1)
    d0 = delta % S                            # fallback: two-slice rotate
    return jnp.concatenate([a[:, d0:], a[:, :d0]], axis=1)

  def conv3x3x3(a, w_ref_, b_ref_):
    """3x3x3 'same' conv of a (C, S) f32 activation -> (Cout, S) f32.

    Accumulated as 3 MXU matmuls (one per kd plane); the per-plane (9*C, S)
    im2col patch is written tap-by-tap into the f32 VMEM scratch.
    """
    c = a.shape[0]
    acc = None
    for kd_i, dd in enumerate((-1, 0, 1)):
      for kh_i, dh in enumerate((-1, 0, 1)):
        for kw_i, dw in enumerate((-1, 0, 1)):
          delta = dd * HW + dh * W + dw
          sl = shifted(a, delta)
          if (dd, dh, dw) != (0, 0, 0):
            tap = kd_i * 9 + kh_i * 3 + kw_i
            sl = sl * masks_ref[tap:tap + 1, :]   # zero D/H/W out-of-range taps
          t = kh_i * 3 + kw_i
          patch_ref[t * c:(t + 1) * c, :] = sl    # f32, 8-row-aligned write
      contrib = jnp.dot(w_ref_[kd_i].astype(mm_dtype),
                        patch_ref[0:9 * c, :].astype(mm_dtype),
                        preferred_element_type=f32)
      acc = contrib if acc is None else acc + contrib
    return acc + b_ref_[...].astype(f32)          # (Cout, S) + (Cout, 1)

  def group_norm(y, g_ref, b_ref, minv_ref):
    # Two-pass: group mean first, then variance of centered data (numerically
    # stable).  minv is the precomputed (C, C) group-averaging matrix / (cpg*S).
    s1 = jnp.sum(y, axis=1, keepdims=True)                        # (C, 1)
    mean = jnp.dot(minv_ref[...], s1, preferred_element_type=f32)  # per-chan group mean
    yc = y - mean
    s2 = jnp.sum(yc * yc, axis=1, keepdims=True)                  # (C, 1)
    var = jnp.dot(minv_ref[...], s2, preferred_element_type=f32)
    scale = g_ref[...].astype(f32) * lax.rsqrt(var + eps)
    return yc * scale + b_ref[...].astype(f32)

  def lrelu(y):
    return jnp.maximum(y, neg_slope * y)

  # double_conv branch: GN -> LReLU -> Conv -> GN -> LReLU -> Conv
  h1 = lrelu(group_norm(x, gn1_g_ref, gn1_b_ref, minv_in_ref))
  c1 = conv3x3x3(h1, w1_ref, b1_ref)
  h2 = lrelu(group_norm(c1, gn2_g_ref, gn2_b_ref, minv_out_ref))
  c2 = conv3x3x3(h2, w2_ref, b2_ref)
  # skip branch: Conv -> GN, then residual add (all in VMEM)
  sk = group_norm(conv3x3x3(x, ws_ref, bs_ref), gns_g_ref, gns_b_ref,
                  minv_out_ref)
  o_ref[0] = (c2 + sk).astype(o_ref.dtype)


# --------------------------------------------------------------------------
# Wrapper
# --------------------------------------------------------------------------
def _group_avg_matrix(c, num_groups, s):
  """M[i,j] = 1/(cpg*S) if channels i,j share a group, else 0."""
  cpg = c // num_groups
  gid = jnp.arange(c) // cpg
  m = (gid[:, None] == gid[None, :]).astype(jnp.float32)
  return m / float(cpg * s)


def _boundary_masks(d, h, w):
  """(27, S) f32 masks; row t=((kd*3)+kh)*3+kw is 1 where tap (kd,kh,kw) is valid."""
  s = d * h * w
  idx = jnp.arange(s, dtype=jnp.int32)
  wi = idx % w
  hi = (idx // w) % h
  di = idx // (h * w)
  rows = []
  for dd in (-1, 0, 1):
    for dh in (-1, 0, 1):
      for dw in (-1, 0, 1):
        ok = ((wi + dw >= 0) & (wi + dw < w) &
              (hi + dh >= 0) & (hi + dh < h) &
              (di + dd >= 0) & (di + dd < d))
        rows.append(ok)
  return jnp.stack(rows, axis=0).astype(jnp.float32)


def _pack_conv_weight(w_oidhw, mm_dtype):
  """PyTorch (Cout, Cin, 3, 3, 3) -> (3, Cout, 9*Cin), rows ordered (kh, kw, ci)."""
  co, ci = w_oidhw.shape[0], w_oidhw.shape[1]
  wt = jnp.transpose(w_oidhw, (2, 0, 3, 4, 1))          # (kd, Cout, kh, kw, Cin)
  return wt.reshape(3, co, 9 * ci).astype(mm_dtype)


def res_double_conv(x_ncdhw, params, num_groups=8, eps=1e-5, neg_slope=0.01,
                    mm_dtype=jnp.float32):
  """Fused ResDoubleConv forward.  x: (N, Cin, D, H, W) float32 (PyTorch NCDHW)."""
  n, cin, d, h, w = x_ncdhw.shape
  cout = params["conv1_w"].shape[0]
  s = d * h * w
  cmax = max(cin, cout)
  f32 = jnp.float32
  assert s % 128 == 0, (
      "res_double_conv requires D*H*W to be a multiple of 128 for lane-dense "
      f"layout; got {d}x{h}x{w} = {s}")

  x2 = x_ncdhw.reshape(n, cin, s)                        # metadata-only reshape

  w1 = _pack_conv_weight(params["conv1_w"], mm_dtype)
  w2 = _pack_conv_weight(params["conv2_w"], mm_dtype)
  wsk = _pack_conv_weight(params["skip_w"], mm_dtype)
  b1 = params["conv1_b"].reshape(cout, 1).astype(f32)
  b2 = params["conv2_b"].reshape(cout, 1).astype(f32)
  bsk = params["skip_b"].reshape(cout, 1).astype(f32)
  g1 = params["gn1_w"].reshape(cin, 1).astype(f32)
  be1 = params["gn1_b"].reshape(cin, 1).astype(f32)
  g2 = params["gn2_w"].reshape(cout, 1).astype(f32)
  be2 = params["gn2_b"].reshape(cout, 1).astype(f32)
  gs = params["skip_gn_w"].reshape(cout, 1).astype(f32)
  bes = params["skip_gn_b"].reshape(cout, 1).astype(f32)
  masks = _boundary_masks(d, h, w)
  minv_in = _group_avg_matrix(cin, num_groups, s)
  minv_out = _group_avg_matrix(cout, num_groups, s)

  kern = functools.partial(_res_double_conv_kernel, D=d, H=h, W=w, eps=eps,
                           neg_slope=neg_slope, mm_dtype=mm_dtype,
                           shift_mode=_shift_mode())

  def _cspec(a):  # constant (per-model) input, same block every grid step
    nd = a.ndim
    return pl.BlockSpec(a.shape, lambda i, _nd=nd: (0,) * _nd)

  consts = [masks, g1, be1, minv_in, w1, b1, g2, be2, minv_out, w2, b2,
            wsk, bsk, gs, bes]

  # VMEM budget derived from actual shapes; clamped to <= 64 MiB so it is also
  # safe on v7x.  TODO(synk): raise toward ~100 MiB on v5e/v6e once spatial
  # tiling exists and tile sizes actually need it.
  vmem_need = 4 * (2 * (cin + cout) * s        # double-buffered x / out blocks
                   + 27 * s                    # boundary masks
                   + 9 * cmax * s              # im2col patch scratch
                   + 8 * cmax * s)             # live activations / temporaries
  vmem_limit = int(min(max(2 * vmem_need, 32 * 1024 * 1024), 64 * 1024 * 1024))

  out = pl.pallas_call(
      kern,
      out_shape=jax.ShapeDtypeStruct((n, cout, s), x_ncdhw.dtype),
      grid=(n,),
      in_specs=[pl.BlockSpec((1, cin, s), lambda i: (i, 0, 0))]
               + [_cspec(a) for a in consts],
      out_specs=pl.BlockSpec((1, cout, s), lambda i: (i, 0, 0)),
      scratch_shapes=[pltpu.VMEM((9 * cmax, s), jnp.float32)],
      compiler_params=pltpu.CompilerParams(
          dimension_semantics=("parallel",),
          vmem_limit_bytes=vmem_limit),
  )(x2, *consts)
  return out.reshape(n, cout, d, h, w)


# --------------------------------------------------------------------------
# Pure-JAX reference (NCDHW, matches the PyTorch module)
# --------------------------------------------------------------------------
def _gn_ref(x, gamma, beta, g, eps=1e-5):
  n, c, d, h, w = x.shape
  xg = x.reshape(n, g, c // g, d, h, w)
  mean = xg.mean(axis=(2, 3, 4, 5), keepdims=True)
  var = ((xg - mean) ** 2).mean(axis=(2, 3, 4, 5), keepdims=True)
  xn = ((xg - mean) * lax.rsqrt(var + eps)).reshape(n, c, d, h, w)
  return xn * gamma.reshape(1, c, 1, 1, 1) + beta.reshape(1, c, 1, 1, 1)


def _conv_ref(x, w, b):
  y = lax.conv_general_dilated(
      x, w, (1, 1, 1), "SAME",
      dimension_numbers=("NCDHW", "OIDHW", "NCDHW"))
  return y + b.reshape(1, -1, 1, 1, 1)


def _lrelu_ref(x):
  return jnp.where(x >= 0, x, 0.01 * x)


def _ref_forward(x, p, g=8):
  h = _lrelu_ref(_gn_ref(x, p["gn1_w"], p["gn1_b"], g))
  h = _conv_ref(h, p["conv1_w"], p["conv1_b"])
  h = _lrelu_ref(_gn_ref(h, p["gn2_w"], p["gn2_b"], g))
  h = _conv_ref(h, p["conv2_w"], p["conv2_b"])
  s = _gn_ref(_conv_ref(x, p["skip_w"], p["skip_b"]),
              p["skip_gn_w"], p["skip_gn_b"], g)
  return h + s


# --------------------------------------------------------------------------
if __name__ == "__main__":
  n, cin, cout = 2, 8, 16
  d, h, w = 8, 8, 8
  num_groups = 8

  keys = jax.random.split(jax.random.PRNGKey(0), 13)
  k_in, kp = keys[0], keys[1:]

  def nrm(k, shape, scale=0.1):
    return (scale * jax.random.normal(k, shape)).astype(jnp.float32)

  params = {
      "gn1_w": 1.0 + nrm(kp[0], (cin,)),
      "gn1_b": nrm(kp[1], (cin,)),
      "conv1_w": nrm(kp[2], (cout, cin, 3, 3, 3)),     # PyTorch OIDHW
      "conv1_b": nrm(kp[3], (cout,)),
      "gn2_w": 1.0 + nrm(kp[4], (cout,)),
      "gn2_b": nrm(kp[5], (cout,)),
      "conv2_w": nrm(kp[6], (cout, cout, 3, 3, 3)),
      "conv2_b": nrm(kp[7], (cout,)),
      "skip_w": nrm(kp[8], (cout, cin, 3, 3, 3)),
      "skip_b": nrm(kp[9], (cout,)),
      "skip_gn_w": 1.0 + nrm(kp[10], (cout,)),
      "skip_gn_b": nrm(kp[11], (cout,)),
  }

  # Input in PyTorch NCDHW convention; the kernel consumes it directly.
  x = jax.random.normal(k_in, (n, cin, d, h, w), jnp.float32)

  ref = _ref_forward(x, params, num_groups)

  # f32 MXU mode: tight tolerance.
  out = jax.block_until_ready(res_double_conv(x, params, num_groups))
  assert out.shape == (n, cout, d, h, w), out.shape
  err = float(jnp.max(jnp.abs(out - ref)))
  assert jnp.allclose(out, ref, rtol=1e-3, atol=1e-3), err

  # bf16 MXU mode (perf configuration for v6e/v7x): loose tolerance.
  out_bf = jax.block_until_ready(
      res_double_conv(x, params, num_groups, mm_dtype=jnp.bfloat16))
  err_bf = float(jnp.max(jnp.abs(out_bf - ref)))
  assert jnp.allclose(out_bf, ref, rtol=5e-2, atol=5e-2), err_bf

  print("KERNEL_OK")
</pallas_src>

<mosaic_0001>
module attributes {stable_mosaic.version = 11 : i64} {
  func.func @k(%arg0: memref<8x256xf32, #tpu.memory_space<vmem>>, %arg1: memref<8x256xf32, #tpu.memory_space<vmem>>) attributes {dimension_semantics = [], scalar_prefetch = 0 : i64, scratch_operands = 0 : i64, tpu.core_type = #tpu.core_type<tc>} {
    %c0 = arith.constant 0 : index
    %c0_0 = arith.constant 0 : index
    %0 = vector.load %arg0[%c0, %c0_0] : memref<8x256xf32, #tpu.memory_space<vmem>>, vector<8x256xf32>
    %c3_i32 = arith.constant 3 : i32
    %1 = tpu.dynamic_rotate %0 by %c3_i32 dim 1 : vector<8x256xf32>, i32 -> vector<8x256xf32>
    %c0_1 = arith.constant 0 : index
    %c0_2 = arith.constant 0 : index
    %2 = vector.load %arg1[%c0_1, %c0_2] : memref<8x256xf32, #tpu.memory_space<vmem>>, vector<8x256xf32>
    tpu.vector_store %arg1[%c0_1, %c0_2], %1 {strides = array<i32>} : memref<8x256xf32, #tpu.memory_space<vmem>>, vector<8x256xf32>,
    return
  }
}

module attributes {stable_mosaic.version = 11 : i64} {
  func.func @_res_double_conv_kernel(%arg0: i32, %arg1: memref<1x8x512xf32, #tpu.memory_space<vmem>>, %arg2: memref<27x512xf32, #tpu.memory_space<vmem>>, %arg3: memref<8x1xf32, #tpu.memory_space<vmem>>, %arg4: memref<8x1xf32, #tpu.memory_space<vmem>>, %arg5: memref<8x8xf32, #tpu.memory_space<vmem>>, %arg6: memref<3x16x72xf32, #tpu.memory_space<vmem>>, %arg7: memref<16x1xf32, #tpu.memory_space<vmem>>, %arg8: memref<16x1xf32, #tpu.memory_space<vmem>>, %arg9: memref<16x1xf32, #tpu.memory_space<vmem>>, %arg10: memref<16x16xf32, #tpu.memory_space<vmem>>, %arg11: memref<3x16x144xf32, #tpu.memory_space<vmem>>, %arg12: memref<16x1xf32, #tpu.memory_space<vmem>>, %arg13: memref<3x16x72xf32, #tpu.memory_space<vmem>>, %arg14: memref<16x1xf32, #tpu.memory_space<vmem>>, %arg15: memref<16x1xf32, #tpu.memory_space<vmem>>, %arg16: memref<16x1xf32, #tpu.memory_space<vmem>>, %arg17: memref<1x16x512xf32, #tpu.memory_space<vmem>>, %arg18: memref<144x512xf32, #tpu.memory_space<vmem>>) attributes {dimension_semantics = [#tpu.dimension_semantics<parallel>], iteration_bounds = array<i64: 2>, scalar_prefetch = 0 : i64, scratch_operands = 1 : i64, tpu.core_type = #tpu.core_type<tc>, window_params = [{transform_indices = @transform_0, window_bounds = array<i64: 1, 8, 512>}, {pipeline_mode = #tpu.pipeline_mode<synchronous>, transform_indices = @transform_1, window_bounds = array<i64: 27, 512>}, {pipeline_mode = #tpu.pipeline_mode<synchronous>, transform_indices = @transform_2, window_bounds = array<i64: 8, 1>}, {pipeline_mode = #tpu.pipeline_mode<synchronous>, transform_indices = @transform_3, window_bounds = array<i64: 8, 1>}, {pipeline_mode = #tpu.pipeline_mode<synchronous>, transform_indices = @transform_4, window_bounds = array<i64: 8, 8>}, {pipeline_mode = #tpu.pipeline_mode<synchronous>, transform_indices = @transform_5, window_bounds = array<i64: 3, 16, 72>}, {pipeline_mode = #tpu.pipeline_mode<synchronous>, transform_indices = @transform_6, window_bounds = array<i64: 16, 1>}, {pipeline_mode = #tpu.pipeline_mode<synchronous>, transform_indices = @transform_7, window_bounds = array<i64: 16, 1>}, {pipeline_mode = #tpu.pipeline_mode<synchronous>, transform_indices = @transform_8, window_bounds = array<i64: 16, 1>}, {pipeline_mode = #tpu.pipeline_mode<synchronous>, transform_indices = @transform_9, window_bounds = array<i64: 16, 16>}, {pipeline_mode = #tpu.pipeline_mode<synchronous>, transform_indices = @transform_10, window_bounds = array<i64: 3, 16, 144>}, {pipeline_mode = #tpu.pipeline_mode<synchronous>, transform_indices = @transform_11, window_bounds = array<i64: 16, 1>}, {pipeline_mode = #tpu.pipeline_mode<synchronous>, transform_indices = @transform_12, window_bounds = array<i64: 3, 16, 72>}, {pipeline_mode = #tpu.pipeline_mode<synchronous>, transform_indices = @transform_13, window_bounds = array<i64: 16, 1>}, {pipeline_mode = #tpu.pipeline_mode<synchronous>, transform_indices = @transform_14, window_bounds = array<i64: 16, 1>}, {pipeline_mode = #tpu.pipeline_mode<synchronous>, transform_indices = @transform_15, window_bounds = array<i64: 16, 1>}, {transform_indices = @transform_16, window_bounds = array<i64: 1, 16, 512>}]} {
    %c0 = arith.constant 0 : index
    %c0_0 = arith.constant 0 : index
    %c0_1 = arith.constant 0 : index
    %0 = vector.load %arg1[%c0, %c0_0, %c0_1] : memref<1x8x512xf32, #tpu.memory_space<vmem>>, vector<1x8x512xf32>
    %1 = vector.shape_cast %0 : vector<1x8x512xf32> to vector<8x512xf32>
    %cst = arith.constant dense<0.000000e+00> : vector<8xf32>
    %2 = vector.multi_reduction <add>, %1, %cst [1] : vector<8x512xf32> to vector<8xf32>
    %3 = vector.shape_cast %2 : vector<8xf32> to vector<8x1xf32>
    %c0_2 = arith.constant 0 : index
    %c0_3 = arith.constant 0 : index
    %4 = vector.load %arg5[%c0_2, %c0_3] : memref<8x8xf32, #tpu.memory_space<vmem>>, vector<8x8xf32>
    %cst_4 = arith.constant dense<0.000000e+00> : vector<8x1xf32>
    %5 = tpu.matmul %4, %3, %cst_4 {dimension_numbers = #tpu.dot_dimension_numbers<[1], [0], [0], [1], [0, 0, 1, 1], [], []>} : vector<8x8xf32>, vector<8x1xf32>, vector<8x1xf32> -> vector<8x1xf32>
    %6 = vector.broadcast %5 : vector<8x1xf32> to vector<8x512xf32>
    %7 = arith.subf %1, %6 : vector<8x512xf32>
    %8 = arith.mulf %7, %7 : vector<8x512xf32>
    %cst_5 = arith.constant dense<0.000000e+00> : vector<8xf32>
    %9 = vector.multi_reduction <add>, %8, %cst_5 [1] : vector<8x512xf32> to vector<8xf32>
    %10 = vector.shape_cast %9 : vector<8xf32> to vector<8x1xf32>
    %c0_6 = arith.constant 0 : index
    %c0_7 = arith.constant 0 : index
    %11 = vector.load %arg5[%c0_6, %c0_7] : memref<8x8xf32, #tpu.memory_space<vmem>>, vector<8x8xf32>
    %cst_8 = arith.constant dense<0.000000e+00> : vector<8x1xf32>
    %12 = tpu.matmul %11, %10, %cst_8 {dimension_numbers = #tpu.dot_dimension_numbers<[1], [0], [0], [1], [0, 0, 1, 1], [], []>} : vector<8x8xf32>, vector<8x1xf32>, vector<8x1xf32> -> vector<8x1xf32>
    %c0_9 = arith.constant 0 : index
    %c0_10 = arith.constant 0 : index
    %13 = vector.load %arg3[%c0_9, %c0_10] : memref<8x1xf32, #tpu.memory_space<vmem>>, vector<8x1xf32>
    %cst_11 = arith.constant 9.99999974E-6 : f32
    %14 = vector.broadcast %cst_11 : f32 to vector<8x1xf32>
    %15 = arith.addf %12, %14 : vector<8x1xf32>
    %16 = math.rsqrt %15 : vector<8x1xf32>
    %17 = arith.mulf %13, %16 : vector<8x1xf32>
    %18 = vector.broadcast %17 : vector<8x1xf32> to vector<8x512xf32>
    %19 = arith.mulf %7, %18 : vector<8x512xf32>
    %c0_12 = arith.constant 0 : index
    %c0_13 = arith.constant 0 : index
    %20 = vector.load %arg4[%c0_12, %c0_13] : memref<8x1xf32, #tpu.memory_space<vmem>>, vector<8x1xf32>
    %21 = vector.broadcast %20 : vector<8x1xf32> to vector<8x512xf32>
    %22 = arith.addf %19, %21 : vector<8x512xf32>
    %cst_14 = arith.constant 0.00999999977 : f32
    %23 = vector.broadcast %cst_14 : f32 to vector<8x512xf32>
    %24 = arith.mulf %23, %22 : vector<8x512xf32>
    %25 = arith.maximumf %22, %24 : vector<8x512xf32>
    %26 = vector.extract_strided_slice %25 {offsets = [0, 439], sizes = [8, 73], strides = [1, 1]} : vector<8x512xf32> to vector<8x73xf32>
    %27 = vector.extract_strided_slice %25 {offsets = [0, 0], sizes = [8, 439], strides = [1, 1]} : vector<8x512xf32> to vector<8x439xf32>
    %28 = tpu.concatenate %26, %27 in 1 : vector<8x73xf32>, vector<8x439xf32> -> vector<8x512xf32>
    %c0_15 = arith.constant 0 : index
    %c0_16 = arith.constant 0 : index
    %29 = vector.load %arg2[%c0_15, %c0_16] : memref<27x512xf32, #tpu.memory_space<vmem>>, vector<1x512xf32>
    %30 = vector.broadcast %29 : vector<1x512xf32> to vector<8x512xf32>
    %31 = arith.mulf %28, %30 : vector<8x512xf32>
    %c0_17 = arith.constant 0 : index
    %c0_18 = arith.constant 0 : index
    %32 = vector.load %arg18[%c0_17, %c0_18] : memref<144x512xf32, #tpu.memory_space<vmem>>, vector<8x512xf32>
    tpu.vector_store %arg18[%c0_17, %c0_18], %31 {strides = array<i32>} : memref<144x512xf32, #tpu.memory_space<vmem>>, vector<8x512xf32>,
    %33 = vector.extract_strided_slice %25 {offsets = [0, 440], sizes = [8, 72], strides = [1, 1]} : vector<8x512xf32> to vector<8x72xf32>
    %34 = vector.extract_strided_slice %25 {offsets = [0, 0], sizes = [8, 440], strides = [1, 1]} : vector<8x512xf32> to vector<8x440xf32>
    %35 = tpu.concatenate %33, %34 in 1 : vector<8x72xf32>, vector<8x440xf32> -> vector<8x512xf32>
    %c1 = arith.constant 1 : index
    %c0_19 = arith.constant 0 : index
    %36 = vector.load %arg2[%c1, %c0_19] : memref<27x512xf32, #tpu.memory_space<vmem>>, vector<1x512xf32>
    %37 = vector.broadcast %36 : vector<1x512xf32> to vector<8x512xf32>
    %38 = arith.mulf %35, %37 : vector<8x512xf32>
    %c8 = arith.constant 8 : index
    %c0_20 = arith.constant 0 : index
    %39 = vector.load %arg18[%c8, %c0_20] : memref<144x512xf32, #tpu.memory_space<vmem>>, vector<8x512xf32>
    tpu.vector_store %arg18[%c8, %c0_20], %38 {strides = array<i32>} : memref<144x512xf32, #tpu.memory_space<vmem>>, vector<8x512xf32>,
    %40 = vector.extract_strided_slice %25 {offsets = [0, 441], sizes = [8, 71], strides = [1, 1]} : vector<8x512xf32> to vector<8x71xf32>
    %41 = vector.extract_strided_slice %25 {offsets = [0, 0], sizes = [8, 441], strides = [1, 1]} : vector<8x512xf32> to vector<8x441xf32>
    %42 = tpu.concatenate %40, %41 in 1 : vector<8x71xf32>, vector<8x441xf32> -> vector<8x512xf32>
    %c2 = arith.constant 2 : index
    %c0_21 = arith.constant 0 : index
    %43 = vector.load %arg2[%c2, %c0_21] : memref<27x512xf32, #tpu.memory_space<vmem>>, vector<1x512xf32>
    %44 = vector.broadcast %43 : vector<1x512xf32> to vector<8x512xf32>
    %45 = arith.mulf %42, %44 : vector<8x512xf32>
    %c16 = arith.constant 16 : index
    %c0_22 = arith.constant 0 : index
    %46 = vector.load %arg18[%c16, %c0_22] : memref<144x512xf32, #tpu.memory_space<vmem>>, vector<8x512xf32>
    tpu.vector_store %arg18[%c16, %c0_22], %45 {strides = array<i32>} : memref<144x512xf32, #tpu.memory_space<vmem>>, vector<8x512xf32>,
    %47 = vector.extract_strided_slice %25 {offsets = [0, 447], sizes = [8, 65], strides = [1, 1]} : vector<8x512xf32> to vector<8x65xf32>
    %48 = vector.extract_strided_slice %25 {offsets = [0, 0], sizes = [8, 447], strides = [1, 1]} : vector<8x512xf32> to vector<8x447xf32>
    %49 = tpu.concatenate %47, %48 in 1 : vector<8x65xf32>, vector<8x447xf32> -> vector<8x512xf32>
    %c3 = arith.constant 3 : index
    %c0_23 = arith.constant 0 : index
    %50 = vector.load %arg2[%c3, %c0_23] : memref<27x512xf32, #tpu.memory_space<vmem>>, vector<1x512xf32>
    %51 = vector.broadcast %50 : vector<1x512xf32> to vector<8x512xf32>
    %52 = arith.mulf %49, %51 : vector<8x512xf32>
    %c24 = arith.constant 24 : index
    %c0_24 = arith.constant 0 : index
    %53 = vector.load %arg18[%c24, %c0_24] : memref<144x512xf32, #tpu.memory_space<vmem>>, vector<8x512xf32>
    tpu.vector_store %arg18[%c24, %c0_24], %52 {strides = array<i32>} : memref<144x512xf32, #tpu.memory_space<vmem>>, vector<8x512xf32>,
    %54 = vector.extract_strided_slice %25 {offsets = [0, 448], sizes = [8, 64], strides = [1, 1]} : vector<8x512xf32> to vector<8x64xf32>
    %55 = vector.extract_strided_slice %25 {offsets = [0, 0], sizes = [8, 448], strides = [1, 1]} : vector<8x512xf32> to vector<8x448xf32>
    %56 = tpu.concatenate %54, %55 in 1 : vector<8x64xf32>, vector<8x448xf32> -> vector<8x512xf32>
    %c4 = arith.constant 4 : index
    %c0_25 = arith.constant 0 : index
    %57 = vector.load %arg2[%c4, %c0_25] : memref<27x512xf32, #tpu.memory_space<vmem>>, vector<1x512xf32>
    %58 = vector.broadcast %57 : vector<1x512xf32> to vector<8x512xf32>
    %59 = arith.mulf %56, %58 : vector<8x512xf32>
    %c32 = arith.constant 32 : index
    %c0_26 = arith.constant 0 : index
    %60 = vector.load %arg18[%c32, %c0_26] : memref<144x512xf32, #tpu.memory_space<vmem>>, vector<8x512xf32>
    tpu.vector_store %arg18[%c32, %c0_26], %59 {strides = array<i32>} : memref<144x512xf32, #tpu.memory_space<vmem>>, vector<8x512xf32>,
    %61 = vector.extract_strided_slice %25 {offsets = [0, 449], sizes = [8, 63], strides = [1, 1]} : vector<8x512xf32> to vector<8x63xf32>
    %62 = vector.extract_strided_slice %25 {offsets = [0, 0], sizes = [8, 449], strides = [1, 1]} : vector<8x512xf32> to vector<8x449xf32>
    %63 = tpu.concatenate %61, %62 in 1 : vector<8x63xf32>, vector<8x449xf32> -> vector<8x512xf32>
    %c5 = arith.constant 5 : index
    %c0_27 = arith.constant 0 : index
    %64 = vector.load %arg2[%c5, %c0_27] : memref<27x512xf32, #tpu.memory_space<vmem>>, vector<1x512xf32>
    %65 = vector.broadcast %64 : vector<1x512xf32> to vector<8x512xf32>
    %66 = arith.mulf %63, %65 : vector<8x512xf32>
    %c40 = arith.constant 40 : index
    %c0_28 = arith.constant 0 : index
    %67 = vector.load %arg18[%c40, %c0_28] : memref<144x512xf32, #tpu.memory_space<vmem>>, vector<8x512xf32>
    tpu.vector_store %arg18[%c40, %c0_28], %66 {strides = array<i32>} : memref<144x512xf32, #tpu.memory_space<vmem>>, vector<8x512xf32>,
    %68 = vector.extract_strided_slice %25 {offsets = [0, 455], sizes = [8, 57], strides = [1, 1]} : vector<8x512xf32> to vector<8x57xf32>
    %69 = vector.extract_strided_slice %25 {offsets = [0, 0], sizes = [8, 455], strides = [1, 1]} : vector<8x512xf32> to vector<8x455xf32>
    %70 = tpu.concatenate %68, %69 in 1 : vector<8x57xf32>, vector<8x455xf32> -> vector<8x512xf32>
    %c6 = arith.constant 6 : index
    %c0_29 = arith.constant 0 : index
    %71 = vector.load %arg2[%c6, %c0_29] : memref<27x512xf32, #tpu.memory_space<vmem>>, vector<1x512xf32>
    %72 = vector.broadcast %71 : vector<1x512xf32> to vector<8x512xf32>
    %73 = arith.mulf %70, %72 : vector<8x512xf32>
    %c48 = arith.constant 48 : index
    %c0_30 = arith.constant 0 : index
    %74 = vector.load %arg18[%c48, %c0_30] : memref<144x512xf32, #tpu.memory_space<vmem>>, vector<8x512xf32>
    tpu.vector_store %arg18[%c48, %c0_30], %73 {strides = array<i32>} : memref<144x512xf32, #tpu.memory_space<vmem>>, vector<8x512xf32>,
    %75 = vector.extract_strided_slice %25 {offsets = [0, 456], sizes = [8, 56], strides = [1, 1]} : vector<8x512xf32> to vector<8x56xf32>
    %76 = vector.extract_strided_slice %25 {offsets = [0, 0], sizes = [8, 456], strides = [1, 1]} : vector<8x512xf32> to vector<8x456xf32>
    %77 = tpu.concatenate %75, %76 in 1 : vector<8x56xf32>, vector<8x456xf32> -> vector<8x512xf32>
    %c7 = arith.constant 7 : index
    %c0_31 = arith.constant 0 : index
    %78 = vector.load %arg2[%c7, %c0_31] : memref<27x512xf32, #tpu.memory_space<vmem>>, vector<1x512xf32>
    %79 = vector.broadcast %78 : vector<1x512xf32> to vector<8x512xf32>
    %80 = arith.mulf %77, %79 : vector<8x512xf32>
    %c56 = arith.constant 56 : index
    %c0_32 = arith.constant 0 : index
    %81 = vector.load %arg18[%c56, %c0_32] : memref<144x512xf32, #tpu.memory_space<vmem>>, vector<8x512xf32>
    tpu.vector_store %arg18[%c56, %c0_32], %80 {strides = array<i32>} : memref<144x512xf32, #tpu.memory_space<vmem>>, vector<8x512xf32>,
    %82 = vector.extract_strided_slice %25 {offsets = [0, 457], sizes = [8, 55], strides = [1, 1]} : vector<8x512xf32> to vector<8x55xf32>
    %83 = vector.extract_strided_slice %25 {offsets = [0, 0], sizes = [8, 457], strides = [1, 1]} : vector<8x512xf32> to vector<8x457xf32>
    %84 = tpu.concatenate %82, %83 in 1 : vector<8x55xf32>, vector<8x457xf32> -> vector<8x512xf32>
    %c8_33 = arith.constant 8 : index
    %c0_34 = arith.constant 0 : index
    %85 = vector.load %arg2[%c8_33, %c0_34] : memref<27x512xf32, #tpu.memory_space<vmem>>, vector<1x512xf32>
    %86 = vector.broadcast %85 : vector<1x512xf32> to vector<8x512xf32>
    %87 = arith.mulf %84, %86 : vector<8x512xf32>
    %c64 = arith.constant 64 : index
    %c0_35 = arith.constant 0 : index
    %88 = vector.load %arg18[%c64, %c0_35] : memref<144x512xf32, #tpu.memory_space<vmem>>, vector<8x512xf32>
    tpu.vector_store %arg18[%c64, %c0_35], %87 {strides = array<i32>} : memref<144x512xf32, #tpu.memory_space<vmem>>, vector<8x512xf32>,
    %c0_36 = arith.constant 0 : index
    %c0_37 = arith.constant 0 : index
    %c0_38 = arith.constant 0 : index
    %89 = vector.load %arg6[%c0_36, %c0_37, %c0_38] : memref<3x16x72xf32, #tpu.memory_space<vmem>>, vector<1x16x72xf32>
    %90 = vector.shape_cast %89 : vector<1x16x72xf32> to vector<16x72xf32>
    %c0_39 = arith.constant 0 : index
    %c0_40 = arith.constant 0 : index
    %91 = vector.load %arg18[%c0_39, %c0_40] : memref<144x512xf32, #tpu.memory_space<vmem>>, vector<72x512xf32>
    %cst_41 = arith.constant dense<0.000000e+00> : vector<16x512xf32>
    %92 = tpu.matmul %90, %91, %cst_41 {dimension_numbers = #tpu.dot_dimension_numbers<[1], [0], [0], [1], [0, 0, 1, 1], [], []>} : vector<16x72xf32>, vector<72x512xf32>, vector<16x512xf32> -> vector<16x512xf32>
    %93 = vector.extract_strided_slice %25 {offsets = [0, 503], sizes = [8, 9], strides = [1, 1]} : vector<8x512xf32> to vector<8x9xf32>
    %94 = vector.extract_strided_slice %25 {offsets = [0, 0], sizes = [8, 503], strides = [1, 1]} : vector<8x512xf32> to vector<8x503xf32>
    %95 = tpu.concatenate %93, %94 in 1 : vector<8x9xf32>, vector<8x503xf32> -> vector<8x512xf32>
    %c9 = arith.constant 9 : index
    %c0_42 = arith.constant 0 : index
    %96 = vector.load %arg2[%c9, %c0_42] : memref<27x512xf32, #tpu.memory_space<vmem>>, vector<1x512xf32>
    %97 = vector.broadcast %96 : vector<1x512xf32> to vector<8x512xf32>
    %98 = arith.mulf %95, %97 : vector<8x512xf32>
    %c0_43 = arith.constant 0 : index
    %c0_44 = arith.constant 0 : index
    %99 = vector.load %arg18[%c0_43, %c0_44] : memref<144x512xf32, #tpu.memory_space<vmem>>, vector<8x512xf32>
    tpu.vector_store %arg18[%c0_43, %c0_44], %98 {strides = array<i32>} : memref<144x512xf32, #tpu.memory_space<vmem>>, vector<8x512xf32>,
    %100 = vector.extract_strided_slice %25 {offsets = [0, 504], sizes = [8, 8], strides = [1, 1]} : vector<8x512xf32> to vector<8x8xf32>
    %101 = vector.extract_strided_slice %25 {offsets = [0, 0], sizes = [8, 504], strides = [1, 1]} : vector<8x512xf32> to vector<8x504xf32>
    %102 = tpu.concatenate %100, %101 in 1 : vector<8x8xf32>, vector<8x504xf32> -> vector<8x512xf32>
    %c10 = arith.constant 10 : index
    %c0_45 = arith.constant 0 : index
    %103 = vector.load %arg2[%c10, %c0_45] : memref<27x512xf32, #tpu.memory_space<vmem>>, vector<1x512xf32>
    %104 = vector.broadcast %103 : vector<1x512xf32> to vector<8x512xf32>
    %105 = arith.mulf %102, %104 : vector<8x512xf32>
    %c8_46 = arith.constant 8 : index
    %c0_47 = arith.constant 0 : index
    %106 = vector.load %arg18[%c8_46, %c0_47] : memref<144x512xf32, #tpu.memory_space<vmem>>, vector<8x512xf32>
    tpu.vector_store %arg18[%c8_46, %c0_47], %105 {strides = array<i32>} : memref<144x512xf32, #tpu.memory_space<vmem>>, vector<8x512xf32>,
    %107 = vector.extract_strided_slice %25 {offsets = [0, 505], sizes = [8, 7], strides = [1, 1]} : vector<8x512xf32> to vector<8x7xf32>
    %108 = vector.extract_strided_slice %25 {offsets = [0, 0], sizes = [8, 505], strides = [1, 1]} : vector<8x512xf32> to vector<8x505xf32>
    %109 = tpu.concatenate %107, %108 in 1 : vector<8x7xf32>, vector<8x505xf32> -> vector<8x512xf32>
    %c11 = arith.constant 11 : index
    %c0_48 = arith.constant 0 : index
    %110 = vector.load %arg2[%c11, %c0_48] : memref<27x512xf32, #tpu.memory_space<vmem>>, vector<1x512xf32>
    %111 = vector.broadcast %110 : vector<1x512xf32> to vector<8x512xf32>
    %112 = arith.mulf %109, %111 : vector<8x512xf32>
    %c16_49 = arith.constant 16 : index
    %c0_50 = arith.constant 0 : index
    %113 = vector.load %arg18[%c16_49, %c0_50] : memref<144x512xf32, #tpu.memory_space<vmem>>, vector<8x512xf32>
    tpu.vector_store %arg18[%c16_49, %c0_50], %112 {strides = array<i32>} : memref<144x512xf32, #tpu.memory_space<vmem>>, vector<8x512xf32>,
    %114 = vector.extract_strided_slice %25 {offsets = [0, 511], sizes = [8, 1], strides = [1, 1]} : vector<8x512xf32> to vector<8x1xf32>
    %115 = vector.extract_strided_slice %25 {offsets = [0, 0], sizes = [8, 511], strides = [1, 1]} : vector<8x512xf32> to vector<8x511xf32>
    %116 = tpu.concatenate %114, %115 in 1 : vector<8x1xf32>, vector<8x511xf32> -> vector<8x512xf32>
    %c12 = arith.constant 12 : index
    %c0_51 = arith.constant 0 : index
    %117 = vector.load %arg2[%c12, %c0_51] : memref<27x512xf32, #tpu.memory_space<vmem>>, vector<1x512xf32>
    %118 = vector.broadcast %117 : vector<1x512xf32> to vector<8x512xf32>
    %119 = arith.mulf %116, %118 : vector<8x512xf32>
    %c24_52 = arith.constant 24 : index
    %c0_53 = arith.constant 0 : index
    %120 = vector.load %arg18[%c24_52, %c0_53] : memref<144x512xf32, #tpu.memory_space<vmem>>, vector<8x512xf32>
    tpu.vector_store %arg18[%c24_52, %c0_53], %119 {strides = array<i32>} : memref<144x512xf32, #tpu.memory_space<vmem>>, vector<8x512xf32>,
    %c32_54 = arith.constant 32 : index
    %c0_55 = arith.constant 0 : index
    %121 = vector.load %arg18[%c32_54, %c0_55] : memref<144x512xf32, #tpu.memory_space<vmem>>, vector<8x512xf32>
    tpu.vector_store %arg18[%c32_54, %c0_55], %25 {strides = array<i32>} : memref<144x512xf32, #tpu.memory_space<vmem>>, vector<8x512xf32>,
    %122 = vector.extract_strided_slice %25 {offsets = [0, 1], sizes = [8, 511], strides = [1, 1]} : vector<8x512xf32> to vector<8x511xf32>
    %123 = vector.extract_strided_slice %25 {offsets = [0, 0], sizes = [8, 1], strides = [1, 1]} : vector<8x512xf32> to vector<8x1xf32>
    %124 = tpu.concatenate %122, %123 in 1 : vector<8x511xf32>, vector<8x1xf32> -> vector<8x512xf32>
    %c14 = arith.constant 14 : index
    %c0_56 = arith.constant 0 : index
    %125 = vector.load %arg2[%c14, %c0_56] : memref<27x512xf32, #tpu.memory_space<vmem>>, vector<1x512xf32>
    %126 = vector.broadcast %125 : vector<1x512xf32> to vector<8x512xf32>
    %127 = arith.mulf %124, %126 : vector<8x512xf32>
    %c40_57 = arith.constant 40 : index
    %c0_58 = arith.constant 0 : index
    %128 = vector.load %arg18[%c40_57, %c0_58] : memref<144x512xf32, #tpu.memory_space<vmem>>, vector<8x512xf32>
    tpu.vector_store %arg18[%c40_57, %c0_58], %127 {strides = array<i32>} : memref<144x512xf32, #tpu.memory_space<vmem>>, vector<8x512xf32>,
    %129 = vector.extract_strided_slice %25 {offsets = [0, 7], sizes = [8, 505], strides = [1, 1]} : vector<8x512xf32> to vector<8x505xf32>
    %130 = vector.extract_strided_slice %25 {offsets = [0, 0], sizes = [8, 7], strides = [1, 1]} : vector<8x512xf32> to vector<8x7xf32>
    %131 = tpu.concatenate %129, %130 in 1 : vector<8x505xf32>, vector<8x7xf32> -> vector<8x512xf32>
    %c15 = arith.constant 15 : index
    %c0_59 = arith.constant 0 : index
    %132 = vector.load %arg2[%c15, %c0_59] : memref<27x512xf32, #tpu.memory_space<vmem>>, vector<1x512xf32>
    %133 = vector.broadcast %132 : vector<1x512xf32> to vector<8x512xf32>
    %134 = arith.mulf %131, %133 : vector<8x512xf32>
    %c48_60 = arith.constant 48 : index
    %c0_61 = arith.constant 0 : index
    %135 = vector.load %arg18[%c48_60, %c0_61] : memref<144x512xf32, #tpu.memory_space<vmem>>, vector<8x512xf32>
    tpu.vector_store %arg18[%c48_60, %c0_61], %134 {strides = array<i32>} : memref<144x512xf32, #tpu.memory_space<vmem>>, vector<8x512xf32>,
    %136 = vector.extract_strided_slice %25 {offsets = [0, 8], sizes = [8, 504], strides = [1, 1]} : vector<8x512xf32> to vector<8x504xf32>
    %137 = vector.extract_strided_slice %25 {offsets = [0, 0], sizes = [8, 8], strides = [1, 1]} : vector<8x512xf32> to vector<8x8xf32>
    %138 = tpu.concatenate %136, %137 in 1 : vector<8x504xf32>, vector<8x8xf32> -> vector<8x512xf32>
    %c16_62 = arith.constant 16 : index
    %c0_63 = arith.constant 0 : index
    %139 = vector.load %arg2[%c16_62, %c0_63] : memref<27x512xf32, #tpu.memory_space<vmem>>, vector<1x512xf32>
    %140 = vector.broadcast %139 : vector<1x512xf32> to vector<8x512xf32>
    %141 = arith.mulf %138, %140 : vector<8x512xf32>
    %c56_64 = arith.constant 56 : index
    %c0_65 = arith.constant 0 : index
    %142 = vector.load %arg18[%c56_64, %c0_65] : memref<144x512xf32, #tpu.memory_space<vmem>>, vector<8x512xf32>
    tpu.vector_store %arg18[%c56_64, %c0_65], %141 {strides = array<i32>} : memref<144x512xf32, #tpu.memory_space<vmem>>, vector<8x512xf32>,
    %143 = vector.extract_strided_slice %25 {offsets = [0, 9], sizes = [8, 503], strides = [1, 1]} : vector<8x512xf32> to vector<8x503xf32>
    %144 = vector.extract_strided_slice %25 {offsets = [0, 0], sizes = [8, 9], strides = [1, 1]} : vector<8x512xf32> to vector<8x9xf32>
    %145 = tpu.concatenate %143, %144 in 1 : vector<8x503xf32>, vector<8x9xf32> -> vector<8x512xf32>
    %c17 = arith.constant 17 : index
    %c0_66 = arith.constant 0 : index
    %146 = vector.load %arg2[%c17, %c0_66] : memref<27x512xf32, #tpu.memory_space<vmem>>, vector<1x512xf32>
    %147 = vector.broadcast %146 : vector<1x512xf32> to vector<8x512xf32>
    %148 = arith.mulf %145, %147 : vector<8x512xf32>
    %c64_67 = arith.constant 64 : index
    %c0_68 = arith.constant 0 : index
    %149 = vector.load %arg18[%c64_67, %c0_68] : memref<144x512xf32, #tpu.memory_space<vmem>>, vector<8x512xf32>
    tpu.vector_store %arg18[%c64_67, %c0_68], %148 {strides = array<i32>} : memref<144x512xf32, #tpu.memory_space<vmem>>, vector<8x512xf32>,
    %c1_69 = arith.constant 1 : index
    %c0_70 = arith.constant 0 : index
    %c0_71 = arith.constant 0 : index
    %150 = vector.load %arg6[%c1_69, %c0_70, %c0_71] : memref<3x16x72xf32, #tpu.memory_space<vmem>>, vector<1x16x72xf32>
    %151 = vector.shape_cast %150 : vector<1x16x72xf32> to vector<16x72xf32>
    %c0_72 = arith.constant 0 : index
    %c0_73 = arith.constant 0 : index
    %152 = vector.load %arg18[%c0_72, %c0_73] : memref<144x512xf32, #tpu.memory_space<vmem>>, vector<72x512xf32>
    %cst_74 = arith.constant dense<0.000000e+00> : vector<16x512xf32>
    %153 = tpu.matmul %151, %152, %cst_74 {dimension_numbers = #tpu.dot_dimension_numbers<[1], [0], [0], [1], [0, 0, 1, 1], [], []>} : vector<16x72xf32>, vector<72x512xf32>, vector<16x512xf32> -> vector<16x512xf32>
    %154 = arith.addf %92, %153 : vector<16x512xf32>
    %155 = vector.extract_strided_slice %25 {offsets = [0, 55], sizes = [8, 457], strides = [1, 1]} : vector<8x512xf32> to vector<8x457xf32>
    %156 = vector.extract_strided_slice %25 {offsets = [0, 0], sizes = [8, 55], strides = [1, 1]} : vector<8x512xf32> to vector<8x55xf32>
    %157 = tpu.concatenate %155, %156 in 1 : vector<8x457xf32>, vector<8x55xf32> -> vector<8x512xf32>
    %c18 = arith.constant 18 : index
    %c0_75 = arith.constant 0 : index
    %158 = vector.load %arg2[%c18, %c0_75] : memref<27x512xf32, #tpu.memory_space<vmem>>, vector<1x512xf32>
    %159 = vector.broadcast %158 : vector<1x512xf32> to vector<8x512xf32>
    %160 = arith.mulf %157, %159 : vector<8x512xf32>
    %c0_76 = arith.constant 0 : index
    %c0_77 = arith.constant 0 : index
    %161 = vector.load %arg18[%c0_76, %c0_77] : memref<144x512xf32, #tpu.memory_space<vmem>>, vector<8x512xf32>
    tpu.vector_store %arg18[%c0_76, %c0_77], %160 {strides = array<i32>} : memref<144x512xf32, #tpu.memory_space<vmem>>, vector<8x512xf32>,
    %162 = vector.extract_strided_slice %25 {offsets = [0, 56], sizes = [8, 456], strides = [1, 1]} : vector<8x512xf32> to vector<8x456xf32>
    %163 = vector.extract_strided_slice %25 {offsets = [0, 0], sizes = [8, 56], strides = [1, 1]} : vector<8x512xf32> to vector<8x56xf32>
    %164 = tpu.concatenate %162, %163 in 1 : vector<8x456xf32>, vector<8x56xf32> -> vector<8x512xf32>
    %c19 = arith.constant 19 : index
    %c0_78 = arith.constant 0 : index
    %165 = vector.load %arg2[%c19, %c0_78] : memref<27x512xf32, #tpu.memory_space<vmem>>, vector<1x512xf32>
    %166 = vector.broadcast %165 : vector<1x512xf32> to vector<8x512xf32>
    %167 = arith.mulf %164, %166 : vector<8x512xf32>
    %c8_79 = arith.constant 8 : index
    %c0_80 = arith.constant 0 : index
    %168 = vector.load %arg18[%c8_79, %c0_80] : memref<144x512xf32, #tpu.memory_space<vmem>>, vector<8x512xf32>
    tpu.vector_store %arg18[%c8_79, %c0_80], %167 {strides = array<i32>} : memref<144x512xf32, #tpu.memory_space<vmem>>, vector<8x512xf32>,
    %169 = vector.extract_strided_slice %25 {offsets = [0, 57], sizes = [8, 455], strides = [1, 1]} : vector<8x512xf32> to vector<8x455xf32>
    %170 = vector.extract_strided_slice %25 {offsets = [0, 0], sizes = [8, 57], strides = [1, 1]} : vector<8x512xf32> to vector<8x57xf32>
    %171 = tpu.concatenate %169, %170 in 1 : vector<8x455xf32>, vector<8x57xf32> -> vector<8x512xf32>
    %c20 = arith.constant 20 : index
    %c0_81 = arith.constant 0 : index
    %172 = vector.load %arg2[%c20, %c0_81] : memref<27x512xf32, #tpu.memory_space<vmem>>, vector<1x512xf32>
    %173 = vector.broadcast %172 : vector<1x512xf32> to vector<8x512xf32>
    %174 = arith.mulf %171, %173 : vector<8x512xf32>
    %c16_82 = arith.constant 16 : index
    %c0_83 = arith.constant 0 : index
    %175 = vector.load %arg18[%c16_82, %c0_83] : memref<144x512xf32, #tpu.memory_space<vmem>>, vector<8x512xf32>
    tpu.vector_store %arg18[%c16_82, %c0_83], %174 {strides = array<i32>} : memref<144x512xf32, #tpu.memory_space<vmem>>, vector<8x512xf32>,
    %176 = vector.extract_strided_slice %25 {offsets = [0, 63], sizes = [8, 449], strides = [1, 1]} : vector<8x512xf32> to vector<8x449xf32>
    %177 = vector.extract_strided_slice %25 {offsets = [0, 0], sizes = [8, 63], strides = [1, 1]} : vector<8x512xf32> to vector<8x63xf32>
    %178 = tpu.concatenate %176, %177 in 1 : vector<8x449xf32>, vector<8x63xf32> -> vector<8x512xf32>
    %c21 = arith.constant 21 : index
    %c0_84 = arith.constant 0 : index
    %179 = vector.load %arg2[%c21, %c0_84] : memref<27x512xf32, #tpu.memory_space<vmem>>, vector<1x512xf32>
    %180 = vector.broadcast %179 : vector<1x512xf32> to vector<8x512xf32>
    %181 = arith.mulf %178, %180 : vector<8x512xf32>
    %c24_85 = arith.constant 24 : index
    %c0_86 = arith.constant 0 : index
    %182 = vector.load %arg18[%c24_85, %c0_86] : memref<144x512xf32, #tpu.memory_space<vmem>>, vector<8x512xf32>
    tpu.vector_store %arg18[%c24_85, %c0_86], %181 {strides = array<i32>} : memref<144x512xf32, #tpu.memory_space<vmem>>, vector<8x512xf32>,
    %183 = vector.extract_strided_slice %25 {offsets = [0, 64], sizes = [8, 448], strides = [1, 1]} : vector<8x512xf32> to vector<8x448xf32>
    %184 = vector.extract_strided_slice %25 {offsets = [0, 0], sizes = [8, 64], strides = [1, 1]} : vector<8x512xf32> to vector<8x64xf32>
    %185 = tpu.concatenate %183, %184 in 1 : vector<8x448xf32>, vector<8x64xf32> -> vector<8x512xf32>
    %c22 = arith.constant 22 : index
    %c0_87 = arith.constant 0 : index
    %186 = vector.load %arg2[%c22, %c0_87] : memref<27x512xf32, #tpu.memory_space<vmem>>, vector<1x512xf32>
    %187 = vector.broadcast %186 : vector<1x512xf32> to vector<8x512xf32>
    %188 = arith.mulf %185, %187 : vector<8x512xf32>
    %c32_88 = arith.constant 32 : index
    %c0_89 = arith.constant 0 : index
    %189 = vector.load %arg18[%c32_88, %c0_89] : memref<144x512xf32, #tpu.memory_space<vmem>>, vector<8x512xf32>
    tpu.vector_store %arg18[%c32_88, %c0_89], %188 {strides = array<i32>} : memref<144x512xf32, #tpu.memory_space<vmem>>, vector<8x512xf32>,
    %190 = vector.extract_strided_slice %25 {offsets = [0, 65], sizes = [8, 447], strides = [1, 1]} : vector<8x512xf32> to vector<8x447xf32>
    %191 = vector.extract_strided_slice %25 {offsets = [0, 0], sizes = [8, 65], strides = [1, 1]} : vector<8x512xf32> to vector<8x65xf32>
    %192 = tpu.concatenate %190, %191 in 1 : vector<8x447xf32>, vector<8x65xf32> -> vector<8x512xf32>
    %c23 = arith.constant 23 : index
    %c0_90 = arith.constant 0 : index
    %193 = vector.load %arg2[%c23, %c0_90] : memref<27x512xf32, #tpu.memory_space<vmem>>, vector<1x512xf32>
    %194 = vector.broadcast %193 : vector<1x512xf32> to vector<8x512xf32>
    %195 = arith.mulf %192, %194 : vector<8x512xf32>
    %c40_91 = arith.constant 40 : index
    %c0_92 = arith.constant 0 : index
    %196 = vector.load %arg18[%c40_91, %c0_92] : memref<144x512xf32, #tpu.memory_space<vmem>>, vector<8x512xf32>
    tpu.vector_store %arg18[%c40_91, %c0_92], %195 {strides = array<i32>} : memref<144x512xf32, #tpu.memory_space<vmem>>, vector<8x512xf32>,
    %197 = vector.extract_strided_slice %25 {offsets = [0, 71], sizes = [8, 441], strides = [1, 1]} : vector<8x512xf32> to vector<8x441xf32>
    %198 = vector.extract_strided_slice %25 {offsets = [0, 0], sizes = [8, 71], strides = [1, 1]} : vector<8x512xf32> to vector<8x71xf32>
    %199 = tpu.concatenate %197, %198 in 1 : vector<8x441xf32>, vector<8x71xf32> -> vector<8x512xf32>
    %c24_93 = arith.constant 24 : index
    %c0_94 = arith.constant 0 : index
    %200 = vector.load %arg2[%c24_93, %c0_94] : memref<27x512xf32, #tpu.memory_space<vmem>>, vector<1x512xf32>
    %201 = vector.broadcast %200 : vector<1x512xf32> to vector<8x512xf32>
    %202 = arith.mulf %199, %201 : vector<8x512xf32>
    %c48_95 = arith.constant 48 : index
    %c0_96 = arith.constant 0 : index
    %203 = vector.load %arg18[%c48_95, %c0_96] : memref<144x512xf32, #tpu.memory_space<vmem>>, vector<8x512xf32>
    tpu.vector_store %arg18[%c48_95, %c0_96], %202 {strides = array<i32>} : memref<144x512xf32, #tpu.memory_space<vmem>>, vector<8x512xf32>,
    %204 = vector.extract_strided_slice %25 {offsets = [0, 72], sizes = [8, 440], strides = [1, 1]} : vector<8x512xf32> to vector<8x440xf32>
    %205 = vector.extract_strided_slice %25 {offsets = [0, 0], sizes = [8, 72], strides = [1, 1]} : vector<8x512xf32> to vector<8x72xf32>
    %206 = tpu.concatenate %204, %205 in 1 : vector<8x440xf32>, vector<8x72xf32> -> vector<8x512xf32>
    %c25 = arith.constant 25 : index
    %c0_97 = arith.constant 0 : index
    %207 = vector.load %arg2[%c25, %c0_97] : memref<27x512xf32, #tpu.memory_space<vmem>>, vector<1x512xf32>
    %208 = vector.broadcast %207 : vector<1x512xf32> to vector<8x512xf32>
    %209 = arith.mulf %206, %208 : vector<8x512xf32>
    %c56_98 = arith.constant 56 : index
    %c0_99 = arith.constant 0 : index
    %210 = vector.load %arg18[%c56_98, %c0_99] : memref<144x512xf32, #tpu.memory_space<vmem>>, vector<8x512xf32>
    tpu.vector_store %arg18[%c56_98, %c0_99], %209 {strides = array<i32>} : memref<144x512xf32, #tpu.memory_space<vmem>>, vector<8x512xf32>,
    %211 = vector.extract_strided_slice %25 {offsets = [0, 73], sizes = [8, 439], strides = [1, 1]} : vector<8x512xf32> to vector<8x439xf32>
    %212 = vector.extract_strided_slice %25 {offsets = [0, 0], sizes = [8, 73], strides = [1, 1]} : vector<8x512xf32> to vector<8x73xf32>
    %213 = tpu.concatenate %211, %212 in 1 : vector<8x439xf32>, vector<8x73xf32> -> vector<8x512xf32>
    %c26 = arith.constant 26 : index
    %c0_100 = arith.constant 0 : index
    %214 = vector.load %arg2[%c26, %c0_100] : memref<27x512xf32, #tpu.memory_space<vmem>>, vector<1x512xf32>
    %215 = vector.broadcast %214 : vector<1x512xf32> to vector<8x512xf32>
    %216 = arith.mulf %213, %215 : vector<8x512xf32>
    %c64_101 = arith.constant 64 : index
    %c0_102 = arith.constant 0 : index
    %217 = vector.load %arg18[%c64_101, %c0_102] : memref<144x512xf32, #tpu.memory_space<vmem>>, vector<8x512xf32>
    tpu.vector_store %arg18[%c64_101, %c0_102], %216 {strides = array<i32>} : memref<144x512xf32, #tpu.memory_space<vmem>>, vector<8x512xf32>,
    %c2_103 = arith.constant 2 : index
    %c0_104 = arith.constant 0 : index
    %c0_105 = arith.constant 0 : index
    %218 = vector.load %arg6[%c2_103, %c0_104, %c0_105] : memref<3x16x72xf32, #tpu.memory_space<vmem>>, vector<1x16x72xf32>
    %219 = vector.shape_cast %218 : vector<1x16x72xf32> to vector<16x72xf32>
    %c0_106 = arith.constant 0 : index
    %c0_107 = arith.constant 0 : index
    %220 = vector.load %arg18[%c0_106, %c0_107] : memref<144x512xf32, #tpu.memory_space<vmem>>, vector<72x512xf32>
    %cst_108 = arith.constant dense<0.000000e+00> : vector<16x512xf32>
    %221 = tpu.matmul %219, %220, %cst_108 {dimension_numbers = #tpu.dot_dimension_numbers<[1], [0], [0], [1], [0, 0, 1, 1], [], []>} : vector<16x72xf32>, vector<72x512xf32>, vector<16x512xf32> -> vector<16x512xf32>
    %222 = arith.addf %154, %221 : vector<16x512xf32>
    %c0_109 = arith.constant 0 : index
    %c0_110 = arith.constant 0 : index
    %223 = vector.load %arg7[%c0_109, %c0_110] : memref<16x1xf32, #tpu.memory_space<vmem>>, vector<16x1xf32>
    %224 = vector.broadcast %223 : vector<16x1xf32> to vector<16x512xf32>
    %225 = arith.addf %222, %224 : vector<16x512xf32>
    %cst_111 = arith.constant dense<0.000000e+00> : vector<16xf32>
    %226 = vector.multi_reduction <add>, %225, %cst_111 [1] : vector<16x512xf32> to vector<16xf32>
    %227 = vector.shape_cast %226 : vector<16xf32> to vector<16x1xf32>
    %c0_112 = arith.constant 0 : index
    %c0_113 = arith.constant 0 : index
    %228 = vector.load %arg10[%c0_112, %c0_113] : memref<16x16xf32, #tpu.memory_space<vmem>>, vector<16x16xf32>
    %cst_114 = arith.constant dense<0.000000e+00> : vector<16x1xf32>
    %229 = tpu.matmul %228, %227, %cst_114 {dimension_numbers = #tpu.dot_dimension_numbers<[1], [0], [0], [1], [0, 0, 1, 1], [], []>} : vector<16x16xf32>, vector<16x1xf32>, vector<16x1xf32> -> vector<16x1xf32>
    %230 = vector.broadcast %229 : vector<16x1xf32> to vector<16x512xf32>
    %231 = arith.subf %225, %230 : vector<16x512xf32>
    %232 = arith.mulf %231, %231 : vector<16x512xf32>
    %cst_115 = arith.constant dense<0.000000e+00> : vector<16xf32>
    %233 = vector.multi_reduction <add>, %232, %cst_115 [1] : vector<16x512xf32> to vector<16xf32>
    %234 = vector.shape_cast %233 : vector<16xf32> to vector<16x1xf32>
    %c0_116 = arith.constant 0 : index
    %c0_117 = arith.constant 0 : index
    %235 = vector.load %arg10[%c0_116, %c0_117] : memref<16x16xf32, #tpu.memory_space<vmem>>, vector<16x16xf32>
    %cst_118 = arith.constant dense<0.000000e+00> : vector<16x1xf32>
    %236 = tpu.matmul %235, %234, %cst_118 {dimension_numbers = #tpu.dot_dimension_numbers<[1], [0], [0], [1], [0, 0, 1, 1], [], []>} : vector<16x16xf32>, vector<16x1xf32>, vector<16x1xf32> -> vector<16x1xf32>
    %c0_119 = arith.constant 0 : index
    %c0_120 = arith.constant 0 : index
    %237 = vector.load %arg8[%c0_119, %c0_120] : memref<16x1xf32, #tpu.memory_space<vmem>>, vector<16x1xf32>
    %cst_121 = arith.constant 9.99999974E-6 : f32
    %238 = vector.broadcast %cst_121 : f32 to vector<16x1xf32>
    %239 = arith.addf %236, %238 : vector<16x1xf32>
    %240 = math.rsqrt %239 : vector<16x1xf32>
    %241 = arith.mulf %237, %240 : vector<16x1xf32>
    %242 = vector.broadcast %241 : vector<16x1xf32> to vector<16x512xf32>
    %243 = arith.mulf %231, %242 : vector<16x512xf32>
    %c0_122 = arith.constant 0 : index
    %c0_123 = arith.constant 0 : index
    %244 = vector.load %arg9[%c0_122, %c0_123] : memref<16x1xf32, #tpu.memory_space<vmem>>, vector<16x1xf32>
    %245 = vector.broadcast %244 : vector<16x1xf32> to vector<16x512xf32>
    %246 = arith.addf %243, %245 : vector<16x512xf32>
    %cst_124 = arith.constant 0.00999999977 : f32
    %247 = vector.broadcast %cst_124 : f32 to vector<16x512xf32>
    %248 = arith.mulf %247, %246 : vector<16x512xf32>
    %249 = arith.maximumf %246, %248 : vector<16x512xf32>
    %250 = vector.extract_strided_slice %249 {offsets = [0, 439], sizes = [16, 73], strides = [1, 1]} : vector<16x512xf32> to vector<16x73xf32>
    %251 = vector.extract_strided_slice %249 {offsets = [0, 0], sizes = [16, 439], strides = [1, 1]} : vector<16x512xf32> to vector<16x439xf32>
    %252 = tpu.concatenate %250, %251 in 1 : vector<16x73xf32>, vector<16x439xf32> -> vector<16x512xf32>
    %c0_125 = arith.constant 0 : index
    %c0_126 = arith.constant 0 : index
    %253 = vector.load %arg2[%c0_125, %c0_126] : memref<27x512xf32, #tpu.memory_space<vmem>>, vector<1x512xf32>
    %254 = vector.broadcast %253 : vector<1x512xf32> to vector<16x512xf32>
    %255 = arith.mulf %252, %254 : vector<16x512xf32>
    %c0_127 = arith.constant 0 : index
    %c0_128 = arith.constant 0 : index
    %256 = vector.load %arg18[%c0_127, %c0_128] : memref<144x512xf32, #tpu.memory_space<vmem>>, vector<16x512xf32>
    tpu.vector_store %arg18[%c0_127, %c0_128], %255 {strides = array<i32>} : memref<144x512xf32, #tpu.memory_space<vmem>>, vector<16x512xf32>,
    %257 = vector.extract_strided_slice %249 {offsets = [0, 440], sizes = [16, 72], strides = [1, 1]} : vector<16x512xf32> to vector<16x72xf32>
    %258 = vector.extract_strided_slice %249 {offsets = [0, 0], sizes = [16, 440], strides = [1, 1]} : vector<16x512xf32> to vector<16x440xf32>
    %259 = tpu.concatenate %257, %258 in 1 : vector<16x72xf32>, vector<16x440xf32> -> vector<16x512xf32>
    %c1_129 = arith.constant 1 : index
    %c0_130 = arith.constant 0 : index
    %260 = vector.load %arg2[%c1_129, %c0_130] : memref<27x512xf32, #tpu.memory_space<vmem>>, vector<1x512xf32>
    %261 = vector.broadcast %260 : vector<1x512xf32> to vector<16x512xf32>
    %262 = arith.mulf %259, %261 : vector<16x512xf32>
    %c16_131 = arith.constant 16 : index
    %c0_132 = arith.constant 0 : index
    %263 = vector.load %arg18[%c16_131, %c0_132] : memref<144x512xf32, #tpu.memory_space<vmem>>, vector<16x512xf32>
    tpu.vector_store %arg18[%c16_131, %c0_132], %262 {strides = array<i32>} : memref<144x512xf32, #tpu.memory_space<vmem>>, vector<16x512xf32>,
    %264 = vector.extract_strided_slice %249 {offsets = [0, 441], sizes = [16, 71], strides = [1, 1]} : vector<16x512xf32> to vector<16x71xf32>
    %265 = vector.extract_strided_slice %249 {offsets = [0, 0], sizes = [16, 441], strides = [1, 1]} : vector<16x512xf32> to vector<16x441xf32>
    %266 = tpu.concatenate %264, %265 in 1 : vector<16x71xf32>, vector<16x441xf32> -> vector<16x512xf32>
    %c2_133 = arith.constant 2 : index
    %c0_134 = arith.constant 0 : index
    %267 = vector.load %arg2[%c2_133, %c0_134] : memref<27x512xf32, #tpu.memory_space<vmem>>, vector<1x512xf32>
    %268 = vector.broadcast %267 : vector<1x512xf32> to vector<16x512xf32>
    %269 = arith.mulf %266, %268 : vector<16x512xf32>
    %c32_135 = arith.constant 32 : index
    %c0_136 = arith.constant 0 : index
    %270 = vector.load %arg18[%c32_135, %c0_136] : memref<144x512xf32, #tpu.memory_space<vmem>>, vector<16x512xf32>
    tpu.vector_store %arg18[%c32_135, %c0_136], %269 {strides = array<i32>} : memref<144x512xf32, #tpu.memory_space<vmem>>, vector<16x512xf32>,
    %271 = vector.extract_strided_slice %249 {offsets = [0, 447], sizes = [16, 65], strides = [1, 1]} : vector<16x512xf32> to vector<16x65xf32>
    %272 = vector.extract_strided_slice %249 {offsets = [0, 0], sizes = [16, 447], strides = [1, 1]} : vector<16x512xf32> to vector<16x447xf32>
    %273 = tpu.concatenate %271, %272 in 1 : vector<16x65xf32>, vector<16x447xf32> -> vector<16x512xf32>
    %c3_137 = arith.constant 3 : index
    %c0_138 = arith.constant 0 : index
    %274 = vector.load %arg2[%c3_137, %c0_138] : memref<27x512xf32, #tpu.memory_space<vmem>>, vector<1x512xf32>
    %275 = vector.broadcast %274 : vector<1x512xf32> to vector<16x512xf32>
    %276 = arith.mulf %273, %275 : vector<16x512xf32>
    %c48_139 = arith.constant 48 : index
    %c0_140 = arith.constant 0 : index
    %277 = vector.load %arg18[%c48_139, %c0_140] : memref<144x512xf32, #tpu.memory_space<vmem>>, vector<16x512xf32>
    tpu.vector_store %arg18[%c48_139, %c0_140], %276 {strides = array<i32>} : memref<144x512xf32, #tpu.memory_space<vmem>>, vector<16x512xf32>,
    %278 = vector.extract_strided_slice %249 {offsets = [0, 448], sizes = [16, 64], strides = [1, 1]} : vector<16x512xf32> to vector<16x64xf32>
    %279 = vector.extract_strided_slice %249 {offsets = [0, 0], sizes = [16, 448], strides = [1, 1]} : vector<16x512xf32> to vector<16x448xf32>
    %280 = tpu.concatenate %278, %279 in 1 : vector<16x64xf32>, vector<16x448xf32> -> vector<16x512xf32>
    %c4_141 = arith.constant 4 : index
    %c0_142 = arith.constant 0 : index
    %281 = vector.load %arg2[%c4_141, %c0_142] : memref<27x512xf32, #tpu.memory_space<vmem>>, vector<1x512xf32>
    %282 = vector.broadcast %281 : vector<1x512xf32> to vector<16x512xf32>
    %283 = arith.mulf %280, %282 : vector<16x512xf32>
    %c64_143 = arith.constant 64 : index
    %c0_144 = arith.constant 0 : index
    %284 = vector.load %arg18[%c64_143, %c0_144] : memref<144x512xf32, #tpu.memory_space<vmem>>, vector<16x512xf32>
    tpu.vector_store %arg18[%c64_143, %c0_144], %283 {strides = array<i32>} : memref<144x512xf32, #tpu.memory_space<vmem>>, vector<16x512xf32>,
    %285 = vector.extract_strided_slice %249 {offsets = [0, 449], sizes = [16, 63], strides = [1, 1]} : vector<16x512xf32> to vector<16x63xf32>
    %286 = vector.extract_strided_slice %249 {offsets = [0, 0], sizes = [16, 449], strides = [1, 1]} : vector<16x512xf32> to vector<16x449xf32>
    %287 = tpu.concatenate %285, %286 in 1 : vector<16x63xf32>, vector<16x449xf32> -> vector<16x512xf32>
    %c5_145 = arith.constant 5 : index
    %c0_146 = arith.constant 0 : index
    %288 = vector.load %arg2[%c5_145, %c0_146] : memref<27x512xf32, #tpu.memory_space<vmem>>, vector<1x512xf32>
    %289 = vector.broadcast %288 : vector<1x512xf32> to vector<16x512xf32>
    %290 = arith.mulf %287, %289 : vector<16x512xf32>
    %c80 = arith.constant 80 : index
    %c0_147 = arith.constant 0 : index
    %291 = vector.load %arg18[%c80, %c0_147] : memref<144x512xf32, #tpu.memory_space<vmem>>, vector<16x512xf32>
    tpu.vector_store %arg18[%c80, %c0_147], %290 {strides = array<i32>} : memref<144x512xf32, #tpu.memory_space<vmem>>, vector<16x512xf32>,
    %292 = vector.extract_strided_slice %249 {offsets = [0, 455], sizes = [16, 57], strides = [1, 1]} : vector<16x512xf32> to vector<16x57xf32>
    %293 = vector.extract_strided_slice %249 {offsets = [0, 0], sizes = [16, 455], strides = [1, 1]} : vector<16x512xf32> to vector<16x455xf32>
    %294 = tpu.concatenate %292, %293 in 1 : vector<16x57xf32>, vector<16x455xf32> -> vector<16x512xf32>
    %c6_148 = arith.constant 6 : index
    %c0_149 = arith.constant 0 : index
    %295 = vector.load %arg2[%c6_148, %c0_149] : memref<27x512xf32, #tpu.memory_space<vmem>>, vector<1x512xf32>
    %296 = vector.broadcast %295 : vector<1x512xf32> to vector<16x512xf32>
    %297 = arith.mulf %294, %296 : vector<16x512xf32>
    %c96 = arith.constant 96 : index
    %c0_150 = arith.constant 0 : index
    %298 = vector.load %arg18[%c96, %c0_150] : memref<144x512xf32, #tpu.memory_space<vmem>>, vector<16x512xf32>
    tpu.vector_store %arg18[%c96, %c0_150], %297 {strides = array<i32>} : memref<144x512xf32, #tpu.memory_space<vmem>>, vector<16x512xf32>,
    %299 = vector.extract_strided_slice %249 {offsets = [0, 456], sizes = [16, 56], strides = [1, 1]} : vector<16x512xf32> to vector<16x56xf32>
    %300 = vector.extract_strided_slice %249 {offsets = [0, 0], sizes = [16, 456], strides = [1, 1]} : vector<16x512xf32> to vector<16x456xf32>
    %301 = tpu.concatenate %299, %300 in 1 : vector<16x56xf32>, vector<16x456xf32> -> vector<16x512xf32>
    %c7_151 = arith.constant 7 : index
    %c0_152 = arith.constant 0 : index
    %302 = vector.load %arg2[%c7_151, %c0_152] : memref<27x512xf32, #tpu.memory_space<vmem>>, vector<1x512xf32>
    %303 = vector.broadcast %302 : vector<1x512xf32> to vector<16x512xf32>
    %304 = arith.mulf %301, %303 : vector<16x512xf32>
    %c112 = arith.constant 112 : index
    %c0_153 = arith.constant 0 : index
    %305 = vector.load %arg18[%c112, %c0_153] : memref<144x512xf32, #tpu.memory_space<vmem>>, vector<16x512xf32>
    tpu.vector_store %arg18[%c112, %c0_153], %304 {strides = array<i32>} : memref<144x512xf32, #tpu.memory_space<vmem>>, vector<16x512xf32>,
    %306 = vector.extract_strided_slice %249 {offsets = [0, 457], sizes = [16, 55], strides = [1, 1]} : vector<16x512xf32> to vector<16x55xf32>
    %307 = vector.extract_strided_slice %249 {offsets = [0, 0], sizes = [16, 457], strides = [1, 1]} : vector<16x512xf32> to vector<16x457xf32>
    %308 = tpu.concatenate %306, %307 in 1 : vector<16x55xf32>, vector<16x457xf32> -> vector<16x512xf32>
    %c8_154 = arith.constant 8 : index
    %c0_155 = arith.constant 0 : index
    %309 = vector.load %arg2[%c8_154, %c0_155] : memref<27x512xf32, #tpu.memory_space<vmem>>, vector<1x512xf32>
    %310 = vector.broadcast %309 : vector<1x512xf32> to vector<16x512xf32>
    %311 = arith.mulf %308, %310 : vector<16x512xf32>
    %c128 = arith.constant 128 : index
    %c0_156 = arith.constant 0 : index
    %312 = vector.load %arg18[%c128, %c0_156] : memref<144x512xf32, #tpu.memory_space<vmem>>, vector<16x512xf32>
    tpu.vector_store %arg18[%c128, %c0_156], %311 {strides = array<i32>} : memref<144x512xf32, #tpu.memory_space<vmem>>, vector<16x512xf32>,
    %c0_157 = arith.constant 0 : index
    %c0_158 = arith.constant 0 : index
    %c0_159 = arith.constant 0 : index
    %313 = vector.load %arg11[%c0_157, %c0_158, %c0_159] : memref<3x16x144xf32, #tpu.memory_space<vmem>>, vector<1x16x144xf32>
    %314 = vector.shape_cast %313 : vector<1x16x144xf32> to vector<16x144xf32>
    %c0_160 = arith.constant 0 : index
    %c0_161 = arith.constant 0 : index
    %315 = vector.load %arg18[%c0_160, %c0_161] : memref<144x512xf32, #tpu.memory_space<vmem>>, vector<144x512xf32>
    %cst_162 = arith.constant dense<0.000000e+00> : vector<16x512xf32>
    %316 = tpu.matmul %314, %315, %cst_162 {dimension_numbers = #tpu.dot_dimension_numbers<[1], [0], [0], [1], [0, 0, 1, 1], [], []>} : vector<16x144xf32>, vector<144x512xf32>, vector<16x512xf32> -> vector<16x512xf32>
    %317 = vector.extract_strided_slice %249 {offsets = [0, 503], sizes = [16, 9], strides = [1, 1]} : vector<16x512xf32> to vector<16x9xf32>
    %318 = vector.extract_strided_slice %249 {offsets = [0, 0], sizes = [16, 503], strides = [1, 1]} : vector<16x512xf32> to vector<16x503xf32>
    %319 = tpu.concatenate %317, %318 in 1 : vector<16x9xf32>, vector<16x503xf32> -> vector<16x512xf32>
    %c9_163 = arith.constant 9 : index
    %c0_164 = arith.constant 0 : index
    %320 = vector.load %arg2[%c9_163, %c0_164] : memref<27x512xf32, #tpu.memory_space<vmem>>, vector<1x512xf32>
    %321 = vector.broadcast %320 : vector<1x512xf32> to vector<16x512xf32>
    %322 = arith.mulf %319, %321 : vector<16x512xf32>
    %c0_165 = arith.constant 0 : index
    %c0_166 = arith.constant 0 : index
    %323 = vector.load %arg18[%c0_165, %c0_166] : memref<144x512xf32, #tpu.memory_space<vmem>>, vector<16x512xf32>
    tpu.vector_store %arg18[%c0_165, %c0_166], %322 {strides = array<i32>} : memref<144x512xf32, #tpu.memory_space<vmem>>, vector<16x512xf32>,
    %324 = vector.extract_strided_slice %249 {offsets = [0, 504], sizes = [16, 8], strides = [1, 1]} : vector<16x512xf32> to vector<16x8xf32>
    %325 = vector.extract_strided_slice %249 {offsets = [0, 0], sizes = [16, 504], strides = [1, 1]} : vector<16x512xf32> to vector<16x504xf32>
    %326 = tpu.concatenate %324, %325 in 1 : vector<16x8xf32>, vector<16x504xf32> -> vector<16x512xf32>
    %c10_167 = arith.constant 10 : index
    %c0_168 = arith.constant 0 : index
    %327 = vector.load %arg2[%c10_167, %c0_168] : memref<27x512xf32, #tpu.memory_space<vmem>>, vector<1x512xf32>
    %328 = vector.broadcast %327 : vector<1x512xf32> to vector<16x512xf32>
    %329 = arith.mulf %326, %328 : vector<16x512xf32>
    %c16_169 = arith.constant 16 : index
    %c0_170 = arith.constant 0 : index
    %330 = vector.load %arg18[%c16_169, %c0_170] : memref<144x512xf32, #tpu.memory_space<vmem>>, vector<16x512xf32>
    tpu.vector_store %arg18[%c16_169, %c0_170], %329 {strides = array<i32>} : memref<144x512xf32, #tpu.memory_space<vmem>>, vector<16x512xf32>,
    %331 = vector.extract_strided_slice %249 {offsets = [0, 505], sizes = [16, 7], strides = [1, 1]} : vector<16x512xf32> to vector<16x7xf32>
    %332 = vector.extract_strided_slice %249 {offsets = [0, 0], sizes = [16, 505], strides = [1, 1]} : vector<16x512xf32> to vector<16x505xf32>
    %333 = tpu.concatenate %331, %332 in 1 : vector<16x7xf32>, vector<16x505xf32> -> vector<16x512xf32>
    %c11_171 = arith.constant 11 : index
    %c0_172 = arith.constant 0 : index
    %334 = vector.load %arg2[%c11_171, %c0_172] : memref<27x512xf32, #tpu.memory_space<vmem>>, vector<1x512xf32>
    %335 = vector.broadcast %334 : vector<1x512xf32> to vector<16x512xf32>
    %336 = arith.mulf %333, %335 : vector<16x512xf32>
    %c32_173 = arith.constant 32 : index
    %c0_174 = arith.constant 0 : index
    %337 = vector.load %arg18[%c32_173, %c0_174] : memref<144x512xf32, #tpu.memory_space<vmem>>, vector<16x512xf32>
    tpu.vector_store %arg18[%c32_173, %c0_174], %336 {strides = array<i32>} : memref<144x512xf32, #tpu.memory_space<vmem>>, vector<16x512xf32>,
    %338 = vector.extract_strided_slice %249 {offsets = [0, 511], sizes = [16, 1], strides = [1, 1]} : vector<16x512xf32> to vector<16x1xf32>
    %339 = vector.extract_strided_slice %249 {offsets = [0, 0], sizes = [16, 511], strides = [1, 1]} : vector<16x512xf32> to vector<16x511xf32>
    %340 = tpu.concatenate %338, %339 in 1 : vector<16x1xf32>, vector<16x511xf32> -> vector<16x512xf32>
    %c12_175 = arith.constant 12 : index
    %c0_176 = arith.constant 0 : index
    %341 = vector.load %arg2[%c12_175, %c0_176] : memref<27x512xf32, #tpu.memory_space<vmem>>, vector<1x512xf32>
    %342 = vector.broadcast %341 : vector<1x512xf32> to vector<16x512xf32>
    %343 = arith.mulf %340, %342 : vector<16x512xf32>
    %c48_177 = arith.constant 48 : index
    %c0_178 = arith.constant 0 : index
    %344 = vector.load %arg18[%c48_177, %c0_178] : memref<144x512xf32, #tpu.memory_space<vmem>>, vector<16x512xf32>
    tpu.vector_store %arg18[%c48_177, %c0_178], %343 {strides = array<i32>} : memref<144x512xf32, #tpu.memory_space<vmem>>, vector<16x512xf32>,
    %c64_179 = arith.constant 64 : index
    %c0_180 = arith.constant 0 : index
    %345 = vector.load %arg18[%c64_179, %c0_180] : memref<144x512xf32, #tpu.memory_space<vmem>>, vector<16x512xf32>
    tpu.vector_store %arg18[%c64_179, %c0_180], %249 {strides = array<i32>} : memref<144x512xf32, #tpu.memory_space<vmem>>, vector<16x512xf32>,
    %346 = vector.extract_strided_slice %249 {offsets = [0, 1], sizes = [16, 511], strides = [1, 1]} : vector<16x512xf32> to vector<16x511xf32>
    %347 = vector.extract_strided_slice %249 {offsets = [0, 0], sizes = [16, 1], strides = [1, 1]} : vector<16x512xf32> to vector<16x1xf32>
    %348 = tpu.concatenate %346, %347 in 1 : vector<16x511xf32>, vector<16x1xf32> -> vector<16x512xf32>
    %c14_181 = arith.constant 14 : index
    %c0_182 = arith.constant 0 : index
    %349 = vector.load %arg2[%c14_181, %c0_182] : memref<27x512xf32, #tpu.memory_space<vmem>>, vector<1x512xf32>
    %350 = vector.broadcast %349 : vector<1x512xf32> to vector<16x512xf32>
    %351 = arith.mulf %348, %350 : vector<16x512xf32>
    %c80_183 = arith.constant 80 : index
    %c0_184 = arith.constant 0 : index
    %352 = vector.load %arg18[%c80_183, %c0_184] : memref<144x512xf32, #tpu.memory_space<vmem>>, vector<16x512xf32>
    tpu.vector_store %arg18[%c80_183, %c0_184], %351 {strides = array<i32>} : memref<144x512xf32, #tpu.memory_space<vmem>>, vector<16x512xf32>,
    %353 = vector.extract_strided_slice %249 {offsets = [0, 7], sizes = [16, 505], strides = [1, 1]} : vector<16x512xf32> to vector<16x505xf32>
    %354 = vector.extract_strided_slice %249 {offsets = [0, 0], sizes = [16, 7], strides = [1, 1]} : vector<16x512xf32> to vector<16x7xf32>
    %355 = tpu.concatenate %353, %354 in 1 : vector<16x505xf32>, vector<16x7xf32> -> vector<16x512xf32>
    %c15_185 = arith.constant 15 : index
    %c0_186 = arith.constant 0 : index
    %356 = vector.load %arg2[%c15_185, %c0_186] : memref<27x512xf32, #tpu.memory_space<vmem>>, vector<1x512xf32>
    %357 = vector.broadcast %356 : vector<1x512xf32> to vector<16x512xf32>
    %358 = arith.mulf %355, %357 : vector<16x512xf32>
    %c96_187 = arith.constant 96 : index
    %c0_188 = arith.constant 0 : index
    %359 = vector.load %arg18[%c96_187, %c0_188] : memref<144x512xf32, #tpu.memory_space<vmem>>, vector<16x512xf32>
    tpu.vector_store %arg18[%c96_187, %c0_188], %358 {strides = array<i32>} : memref<144x512xf32, #tpu.memory_space<vmem>>, vector<16x512xf32>,
    %360 = vector.extract_strided_slice %249 {offsets = [0, 8], sizes = [16, 504], strides = [1, 1]} : vector<16x512xf32> to vector<16x504xf32>
    %361 = vector.extract_strided_slice %249 {offsets = [0, 0], sizes = [16, 8], strides = [1, 1]} : vector<16x512xf32> to vector<16x8xf32>
    %362 = tpu.concatenate %360, %361 in 1 : vector<16x504xf32>, vector<16x8xf32> -> vector<16x512xf32>
    %c16_189 = arith.constant 16 : index
    %c0_190 = arith.constant 0 : index
    %363 = vector.load %arg2[%c16_189, %c0_190] : memref<27x512xf32, #tpu.memory_space<vmem>>, vector<1x512xf32>
    %364 = vector.broadcast %363 : vector<1x512xf32> to vector<16x512xf32>
    %365 = arith.mulf %362, %364 : vector<16x512xf32>
    %c112_191 = arith.constant 112 : index
    %c0_192 = arith.constant 0 : index
    %366 = vector.load %arg18[%c112_191, %c0_192] : memref<144x512xf32, #tpu.memory_space<vmem>>, vector<16x512xf32>
    tpu.vector_store %arg18[%c112_191, %c0_192], %365 {strides = array<i32>} : memref<144x512xf32, #tpu.memory_space<vmem>>, vector<16x512xf32>,
    %367 = vector.extract_strided_slice %249 {offsets = [0, 9], sizes = [16, 503], strides = [1, 1]} : vector<16x512xf32> to vector<16x503xf32>
    %368 = vector.extract_strided_slice %249 {offsets = [0, 0], sizes = [16, 9], strides = [1, 1]} : vector<16x512xf32> to vector<16x9xf32>
    %369 = tpu.concatenate %367, %368 in 1 : vector<16x503xf32>, vector<16x9xf32> -> vector<16x512xf32>
    %c17_193 = arith.constant 17 : index
    %c0_194 = arith.constant 0 : index
    %370 = vector.load %arg2[%c17_193, %c0_194] : memref<27x512xf32, #tpu.memory_space<vmem>>, vector<1x512xf32>
    %371 = vector.broadcast %370 : vector<1x512xf32> to vector<16x512xf32>
    %372 = arith.mulf %369, %371 : vector<16x512xf32>
    %c128_195 = arith.constant 128 : index
    %c0_196 = arith.constant 0 : index
    %373 = vector.load %arg18[%c128_195, %c0_196] : memref<144x512xf32, #tpu.memory_space<vmem>>, vector<16x512xf32>
    tpu.vector_store %arg18[%c128_195, %c0_196], %372 {strides = array<i32>} : memref<144x512xf32, #tpu.memory_space<vmem>>, vector<16x512xf32>,
    %c1_197 = arith.constant 1 : index
    %c0_198 = arith.constant 0 : index
    %c0_199 = arith.constant 0 : index
    %374 = vector.load %arg11[%c1_197, %c0_198, %c0_199] : memref<3x16x144xf32, #tpu.memory_space<vmem>>, vector<1x16x144xf32>
    %375 = vector.shape_cast %374 : vector<1x16x144xf32> to vector<16x144xf32>
    %c0_200 = arith.constant 0 : index
    %c0_201 = arith.constant 0 : index
    %376 = vector.load %arg18[%c0_200, %c0_201] : memref<144x512xf32, #tpu.memory_space<vmem>>, vector<144x512xf32>
    %cst_202 = arith.constant dense<0.000000e+00> : vector<16x512xf32>
    %377 = tpu.matmul %375, %376, %cst_202 {dimension_numbers = #tpu.dot_dimension_numbers<[1], [0], [0], [1], [0, 0, 1, 1], [], []>} : vector<16x144xf32>, vector<144x512xf32>, vector<16x512xf32> -> vector<16x512xf32>
    %378 = arith.addf %316, %377 : vector<16x512xf32>
    %379 = vector.extract_strided_slice %249 {offsets = [0, 55], sizes = [16, 457], strides = [1, 1]} : vector<16x512xf32> to vector<16x457xf32>
    %380 = vector.extract_strided_slice %249 {offsets = [0, 0], sizes = [16, 55], strides = [1, 1]} : vector<16x512xf32> to vector<16x55xf32>
    %381 = tpu.concatenate %379, %380 in 1 : vector<16x457xf32>, vector<16x55xf32> -> vector<16x512xf32>
    %c18_203 = arith.constant 18 : index
    %c0_204 = arith.constant 0 : index
    %382 = vector.load %arg2[%c18_203, %c0_204] : memref<27x512xf32, #tpu.memory_space<vmem>>, vector<1x512xf32>
    %383 = vector.broadcast %382 : vector<1x512xf32> to vector<16x512xf32>
    %384 = arith.mulf %381, %383 : vector<16x512xf32>
    %c0_205 = arith.constant 0 : index
    %c0_206 = arith.constant 0 : index
    %385 = vector.load %arg18[%c0_205, %c0_206] : memref<144x512xf32, #tpu.memory_space<vmem>>, vector<16x512xf32>
    tpu.vector_store %arg18[%c0_205, %c0_206], %384 {strides = array<i32>} : memref<144x512xf32, #tpu.memory_space<vmem>>, vector<16x512xf32>,
    %386 = vector.extract_strided_slice %249 {offsets = [0, 56], sizes = [16, 456], strides = [1, 1]} : vector<16x512xf32> to vector<16x456xf32>
    %387 = vector.extract_strided_slice %249 {offsets = [0, 0], sizes = [16, 56], strides = [1, 1]} : vector<16x512xf32> to vector<16x56xf32>
    %388 = tpu.concatenate %386, %387 in 1 : vector<16x456xf32>, vector<16x56xf32> -> vector<16x512xf32>
    %c19_207 = arith.constant 19 : index
    %c0_208 = arith.constant 0 : index
    %389 = vector.load %arg2[%c19_207, %c0_208] : memref<27x512xf32, #tpu.memory_space<vmem>>, vector<1x512xf32>
    %390 = vector.broadcast %389 : vector<1x512xf32> to vector<16x512xf32>
    %391 = arith.mulf %388, %390 : vector<16x512xf32>
    %c16_209 = arith.constant 16 : index
    %c0_210 = arith.constant 0 : index
    %392 = vector.load %arg18[%c16_209, %c0_210] : memref<144x512xf32, #tpu.memory_space<vmem>>, vector<16x512xf32>
    tpu.vector_store %arg18[%c16_209, %c0_210], %391 {strides = array<i32>} : memref<144x512xf32, #tpu.memory_space<vmem>>, vector<16x512xf32>,
    %393 = vector.extract_strided_slice %249 {offsets = [0, 57], sizes = [16, 455], strides = [1, 1]} : vector<16x512xf32> to vector<16x455xf32>
    %394 = vector.extract_strided_slice %249 {offsets = [0, 0], sizes = [16, 57], strides = [1, 1]} : vector<16x512xf32> to vector<16x57xf32>
    %395 = tpu.concatenate %393, %394 in 1 : vector<16x455xf32>, vector<16x57xf32> -> vector<16x512xf32>
    %c20_211 = arith.constant 20 : index
    %c0_212 = arith.constant 0 : index
    %396 = vector.load %arg2[%c20_211, %c0_212] : memref<27x512xf32, #tpu.memory_space<vmem>>, vector<1x512xf32>
    %397 = vector.broadcast %396 : vector<1x512xf32> to vector<16x512xf32>
    %398 = arith.mulf %395, %397 : vector<16x512xf32>
    %c32_213 = arith.constant 32 : index
    %c0_214 = arith.constant 0 : index
    %399 = vector.load %arg18[%c32_213, %c0_214] : memref<144x512xf32, #tpu.memory_space<vmem>>, vector<16x512xf32>
    tpu.vector_store %arg18[%c32_213, %c0_214], %398 {strides = array<i32>} : memref<144x512xf32, #tpu.memory_space<vmem>>, vector<16x512xf32>,
    %400 = vector.extract_strided_slice %249 {offsets = [0, 63], sizes = [16, 449], strides = [1, 1]} : vector<16x512xf32> to vector<16x449xf32>
    %401 = vector.extract_strided_slice %249 {offsets = [0, 0], sizes = [16, 63], strides = [1, 1]} : vector<16x512xf32> to vector<16x63xf32>
    %402 = tpu.concatenate %400, %401 in 1 : vector<16x449xf32>, vector<16x63xf32> -> vector<16x512xf32>
    %c21_215 = arith.constant 21 : index
    %c0_216 = arith.constant 0 : index
    %403 = vector.load %arg2[%c21_215, %c0_216] : memref<27x512xf32, #tpu.memory_space<vmem>>, vector<1x512xf32>
    %404 = vector.broadcast %403 : vector<1x512xf32> to vector<16x512xf32>
    %405 = arith.mulf %402, %404 : vector<16x512xf32>
    %c48_217 = arith.constant 48 : index
    %c0_218 = arith.constant 0 : index
    %406 = vector.load %arg18[%c48_217, %c0_218] : memref<144x512xf32, #tpu.memory_space<vmem>>, vector<16x512xf32>
    tpu.vector_store %arg18[%c48_217, %c0_218], %405 {strides = array<i32>} : memref<144x512xf32, #tpu.memory_space<vmem>>, vector<16x512xf32>,
    %407 = vector.extract_strided_slice %249 {offsets = [0, 64], sizes = [16, 448], strides = [1, 1]} : vector<16x512xf32> to vector<16x448xf32>
    %408 = vector.extract_strided_slice %249 {offsets = [0, 0], sizes = [16, 64], strides = [1, 1]} : vector<16x512xf32> to vector<16x64xf32>
    %409 = tpu.concatenate %407, %408 in 1 : vector<16x448xf32>, vector<16x64xf32> -> vector<16x512xf32>
    %c22_219 = arith.constant 22 : index
    %c0_220 = arith.constant 0 : index
    %410 = vector.load %arg2[%c22_219, %c0_220] : memref<27x512xf32, #tpu.memory_space<vmem>>, vector<1x512xf32>
    %411 = vector.broadcast %410 : vector<1x512xf32> to vector<16x512xf32>
    %412 = arith.mulf %409, %411 : vector<16x512xf32>
    %c64_221 = arith.constant 64 : index
    %c0_222 = arith.constant 0 : index
    %413 = vector.load %arg18[%c64_221, %c0_222] : memref<144x512xf32, #tpu.memory_space<vmem>>, vector<16x512xf32>
    tpu.vector_store %arg18[%c64_221, %c0_222], %412 {strides = array<i32>} : memref<144x512xf32, #tpu.memory_space<vmem>>, vector<16x512xf32>,
    %414 = vector.extract_strided_slice %249 {offsets = [0, 65], sizes = [16, 447], strides = [1, 1]} : vector<16x512xf32> to vector<16x447xf32>
    %415 = vector.extract_strided_slice %249 {offsets = [0, 0], sizes = [16, 65], strides = [1, 1]} : vector<16x512xf32> to vector<16x65xf32>
    %416 = tpu.concatenate %414, %415 in 1 : vector<16x447xf32>, vector<16x65xf32> -> vector<16x512xf32>
    %c23_223 = arith.constant 23 : index
    %c0_224 = arith.constant 0 : index
    %417 = vector.load %arg2[%c23_223, %c0_224] : memref<27x512xf32, #tpu.memory_space<vmem>>, vector<1x512xf32>
    %418 = vector.broadcast %417 : vector<1x512xf32> to vector<16x512xf32>
    %419 = arith.mulf %416, %418 : vector<16x512xf32>
    %c80_225 = arith.constant 80 : index
    %c0_226 = arith.constant 0 : index
    %420 = vector.load %arg18[%c80_225, %c0_226] : memref<144x512xf32, #tpu.memory_space<vmem>>, vector<16x512xf32>
    tpu.vector_store %arg18[%c80_225, %c0_226], %419 {strides = array<i32>} : memref<144x512xf32, #tpu.memory_space<vmem>>, vector<16x512xf32>,
    %421 = vector.extract_strided_slice %249 {offsets = [0, 71], sizes = [16, 441], strides = [1, 1]} : vector<16x512xf32> to vector<16x441xf32>
    %422 = vector.extract_strided_slice %249 {offsets = [0, 0], sizes = [16, 71], strides = [1, 1]} : vector<16x512xf32> to vector<16x71xf32>
    %423 = tpu.concatenate %421, %422 in 1 : vector<16x441xf32>, vector<16x71xf32> -> vector<16x512xf32>
    %c24_227 = arith.constant 24 : index
    %c0_228 = arith.constant 0 : index
    %424 = vector.load %arg2[%c24_227, %c0_228] : memref<27x512xf32, #tpu.memory_space<vmem>>, vector<1x512xf32>
    %425 = vector.broadcast %424 : vector<1x512xf32> to vector<16x512xf32>
    %426 = arith.mulf %423, %425 : vector<16x512xf32>
    %c96_229 = arith.constant 96 : index
    %c0_230 = arith.constant 0 : index
    %427 = vector.load %arg18[%c96_229, %c0_230] : memref<144x512xf32, #tpu.memory_space<vmem>>, vector<16x512xf32>
    tpu.vector_store %arg18[%c96_229, %c0_230], %426 {strides = array<i32>} : memref<144x512xf32, #tpu.memory_space<vmem>>, vector<16x512xf32>,
    %428 = vector.extract_strided_slice %249 {offsets = [0, 72], sizes = [16, 440], strides = [1, 1]} : vector<16x512xf32> to vector<16x440xf32>
    %429 = vector.extract_strided_slice %249 {offsets = [0, 0], sizes = [16, 72], strides = [1, 1]} : vector<16x512xf32> to vector<16x72xf32>
    %430 = tpu.concatenate %428, %429 in 1 : vector<16x440xf32>, vector<16x72xf32> -> vector<16x512xf32>
    %c25_231 = arith.constant 25 : index
    %c0_232 = arith.constant 0 : index
    %431 = vector.load %arg2[%c25_231, %c0_232] : memref<27x512xf32, #tpu.memory_space<vmem>>, vector<1x512xf32>
    %432 = vector.broadcast %431 : vector<1x512xf32> to vector<16x512xf32>
    %433 = arith.mulf %430, %432 : vector<16x512xf32>
    %c112_233 = arith.constant 112 : index
    %c0_234 = arith.constant 0 : index
    %434 = vector.load %arg18[%c112_233, %c0_234] : memref<144x512xf32, #tpu.memory_space<vmem>>, vector<16x512xf32>
    tpu.vector_store %arg18[%c112_233, %c0_234], %433 {strides = array<i32>} : memref<144x512xf32, #tpu.memory_space<vmem>>, vector<16x512xf32>,
    %435 = vector.extract_strided_slice %249 {offsets = [0, 73], sizes = [16, 439], strides = [1, 1]} : vector<16x512xf32> to vector<16x439xf32>
    %436 = vector.extract_strided_slice %249 {offsets = [0, 0], sizes = [16, 73], strides = [1, 1]} : vector<16x512xf32> to vector<16x73xf32>
    %437 = tpu.concatenate %435, %436 in 1 : vector<16x439xf32>, vector<16x73xf32> -> vector<16x512xf32>
    %c26_235 = arith.constant 26 : index
    %c0_236 = arith.constant 0 : index
    %438 = vector.load %arg2[%c26_235, %c0_236] : memref<27x512xf32, #tpu.memory_space<vmem>>, vector<1x512xf32>
    %439 = vector.broadcast %438 : vector<1x512xf32> to vector<16x512xf32>
    %440 = arith.mulf %437, %439 : vector<16x512xf32>
    %c128_237 = arith.constant 128 : index
    %c0_238 = arith.constant 0 : index
    %441 = vector.load %arg18[%c128_237, %c0_238] : memref<144x512xf32, #tpu.memory_space<vmem>>, vector<16x512xf32>
    tpu.vector_store %arg18[%c128_237, %c0_238], %440 {strides = array<i32>} : memref<144x512xf32, #tpu.memory_space<vmem>>, vector<16x512xf32>,
    %c2_239 = arith.constant 2 : index
    %c0_240 = arith.constant 0 : index
    %c0_241 = arith.constant 0 : index
    %442 = vector.load %arg11[%c2_239, %c0_240, %c0_241] : memref<3x16x144xf32, #tpu.memory_space<vmem>>, vector<1x16x144xf32>
    %443 = vector.shape_cast %442 : vector<1x16x144xf32> to vector<16x144xf32>
    %c0_242 = arith.constant 0 : index
    %c0_243 = arith.constant 0 : index
    %444 = vector.load %arg18[%c0_242, %c0_243] : memref<144x512xf32, #tpu.memory_space<vmem>>, vector<144x512xf32>
    %cst_244 = arith.constant dense<0.000000e+00> : vector<16x512xf32>
    %445 = tpu.matmul %443, %444, %cst_244 {dimension_numbers = #tpu.dot_dimension_numbers<[1], [0], [0], [1], [0, 0, 1, 1], [], []>} : vector<16x144xf32>, vector<144x512xf32>, vector<16x512xf32> -> vector<16x512xf32>
    %446 = arith.addf %378, %445 : vector<16x512xf32>
    %c0_245 = arith.constant 0 : index
    %c0_246 = arith.constant 0 : index
    %447 = vector.load %arg12[%c0_245, %c0_246] : memref<16x1xf32, #tpu.memory_space<vmem>>, vector<16x1xf32>
    %448 = vector.broadcast %447 : vector<16x1xf32> to vector<16x512xf32>
    %449 = arith.addf %446, %448 : vector<16x512xf32>
    %450 = vector.extract_strided_slice %1 {offsets = [0, 439], sizes = [8, 73], strides = [1, 1]} : vector<8x512xf32> to vector<8x73xf32>
    %451 = vector.extract_strided_slice %1 {offsets = [0, 0], sizes = [8, 439], strides = [1, 1]} : vector<8x512xf32> to vector<8x439xf32>
    %452 = tpu.concatenate %450, %451 in 1 : vector<8x73xf32>, vector<8x439xf32> -> vector<8x512xf32>
    %c0_247 = arith.constant 0 : index
    %c0_248 = arith.constant 0 : index
    %453 = vector.load %arg2[%c0_247, %c0_248] : memref<27x512xf32, #tpu.memory_space<vmem>>, vector<1x512xf32>
    %454 = vector.broadcast %453 : vector<1x512xf32> to vector<8x512xf32>
    %455 = arith.mulf %452, %454 : vector<8x512xf32>
    %c0_249 = arith.constant 0 : index
    %c0_250 = arith.constant 0 : index
    %456 = vector.load %arg18[%c0_249, %c0_250] : memref<144x512xf32, #tpu.memory_space<vmem>>, vector<8x512xf32>
    tpu.vector_store %arg18[%c0_249, %c0_250], %455 {strides = array<i32>} : memref<144x512xf32, #tpu.memory_space<vmem>>, vector<8x512xf32>,
    %457 = vector.extract_strided_slice %1 {offsets = [0, 440], sizes = [8, 72], strides = [1, 1]} : vector<8x512xf32> to vector<8x72xf32>
    %458 = vector.extract_strided_slice %1 {offsets = [0, 0], sizes = [8, 440], strides = [1, 1]} : vector<8x512xf32> to vector<8x440xf32>
    %459 = tpu.concatenate %457, %458 in 1 : vector<8x72xf32>, vector<8x440xf32> -> vector<8x512xf32>
    %c1_251 = arith.constant 1 : index
    %c0_252 = arith.constant 0 : index
    %460 = vector.load %arg2[%c1_251, %c0_252] : memref<27x512xf32, #tpu.memory_space<vmem>>, vector<1x512xf32>
    %461 = vector.broadcast %460 : vector<1x512xf32> to vector<8x512xf32>
    %462 = arith.mulf %459, %461 : vector<8x512xf32>
    %c8_253 = arith.constant 8 : index
    %c0_254 = arith.constant 0 : index
    %463 = vector.load %arg18[%c8_253, %c0_254] : memref<144x512xf32, #tpu.memory_space<vmem>>, vector<8x512xf32>
    tpu.vector_store %arg18[%c8_253, %c0_254], %462 {strides = array<i32>} : memref<144x512xf32, #tpu.memory_space<vmem>>, vector<8x512xf32>,
    %464 = vector.extract_strided_slice %1 {offsets = [0, 441], sizes = [8, 71], strides = [1, 1]} : vector<8x512xf32> to vector<8x71xf32>
    %465 = vector.extract_strided_slice %1 {offsets = [0, 0], sizes = [8, 441], strides = [1, 1]} : vector<8x512xf32> to vector<8x441xf32>
    %466 = tpu.concatenate %464, %465 in 1 : vector<8x71xf32>, vector<8x441xf32> -> vector<8x512xf32>
    %c2_255 = arith.constant 2 : index
    %c0_256 = arith.constant 0 : index
    %467 = vector.load %arg2[%c2_255, %c0_256] : memref<27x512xf32, #tpu.memory_space<vmem>>, vector<1x512xf32>
    %468 = vector.broadcast %467 : vector<1x512xf32> to vector<8x512xf32>
    %469 = arith.mulf %466, %468 : vector<8x512xf32>
    %c16_257 = arith.constant 16 : index
    %c0_258 = arith.constant 0 : index
    %470 = vector.load %arg18[%c16_257, %c0_258] : memref<144x512xf32, #tpu.memory_space<vmem>>, vector<8x512xf32>
    tpu.vector_store %arg18[%c16_257, %c0_258], %469 {strides = array<i32>} : memref<144x512xf32, #tpu.memory_space<vmem>>, vector<8x512xf32>,
    %471 = vector.extract_strided_slice %1 {offsets = [0, 447], sizes = [8, 65], strides = [1, 1]} : vector<8x512xf32> to vector<8x65xf32>
    %472 = vector.extract_strided_slice %1 {offsets = [0, 0], sizes = [8, 447], strides = [1, 1]} : vector<8x512xf32> to vector<8x447xf32>
    %473 = tpu.concatenate %471, %472 in 1 : vector<8x65xf32>, vector<8x447xf32> -> vector<8x512xf32>
    %c3_259 = arith.constant 3 : index
    %c0_260 = arith.constant 0 : index
    %474 = vector.load %arg2[%c3_259, %c0_260] : memref<27x512xf32, #tpu.memory_space<vmem>>, vector<1x512xf32>
    %475 = vector.broadcast %474 : vector<1x512xf32> to vector<8x512xf32>
    %476 = arith.mulf %473, %475 : vector<8x512xf32>
    %c24_261 = arith.constant 24 : index
    %c0_262 = arith.constant 0 : index
    %477 = vector.load %arg18[%c24_261, %c0_262] : memref<144x512xf32, #tpu.memory_space<vmem>>, vector<8x512xf32>
    tpu.vector_store %arg18[%c24_261, %c0_262], %476 {strides = array<i32>} : memref<144x512xf32, #tpu.memory_space<vmem>>, vector<8x512xf32>,
    %478 = vector.extract_strided_slice %1 {offsets = [0, 448], sizes = [8, 64], strides = [1, 1]} : vector<8x512xf32> to vector<8x64xf32>
    %479 = vector.extract_strided_slice %1 {offsets = [0, 0], sizes = [8, 448], strides = [1, 1]} : vector<8x512xf32> to vector<8x448xf32>
    %480 = tpu.concatenate %478, %479 in 1 : vector<8x64xf32>, vector<8x448xf32> -> vector<8x512xf32>
    %c4_263 = arith.constant 4 : index
    %c0_264 = arith.constant 0 : index
    %481 = vector.load %arg2[%c4_263, %c0_264] : memref<27x512xf32, #tpu.memory_space<vmem>>, vector<1x512xf32>
    %482 = vector.broadcast %481 : vector<1x512xf32> to vector<8x512xf32>
    %483 = arith.mulf %480, %482 : vector<8x512xf32>
    %c32_265 = arith.constant 32 : index
    %c0_266 = arith.constant 0 : index
    %484 = vector.load %arg18[%c32_265, %c0_266] : memref<144x512xf32, #tpu.memory_space<vmem>>, vector<8x512xf32>
    tpu.vector_store %arg18[%c32_265, %c0_266], %483 {strides = array<i32>} : memref<144x512xf32, #tpu.memory_space<vmem>>, vector<8x512xf32>,
    %485 = vector.extract_strided_slice %1 {offsets = [0, 449], sizes = [8, 63], strides = [1, 1]} : vector<8x512xf32> to vector<8x63xf32>
    %486 = vector.extract_strided_slice %1 {offsets = [0, 0], sizes = [8, 449], strides = [1, 1]} : vector<8x512xf32> to vector<8x449xf32>
    %487 = tpu.concatenate %485, %486 in 1 : vector<8x63xf32>, vector<8x449xf32> -> vector<8x512xf32>
    %c5_267 = arith.constant 5 : index
    %c0_268 = arith.constant 0 : index
    %488 = vector.load %arg2[%c5_267, %c0_268] : memref<27x512xf32, #tpu.memory_space<vmem>>, vector<1x512xf32>
    %489 = vector.broadcast %488 : vector<1x512xf32> to vector<8x512xf32>
    %490 = arith.mulf %487, %489 : vector<8x512xf32>
    %c40_269 = arith.constant 40 : index
    %c0_270 = arith.constant 0 : index
    %491 = vector.load %arg18[%c40_269, %c0_270] : memref<144x512xf32, #tpu.memory_space<vmem>>, vector<8x512xf32>
    tpu.vector_store %arg18[%c40_269, %c0_270], %490 {strides = array<i32>} : memref<144x512xf32, #tpu.memory_space<vmem>>, vector<8x512xf32>,
    %492 = vector.extract_strided_slice %1 {offsets = [0, 455], sizes = [8, 57], strides = [1, 1]} : vector<8x512xf32> to vector<8x57xf32>
    %493 = vector.extract_strided_slice %1 {offsets = [0, 0], sizes = [8, 455], strides = [1, 1]} : vector<8x512xf32> to vector<8x455xf32>
    %494 = tpu.concatenate %492, %493 in 1 : vector<8x57xf32>, vector<8x455xf32> -> vector<8x512xf32>
    %c6_271 = arith.constant 6 : index
    %c0_272 = arith.constant 0 : index
    %495 = vector.load %arg2[%c6_271, %c0_272] : memref<27x512xf32, #tpu.memory_space<vmem>>, vector<1x512xf32>
    %496 = vector.broadcast %495 : vector<1x512xf32> to vector<8x512xf32>
    %497 = arith.mulf %494, %496 : vector<8x512xf32>
    %c48_273 = arith.constant 48 : index
    %c0_274 = arith.constant 0 : index
    %498 = vector.load %arg18[%c48_273, %c0_274] : memref<144x512xf32, #tpu.memory_space<vmem>>, vector<8x512xf32>
    tpu.vector_store %arg18[%c48_273, %c0_274], %497 {strides = array<i32>} : memref<144x512xf32, #tpu.memory_space<vmem>>, vector<8x512xf32>,
    %499 = vector.extract_strided_slice %1 {offsets = [0, 456], sizes = [8, 56], strides = [1, 1]} : vector<8x512xf32> to vector<8x56xf32>
    %500 = vector.extract_strided_slice %1 {offsets = [0, 0], sizes = [8, 456], strides = [1, 1]} : vector<8x512xf32> to vector<8x456xf32>
    %501 = tpu.concatenate %499, %500 in 1 : vector<8x56xf32>, vector<8x456xf32> -> vector<8x512xf32>
    %c7_275 = arith.constant 7 : index
    %c0_276 = arith.constant 0 : index
    %502 = vector.load %arg2[%c7_275, %c0_276] : memref<27x512xf32, #tpu.memory_space<vmem>>, vector<1x512xf32>
    %503 = vector.broadcast %502 : vector<1x512xf32> to vector<8x512xf32>
    %504 = arith.mulf %501, %503 : vector<8x512xf32>
    %c56_277 = arith.constant 56 : index
    %c0_278 = arith.constant 0 : index
    %505 = vector.load %arg18[%c56_277, %c0_278] : memref<144x512xf32, #tpu.memory_space<vmem>>, vector<8x512xf32>
    tpu.vector_store %arg18[%c56_277, %c0_278], %504 {strides = array<i32>} : memref<144x512xf32, #tpu.memory_space<vmem>>, vector<8x512xf32>,
    %506 = vector.extract_strided_slice %1 {offsets = [0, 457], sizes = [8, 55], strides = [1, 1]} : vector<8x512xf32> to vector<8x55xf32>
    %507 = vector.extract_strided_slice %1 {offsets = [0, 0], sizes = [8, 457], strides = [1, 1]} : vector<8x512xf32> to vector<8x457xf32>
    %508 = tpu.concatenate %506, %507 in 1 : vector<8x55xf32>, vector<8x457xf32> -> vector<8x512xf32>
    %c8_279 = arith.constant 8 : index
    %c0_280 = arith.constant 0 : index
    %509 = vector.load %arg2[%c8_279, %c0_280] : memref<27x512xf32, #tpu.memory_space<vmem>>, vector<1x512xf32>
    %510 = vector.broadcast %509 : vector<1x512xf32> to vector<8x512xf32>
    %511 = arith.mulf %508, %510 : vector<8x512xf32>
    %c64_281 = arith.constant 64 : index
    %c0_282 = arith.constant 0 : index
    %512 = vector.load %arg18[%c64_281, %c0_282] : memref<144x512xf32, #tpu.memory_space<vmem>>, vector<8x512xf32>
    tpu.vector_store %arg18[%c64_281, %c0_282], %511 {strides = array<i32>} : memref<144x512xf32, #tpu.memory_space<vmem>>, vector<8x512xf32>,
    %c0_283 = arith.constant 0 : index
    %c0_284 = arith.constant 0 : index
    %c0_285 = arith.constant 0 : index
    %513 = vector.load %arg13[%c0_283, %c0_284, %c0_285] : memref<3x16x72xf32, #tpu.memory_space<vmem>>, vector<1x16x72xf32>
    %514 = vector.shape_cast %513 : vector<1x16x72xf32> to vector<16x72xf32>
    %c0_286 = arith.constant 0 : index
    %c0_287 = arith.constant 0 : index
    %515 = vector.load %arg18[%c0_286, %c0_287] : memref<144x512xf32, #tpu.memory_space<vmem>>, vector<72x512xf32>
    %cst_288 = arith.constant dense<0.000000e+00> : vector<16x512xf32>
    %516 = tpu.matmul %514, %515, %cst_288 {dimension_numbers = #tpu.dot_dimension_numbers<[1], [0], [0], [1], [0, 0, 1, 1], [], []>} : vector<16x72xf32>, vector<72x512xf32>, vector<16x512xf32> -> vector<16x512xf32>
    %517 = vector.extract_strided_slice %1 {offsets = [0, 503], sizes = [8, 9], strides = [1, 1]} : vector<8x512xf32> to vector<8x9xf32>
    %518 = vector.extract_strided_slice %1 {offsets = [0, 0], sizes = [8, 503], strides = [1, 1]} : vector<8x512xf32> to vector<8x503xf32>
    %519 = tpu.concatenate %517, %518 in 1 : vector<8x9xf32>, vector<8x503xf32> -> vector<8x512xf32>
    %c9_289 = arith.constant 9 : index
    %c0_290 = arith.constant 0 : index
    %520 = vector.load %arg2[%c9_289, %c0_290] : memref<27x512xf32, #tpu.memory_space<vmem>>, vector<1x512xf32>
    %521 = vector.broadcast %520 : vector<1x512xf32> to vector<8x512xf32>
    %522 = arith.mulf %519, %521 : vector<8x512xf32>
    %c0_291 = arith.constant 0 : index
    %c0_292 = arith.constant 0 : index
    %523 = vector.load %arg18[%c0_291, %c0_292] : memref<144x512xf32, #tpu.memory_space<vmem>>, vector<8x512xf32>
    tpu.vector_store %arg18[%c0_291, %c0_292], %522 {strides = array<i32>} : memref<144x512xf32, #tpu.memory_space<vmem>>, vector<8x512xf32>,
    %524 = vector.extract_strided_slice %1 {offsets = [0, 504], sizes = [8, 8], strides = [1, 1]} : vector<8x512xf32> to vector<8x8xf32>
    %525 = vector.extract_strided_slice %1 {offsets = [0, 0], sizes = [8, 504], strides = [1, 1]} : vector<8x512xf32> to vector<8x504xf32>
    %526 = tpu.concatenate %524, %525 in 1 : vector<8x8xf32>, vector<8x504xf32> -> vector<8x512xf32>
    %c10_293 = arith.constant 10 : index
    %c0_294 = arith.constant 0 : index
    %527 = vector.load %arg2[%c10_293, %c0_294] : memref<27x512xf32, #tpu.memory_space<vmem>>, vector<1x512xf32>
    %528 = vector.broadcast %527 : vector<1x512xf32> to vector<8x512xf32>
    %529 = arith.mulf %526, %528 : vector<8x512xf32>
    %c8_295 = arith.constant 8 : index
    %c0_296 = arith.constant 0 : index
    %530 = vector.load %arg18[%c8_295, %c0_296] : memref<144x512xf32, #tpu.memory_space<vmem>>, vector<8x512xf32>
    tpu.vector_store %arg18[%c8_295, %c0_296], %529 {strides = array<i32>} : memref<144x512xf32, #tpu.memory_space<vmem>>, vector<8x512xf32>,
    %531 = vector.extract_strided_slice %1 {offsets = [0, 505], sizes = [8, 7], strides = [1, 1]} : vector<8x512xf32> to vector<8x7xf32>
    %532 = vector.extract_strided_slice %1 {offsets = [0, 0], sizes = [8, 505], strides = [1, 1]} : vector<8x512xf32> to vector<8x505xf32>
    %533 = tpu.concatenate %531, %532 in 1 : vector<8x7xf32>, vector<8x505xf32> -> vector<8x512xf32>
    %c11_297 = arith.constant 11 : index
    %c0_298 = arith.constant 0 : index
    %534 = vector.load %arg2[%c11_297, %c0_298] : memref<27x512xf32, #tpu.memory_space<vmem>>, vector<1x512xf32>
    %535 = vector.broadcast %534 : vector<1x512xf32> to vector<8x512xf32>
    %536 = arith.mulf %533, %535 : vector<8x512xf32>
    %c16_299 = arith.constant 16 : index
    %c0_300 = arith.constant 0 : index
    %537 = vector.load %arg18[%c16_299, %c0_300] : memref<144x512xf32, #tpu.memory_space<vmem>>, vector<8x512xf32>
    tpu.vector_store %arg18[%c16_299, %c0_300], %536 {strides = array<i32>} : memref<144x512xf32, #tpu.memory_space<vmem>>, vector<8x512xf32>,
    %538 = vector.extract_strided_slice %1 {offsets = [0, 511], sizes = [8, 1], strides = [1, 1]} : vector<8x512xf32> to vector<8x1xf32>
    %539 = vector.extract_strided_slice %1 {offsets = [0, 0], sizes = [8, 511], strides = [1, 1]} : vector<8x512xf32> to vector<8x511xf32>
    %540 = tpu.concatenate %538, %539 in 1 : vector<8x1xf32>, vector<8x511xf32> -> vector<8x512xf32>
    %c12_301 = arith.constant 12 : index
    %c0_302 = arith.constant 0 : index
    %541 = vector.load %arg2[%c12_301, %c0_302] : memref<27x512xf32, #tpu.memory_space<vmem>>, vector<1x512xf32>
    %542 = vector.broadcast %541 : vector<1x512xf32> to vector<8x512xf32>
    %543 = arith.mulf %540, %542 : vector<8x512xf32>
    %c24_303 = arith.constant 24 : index
    %c0_304 = arith.constant 0 : index
    %544 = vector.load %arg18[%c24_303, %c0_304] : memref<144x512xf32, #tpu.memory_space<vmem>>, vector<8x512xf32>
    tpu.vector_store %arg18[%c24_303, %c0_304], %543 {strides = array<i32>} : memref<144x512xf32, #tpu.memory_space<vmem>>, vector<8x512xf32>,
    %c32_305 = arith.constant 32 : index
    %c0_306 = arith.constant 0 : index
    %545 = vector.load %arg18[%c32_305, %c0_306] : memref<144x512xf32, #tpu.memory_space<vmem>>, vector<8x512xf32>
    tpu.vector_store %arg18[%c32_305, %c0_306], %1 {strides = array<i32>} : memref<144x512xf32, #tpu.memory_space<vmem>>, vector<8x512xf32>,
    %546 = vector.extract_strided_slice %1 {offsets = [0, 1], sizes = [8, 511], strides = [1, 1]} : vector<8x512xf32> to vector<8x511xf32>
    %547 = vector.extract_strided_slice %1 {offsets = [0, 0], sizes = [8, 1], strides = [1, 1]} : vector<8x512xf32> to vector<8x1xf32>
    %548 = tpu.concatenate %546, %547 in 1 : vector<8x511xf32>, vector<8x1xf32> -> vector<8x512xf32>
    %c14_307 = arith.constant 14 : index
    %c0_308 = arith.constant 0 : index
    %549 = vector.load %arg2[%c14_307, %c0_308] : memref<27x512xf32, #tpu.memory_space<vmem>>, vector<1x512xf32>
    %550 = vector.broadcast %549 : vector<1x512xf32> to vector<8x512xf32>
    %551 = arith.mulf %548, %550 : vector<8x512xf32>
    %c40_309 = arith.constant 40 : index
    %c0_310 = arith.constant 0 : index
    %552 = vector.load %arg18[%c40_309, %c0_310] : memref<144x512xf32, #tpu.memory_space<vmem>>, vector<8x512xf32>
    tpu.vector_store %arg18[%c40_309, %c0_310], %551 {strides = array<i32>} : memref<144x512xf32, #tpu.memory_space<vmem>>, vector<8x512xf32>,
    %553 = vector.extract_strided_slice %1 {offsets = [0, 7], sizes = [8, 505], strides = [1, 1]} : vector<8x512xf32> to vector<8x505xf32>
    %554 = vector.extract_strided_slice %1 {offsets = [0, 0], sizes = [8, 7], strides = [1, 1]} : vector<8x512xf32> to vector<8x7xf32>
    %555 = tpu.concatenate %553, %554 in 1 : vector<8x505xf32>, vector<8x7xf32> -> vector<8x512xf32>
    %c15_311 = arith.constant 15 : index
    %c0_312 = arith.constant 0 : index
    %556 = vector.load %arg2[%c15_311, %c0_312] : memref<27x512xf32, #tpu.memory_space<vmem>>, vector<1x512xf32>
    %557 = vector.broadcast %556 : vector<1x512xf32> to vector<8x512xf32>
    %558 = arith.mulf %555, %557 : vector<8x512xf32>
    %c48_313 = arith.constant 48 : index
    %c0_314 = arith.constant 0 : index
    %559 = vector.load %arg18[%c48_313, %c0_314] : memref<144x512xf32, #tpu.memory_space<vmem>>, vector<8x512xf32>
    tpu.vector_store %arg18[%c48_313, %c0_314], %558 {strides = array<i32>} : memref<144x512xf32, #tpu.memory_space<vmem>>, vector<8x512xf32>,
    %560 = vector.extract_strided_slice %1 {offsets = [0, 8], sizes = [8, 504], strides = [1, 1]} : vector<8x512xf32> to vector<8x504xf32>
    %561 = vector.extract_strided_slice %1 {offsets = [0, 0], sizes = [8, 8], strides = [1, 1]} : vector<8x512xf32> to vector<8x8xf32>
    %562 = tpu.concatenate %560, %561 in 1 : vector<8x504xf32>, vector<8x8xf32> -> vector<8x512xf32>
    %c16_315 = arith.constant 16 : index
    %c0_316 = arith.constant 0 : index
    %563 = vector.load %arg2[%c16_315, %c0_316] : memref<27x512xf32, #tpu.memory_space<vmem>>, vector<1x512xf32>
    %564 = vector.broadcast %563 : vector<1x512xf32> to vector<8x512xf32>
    %565 = arith.mulf %562, %564 : vector<8x512xf32>
    %c56_317 = arith.constant 56 : index
    %c0_318 = arith.constant 0 : index
    %566 = vector.load %arg18[%c56_317, %c0_318] : memref<144x512xf32, #tpu.memory_space<vmem>>, vector<8x512xf32>
    tpu.vector_store %arg18[%c56_317, %c0_318], %565 {strides = array<i32>} : memref<144x512xf32, #tpu.memory_space<vmem>>, vector<8x512xf32>,
    %567 = vector.extract_strided_slice %1 {offsets = [0, 9], sizes = [8, 503], strides = [1, 1]} : vector<8x512xf32> to vector<8x503xf32>
    %568 = vector.extract_strided_slice %1 {offsets = [0, 0], sizes = [8, 9], strides = [1, 1]} : vector<8x512xf32> to vector<8x9xf32>
    %569 = tpu.concatenate %567, %568 in 1 : vector<8x503xf32>, vector<8x9xf32> -> vector<8x512xf32>
    %c17_319 = arith.constant 17 : index
    %c0_320 = arith.constant 0 : index
    %570 = vector.load %arg2[%c17_319, %c0_320] : memref<27x512xf32, #tpu.memory_space<vmem>>, vector<1x512xf32>
    %571 = vector.broadcast %570 : vector<1x512xf32> to vector<8x512xf32>
    %572 = arith.mulf %569, %571 : vector<8x512xf32>
    %c64_321 = arith.constant 64 : index
    %c0_322 = arith.constant 0 : index
    %573 = vector.load %arg18[%c64_321, %c0_322] : memref<144x512xf32, #tpu.memory_space<vmem>>, vector<8x512xf32>
    tpu.vector_store %arg18[%c64_321, %c0_322], %572 {strides = array<i32>} : memref<144x512xf32, #tpu.memory_space<vmem>>, vector<8x512xf32>,
    %c1_323 = arith.constant 1 : index
    %c0_324 = arith.constant 0 : index
    %c0_325 = arith.constant 0 : index
    %574 = vector.load %arg13[%c1_323, %c0_324, %c0_325] : memref<3x16x72xf32, #tpu.memory_space<vmem>>, vector<1x16x72xf32>
    %575 = vector.shape_cast %574 : vector<1x16x72xf32> to vector<16x72xf32>
    %c0_326 = arith.constant 0 : index
    %c0_327 = arith.constant 0 : index
    %576 = vector.load %arg18[%c0_326, %c0_327] : memref<144x512xf32, #tpu.memory_space<vmem>>, vector<72x512xf32>
    %cst_328 = arith.constant dense<0.000000e+00> : vector<16x512xf32>
    %577 = tpu.matmul %575, %576, %cst_328 {dimension_numbers = #tpu.dot_dimension_numbers<[1], [0], [0], [1], [0, 0, 1, 1], [], []>} : vector<16x72xf32>, vector<72x512xf32>, vector<16x512xf32> -> vector<16x512xf32>
    %578 = arith.addf %516, %577 : vector<16x512xf32>
    %579 = vector.extract_strided_slice %1 {offsets = [0, 55], sizes = [8, 457], strides = [1, 1]} : vector<8x512xf32> to vector<8x457xf32>
    %580 = vector.extract_strided_slice %1 {offsets = [0, 0], sizes = [8, 55], strides = [1, 1]} : vector<8x512xf32> to vector<8x55xf32>
    %581 = tpu.concatenate %579, %580 in 1 : vector<8x457xf32>, vector<8x55xf32> -> vector<8x512xf32>
    %c18_329 = arith.constant 18 : index
    %c0_330 = arith.constant 0 : index
    %582 = vector.load %arg2[%c18_329, %c0_330] : memref<27x512xf32, #tpu.memory_space<vmem>>, vector<1x512xf32>
    %583 = vector.broadcast %582 : vector<1x512xf32> to vector<8x512xf32>
    %584 = arith.mulf %581, %583 : vector<8x512xf32>
    %c0_331 = arith.constant 0 : index
    %c0_332 = arith.constant 0 : index
    %585 = vector.load %arg18[%c0_331, %c0_332] : memref<144x512xf32, #tpu.memory_space<vmem>>, vector<8x512xf32>
    tpu.vector_store %arg18[%c0_331, %c0_332], %584 {strides = array<i32>} : memref<144x512xf32, #tpu.memory_space<vmem>>, vector<8x512xf32>,
    %586 = vector.extract_strided_slice %1 {offsets = [0, 56], sizes = [8, 456], strides = [1, 1]} : vector<8x512xf32> to vector<8x456xf32>
    %587 = vector.extract_strided_slice %1 {offsets = [0, 0], sizes = [8, 56], strides = [1, 1]} : vector<8x512xf32> to vector<8x56xf32>
    %588 = tpu.concatenate %586, %587 in 1 : vector<8x456xf32>, vector<8x56xf32> -> vector<8x512xf32>
    %c19_333 = arith.constant 19 : index
    %c0_334 = arith.constant 0 : index
    %589 = vector.load %arg2[%c19_333, %c0_334] : memref<27x512xf32, #tpu.memory_space<vmem>>, vector<1x512xf32>
    %590 = vector.broadcast %589 : vector<1x512xf32> to vector<8x512xf32>
    %591 = arith.mulf %588, %590 : vector<8x512xf32>
    %c8_335 = arith.constant 8 : index
    %c0_336 = arith.constant 0 : index
    %592 = vector.load %arg18[%c8_335, %c0_336] : memref<144x512xf32, #tpu.memory_space<vmem>>, vector<8x512xf32>
    tpu.vector_store %arg18[%c8_335, %c0_336], %591 {strides = array<i32>} : memref<144x512xf32, #tpu.memory_space<vmem>>, vector<8x512xf32>,
    %593 = vector.extract_strided_slice %1 {offsets = [0, 57], sizes = [8, 455], strides = [1, 1]} : vector<8x512xf32> to vector<8x455xf32>
    %594 = vector.extract_strided_slice %1 {offsets = [0, 0], sizes = [8, 57], strides = [1, 1]} : vector<8x512xf32> to vector<8x57xf32>
    %595 = tpu.concatenate %593, %594 in 1 : vector<8x455xf32>, vector<8x57xf32> -> vector<8x512xf32>
    %c20_337 = arith.constant 20 : index
    %c0_338 = arith.constant 0 : index
    %596 = vector.load %arg2[%c20_337, %c0_338] : memref<27x512xf32, #tpu.memory_space<vmem>>, vector<1x512xf32>
    %597 = vector.broadcast %596 : vector<1x512xf32> to vector<8x512xf32>
    %598 = arith.mulf %595, %597 : vector<8x512xf32>
    %c16_339 = arith.constant 16 : index
    %c0_340 = arith.constant 0 : index
    %599 = vector.load %arg18[%c16_339, %c0_340] : memref<144x512xf32, #tpu.memory_space<vmem>>, vector<8x512xf32>
    tpu.vector_store %arg18[%c16_339, %c0_340], %598 {strides = array<i32>} : memref<144x512xf32, #tpu.memory_space<vmem>>, vector<8x512xf32>,
    %600 = vector.extract_strided_slice %1 {offsets = [0, 63], sizes = [8, 449], strides = [1, 1]} : vector<8x512xf32> to vector<8x449xf32>
    %601 = vector.extract_strided_slice %1 {offsets = [0, 0], sizes = [8, 63], strides = [1, 1]} : vector<8x512xf32> to vector<8x63xf32>
    %602 = tpu.concatenate %600, %601 in 1 : vector<8x449xf32>, vector<8x63xf32> -> vector<8x512xf32>
    %c21_341 = arith.constant 21 : index
    %c0_342 = arith.constant 0 : index
    %603 = vector.load %arg2[%c21_341, %c0_342] : memref<27x512xf32, #tpu.memory_space<vmem>>, vector<1x512xf32>
    %604 = vector.broadcast %603 : vector<1x512xf32> to vector<8x512xf32>
    %605 = arith.mulf %602, %604 : vector<8x512xf32>
    %c24_343 = arith.constant 24 : index
    %c0_344 = arith.constant 0 : index
    %606 = vector.load %arg18[%c24_343, %c0_344] : memref<144x512xf32, #tpu.memory_space<vmem>>, vector<8x512xf32>
    tpu.vector_store %arg18[%c24_343, %c0_344], %605 {strides = array<i32>} : memref<144x512xf32, #tpu.memory_space<vmem>>, vector<8x512xf32>,
    %607 = vector.extract_strided_slice %1 {offsets = [0, 64], sizes = [8, 448], strides = [1, 1]} : vector<8x512xf32> to vector<8x448xf32>
    %608 = vector.extract_strided_slice %1 {offsets = [0, 0], sizes = [8, 64], strides = [1, 1]} : vector<8x512xf32> to vector<8x64xf32>
    %609 = tpu.concatenate %607, %608 in 1 : vector<8x448xf32>, vector<8x64xf32> -> vector<8x512xf32>
    %c22_345 = arith.constant 22 : index
    %c0_346 = arith.constant 0 : index
    %610 = vector.load %arg2[%c22_345, %c0_346] : memref<27x512xf32, #tpu.memory_space<vmem>>, vector<1x512xf32>
    %611 = vector.broadcast %610 : vector<1x512xf32> to vector<8x512xf32>
    %612 = arith.mulf %609, %611 : vector<8x512xf32>
    %c32_347 = arith.constant 32 : index
    %c0_348 = arith.constant 0 : index
    %613 = vector.load %arg18[%c32_347, %c0_348] : memref<144x512xf32, #tpu.memory_space<vmem>>, vector<8x512xf32>
    tpu.vector_store %arg18[%c32_347, %c0_348], %612 {strides = array<i32>} : memref<144x512xf32, #tpu.memory_space<vmem>>, vector<8x512xf32>,
    %614 = vector.extract_strided_slice %1 {offsets = [0, 65], sizes = [8, 447], strides = [1, 1]} : vector<8x512xf32> to vector<8x447xf32>
    %615 = vector.extract_strided_slice %1 {offsets = [0, 0], sizes = [8, 65], strides = [1, 1]} : vector<8x512xf32> to vector<8x65xf32>
    %616 = tpu.concatenate %614, %615 in 1 : vector<8x447xf32>, vector<8x65xf32> -> vector<8x512xf32>
    %c23_349 = arith.constant 23 : index
    %c0_350 = arith.constant 0 : index
    %617 = vector.load %arg2[%c23_349, %c0_350] : memref<27x512xf32, #tpu.memory_space<vmem>>, vector<1x512xf32>
    %618 = vector.broadcast %617 : vector<1x512xf32> to vector<8x512xf32>
    %619 = arith.mulf %616, %618 : vector<8x512xf32>
    %c40_351 = arith.constant 40 : index
    %c0_352 = arith.constant 0 : index
    %620 = vector.load %arg18[%c40_351, %c0_352] : memref<144x512xf32, #tpu.memory_space<vmem>>, vector<8x512xf32>
    tpu.vector_store %arg18[%c40_351, %c0_352], %619 {strides = array<i32>} : memref<144x512xf32, #tpu.memory_space<vmem>>, vector<8x512xf32>,
    %621 = vector.extract_strided_slice %1 {offsets = [0, 71], sizes = [8, 441], strides = [1, 1]} : vector<8x512xf32> to vector<8x441xf32>
    %622 = vector.extract_strided_slice %1 {offsets = [0, 0], sizes = [8, 71], strides = [1, 1]} : vector<8x512xf32> to vector<8x71xf32>
    %623 = tpu.concatenate %621, %622 in 1 : vector<8x441xf32>, vector<8x71xf32> -> vector<8x512xf32>
    %c24_353 = arith.constant 24 : index
    %c0_354 = arith.constant 0 : index
    %624 = vector.load %arg2[%c24_353, %c0_354] : memref<27x512xf32, #tpu.memory_space<vmem>>, vector<1x512xf32>
    %625 = vector.broadcast %624 : vector<1x512xf32> to vector<8x512xf32>
    %626 = arith.mulf %623, %625 : vector<8x512xf32>
    %c48_355 = arith.constant 48 : index
    %c0_356 = arith.constant 0 : index
    %627 = vector.load %arg18[%c48_355, %c0_356] : memref<144x512xf32, #tpu.memory_space<vmem>>, vector<8x512xf32>
    tpu.vector_store %arg18[%c48_355, %c0_356], %626 {strides = array<i32>} : memref<144x512xf32, #tpu.memory_space<vmem>>, vector<8x512xf32>,
    %628 = vector.extract_strided_slice %1 {offsets = [0, 72], sizes = [8, 440], strides = [1, 1]} : vector<8x512xf32> to vector<8x440xf32>
    %629 = vector.extract_strided_slice %1 {offsets = [0, 0], sizes = [8, 72], strides = [1, 1]} : vector<8x512xf32> to vector<8x72xf32>
    %630 = tpu.concatenate %628, %629 in 1 : vector<8x440xf32>, vector<8x72xf32> -> vector<8x512xf32>
    %c25_357 = arith.constant 25 : index
    %c0_358 = arith.constant 0 : index
    %631 = vector.load %arg2[%c25_357, %c0_358] : memref<27x512xf32, #tpu.memory_space<vmem>>, vector<1x512xf32>
    %632 = vector.broadcast %631 : vector<1x512xf32> to vector<8x512xf32>
    %633 = arith.mulf %630, %632 : vector<8x512xf32>
    %c56_359 = arith.constant 56 : index
    %c0_360 = arith.constant 0 : index
    %634 = vector.load %arg18[%c56_359, %c0_360] : memref<144x512xf32, #tpu.memory_space<vmem>>, vector<8x512xf32>
    tpu.vector_store %arg18[%c56_359, %c0_360], %633 {strides = array<i32>} : memref<144x512xf32, #tpu.memory_space<vmem>>, vector<8x512xf32>,
    %635 = vector.extract_strided_slice %1 {offsets = [0, 73], sizes = [8, 439], strides = [1, 1]} : vector<8x512xf32> to vector<8x439xf32>
    %636 = vector.extract_strided_slice %1 {offsets = [0, 0], sizes = [8, 73], strides = [1, 1]} : vector<8x512xf32> to vector<8x73xf32>
    %637 = tpu.concatenate %635, %636 in 1 : vector<8x439xf32>, vector<8x73xf32> -> vector<8x512xf32>
    %c26_361 = arith.constant 26 : index
    %c0_362 = arith.constant 0 : index
    %638 = vector.load %arg2[%c26_361, %c0_362] : memref<27x512xf32, #tpu.memory_space<vmem>>, vector<1x512xf32>
    %639 = vector.broadcast %638 : vector<1x512xf32> to vector<8x512xf32>
    %640 = arith.mulf %637, %639 : vector<8x512xf32>
    %c64_363 = arith.constant 64 : index
    %c0_364 = arith.constant 0 : index
    %641 = vector.load %arg18[%c64_363, %c0_364] : memref<144x512xf32, #tpu.memory_space<vmem>>, vector<8x512xf32>
    tpu.vector_store %arg18[%c64_363, %c0_364], %640 {strides = array<i32>} : memref<144x512xf32, #tpu.memory_space<vmem>>, vector<8x512xf32>,
    %c2_365 = arith.constant 2 : index
    %c0_366 = arith.constant 0 : index
    %c0_367 = arith.constant 0 : index
    %642 = vector.load %arg13[%c2_365, %c0_366, %c0_367] : memref<3x16x72xf32, #tpu.memory_space<vmem>>, vector<1x16x72xf32>
    %643 = vector.shape_cast %642 : vector<1x16x72xf32> to vector<16x72xf32>
    %c0_368 = arith.constant 0 : index
    %c0_369 = arith.constant 0 : index
    %644 = vector.load %arg18[%c0_368, %c0_369] : memref<144x512xf32, #tpu.memory_space<vmem>>, vector<72x512xf32>
    %cst_370 = arith.constant dense<0.000000e+00> : vector<16x512xf32>
    %645 = tpu.matmul %643, %644, %cst_370 {dimension_numbers = #tpu.dot_dimension_numbers<[1], [0], [0], [1], [0, 0, 1, 1], [], []>} : vector<16x72xf32>, vector<72x512xf32>, vector<16x512xf32> -> vector<16x512xf32>
    %646 = arith.addf %578, %645 : vector<16x512xf32>
    %c0_371 = arith.constant 0 : index
    %c0_372 = arith.constant 0 : index
    %647 = vector.load %arg14[%c0_371, %c0_372] : memref<16x1xf32, #tpu.memory_space<vmem>>, vector<16x1xf32>
    %648 = vector.broadcast %647 : vector<16x1xf32> to vector<16x512xf32>
    %649 = arith.addf %646, %648 : vector<16x512xf32>
    %cst_373 = arith.constant dense<0.000000e+00> : vector<16xf32>
    %650 = vector.multi_reduction <add>, %649, %cst_373 [1] : vector<16x512xf32> to vector<16xf32>
    %651 = vector.shape_cast %650 : vector<16xf32> to vector<16x1xf32>
    %c0_374 = arith.constant 0 : index
    %c0_375 = arith.constant 0 : index
    %652 = vector.load %arg10[%c0_374, %c0_375] : memref<16x16xf32, #tpu.memory_space<vmem>>, vector<16x16xf32>
    %cst_376 = arith.constant dense<0.000000e+00> : vector<16x1xf32>
    %653 = tpu.matmul %652, %651, %cst_376 {dimension_numbers = #tpu.dot_dimension_numbers<[1], [0], [0], [1], [0, 0, 1, 1], [], []>} : vector<16x16xf32>, vector<16x1xf32>, vector<16x1xf32> -> vector<16x1xf32>
    %654 = vector.broadcast %653 : vector<16x1xf32> to vector<16x512xf32>
    %655 = arith.subf %649, %654 : vector<16x512xf32>
    %656 = arith.mulf %655, %655 : vector<16x512xf32>
    %cst_377 = arith.constant dense<0.000000e+00> : vector<16xf32>
    %657 = vector.multi_reduction <add>, %656, %cst_377 [1] : vector<16x512xf32> to vector<16xf32>
    %658 = vector.shape_cast %657 : vector<16xf32> to vector<16x1xf32>
    %c0_378 = arith.constant 0 : index
    %c0_379 = arith.constant 0 : index
    %659 = vector.load %arg10[%c0_378, %c0_379] : memref<16x16xf32, #tpu.memory_space<vmem>>, vector<16x16xf32>
    %cst_380 = arith.constant dense<0.000000e+00> : vector<16x1xf32>
    %660 = tpu.matmul %659, %658, %cst_380 {dimension_numbers = #tpu.dot_dimension_numbers<[1], [0], [0], [1], [0, 0, 1, 1], [], []>} : vector<16x16xf32>, vector<16x1xf32>, vector<16x1xf32> -> vector<16x1xf32>
    %c0_381 = arith.constant 0 : index
    %c0_382 = arith.constant 0 : index
    %661 = vector.load %arg15[%c0_381, %c0_382] : memref<16x1xf32, #tpu.memory_space<vmem>>, vector<16x1xf32>
    %cst_383 = arith.constant 9.99999974E-6 : f32
    %662 = vector.broadcast %cst_383 : f32 to vector<16x1xf32>
    %663 = arith.addf %660, %662 : vector<16x1xf32>
    %664 = math.rsqrt %663 : vector<16x1xf32>
    %665 = arith.mulf %661, %664 : vector<16x1xf32>
    %666 = vector.broadcast %665 : vector<16x1xf32> to vector<16x512xf32>
    %667 = arith.mulf %655, %666 : vector<16x512xf32>
    %c0_384 = arith.constant 0 : index
    %c0_385 = arith.constant 0 : index
    %668 = vector.load %arg16[%c0_384, %c0_385] : memref<16x1xf32, #tpu.memory_space<vmem>>, vector<16x1xf32>
    %669 = vector.broadcast %668 : vector<16x1xf32> to vector<16x512xf32>
    %670 = arith.addf %667, %669 : vector<16x512xf32>
    %671 = arith.addf %449, %670 : vector<16x512xf32>
    %c0_386 = arith.constant 0 : index
    %c0_387 = arith.constant 0 : index
    %c0_388 = arith.constant 0 : index
    %672 = vector.load %arg17[%c0_386, %c0_387, %c0_388] : memref<1x16x512xf32, #tpu.memory_space<vmem>>, vector<1x16x512xf32>
    %673 = vector.shape_cast %672 : vector<1x16x512xf32> to vector<16x512xf32>
    %674 = vector.shape_cast %671 : vector<16x512xf32> to vector<1x16x512xf32>
    tpu.vector_store %arg17[%c0_386, %c0_387, %c0_388], %674 {strides = array<i32>} : memref<1x16x512xf32, #tpu.memory_space<vmem>>, vector<1x16x512xf32>,
    return
  }
  func.func @transform_0(%arg0: i32) -> (i32, i32, i32) {
    %c0_i32 = arith.constant 0 : i32
    %c0_i32_0 = arith.constant 0 : i32
    %c0_i32_1 = arith.constant 0 : i32
    return %arg0, %c0_i32, %c0_i32_0 : i32, i32, i32
  }
  func.func @transform_1(%arg0: i32) -> (i32, i32) {
    %c0_i32 = arith.constant 0 : i32
    %c0_i32_0 = arith.constant 0 : i32
    %c0_i32_1 = arith.constant 0 : i32
    return %c0_i32, %c0_i32_0 : i32, i32
  }
  func.func @transform_2(%arg0: i32) -> (i32, i32) {
    %c0_i32 = arith.constant 0 : i32
    %c0_i32_0 = arith.constant 0 : i32
    %c0_i32_1 = arith.constant 0 : i32
    return %c0_i32, %c0_i32_0 : i32, i32
  }
  func.func @transform_3(%arg0: i32) -> (i32, i32) {
    %c0_i32 = arith.constant 0 : i32
    %c0_i32_0 = arith.constant 0 : i32
    %c0_i32_1 = arith.constant 0 : i32
    return %c0_i32, %c0_i32_0 : i32, i32
  }
  func.func @transform_4(%arg0: i32) -> (i32, i32) {
    %c0_i32 = arith.constant 0 : i32
    %c0_i32_0 = arith.constant 0 : i32
    %c0_i32_1 = arith.constant 0 : i32
    return %c0_i32, %c0_i32_0 : i32, i32
  }
  func.func @transform_5(%arg0: i32) -> (i32, i32, i32) {
    %c0_i32 = arith.constant 0 : i32
    %c0_i32_0 = arith.constant 0 : i32
    %c0_i32_1 = arith.constant 0 : i32
    %c0_i32_2 = arith.constant 0 : i32
    return %c0_i32, %c0_i32_0, %c0_i32_1 : i32, i32, i32
  }
  func.func @transform_6(%arg0: i32) -> (i32, i32) {
    %c0_i32 = arith.constant 0 : i32
    %c0_i32_0 = arith.constant 0 : i32
    %c0_i32_1 = arith.constant 0 : i32
    return %c0_i32, %c0_i32_0 : i32, i32
  }
  func.func @transform_7(%arg0: i32) -> (i32, i32) {
    %c0_i32 = arith.constant 0 : i32
    %c0_i32_0 = arith.constant 0 : i32
    %c0_i32_1 = arith.constant 0 : i32
    return %c0_i32, %c0_i32_0 : i32, i32
  }
  func.func @transform_8(%arg0: i32) -> (i32, i32) {
    %c0_i32 = arith.constant 0 : i32
    %c0_i32_0 = arith.constant 0 : i32
    %c0_i32_1 = arith.constant 0 : i32
    return %c0_i32, %c0_i32_0 : i32, i32
  }
  func.func @transform_9(%arg0: i32) -> (i32, i32) {
    %c0_i32 = arith.constant 0 : i32
    %c0_i32_0 = arith.constant 0 : i32
    %c0_i32_1 = arith.constant 0 : i32
    return %c0_i32, %c0_i32_0 : i32, i32
  }
  func.func @transform_10(%arg0: i32) -> (i32, i32, i32) {
    %c0_i32 = arith.constant 0 : i32
    %c0_i32_0 = arith.constant 0 : i32
    %c0_i32_1 = arith.constant 0 : i32
    %c0_i32_2 = arith.constant 0 : i32
    return %c0_i32, %c0_i32_0, %c0_i32_1 : i32, i32, i32
  }
  func.func @transform_11(%arg0: i32) -> (i32, i32) {
    %c0_i32 = arith.constant 0 : i32
    %c0_i32_0 = arith.constant 0 : i32
    %c0_i32_1 = arith.constant 0 : i32
    return %c0_i32, %c0_i32_0 : i32, i32
  }
  func.func @transform_12(%arg0: i32) -> (i32, i32, i32) {
    %c0_i32 = arith.constant 0 : i32
    %c0_i32_0 = arith.constant 0 : i32
    %c0_i32_1 = arith.constant 0 : i32
    %c0_i32_2 = arith.constant 0 : i32
    return %c0_i32, %c0_i32_0, %c0_i32_1 : i32, i32, i32
  }
  func.func @transform_13(%arg0: i32) -> (i32, i32) {
    %c0_i32 = arith.constant 0 : i32
    %c0_i32_0 = arith.constant 0 : i32
    %c0_i32_1 = arith.constant 0 : i32
    return %c0_i32, %c0_i32_0 : i32, i32
  }
  func.func @transform_14(%arg0: i32) -> (i32, i32) {
    %c0_i32 = arith.constant 0 : i32
    %c0_i32_0 = arith.constant 0 : i32
    %c0_i32_1 = arith.constant 0 : i32
    return %c0_i32, %c0_i32_0 : i32, i32
  }
  func.func @transform_15(%arg0: i32) -> (i32, i32) {
    %c0_i32 = arith.constant 0 : i32
    %c0_i32_0 = arith.constant 0 : i32
    %c0_i32_1 = arith.constant 0 : i32
    return %c0_i32, %c0_i32_0 : i32, i32
  }
  func.func @transform_16(%arg0: i32) -> (i32, i32, i32) {
    %c0_i32 = arith.constant 0 : i32
    %c0_i32_0 = arith.constant 0 : i32
    %c0_i32_1 = arith.constant 0 : i32
    return %arg0, %c0_i32, %c0_i32_0 : i32, i32, i32
  }
}

</mosaic_0001>

<llo_original>
// kernel: tpu_custom_call.1
$region0: #{tpu_custom_call.1}
  #allocation0 [shape = 'u32[]', space=smem, size = 0x4, offset = 0x4, fixed_abs, tag = 'smem constant byte address 0x4 - core index']
  #allocation1 [shape = 'u32[72,128]{1,0:T(1,128)}', space=vmem, size = 0x9000, scoped, tag = 'internal scratch']
  %s0 = inlined_call_operand.hbm [shape: f32[8,256], index: 0, kind: input, shape index: {}]
  %s1 = inlined_call_operand.hbm [shape: f32[8,256], index: 1, kind: output, shape index: {}]
  %s2 = sld [smem:[#allocation0]]
  $region18: #{tpu_custom_call.1} parent=0
    _
  %s4 = ssub.s32 1, %s2
  %s5 = scalar_select 0, %s4, %s2
  $region1: #{tpu_custom_call.1} parent=0
    #allocation2 [shape = 'u8[8192]{0}', space=vmem, size = 0x2000, scoped, tag = 'input window, operand 0, single buffered']
    #allocation3 [shape = 's32[1]{0}', space=sflag, size = 0x4, scoped, tag = 'scoped memory for tpu_custom_call.1']
    #allocation4 [shape = 's32[1]{0}', space=sflag, size = 0x4, scoped, tag = 'scoped memory for tpu_custom_call.1']
    #allocation5 [shape = 'u8[8192]{0}', space=vmem, size = 0x2000, scoped, tag = 'output window, operand 0, single buffered']
    %6 = vsyncpa [#allocation3], 0
    %7 = vsyncpa [#allocation4], 0
    // Predicated region
    $region2: #{tpu_custom_call.1} parent=1 // pred_check
      _
    $region3: #{tpu_custom_call.1} parent=1 // pred_check_branch
      %9 = sbr.rel (0) target = $region5
    $region4: #{tpu_custom_call.1} parent=1 // pred_region
      %11 = vsyncadd [#allocation3], 0
      %s13 = sshll.u32 %s0, 4
      %s14 = int_to_ptr.hbm [resolvable:$true] %s13
      %s15 = sshll.u32 [#allocation2], 4
      %s16 = int_to_ptr.vmem [resolvable:$true] %s15
      %18 = dma.hbm_to_vmem [thread:$0]  %s14, 256, %s16, [#allocation3]
    $region5: #{tpu_custom_call.1} parent=1 // pred_fallthru
      _
    // Predicated region
    $region6: #{tpu_custom_call.1} parent=1 // pred_check
      _
    $region7: #{tpu_custom_call.1} parent=1 // pred_check_branch
      %20 = sbr.rel (0) target = $region9
    $region8: #{tpu_custom_call.1} parent=1 // pred_region
      %22 = dma.done [#allocation3], 256
    $region9: #{tpu_custom_call.1} parent=1 // pred_fallthru
      _
    %v23 = vld [vmem:[#allocation2] sm:$0xff]
    %v24 = vld [vmem:[#allocation2 + $0x8] sm:$0xff]
    %25 = vrot.lane.b32.xlu0 %v23, 3
    %v26 = vpop.permute.xlu0 %25
    %27 = vrot.lane.b32.xlu0 %v24, 3
    %v28 = vpop.permute.xlu0 %27
    %v29 = vlaneseq
    %v30 = vand.u32 %v29, 127
    %vm31 = vcmp.lt.s32.totalorder %v30, 3
    %v32 = vsel %vm31, %v26, %v28
    %v33 = vsel %vm31, %v28, %v26
    %34 = vst [vmem:[#allocation5] sm:$0xff] %v33
    %35 = vst [vmem:[#allocation5 + $0x8] sm:$0xff] %v32
    // Predicated region
    $region10: #{tpu_custom_call.1} parent=1 // pred_check
      _
    $region11: #{tpu_custom_call.1} parent=1 // pred_check_branch
      %37 = sbr.rel (0) target = $region13
    $region12: #{tpu_custom_call.1} parent=1 // pred_region
      %39 = vsyncadd [#allocation4], 0
      %s41 = sshll.u32 [#allocation5], 4
      %s42 = int_to_ptr.vmem [resolvable:$true] %s41
      %s43 = sshll.u32 %s1, 4
      %s44 = int_to_ptr.hbm [resolvable:$true] %s43
      %46 = dma.vmem_to_hbm [thread:$0]  %s42, 256, %s44, [#allocation4]
    $region13: #{tpu_custom_call.1} parent=1 // pred_fallthru
      _
    // Predicated region
    $region14: #{tpu_custom_call.1} parent=1 // pred_check
      _
    $region15: #{tpu_custom_call.1} parent=1 // pred_check_branch
      %48 = sbr.rel (0) target = $region17
    $region16: #{tpu_custom_call.1} parent=1 // pred_region
      %50 = dma.done [#allocation4], 256
    $region17: #{tpu_custom_call.1} parent=1 // pred_fallthru
      _
    %51 = vsyncpa [#allocation3], 1
    %52 = vsyncpa [#allocation4], 1

// kernel: tpu_custom_call.1
$region0: #{tpu_custom_call.1}
  #allocation0 [shape = 'u32[]', space=smem, size = 0x4, offset = 0x4, fixed_abs, tag = 'smem constant byte address 0x4 - core index']
  #allocation1 [shape = 'u32[72,128]{1,0:T(1,128)}', space=vmem, size = 0x9000, scoped, tag = 'internal scratch']
  #allocation2 [shape = 'f32[144,512]{1,0:T(8,128)}', space=vmem, size = 0x48000, scoped, tag = 'scratch operand']
  %s0 = inlined_call_operand.hbm [shape: f32[2,8,512], index: 0, kind: input, shape index: {}]
  %s1 = inlined_call_operand.hbm [shape: f32[27,512], index: 1, kind: input, shape index: {}]
  %s2 = inlined_call_operand.vmem [shape: f32[8,1], index: 2, kind: input, shape index: {}]
  %s3 = inlined_call_operand.vmem [shape: f32[8,1], index: 3, kind: input, shape index: {}]
  %s4 = inlined_call_operand.vmem [shape: f32[8,8], index: 4, kind: input, shape index: {}]
  %s5 = inlined_call_operand.hbm [shape: f32[3,16,72], index: 5, kind: input, shape index: {}]
  %s6 = inlined_call_operand.vmem [shape: f32[16,1], index: 6, kind: input, shape index: {}]
  %s7 = inlined_call_operand.vmem [shape: f32[16,1], index: 7, kind: input, shape index: {}]
  %s8 = inlined_call_operand.vmem [shape: f32[16,1], index: 8, kind: input, shape index: {}]
  %s9 = inlined_call_operand.vmem [shape: f32[16,16], index: 9, kind: input, shape index: {}]
  %s10 = inlined_call_operand.hbm [shape: f32[3,16,144], index: 10, kind: input, shape index: {}]
  %s11 = inlined_call_operand.vmem [shape: f32[16,1], index: 11, kind: input, shape index: {}]
  %s12 = inlined_call_operand.hbm [shape: f32[3,16,72], index: 12, kind: input, shape index: {}]
  %s13 = inlined_call_operand.vmem [shape: f32[16,1], index: 13, kind: input, shape index: {}]
  %s14 = inlined_call_operand.vmem [shape: f32[16,1], index: 14, kind: input, shape index: {}]
  %s15 = inlined_call_operand.vmem [shape: f32[16,1], index: 15, kind: input, shape index: {}]
  %s16 = inlined_call_operand.hbm [shape: f32[2,16,512], index: 16, kind: output, shape index: {}]
  %s17 = sld [smem:[#allocation0]]
  $region117: #{tpu_custom_call.1} parent=0
    _
  %s19 = ssub.s32 1, %s17
  %s20 = scalar_select 0, %s19, %s17
  $region1: #{tpu_custom_call.1} parent=0
    #allocation3 [shape = 'u8[32768]{0}', space=vmem, size = 0x8000, scoped, tag = 'input window, operand 0']
    #allocation4 [shape = 's32[2]{0}', space=sflag, size = 0x8, scoped, tag = 'scoped memory for tpu_custom_call.1']
    #allocation5 [shape = 's32[2]{0}', space=sflag, size = 0x8, scoped, tag = 'scoped memory for tpu_custom_call.1']
    #allocation6 [shape = 'u8[65536]{0}', space=vmem, size = 0x10000, scoped, tag = 'input window, operand 1, single buffered']
    #allocation7 [shape = 's32[1]{0}', space=sflag, size = 0x4, scoped, tag = 'scoped memory for tpu_custom_call.1']
    #allocation8 [shape = 'u8[24576]{0}', space=vmem, size = 0x6000, scoped, tag = 'input window, operand 5, single buffered']
    #allocation9 [shape = 'u8[49152]{0}', space=vmem, size = 0xc000, scoped, tag = 'input window, operand 10, single buffered']
    #allocation10 [shape = 's32[1]{0}', space=sflag, size = 0x4, scoped, tag = 'scoped memory for tpu_custom_call.1']
    #allocation11 [shape = 'u8[24576]{0}', space=vmem, size = 0x6000, scoped, tag = 'input window, operand 12, single buffered']
    #allocation12 [shape = 'u8[65536]{0}', space=vmem, size = 0x10000, scoped, tag = 'output window, operand 0']
    %21 = vsyncpa [#allocation4], 0
    %s22 = scalar_lea.sflag [#allocation4], 1
    %23 = vsyncpa %s22, 0
    %24 = vsyncpa [#allocation7], 0
    %25 = vsyncpa [#allocation10], 0
    %26 = vsyncpa [#allocation5], 0
    %s27 = scalar_lea.sflag [#allocation5], 1
    %28 = vsyncpa %s27, 0
    loop: start=0, step=1, limit=4
    $region2: #{tpu_custom_call.1} parent=1 // loop_pre_header
      _
    $region3: #{tpu_custom_call.1} parent=1 // loop_header
      %s30 = sphi 0, %s34
      %p31 = scmp.ge.s32.totalorder %s30, 4
      %s40 = sphi 0, %s42
      %s43 = sphi 0, %s40
      %s44 = sphi 0, %s43
      %s60 = sphi 0, %s44
      %s64 = sphi 0, %s64
      %s66 = sphi 0, %s64
      %s67 = sphi 0, %s66
      %s81 = sphi 0, %s67
      %s85 = sphi 0, %s85
      %s87 = sphi 0, %s85
      %s88 = sphi 0, %s87
      %s102 = sphi 0, %s88
      %s106 = sphi 0, %s106
      %s108 = sphi 0, %s106
      %s109 = sphi 0, %s108
      %s123 = sphi 0, %s109
      %s127 = sphi 0, %s127
      %s129 = sphi 0, %s127
      %s130 = sphi 0, %s129
      %s144 = sphi 0, %s130
      %s148 = sphi 0, %s148
      %s150 = sphi 0, %s148
      %s151 = sphi 0, %s150
      %s165 = sphi 0, %s151
      %s169 = sphi 0, %s169
      %s171 = sphi 0, %s169
      %s172 = sphi 0, %s171
      %s186 = sphi 0, %s172
      %s190 = sphi 0, %s190
      %s192 = sphi 0, %s190
      %s193 = sphi 0, %s192
      %s207 = sphi 0, %s193
      %s211 = sphi 0, %s211
      %s213 = sphi 0, %s211
      %s214 = sphi 0, %s213
      %s228 = sphi 0, %s214
      %s232 = sphi 0, %s232
      %s234 = sphi 0, %s232
      %s235 = sphi 0, %s234
      %s249 = sphi 0, %s235
      %s253 = sphi 0, %s253
      %s255 = sphi 0, %s253
      %s256 = sphi 0, %s255
      %s270 = sphi 0, %s256
      %s274 = sphi 0, %s274
      %s276 = sphi 0, %s274
      %s277 = sphi 0, %s276
      %s291 = sphi 0, %s277
      %s295 = sphi 0, %s295
      %s297 = sphi 0, %s295
      %s298 = sphi 0, %s297
      %s312 = sphi 0, %s298
      %s316 = sphi 0, %s316
      %s318 = sphi 0, %s316
      %s319 = sphi 0, %s318
      %s333 = sphi 0, %s319
      %s337 = sphi 0, %s337
      %s339 = sphi 0, %s337
      %s340 = sphi 0, %s339
      %s354 = sphi 0, %s340
      %s358 = sphi 0, %s358
      %s360 = sphi 0, %s358
      %s361 = sphi 0, %s360
      %s375 = sphi 0, %s361
      %s381 = sphi 0, %s383
      %s384 = sphi 0, %s381
      %s385 = sphi 0, %s384
      %s401 = sphi 0, %s385
    $region4: #{tpu_custom_call.1} parent=1 // loop_header_branch
      %33 = sbr.rel (%p31) target = $region8
    $region5: #{tpu_custom_call.1} parent=1 // loop_body
      %s35 = ssub.s32 %s30, 1
      %s36 = ssub.s32 %s30, 2
      %s37 = sadd.s32 %s30, 1
      %s38 = ssub.s32 %s30, %s37
      %p39 = scmp.eq.s32.totalorder %s38, 0
      %s41 = sadd.s32 %s40, 1
      %s42 = scalar_select %p39, %s40, %s41
      %p45 = pneg %p39
      %p46 = scmp.eq.s32.totalorder %s30, 1
      %p47 = por %p45, %p46
      %p48 = scmp.ne.s32.totalorder %s40, %s43
      %p49 = scmp.eq.s32.totalorder %s30, 0
      %p50 = por %p48, %p49
      %p51 = scmp.ne.s32.totalorder %s40, %s43
      %p52 = scmp.eq.s32.totalorder %s35, 1
      %p53 = por %p51, %p52
      %p54 = scmp.ne.s32.totalorder %s43, %s44
      %p55 = scmp.eq.s32.totalorder %s35, 0
      %p56 = por %p54, %p55
      %p57 = scmp.ne.s32.totalorder %s43, %s44
      %p58 = scmp.eq.s32.totalorder %s36, 1
      %p59 = por %p57, %p58
      %p61 = scmp.ne.s32.totalorder %s44, %s60
      %p62 = scmp.eq.s32.totalorder %s36, 0
      %p63 = por %p61, %p62
      %s65 = sadd.s32 %s64, 1
      %p68 = scmp.eq.s32.totalorder %s30, 1
      %p69 = scmp.ne.s32.totalorder %s64, %s66
      %p70 = scmp.eq.s32.totalorder %s30, 0
      %p71 = por %p69, %p70
      %p72 = scmp.ne.s32.totalorder %s64, %s66
      %p73 = scmp.eq.s32.totalorder %s35, 1
      %p74 = por %p72, %p73
      %p75 = scmp.ne.s32.totalorder %s66, %s67
      %p76 = scmp.eq.s32.totalorder %s35, 0
      %p77 = por %p75, %p76
      %p78 = scmp.ne.s32.totalorder %s66, %s67
      %p79 = scmp.eq.s32.totalorder %s36, 1
      %p80 = por %p78, %p79
      %p82 = scmp.ne.s32.totalorder %s67, %s81
      %p83 = scmp.eq.s32.totalorder %s36, 0
      %p84 = por %p82, %p83
      %s86 = sadd.s32 %s85, 1
      %p89 = scmp.eq.s32.totalorder %s30, 1
      %p90 = scmp.ne.s32.totalorder %s85, %s87
      %p91 = scmp.eq.s32.totalorder %s30, 0
      %p92 = por %p90, %p91
      %p93 = scmp.ne.s32.totalorder %s85, %s87
      %p94 = scmp.eq.s32.totalorder %s35, 1
      %p95 = por %p93, %p94
      %p96 = scmp.ne.s32.totalorder %s87, %s88
      %p97 = scmp.eq.s32.totalorder %s35, 0
      %p98 = por %p96, %p97
      %p99 = scmp.ne.s32.totalorder %s87, %s88
      %p100 = scmp.eq.s32.totalorder %s36, 1
      %p101 = por %p99, %p100
      %p103 = scmp.ne.s32.totalorder %s88, %s102
      %p104 = scmp.eq.s32.totalorder %s36, 0
      %p105 = por %p103, %p104
      %s107 = sadd.s32 %s106, 1
      %p110 = scmp.eq.s32.totalorder %s30, 1
      %p111 = scmp.ne.s32.totalorder %s106, %s108
      %p112 = scmp.eq.s32.totalorder %s30, 0
      %p113 = por %p111, %p112
      %p114 = scmp.ne.s32.totalorder %s106, %s108
      %p115 = scmp.eq.s32.totalorder %s35, 1
      %p116 = por %p114, %p115
      %p117 = scmp.ne.s32.totalorder %s108, %s109
      %p118 = scmp.eq.s32.totalorder %s35, 0
      %p119 = por %p117, %p118
      %p120 = scmp.ne.s32.totalorder %s108, %s109
      %p121 = scmp.eq.s32.totalorder %s36, 1
      %p122 = por %p120, %p121
      %p124 = scmp.ne.s32.totalorder %s109, %s123
      %p125 = scmp.eq.s32.totalorder %s36, 0
      %p126 = por %p124, %p125
      %s128 = sadd.s32 %s127, 1
      %p131 = scmp.eq.s32.totalorder %s30, 1
      %p132 = scmp.ne.s32.totalorder %s127, %s129
      %p133 = scmp.eq.s32.totalorder %s30, 0
      %p134 = por %p132, %p133
      %p135 = scmp.ne.s32.totalorder %s127, %s129
      %p136 = scmp.eq.s32.totalorder %s35, 1
      %p137 = por %p135, %p136
      %p138 = scmp.ne.s32.totalorder %s129, %s130
      %p139 = scmp.eq.s32.totalorder %s35, 0
      %p140 = por %p138, %p139
      %p141 = scmp.ne.s32.totalorder %s129, %s130
      %p142 = scmp.eq.s32.totalorder %s36, 1
      %p143 = por %p141, %p142
      %p145 = scmp.ne.s32.totalorder %s130, %s144
      %p146 = scmp.eq.s32.totalorder %s36, 0
      %p147 = por %p145, %p146
      %s149 = sadd.s32 %s148, 1
      %p152 = scmp.eq.s32.totalorder %s30, 1
      %p153 = scmp.ne.s32.totalorder %s148, %s150
      %p154 = scmp.eq.s32.totalorder %s30, 0
      %p155 = por %p153, %p154
      %p156 = scmp.ne.s32.totalorder %s148, %s150
      %p157 = scmp.eq.s32.totalorder %s35, 1
      %p158 = por %p156, %p157
      %p159 = scmp.ne.s32.totalorder %s150, %s151
      %p160 = scmp.eq.s32.totalorder %s35, 0
      %p161 = por %p159, %p160
      %p162 = scmp.ne.s32.totalorder %s150, %s151
      %p163 = scmp.eq.s32.totalorder %s36, 1
      %p164 = por %p162, %p163
      %p166 = scmp.ne.s32.totalorder %s151, %s165
      %p167 = scmp.eq.s32.totalorder %s36, 0
      %p168 = por %p166, %p167
      %s170 = sadd.s32 %s169, 1
      %p173 = scmp.eq.s32.totalorder %s30, 1
      %p174 = scmp.ne.s32.totalorder %s169, %s171
      %p175 = scmp.eq.s32.totalorder %s30, 0
      %p176 = por %p174, %p175
      %p177 = scmp.ne.s32.totalorder %s169, %s171
      %p178 = scmp.eq.s32.totalorder %s35, 1
      %p179 = por %p177, %p178
      %p180 = scmp.ne.s32.totalorder %s171, %s172
      %p181 = scmp.eq.s32.totalorder %s35, 0
      %p182 = por %p180, %p181
      %p183 = scmp.ne.s32.totalorder %s171, %s172
      %p184 = scmp.eq.s32.totalorder %s36, 1
      %p185 = por %p183, %p184
      %p187 = scmp.ne.s32.totalorder %s172, %s186
      %p188 = scmp.eq.s32.totalorder %s36, 0
      %p189 = por %p187, %p188
      %s191 = sadd.s32 %s190, 1
      %p194 = scmp.eq.s32.totalorder %s30, 1
      %p195 = scmp.ne.s32.totalorder %s190, %s192
      %p196 = scmp.eq.s32.totalorder %s30, 0
      %p197 = por %p195, %p196
      %p198 = scmp.ne.s32.totalorder %s190, %s192
      %p199 = scmp.eq.s32.totalorder %s35, 1
      %p200 = por %p198, %p199
      %p201 = scmp.ne.s32.totalorder %s192, %s193
      %p202 = scmp.eq.s32.totalorder %s35, 0
      %p203 = por %p201, %p202
      %p204 = scmp.ne.s32.totalorder %s192, %s193
      %p205 = scmp.eq.s32.totalorder %s36, 1
      %p206 = por %p204, %p205
      %p208 = scmp.ne.s32.totalorder %s193, %s207
      %p209 = scmp.eq.s32.totalorder %s36, 0
      %p210 = por %p208, %p209
      %s212 = sadd.s32 %s211, 1
      %p215 = scmp.eq.s32.totalorder %s30, 1
      %p216 = scmp.ne.s32.totalorder %s211, %s213
      %p217 = scmp.eq.s32.totalorder %s30, 0
      %p218 = por %p216, %p217
      %p219 = scmp.ne.s32.totalorder %s211, %s213
      %p220 = scmp.eq.s32.totalorder %s35, 1
      %p221 = por %p219, %p220
      %p222 = scmp.ne.s32.totalorder %s213, %s214
      %p223 = scmp.eq.s32.totalorder %s35, 0
      %p224 = por %p222, %p223
      %p225 = scmp.ne.s32.totalorder %s213, %s214
      %p226 = scmp.eq.s32.totalorder %s36, 1
      %p227 = por %p225, %p226
      %p229 = scmp.ne.s32.totalorder %s214, %s228
      %p230 = scmp.eq.s32.totalorder %s36, 0
      %p231 = por %p229, %p230
      %s233 = sadd.s32 %s232, 1
      %p236 = scmp.eq.s32.totalorder %s30, 1
      %p237 = scmp.ne.s32.totalorder %s232, %s234
      %p238 = scmp.eq.s32.totalorder %s30, 0
      %p239 = por %p237, %p238
      %p240 = scmp.ne.s32.totalorder %s232, %s234
      %p241 = scmp.eq.s32.totalorder %s35, 1
      %p242 = por %p240, %p241
      %p243 = scmp.ne.s32.totalorder %s234, %s235
      %p244 = scmp.eq.s32.totalorder %s35, 0
      %p245 = por %p243, %p244
      %p246 = scmp.ne.s32.totalorder %s234, %s235
      %p247 = scmp.eq.s32.totalorder %s36, 1
      %p248 = por %p246, %p247
      %p250 = scmp.ne.s32.totalorder %s235, %s249
      %p251 = scmp.eq.s32.totalorder %s36, 0
      %p252 = por %p250, %p251
      %s254 = sadd.s32 %s253, 1
      %p257 = scmp.eq.s32.totalorder %s30, 1
      %p258 = scmp.ne.s32.totalorder %s253, %s255
      %p259 = scmp.eq.s32.totalorder %s30, 0
      %p260 = por %p258, %p259
      %p261 = scmp.ne.s32.totalorder %s253, %s255
      %p262 = scmp.eq.s32.totalorder %s35, 1
      %p263 = por %p261, %p262
      %p264 = scmp.ne.s32.totalorder %s255, %s256
      %p265 = scmp.eq.s32.totalorder %s35, 0
      %p266 = por %p264, %p265
      %p267 = scmp.ne.s32.totalorder %s255, %s256
      %p268 = scmp.eq.s32.totalorder %s36, 1
      %p269 = por %p267, %p268
      %p271 = scmp.ne.s32.totalorder %s256, %s270
      %p272 = scmp.eq.s32.totalorder %s36, 0
      %p273 = por %p271, %p272
      %s275 = sadd.s32 %s274, 1
      %p278 = scmp.eq.s32.totalorder %s30, 1
      %p279 = scmp.ne.s32.totalorder %s274, %s276
      %p280 = scmp.eq.s32.totalorder %s30, 0
      %p281 = por %p279, %p280
      %p282 = scmp.ne.s32.totalorder %s274, %s276
      %p283 = scmp.eq.s32.totalorder %s35, 1
      %p284 = por %p282, %p283
      %p285 = scmp.ne.s32.totalorder %s276, %s277
      %p286 = scmp.eq.s32.totalorder %s35, 0
      %p287 = por %p285, %p286
      %p288 = scmp.ne.s32.totalorder %s276, %s277
      %p289 = scmp.eq.s32.totalorder %s36, 1
      %p290 = por %p288, %p289
      %p292 = scmp.ne.s32.totalorder %s277, %s291
      %p293 = scmp.eq.s32.totalorder %s36, 0
      %p294 = por %p292, %p293
      %s296 = sadd.s32 %s295, 1
      %p299 = scmp.eq.s32.totalorder %s30, 1
      %p300 = scmp.ne.s32.totalorder %s295, %s297
      %p301 = scmp.eq.s32.totalorder %s30, 0
      %p302 = por %p300, %p301
      %p303 = scmp.ne.s32.totalorder %s295, %s297
      %p304 = scmp.eq.s32.totalorder %s35, 1
      %p305 = por %p303, %p304
      %p306 = scmp.ne.s32.totalorder %s297, %s298
      %p307 = scmp.eq.s32.totalorder %s35, 0
      %p308 = por %p306, %p307
      %p309 = scmp.ne.s32.totalorder %s297, %s298
      %p310 = scmp.eq.s32.totalorder %s36, 1
      %p311 = por %p309, %p310
      %p313 = scmp.ne.s32.totalorder %s298, %s312
      %p314 = scmp.eq.s32.totalorder %s36, 0
      %p315 = por %p313, %p314
      %s317 = sadd.s32 %s316, 1
      %p320 = scmp.eq.s32.totalorder %s30, 1
      %p321 = scmp.ne.s32.totalorder %s316, %s318
      %p322 = scmp.eq.s32.totalorder %s30, 0
      %p323 = por %p321, %p322
      %p324 = scmp.ne.s32.totalorder %s316, %s318
      %p325 = scmp.eq.s32.totalorder %s35, 1
      %p326 = por %p324, %p325
      %p327 = scmp.ne.s32.totalorder %s318, %s319
      %p328 = scmp.eq.s32.totalorder %s35, 0
      %p329 = por %p327, %p328
      %p330 = scmp.ne.s32.totalorder %s318, %s319
      %p331 = scmp.eq.s32.totalorder %s36, 1
      %p332 = por %p330, %p331
      %p334 = scmp.ne.s32.totalorder %s319, %s333
      %p335 = scmp.eq.s32.totalorder %s36, 0
      %p336 = por %p334, %p335
      %s338 = sadd.s32 %s337, 1
      %p341 = scmp.eq.s32.totalorder %s30, 1
      %p342 = scmp.ne.s32.totalorder %s337, %s339
      %p343 = scmp.eq.s32.totalorder %s30, 0
      %p344 = por %p342, %p343
      %p345 = scmp.ne.s32.totalorder %s337, %s339
      %p346 = scmp.eq.s32.totalorder %s35, 1
      %p347 = por %p345, %p346
      %p348 = scmp.ne.s32.totalorder %s339, %s340
      %p349 = scmp.eq.s32.totalorder %s35, 0
      %p350 = por %p348, %p349
      %p351 = scmp.ne.s32.totalorder %s339, %s340
      %p352 = scmp.eq.s32.totalorder %s36, 1
      %p353 = por %p351, %p352
      %p355 = scmp.ne.s32.totalorder %s340, %s354
      %p356 = scmp.eq.s32.totalorder %s36, 0
      %p357 = por %p355, %p356
      %s359 = sadd.s32 %s358, 1
      %p362 = scmp.eq.s32.totalorder %s30, 1
      %p363 = scmp.ne.s32.totalorder %s358, %s360
      %p364 = scmp.eq.s32.totalorder %s30, 0
      %p365 = por %p363, %p364
      %p366 = scmp.ne.s32.totalorder %s358, %s360
      %p367 = scmp.eq.s32.totalorder %s35, 1
      %p368 = por %p366, %p367
      %p369 = scmp.ne.s32.totalorder %s360, %s361
      %p370 = scmp.eq.s32.totalorder %s35, 0
      %p371 = por %p369, %p370
      %p372 = scmp.ne.s32.totalorder %s360, %s361
      %p373 = scmp.eq.s32.totalorder %s36, 1
      %p374 = por %p372, %p373
      %p376 = scmp.ne.s32.totalorder %s361, %s375
      %p377 = scmp.eq.s32.totalorder %s36, 0
      %p378 = por %p376, %p377
      %s379 = ssub.s32 %s30, %s37
      %p380 = scmp.eq.s32.totalorder %s379, 0
      %s382 = sadd.s32 %s381, 1
      %s383 = scalar_select %p380, %s381, %s382
      %p386 = pneg %p380
      %p387 = scmp.eq.s32.totalorder %s30, 1
      %p388 = por %p386, %p387
      %p389 = scmp.ne.s32.totalorder %s381, %s384
      %p390 = scmp.eq.s32.totalorder %s30, 0
      %p391 = por %p389, %p390
      %p392 = scmp.ne.s32.totalorder %s381, %s384
      %p393 = scmp.eq.s32.totalorder %s35, 1
      %p394 = por %p392, %p393
      %p395 = scmp.ne.s32.totalorder %s384, %s385
      %p396 = scmp.eq.s32.totalorder %s35, 0
      %p397 = por %p395, %p396
      %p398 = scmp.ne.s32.totalorder %s384, %s385
      %p399 = scmp.eq.s32.totalorder %s36, 1
      %p400 = por %p398, %p399
      %p402 = scmp.ne.s32.totalorder %s385, %s401
      %p403 = scmp.eq.s32.totalorder %s36, 0
      %p404 = por %p402, %p403
      %p405 = scmp.le.s32.totalorder 1, %s30
      %p406 = scmp.lt.s32.totalorder %s30, 3
      %p407 = pnand %p405, %p406
      %p408 = pneg %p407
      // Predicated region
      $region9: #{tpu_custom_call.1} parent=5 // pred_check
        _
      $region10: #{tpu_custom_call.1} parent=5 // pred_check_branch
        %410 = sbr.rel (%p407) target = $region12
      $region11: #{tpu_custom_call.1} parent=5 // pred_region
        %s411 = ssub.s32 %s30, 1
        // Predicated region
        $region13: #{tpu_custom_call.1} parent=11 // pred_check
          %p412 = pneg %p77
        $region14: #{tpu_custom_call.1} parent=11 // pred_check_branch
          %414 = sbr.rel (%p412) target = $region16
        $region15: #{tpu_custom_call.1} parent=11 // pred_region
          %416 = vsyncadd [#allocation7], 0
          %s417 = sshll.u32 %s1, 4
          %s418 = int_to_ptr.hbm [resolvable:$true] %s417
          %s419 = sshll.u32 [#allocation6], 4
          %s420 = int_to_ptr.vmem [resolvable:$true] %s419
          %425 = dma.hbm_to_vmem [thread:$0]  %s418, 2048, %s420, [#allocation7], 512, 512, 32
        $region16: #{tpu_custom_call.1} parent=11 // pred_fallthru
          _
        // Predicated region
        $region17: #{tpu_custom_call.1} parent=11 // pred_check
          %p426 = pneg %p98
        $region18: #{tpu_custom_call.1} parent=11 // pred_check_branch
          %428 = sbr.rel (%p426) target = $region20
        $region19: #{tpu_custom_call.1} parent=11 // pred_region
          _
        $region20: #{tpu_custom_call.1} parent=11 // pred_fallthru
          _
        // Predicated region
        $region21: #{tpu_custom_call.1} parent=11 // pred_check
          %p429 = pneg %p119
        $region22: #{tpu_custom_call.1} parent=11 // pred_check_branch
          %431 = sbr.rel (%p429) target = $region24
        $region23: #{tpu_custom_call.1} parent=11 // pred_region
          _
        $region24: #{tpu_custom_call.1} parent=11 // pred_fallthru
          _
        // Predicated region
        $region25: #{tpu_custom_call.1} parent=11 // pred_check
          %p432 = pneg %p140
        $region26: #{tpu_custom_call.1} parent=11 // pred_check_branch
          %434 = sbr.rel (%p432) target = $region28
        $region27: #{tpu_custom_call.1} parent=11 // pred_region
          _
        $region28: #{tpu_custom_call.1} parent=11 // pred_fallthru
          _
        // Predicated region
        $region29: #{tpu_custom_call.1} parent=11 // pred_check
          %p435 = pneg %p161
        $region30: #{tpu_custom_call.1} parent=11 // pred_check_branch
          %437 = sbr.rel (%p435) target = $region32
        $region31: #{tpu_custom_call.1} parent=11 // pred_region
          %439 = vsyncadd [#allocation7], 0
          %s440 = sshll.u32 %s5, 4
          %s441 = int_to_ptr.hbm [resolvable:$true] %s440
          %s442 = sshll.u32 [#allocation8], 4
          %s443 = int_to_ptr.vmem [resolvable:$true] %s442
          %448 = dma.hbm_to_vmem [thread:$0]  %s441, 768, %s443, [#allocation7], 128, 128, 8
        $region32: #{tpu_custom_call.1} parent=11 // pred_fallthru
          _
        // Predicated region
        $region33: #{tpu_custom_call.1} parent=11 // pred_check
          %p449 = pneg %p182
        $region34: #{tpu_custom_call.1} parent=11 // pred_check_branch
          %451 = sbr.rel (%p449) target = $region36
        $region35: #{tpu_custom_call.1} parent=11 // pred_region
          _
        $region36: #{tpu_custom_call.1} parent=11 // pred_fallthru
          _
        // Predicated region
        $region37: #{tpu_custom_call.1} parent=11 // pred_check
          %p452 = pneg %p203
        $region38: #{tpu_custom_call.1} parent=11 // pred_check_branch
          %454 = sbr.rel (%p452) target = $region40
        $region39: #{tpu_custom_call.1} parent=11 // pred_region
          _
        $region40: #{tpu_custom_call.1} parent=11 // pred_fallthru
          _
        // Predicated region
        $region41: #{tpu_custom_call.1} parent=11 // pred_check
          %p455 = pneg %p224
        $region42: #{tpu_custom_call.1} parent=11 // pred_check_branch
          %457 = sbr.rel (%p455) target = $region44
        $region43: #{tpu_custom_call.1} parent=11 // pred_region
          _
        $region44: #{tpu_custom_call.1} parent=11 // pred_fallthru
          _
        // Predicated region
        $region45: #{tpu_custom_call.1} parent=11 // pred_check
          %p458 = pneg %p245
        $region46: #{tpu_custom_call.1} parent=11 // pred_check_branch
          %460 = sbr.rel (%p458) target = $region48
        $region47: #{tpu_custom_call.1} parent=11 // pred_region
          _
        $region48: #{tpu_custom_call.1} parent=11 // pred_fallthru
          _
        // Predicated region
        $region49: #{tpu_custom_call.1} parent=11 // pred_check
          %p461 = pneg %p266
        $region50: #{tpu_custom_call.1} parent=11 // pred_check_branch
          %463 = sbr.rel (%p461) target = $region52
        $region51: #{tpu_custom_call.1} parent=11 // pred_region
          %465 = vsyncadd [#allocation10], 0
          %s466 = sshll.u32 %s10, 4
          %s467 = int_to_ptr.hbm [resolvable:$true] %s466
          %s468 = sshll.u32 [#allocation9], 4
          %s469 = int_to_ptr.vmem [resolvable:$true] %s468
          %474 = dma.hbm_to_vmem [thread:$0]  %s467, 1536, %s469, [#allocation10], 256, 256, 16
        $region52: #{tpu_custom_call.1} parent=11 // pred_fallthru
          _
        // Predicated region
        $region53: #{tpu_custom_call.1} parent=11 // pred_check
          %p475 = pneg %p287
        $region54: #{tpu_custom_call.1} parent=11 // pred_check_branch
          %477 = sbr.rel (%p475) target = $region56
        $region55: #{tpu_custom_call.1} parent=11 // pred_region
          _
        $region56: #{tpu_custom_call.1} parent=11 // pred_fallthru
          _
        // Predicated region
        $region57: #{tpu_custom_call.1} parent=11 // pred_check
          %p478 = pneg %p308
        $region58: #{tpu_custom_call.1} parent=11 // pred_check_branch
          %480 = sbr.rel (%p478) target = $region60
        $region59: #{tpu_custom_call.1} parent=11 // pred_region
          %482 = vsyncadd [#allocation10], 0
          %s483 = sshll.u32 %s12, 4
          %s484 = int_to_ptr.hbm [resolvable:$true] %s483
          %s485 = sshll.u32 [#allocation11], 4
          %s486 = int_to_ptr.vmem [resolvable:$true] %s485
          %491 = dma.hbm_to_vmem [thread:$0]  %s484, 768, %s486, [#allocation10], 128, 128, 8
        $region60: #{tpu_custom_call.1} parent=11 // pred_fallthru
          _
        // Predicated region
        $region61: #{tpu_custom_call.1} parent=11 // pred_check
          %p492 = pneg %p329
        $region62: #{tpu_custom_call.1} parent=11 // pred_check_branch
          %494 = sbr.rel (%p492) target = $region64
        $region63: #{tpu_custom_call.1} parent=11 // pred_region
          _
        $region64: #{tpu_custom_call.1} parent=11 // pred_fallthru
          _
        // Predicated region
        $region65: #{tpu_custom_call.1} parent=11 // pred_check
          %p495 = pneg %p350
        $region66: #{tpu_custom_call.1} parent=11 // pred_check_branch
          %497 = sbr.rel (%p495) target = $region68
        $region67: #{tpu_custom_call.1} parent=11 // pred_region
          _
        $region68: #{tpu_custom_call.1} parent=11 // pred_fallthru
          _
        // Predicated region
        $region69: #{tpu_custom_call.1} parent=11 // pred_check
          %p498 = pneg %p371
        $region70: #{tpu_custom_call.1} parent=11 // pred_check_branch
          %500 = sbr.rel (%p498) target = $region72
        $region71: #{tpu_custom_call.1} parent=11 // pred_region
          _
        $region72: #{tpu_custom_call.1} parent=11 // pred_fallthru
          _
      $region12: #{tpu_custom_call.1} parent=5 // pred_fallthru
        _
      %p501 = scmp.lt.s32.totalorder %s30, 2
      // Predicated region
      $region73: #{tpu_custom_call.1} parent=5 // pred_check
        %p502 = pneg %p501
      $region74: #{tpu_custom_call.1} parent=5 // pred_check_branch
        %504 = sbr.rel (%p502) target = $region76
      $region75: #{tpu_custom_call.1} parent=5 // pred_region
        // Predicated region
        $region77: #{tpu_custom_call.1} parent=75 // pred_check
          %p505 = pneg %p50
        $region78: #{tpu_custom_call.1} parent=75 // pred_check_branch
          %507 = sbr.rel (%p505) target = $region80
        $region79: #{tpu_custom_call.1} parent=75 // pred_region
          %s508 = sand.u32 %s40, 1
          %s509 = scalar_lea.sflag [#allocation4], %s508
          %s510 = sand.u32 %s40, 1
          %s511 = smul.addr %s510, 32
          %s512 = scalar_lea.vmem [#allocation3], %s511
          %514 = vsyncadd %s509, 0
          %s515 = smul.addr %s30, 4
          %s516 = smul.addr %s515, 8
          %s517 = scalar_lea.hbm %s0, %s516
          %s519 = sshll.u32 %s517, 4
          %s520 = int_to_ptr.hbm [resolvable:$true] %s519
          %s521 = sshll.u32 %s512, 4
          %s522 = int_to_ptr.vmem [resolvable:$true] %s521
          %524 = dma.hbm_to_vmem [thread:$0]  %s520, 512, %s522, %s509
        $region80: #{tpu_custom_call.1} parent=75 // pred_fallthru
          _
      $region76: #{tpu_custom_call.1} parent=5 // pred_fallthru
        _
      %p525 = scmp.le.s32.totalorder 1, %s30
      %p526 = scmp.lt.s32.totalorder %s30, 3
      %p527 = pnand %p525, %p526
      %p528 = pneg %p527
      // Predicated region
      $region81: #{tpu_custom_call.1} parent=5 // pred_check
        _
      $region82: #{tpu_custom_call.1} parent=5 // pred_check_branch
        %530 = sbr.rel (%p527) target = $region84
      $region83: #{tpu_custom_call.1} parent=5 // pred_region
        %s531 = ssub.s32 %s30, 1
        %s532 = sand.u32 %s43, 1
        %s533 = scalar_lea.sflag [#allocation4], %s532
        %s534 = sand.u32 %s43, 1
        %s535 = smul.addr %s534, 32
        %s536 = scalar_lea.vmem [#allocation3], %s535
        // Predicated region
        $region85: #{tpu_custom_call.1} parent=83 // pred_check
          %p537 = pneg %p56
        $region86: #{tpu_custom_call.1} parent=83 // pred_check_branch
          %539 = sbr.rel (%p537) target = $region88
        $region87: #{tpu_custom_call.1} parent=83 // pred_region
          %541 = dma.done %s533, 512
        $region88: #{tpu_custom_call.1} parent=83 // pred_fallthru
          _
        // Predicated region
        $region89: #{tpu_custom_call.1} parent=83 // pred_check
          %p542 = pneg %p77
        $region90: #{tpu_custom_call.1} parent=83 // pred_check_branch
          %544 = sbr.rel (%p542) target = $region92
        $region91: #{tpu_custom_call.1} parent=83 // pred_region
          %546 = dma.done [#allocation7], 2048
        $region92: #{tpu_custom_call.1} parent=83 // pred_fallthru
          _
        // Predicated region
        $region93: #{tpu_custom_call.1} parent=83 // pred_check
          %p547 = pneg %p161
        $region94: #{tpu_custom_call.1} parent=83 // pred_check_branch
          %549 = sbr.rel (%p547) target = $region96
        $region95: #{tpu_custom_call.1} parent=83 // pred_region
          %551 = dma.done [#allocation7], 768
        $region96: #{tpu_custom_call.1} parent=83 // pred_fallthru
          _
        // Predicated region
        $region97: #{tpu_custom_call.1} parent=83 // pred_check
          %p552 = pneg %p266
        $region98: #{tpu_custom_call.1} parent=83 // pred_check_branch
          %554 = sbr.rel (%p552) target = $region100
        $region99: #{tpu_custom_call.1} parent=83 // pred_region
          %556 = dma.done [#allocation10], 1536
        $region100: #{tpu_custom_call.1} parent=83 // pred_fallthru
          _
        // Predicated region
        $region101: #{tpu_custom_call.1} parent=83 // pred_check
          %p557 = pneg %p308
        $region102: #{tpu_custom_call.1} parent=83 // pred_check_branch
          %559 = sbr.rel (%p557) target = $region104
        $region103: #{tpu_custom_call.1} parent=83 // pred_region
          %561 = dma.done [#allocation10], 768
        $region104: #{tpu_custom_call.1} parent=83 // pred_fallthru
          _
        %s562 = sand.u32 %s43, 1
        %s563 = scalar_lea.sflag [#allocation4], %s562
        %s564 = sand.u32 %s43, 1
        %s565 = smul.addr %s564, 32
        %s566 = scalar_lea.vmem [#allocation3], %s565
        %p567 = pneg %p56
        %p568 = pneg %p53
        %p569 = pneg %p77
        %p570 = pneg %p74
        %p571 = pneg %p98
        %p572 = pneg %p95
        %p573 = pneg %p119
        %p574 = pneg %p116
        %p575 = pneg %p140
        %p576 = pneg %p137
        %p577 = pneg %p161
        %p578 = pneg %p158
        %p579 = pneg %p182
        %p580 = pneg %p179
        %p581 = pneg %p203
        %p582 = pneg %p200
        %p583 = pneg %p224
        %p584 = pneg %p221
        %p585 = pneg %p245
        %p586 = pneg %p242
        %p587 = pneg %p266
        %p588 = pneg %p263
        %p589 = pneg %p287
        %p590 = pneg %p284
        %p591 = pneg %p308
        %p592 = pneg %p305
        %p593 = pneg %p329
        %p594 = pneg %p326
        %p595 = pneg %p350
        %p596 = pneg %p347
        %p597 = pneg %p371
        %p598 = pneg %p368
        %p599 = pneg %p397
        %p600 = pneg %p394
        %s601 = sand.u32 %s384, 1
        %s602 = scalar_lea.sflag [#allocation5], %s601
        %s603 = sand.u32 %s384, 1
        %s604 = smul.addr %s603, 64
        %s605 = scalar_lea.vmem [#allocation12], %s604
        %v606 = vld [vmem:[%s536] sm:$0xff]
        %v607 = vld [vmem:[%s536 + $0x8] sm:$0xff]
        %v608 = vld [vmem:[%s536 + $0x10] sm:$0xff]
        %v609 = vld [vmem:[%s536 + $0x18] sm:$0xff]
        %v610 = vadd.f32 %v606, %v607
        %v611 = vadd.f32 %v610, %v608
        %v612 = vadd.f32 %v611, %v609
        %613 = vadd.xlane.f32.xlu0 %v612
        %v614 = vpop.xlane.xlu0 %613
        %v615 = vld [vmem:[%s4] sm:$0xff]
        %vm616 = vcmask 64512
        %v618 = vsel %vm616, %v615, 0
        %620 = vmatpush.msra.mxu0 0.0
        %621 = vmatpush.msra.mxu0 0.0
        %622 = vmatpush.msra.mxu0 0.0
        %623 = vmatpush.msra.mxu0 0.0
        %624 = vmatpush.msra.mxu0 0.0
        %625 = vmatpush.msra.mxu0 0.0
        %626 = vmatpush.msra.mxu0 0.0
        %627 = vmatpush.msra.mxu0 0.0
        %628 = vmatpush.msra.mxu0 0.0
        %629 = vmatpush.msra.mxu0 0.0
        %630 = vmatpush.msra.mxu0 0.0
        %631 = vmatpush.msra.mxu0 0.0
        %632 = vmatpush.msra.mxu0 0.0
        %633 = vmatpush.msra.mxu0 0.0
        %634 = vmatpush.msra.mxu0 0.0
        %635 = vmatpush.msra.mxu0 %v614
        %636 = vmatmul.f32.gmra.mxu0 %v618
        %v637 = vpop.f32.mrf.mxu0
        %v638 = vadd.f32 0.0, %v637
        %639 = vdwg.mxu0
        %641 = vset.pattern.permute.xlu0 0
        %642 = vperm.xlu0 %641, %v638
        %v643 = vpop.permute.xlu0 %642
        %v645 = vsub.f32 %v606, %v643
        %v646 = vsub.f32 %v607, %v643
        %v647 = vsub.f32 %v608, %v643
        %v648 = vsub.f32 %v609, %v643
        %v649 = vmul.f32 %v645, %v645
        %v650 = vmul.f32 %v646, %v646
        %v651 = vmul.f32 %v647, %v647
        %v652 = vmul.f32 %v648, %v648
        %v653 = vadd.f32 %v649, %v650
        %v654 = vadd.f32 %v653, %v651
        %v655 = vadd.f32 %v654, %v652
        %656 = vadd.xlane.f32.xlu0 %v655
        %v657 = vpop.xlane.xlu0 %656
        %v658 = vld [vmem:[%s2] sm:$0xff]
        %659 = vmatpush.msra.mxu0 0.0
        %660 = vmatpush.msra.mxu0 0.0
        %661 = vmatpush.msra.mxu0 0.0
        %662 = vmatpush.msra.mxu0 0.0
        %663 = vmatpush.msra.mxu0 0.0
        %664 = vmatpush.msra.mxu0 0.0
        %665 = vmatpush.msra.mxu0 0.0
        %666 = vmatpush.msra.mxu0 0.0
        %667 = vmatpush.msra.mxu0 0.0
        %668 = vmatpush.msra.mxu0 0.0
        %669 = vmatpush.msra.mxu0 0.0
        %670 = vmatpush.msra.mxu0 0.0
        %671 = vmatpush.msra.mxu0 0.0
        %672 = vmatpush.msra.mxu0 0.0
        %673 = vmatpush.msra.mxu0 0.0
        %674 = vmatpush.msra.mxu0 %v657
        %675 = vmatmul.f32.gmra.mxu0 %v618
        %v676 = vpop.f32.mrf.mxu0
        %v677 = vadd.f32 1e-05, %v676
        %678 = vdwg.mxu0
        %v679 = vrsqrt.pop %v677
        %v680 = vmul.f32 %v679, %v677
        %v681 = vmul.f32 %v680, %v679
        %v682 = vmul.f32 0.5, %v681
        %v683 = vsub.f32 1.5, %v682
        %v684 = vmul.f32 %v679, %v683
        %vm685 = vweird.f32 %v677
        %vm686 = vweird.f32 %v679
        %vm687 = vmor %vm685, %vm686
        %v688 = vsel %vm687, %v679, %v684
        %v689 = vmul.f32 %v658, %v688
        %691 = vset.pattern.permute.xlu0 0
        %692 = vperm.xlu0 %691, %v689
        %v693 = vpop.permute.xlu0 %692
        %v695 = vmul.f32 %v645, %v693
        %v696 = vmul.f32 %v646, %v693
        %v697 = vmul.f32 %v647, %v693
        %v698 = vmul.f32 %v648, %v693
        %v699 = vld [vmem:[%s3] sm:$0xff]
        %701 = vset.pattern.permute.xlu0 0
        %702 = vperm.xlu0 %701, %v699
        %v703 = vpop.permute.xlu0 %702
        %v705 = vadd.f32 %v695, %v703
        %v706 = vadd.f32 %v696, %v703
        %v707 = vadd.f32 %v697, %v703
        %v708 = vadd.f32 %v698, %v703
        %v709 = vmul.f32 %v705, 0.01
        %v710 = vmul.f32 %v706, 0.01
        %v711 = vmul.f32 %v707, 0.01
        %v712 = vmul.f32 %v708, 0.01
        %v713 = vmax.f32 %v705, %v709
        %v714 = vmax.f32 %v706, %v710
        %v715 = vmax.f32 %v707, %v711
        %v716 = vmax.f32 %v708, %v712
        %718 = vrot.lane.b32.xlu0 %v716, 73
        %v719 = vpop.permute.xlu0 %718
        %724 = vrot.lane.b32.xlu0 %v713, 73
        %v725 = vpop.permute.xlu0 %724
        %726 = vrot.lane.b32.xlu0 %v714, 73
        %v727 = vpop.permute.xlu0 %726
        %728 = vrot.lane.b32.xlu0 %v715, 73
        %v729 = vpop.permute.xlu0 %728
        %vm730 = vcmask 596992
        %v731 = vsel %vm730, %v725, %v727
        %v732 = vsel %vm730, %v727, %v729
        %v733 = vsel %vm730, %v729, %v719
        %v738 = vsel %vm730, %v719, %v725
        %v739 = vld [vmem:[#allocation6] ss:$8 sm:$0xf]
        %v741 = vperm.slane %v739, 0
        %v742 = vperm.slane %v739, 1
        %v743 = vperm.slane %v739, 2
        %v744 = vperm.slane %v739, 3
        %v749 = vmul.f32 %v738, %v741
        %v750 = vmul.f32 %v731, %v742
        %v751 = vmul.f32 %v732, %v743
        %v752 = vmul.f32 %v733, %v744
        %753 = vst [vmem:[#allocation2] sm:$0xff] %v749
        %754 = vst [vmem:[#allocation2 + $0x8] sm:$0xff] %v750
        %755 = vst [vmem:[#allocation2 + $0x10] sm:$0xff] %v751
        %756 = vst [vmem:[#allocation2 + $0x18] sm:$0xff] %v752
        %757 = vrot.lane.b32.xlu0 %v716, 72
        %v758 = vpop.permute.xlu0 %757
        %760 = vrot.lane.b32.xlu0 %v713, 72
        %v761 = vpop.permute.xlu0 %760
        %762 = vrot.lane.b32.xlu0 %v714, 72
        %v763 = vpop.permute.xlu0 %762
        %764 = vrot.lane.b32.xlu0 %v715, 72
        %v765 = vpop.permute.xlu0 %764
        %vm766 = vcmask 588800
        %v767 = vsel %vm766, %v761, %v763
        %v768 = vsel %vm766, %v763, %v765
        %v769 = vsel %vm766, %v765, %v758
        %v774 = vsel %vm766, %v758, %v761
        %s775 = scalar_lea.vmem [#allocation6], 1
        %v776 = vld [vmem:[%s775] ss:$8 sm:$0xf]
        %v778 = vperm.slane %v776, 0
        %v779 = vperm.slane %v776, 1
        %v780 = vperm.slane %v776, 2
        %v781 = vperm.slane %v776, 3
        %v786 = vmul.f32 %v774, %v778
        %v787 = vmul.f32 %v767, %v779
        %v788 = vmul.f32 %v768, %v780
        %v789 = vmul.f32 %v769, %v781
        %790 = vst [vmem:[#allocation2 + $0x20] sm:$0xff] %v786
        %791 = vst [vmem:[#allocation2 + $0x28] sm:$0xff] %v787
        %792 = vst [vmem:[#allocation2 + $0x30] sm:$0xff] %v788
        %793 = vst [vmem:[#allocation2 + $0x38] sm:$0xff] %v789
        %794 = vrot.lane.b32.xlu0 %v716, 71
        %v795 = vpop.permute.xlu0 %794
        %797 = vrot.lane.b32.xlu0 %v713, 71
        %v798 = vpop.permute.xlu0 %797
        %799 = vrot.lane.b32.xlu0 %v714, 71
        %v800 = vpop.permute.xlu0 %799
        %801 = vrot.lane.b32.xlu0 %v715, 71
        %v802 = vpop.permute.xlu0 %801
        %vm803 = vcmask 580608
        %v804 = vsel %vm803, %v798, %v800
        %v805 = vsel %vm803, %v800, %v802
        %v806 = vsel %vm803, %v802, %v795
        %v811 = vsel %vm803, %v795, %v798
        %s812 = scalar_lea.vmem [#allocation6], 2
        %v813 = vld [vmem:[%s812] ss:$8 sm:$0xf]
        %v815 = vperm.slane %v813, 0
        %v816 = vperm.slane %v813, 1
        %v817 = vperm.slane %v813, 2
        %v818 = vperm.slane %v813, 3
        %v823 = vmul.f32 %v811, %v815
        %v824 = vmul.f32 %v804, %v816
        %v825 = vmul.f32 %v805, %v817
        %v826 = vmul.f32 %v806, %v818
        %827 = vst [vmem:[#allocation2 + $0x40] sm:$0xff] %v823
        %828 = vst [vmem:[#allocation2 + $0x48] sm:$0xff] %v824
        %829 = vst [vmem:[#allocation2 + $0x50] sm:$0xff] %v825
        %830 = vst [vmem:[#allocation2 + $0x58] sm:$0xff] %v826
        %831 = vrot.lane.b32.xlu0 %v716, 65
        %v832 = vpop.permute.xlu0 %831
        %834 = vrot.lane.b32.xlu0 %v713, 65
        %v835 = vpop.permute.xlu0 %834
        %836 = vrot.lane.b32.xlu0 %v714, 65
        %v837 = vpop.permute.xlu0 %836
        %838 = vrot.lane.b32.xlu0 %v715, 65
        %v839 = vpop.permute.xlu0 %838
        %vm840 = vcmask 531456
        %v841 = vsel %vm840, %v835, %v837
        %v842 = vsel %vm840, %v837, %v839
        %v843 = vsel %vm840, %v839, %v832
        %v848 = vsel %vm840, %v832, %v835
        %s849 = scalar_lea.vmem [#allocation6], 3
        %v850 = vld [vmem:[%s849] ss:$8 sm:$0xf]
        %v852 = vperm.slane %v850, 0
        %v853 = vperm.slane %v850, 1
        %v854 = vperm.slane %v850, 2
        %v855 = vperm.slane %v850, 3
        %v860 = vmul.f32 %v848, %v852
        %v861 = vmul.f32 %v841, %v853
        %v862 = vmul.f32 %v842, %v854
        %v863 = vmul.f32 %v843, %v855
        %864 = vst [vmem:[#allocation2 + $0x60] sm:$0xff] %v860
        %865 = vst [vmem:[#allocation2 + $0x68] sm:$0xff] %v861
        %866 = vst [vmem:[#allocation2 + $0x70] sm:$0xff] %v862
        %867 = vst [vmem:[#allocation2 + $0x78] sm:$0xff] %v863
        %868 = vrot.lane.b32.xlu0 %v716, 64
        %v869 = vpop.permute.xlu0 %868
        %871 = vrot.lane.b32.xlu0 %v713, 64
        %v872 = vpop.permute.xlu0 %871
        %873 = vrot.lane.b32.xlu0 %v714, 64
        %v874 = vpop.permute.xlu0 %873
        %875 = vrot.lane.b32.xlu0 %v715, 64
        %v876 = vpop.permute.xlu0 %875
        %vm877 = vcmask 523264
        %v878 = vsel %vm877, %v872, %v874
        %v879 = vsel %vm877, %v874, %v876
        %v880 = vsel %vm877, %v876, %v869
        %v885 = vsel %vm877, %v869, %v872
        %s886 = scalar_lea.vmem [#allocation6], 4
        %v887 = vld [vmem:[%s886] ss:$8 sm:$0xf]
        %v889 = vperm.slane %v887, 0
        %v890 = vperm.slane %v887, 1
        %v891 = vperm.slane %v887, 2
        %v892 = vperm.slane %v887, 3
        %v897 = vmul.f32 %v885, %v889
        %v898 = vmul.f32 %v878, %v890
        %v899 = vmul.f32 %v879, %v891
        %v900 = vmul.f32 %v880, %v892
        %901 = vst [vmem:[#allocation2 + $0x80] sm:$0xff] %v897
        %902 = vst [vmem:[#allocation2 + $0x88] sm:$0xff] %v898
        %903 = vst [vmem:[#allocation2 + $0x90] sm:$0xff] %v899
        %904 = vst [vmem:[#allocation2 + $0x98] sm:$0xff] %v900
        %905 = vrot.lane.b32.xlu0 %v716, 63
        %v906 = vpop.permute.xlu0 %905
        %908 = vrot.lane.b32.xlu0 %v713, 63
        %v909 = vpop.permute.xlu0 %908
        %910 = vrot.lane.b32.xlu0 %v714, 63
        %v911 = vpop.permute.xlu0 %910
        %912 = vrot.lane.b32.xlu0 %v715, 63
        %v913 = vpop.permute.xlu0 %912
        %vm914 = vcmask 515072
        %v915 = vsel %vm914, %v909, %v911
        %v916 = vsel %vm914, %v911, %v913
        %v917 = vsel %vm914, %v913, %v906
        %v922 = vsel %vm914, %v906, %v909
        %s923 = scalar_lea.vmem [#allocation6], 5
        %v924 = vld [vmem:[%s923] ss:$8 sm:$0xf]
        %v926 = vperm.slane %v924, 0
        %v927 = vperm.slane %v924, 1
        %v928 = vperm.slane %v924, 2
        %v929 = vperm.slane %v924, 3
        %v934 = vmul.f32 %v922, %v926
        %v935 = vmul.f32 %v915, %v927
        %v936 = vmul.f32 %v916, %v928
        %v937 = vmul.f32 %v917, %v929
        %938 = vst [vmem:[#allocation2 + $0xa0] sm:$0xff] %v934
        %939 = vst [vmem:[#allocation2 + $0xa8] sm:$0xff] %v935
        %940 = vst [vmem:[#allocation2 + $0xb0] sm:$0xff] %v936
        %941 = vst [vmem:[#allocation2 + $0xb8] sm:$0xff] %v937
        %942 = vrot.lane.b32.xlu0 %v716, 57
        %v943 = vpop.permute.xlu0 %942
        %945 = vrot.lane.b32.xlu0 %v713, 57
        %v946 = vpop.permute.xlu0 %945
        %947 = vrot.lane.b32.xlu0 %v714, 57
        %v948 = vpop.permute.xlu0 %947
        %949 = vrot.lane.b32.xlu0 %v715, 57
        %v950 = vpop.permute.xlu0 %949
        %vm951 = vcmask 465920
        %v952 = vsel %vm951, %v946, %v948
        %v953 = vsel %vm951, %v948, %v950
        %v954 = vsel %vm951, %v950, %v943
        %v959 = vsel %vm951, %v943, %v946
        %s960 = scalar_lea.vmem [#allocation6], 6
        %v961 = vld [vmem:[%s960] ss:$8 sm:$0xf]
        %v963 = vperm.slane %v961, 0
        %v964 = vperm.slane %v961, 1
        %v965 = vperm.slane %v961, 2
        %v966 = vperm.slane %v961, 3
        %v971 = vmul.f32 %v959, %v963
        %v972 = vmul.f32 %v952, %v964
        %v973 = vmul.f32 %v953, %v965
        %v974 = vmul.f32 %v954, %v966
        %975 = vst [vmem:[#allocation2 + $0xc0] sm:$0xff] %v971
        %976 = vst [vmem:[#allocation2 + $0xc8] sm:$0xff] %v972
        %977 = vst [vmem:[#allocation2 + $0xd0] sm:$0xff] %v973
        %978 = vst [vmem:[#allocation2 + $0xd8] sm:$0xff] %v974
        %979 = vrot.lane.b32.xlu0 %v716, 56
        %v980 = vpop.permute.xlu0 %979
        %982 = vrot.lane.b32.xlu0 %v713, 56
        %v983 = vpop.permute.xlu0 %982
        %984 = vrot.lane.b32.xlu0 %v714, 56
        %v985 = vpop.permute.xlu0 %984
        %986 = vrot.lane.b32.xlu0 %v715, 56
        %v987 = vpop.permute.xlu0 %986
        %vm988 = vcmask 457728
        %v989 = vsel %vm988, %v983, %v985
        %v990 = vsel %vm988, %v985, %v987
        %v991 = vsel %vm988, %v987, %v980
        %v996 = vsel %vm988, %v980, %v983
        %s997 = scalar_lea.vmem [#allocation6], 7
        %v998 = vld [vmem:[%s997] ss:$8 sm:$0xf]
        %v1000 = vperm.slane %v998, 0
        %v1001 = vperm.slane %v998, 1
        %v1002 = vperm.slane %v998, 2
        %v1003 = vperm.slane %v998, 3
        %v1008 = vmul.f32 %v996, %v1000
        %v1009 = vmul.f32 %v989, %v1001
        %v1010 = vmul.f32 %v990, %v1002
        %v1011 = vmul.f32 %v991, %v1003
        %1012 = vst [vmem:[#allocation2 + $0xe0] sm:$0xff] %v1008
        %1013 = vst [vmem:[#allocation2 + $0xe8] sm:$0xff] %v1009
        %1014 = vst [vmem:[#allocation2 + $0xf0] sm:$0xff] %v1010
        %1015 = vst [vmem:[#allocation2 + $0xf8] sm:$0xff] %v1011
        %1016 = vrot.lane.b32.xlu0 %v716, 55
        %v1017 = vpop.permute.xlu0 %1016
        %1019 = vrot.lane.b32.xlu0 %v713, 55
        %v1020 = vpop.permute.xlu0 %1019
        %1021 = vrot.lane.b32.xlu0 %v714, 55
        %v1022 = vpop.permute.xlu0 %1021
        %1023 = vrot.lane.b32.xlu0 %v715, 55
        %v1024 = vpop.permute.xlu0 %1023
        %vm1025 = vcmask 449536
        %v1026 = vsel %vm1025, %v1020, %v1022
        %v1027 = vsel %vm1025, %v1022, %v1024
        %v1028 = vsel %vm1025, %v1024, %v1017
        %v1033 = vsel %vm1025, %v1017, %v1020
        %s1034 = scalar_lea.vmem [#allocation6], 32
        %v1035 = vld [vmem:[%s1034] ss:$8 sm:$0xf]
        %v1037 = vperm.slane %v1035, 0
        %v1038 = vperm.slane %v1035, 1
        %v1039 = vperm.slane %v1035, 2
        %v1040 = vperm.slane %v1035, 3
        %v1045 = vmul.f32 %v1033, %v1037
        %v1046 = vmul.f32 %v1026, %v1038
        %v1047 = vmul.f32 %v1027, %v1039
        %v1048 = vmul.f32 %v1028, %v1040
        %1049 = vst [vmem:[#allocation2 + $0x100] sm:$0xff] %v1045
        %1050 = vst [vmem:[#allocation2 + $0x108] sm:$0xff] %v1046
        %1051 = vst [vmem:[#allocation2 + $0x110] sm:$0xff] %v1047
        %1052 = vst [vmem:[#allocation2 + $0x118] sm:$0xff] %v1048
        %v1053 = vld [vmem:[#allocation8] sm:$0xff]
        %v1054 = vld [vmem:[#allocation8 + $0x8] sm:$0xff]
        %v1055 = vld [vmem:[#allocation2] sm:$0xff]
        %v1056 = vld [vmem:[#allocation2 + $0x8] sm:$0xff]
        %v1057 = vld [vmem:[#allocation2 + $0x10] sm:$0xff]
        %v1058 = vld [vmem:[#allocation2 + $0x18] sm:$0xff]
        %v1059 = vld [vmem:[#allocation2 + $0x20] sm:$0xff]
        %v1060 = vld [vmem:[#allocation2 + $0x28] sm:$0xff]
        %v1061 = vld [vmem:[#allocation2 + $0x30] sm:$0xff]
        %v1062 = vld [vmem:[#allocation2 + $0x38] sm:$0xff]
        %v1063 = vld [vmem:[#allocation2 + $0x40] sm:$0xff]
        %v1064 = vld [vmem:[#allocation2 + $0x48] sm:$0xff]
        %v1065 = vld [vmem:[#allocation2 + $0x50] sm:$0xff]
        %v1066 = vld [vmem:[#allocation2 + $0x58] sm:$0xff]
        %v1067 = vld [vmem:[#allocation2 + $0x60] sm:$0xff]
        %v1068 = vld [vmem:[#allocation2 + $0x68] sm:$0xff]
        %v1069 = vld [vmem:[#allocation2 + $0x70] sm:$0xff]
        %v1070 = vld [vmem:[#allocation2 + $0x78] sm:$0xff]
        %v1071 = vld [vmem:[#allocation2 + $0x80] sm:$0xff]
        %v1072 = vld [vmem:[#allocation2 + $0x88] sm:$0xff]
        %v1073 = vld [vmem:[#allocation2 + $0x90] sm:$0xff]
        %v1074 = vld [vmem:[#allocation2 + $0x98] sm:$0xff]
        %v1075 = vld [vmem:[#allocation2 + $0xa0] sm:$0xff]
        %v1076 = vld [vmem:[#allocation2 + $0xa8] sm:$0xff]
        %v1077 = vld [vmem:[#allocation2 + $0xb0] sm:$0xff]
        %v1078 = vld [vmem:[#allocation2 + $0xb8] sm:$0xff]
        %v1079 = vld [vmem:[#allocation2 + $0xc0] sm:$0xff]
        %v1080 = vld [vmem:[#allocation2 + $0xc8] sm:$0xff]
        %v1081 = vld [vmem:[#allocation2 + $0xd0] sm:$0xff]
        %v1082 = vld [vmem:[#allocation2 + $0xd8] sm:$0xff]
        %v1083 = vld [vmem:[#allocation2 + $0xe0] sm:$0xff]
        %v1084 = vld [vmem:[#allocation2 + $0xe8] sm:$0xff]
        %v1085 = vld [vmem:[#allocation2 + $0xf0] sm:$0xff]
        %v1086 = vld [vmem:[#allocation2 + $0xf8] sm:$0xff]
        %v1087 = vld [vmem:[#allocation2 + $0x100] sm:$0xff]
        %v1088 = vld [vmem:[#allocation2 + $0x108] sm:$0xff]
        %v1089 = vld [vmem:[#allocation2 + $0x110] sm:$0xff]
        %v1090 = vld [vmem:[#allocation2 + $0x118] sm:$0xff]
        %1091 = vrot.lane.b32.xlu0 %v716, 9
        %v1092 = vpop.permute.xlu0 %1091
        %1094 = vrot.lane.b32.xlu0 %v713, 9
        %v1095 = vpop.permute.xlu0 %1094
        %1096 = vrot.lane.b32.xlu0 %v714, 9
        %v1097 = vpop.permute.xlu0 %1096
        %1098 = vrot.lane.b32.xlu0 %v715, 9
        %v1099 = vpop.permute.xlu0 %1098
        %vm1100 = vcmask 72704
        %v1101 = vsel %vm1100, %v1095, %v1097
        %v1102 = vsel %vm1100, %v1097, %v1099
        %v1103 = vsel %vm1100, %v1099, %v1092
        %v1108 = vsel %vm1100, %v1092, %v1095
        %s1109 = scalar_lea.vmem [#allocation6], 33
        %v1110 = vld [vmem:[%s1109] ss:$8 sm:$0xf]
        %v1112 = vperm.slane %v1110, 0
        %v1113 = vperm.slane %v1110, 1
        %v1114 = vperm.slane %v1110, 2
        %v1115 = vperm.slane %v1110, 3
        %v1120 = vmul.f32 %v1108, %v1112
        %v1121 = vmul.f32 %v1101, %v1113
        %v1122 = vmul.f32 %v1102, %v1114
        %v1123 = vmul.f32 %v1103, %v1115
        %1124 = vst [vmem:[#allocation2] sm:$0xff] %v1120
        %1125 = vst [vmem:[#allocation2 + $0x8] sm:$0xff] %v1121
        %1126 = vst [vmem:[#allocation2 + $0x10] sm:$0xff] %v1122
        %1127 = vst [vmem:[#allocation2 + $0x18] sm:$0xff] %v1123
        %1128 = vrot.lane.b32.xlu0 %v716, 8
        %v1129 = vpop.permute.xlu0 %1128
        %1131 = vrot.lane.b32.xlu0 %v713, 8
        %v1132 = vpop.permute.xlu0 %1131
        %1133 = vrot.lane.b32.xlu0 %v714, 8
        %v1134 = vpop.permute.xlu0 %1133
        %1135 = vrot.lane.b32.xlu0 %v715, 8
        %v1136 = vpop.permute.xlu0 %1135
        %v1137 = vsel %vm616, %v1132, %v1134
        %v1138 = vsel %vm616, %v1134, %v1136
        %v1139 = vsel %vm616, %v1136, %v1129
        %v1144 = vsel %vm616, %v1129, %v1132
        %s1145 = scalar_lea.vmem [#allocation6], 34
        %v1146 = vld [vmem:[%s1145] ss:$8 sm:$0xf]
        %v1148 = vperm.slane %v1146, 0
        %v1149 = vperm.slane %v1146, 1
        %v1150 = vperm.slane %v1146, 2
        %v1151 = vperm.slane %v1146, 3
        %v1156 = vmul.f32 %v1144, %v1148
        %v1157 = vmul.f32 %v1137, %v1149
        %v1158 = vmul.f32 %v1138, %v1150
        %v1159 = vmul.f32 %v1139, %v1151
        %1160 = vst [vmem:[#allocation2 + $0x20] sm:$0xff] %v1156
        %1161 = vst [vmem:[#allocation2 + $0x28] sm:$0xff] %v1157
        %1162 = vst [vmem:[#allocation2 + $0x30] sm:$0xff] %v1158
        %1163 = vst [vmem:[#allocation2 + $0x38] sm:$0xff] %v1159
        %1164 = vrot.lane.b32.xlu0 %v716, 7
        %v1165 = vpop.permute.xlu0 %1164
        %1167 = vrot.lane.b32.xlu0 %v713, 7
        %v1168 = vpop.permute.xlu0 %1167
        %1169 = vrot.lane.b32.xlu0 %v714, 7
        %v1170 = vpop.permute.xlu0 %1169
        %1171 = vrot.lane.b32.xlu0 %v715, 7
        %v1172 = vpop.permute.xlu0 %1171
        %vm1173 = vcmask 56320
        %v1174 = vsel %vm1173, %v1168, %v1170
        %v1175 = vsel %vm1173, %v1170, %v1172
        %v1176 = vsel %vm1173, %v1172, %v1165
        %v1181 = vsel %vm1173, %v1165, %v1168
        %s1182 = scalar_lea.vmem [#allocation6], 35
        %v1183 = vld [vmem:[%s1182] ss:$8 sm:$0xf]
        %v1185 = vperm.slane %v1183, 0
        %v1186 = vperm.slane %v1183, 1
        %v1187 = vperm.slane %v1183, 2
        %v1188 = vperm.slane %v1183, 3
        %v1193 = vmul.f32 %v1181, %v1185
        %v1194 = vmul.f32 %v1174, %v1186
        %v1195 = vmul.f32 %v1175, %v1187
        %v1196 = vmul.f32 %v1176, %v1188
        %1197 = vst [vmem:[#allocation2 + $0x40] sm:$0xff] %v1193
        %1198 = vst [vmem:[#allocation2 + $0x48] sm:$0xff] %v1194
        %1199 = vst [vmem:[#allocation2 + $0x50] sm:$0xff] %v1195
        %1200 = vst [vmem:[#allocation2 + $0x58] sm:$0xff] %v1196
        %1201 = vrot.lane.b32.xlu0 %v716, 1
        %v1202 = vpop.permute.xlu0 %1201
        %1204 = vrot.lane.b32.xlu0 %v713, 1
        %v1205 = vpop.permute.xlu0 %1204
        %1206 = vrot.lane.b32.xlu0 %v714, 1
        %v1207 = vpop.permute.xlu0 %1206
        %1208 = vrot.lane.b32.xlu0 %v715, 1
        %v1209 = vpop.permute.xlu0 %1208
        %vm1210 = vcmask 7168
        %v1211 = vsel %vm1210, %v1205, %v1207
        %v1212 = vsel %vm1210, %v1207, %v1209
        %v1213 = vsel %vm1210, %v1209, %v1202
        %v1218 = vsel %vm1210, %v1202, %v1205
        %s1219 = scalar_lea.vmem [#allocation6], 36
        %v1220 = vld [vmem:[%s1219] ss:$8 sm:$0xf]
        %v1222 = vperm.slane %v1220, 0
        %v1223 = vperm.slane %v1220, 1
        %v1224 = vperm.slane %v1220, 2
        %v1225 = vperm.slane %v1220, 3
        %v1230 = vmul.f32 %v1218, %v1222
        %v1231 = vmul.f32 %v1211, %v1223
        %v1232 = vmul.f32 %v1212, %v1224
        %v1233 = vmul.f32 %v1213, %v1225
        %1234 = vst [vmem:[#allocation2 + $0x60] sm:$0xff] %v1230
        %1235 = vst [vmem:[#allocation2 + $0x68] sm:$0xff] %v1231
        %1236 = vst [vmem:[#allocation2 + $0x70] sm:$0xff] %v1232
        %1237 = vst [vmem:[#allocation2 + $0x78] sm:$0xff] %v1233
        %1238 = vst [vmem:[#allocation2 + $0x80] sm:$0xff] %v713
        %1239 = vst [vmem:[#allocation2 + $0x88] sm:$0xff] %v714
        %1240 = vst [vmem:[#allocation2 + $0x90] sm:$0xff] %v715
        %1241 = vst [vmem:[#allocation2 + $0x98] sm:$0xff] %v716
        %1242 = vrot.lane.b32.xlu0 %v713, 127
        %v1243 = vpop.permute.xlu0 %1242
        %1244 = vrot.lane.b32.xlu0 %v714, 127
        %v1245 = vpop.permute.xlu0 %1244
        %1246 = vrot.lane.b32.xlu0 %v715, 127
        %v1247 = vpop.permute.xlu0 %1246
        %1248 = vrot.lane.b32.xlu0 %v716, 127
        %v1249 = vpop.permute.xlu0 %1248
        %vm1250 = vcmask 1039360
        %v1251 = vsel %vm1250, %v1243, %v1245
        %v1252 = vsel %vm1250, %v1245, %v1247
        %v1253 = vsel %vm1250, %v1247, %v1249
        %v1259 = vsel %vm1250, %v1249, %v1243
        %s1260 = scalar_lea.vmem [#allocation6], 38
        %v1261 = vld [vmem:[%s1260] ss:$8 sm:$0xf]
        %v1263 = vperm.slane %v1261, 0
        %v1264 = vperm.slane %v1261, 1
        %v1265 = vperm.slane %v1261, 2
        %v1266 = vperm.slane %v1261, 3
        %v1271 = vmul.f32 %v1251, %v1263
        %v1272 = vmul.f32 %v1252, %v1264
        %v1273 = vmul.f32 %v1253, %v1265
        %v1274 = vmul.f32 %v1259, %v1266
        %1275 = vst [vmem:[#allocation2 + $0xa0] sm:$0xff] %v1271
        %1276 = vst [vmem:[#allocation2 + $0xa8] sm:$0xff] %v1272
        %1277 = vst [vmem:[#allocation2 + $0xb0] sm:$0xff] %v1273
        %1278 = vst [vmem:[#allocation2 + $0xb8] sm:$0xff] %v1274
        %1279 = vrot.lane.b32.xlu0 %v713, 121
        %v1280 = vpop.permute.xlu0 %1279
        %1281 = vrot.lane.b32.xlu0 %v714, 121
        %v1282 = vpop.permute.xlu0 %1281
        %1283 = vrot.lane.b32.xlu0 %v715, 121
        %v1284 = vpop.permute.xlu0 %1283
        %1285 = vrot.lane.b32.xlu0 %v716, 121
        %v1286 = vpop.permute.xlu0 %1285
        %vm1287 = vcmask 990208
        %v1288 = vsel %vm1287, %v1280, %v1282
        %v1289 = vsel %vm1287, %v1282, %v1284
        %v1290 = vsel %vm1287, %v1284, %v1286
        %v1296 = vsel %vm1287, %v1286, %v1280
        %s1297 = scalar_lea.vmem [#allocation6], 39
        %v1298 = vld [vmem:[%s1297] ss:$8 sm:$0xf]
        %v1300 = vperm.slane %v1298, 0
        %v1301 = vperm.slane %v1298, 1
        %v1302 = vperm.slane %v1298, 2
        %v1303 = vperm.slane %v1298, 3
        %v1308 = vmul.f32 %v1288, %v1300
        %v1309 = vmul.f32 %v1289, %v1301
        %v1310 = vmul.f32 %v1290, %v1302
        %v1311 = vmul.f32 %v1296, %v1303
        %1312 = vst [vmem:[#allocation2 + $0xc0] sm:$0xff] %v1308
        %1313 = vst [vmem:[#allocation2 + $0xc8] sm:$0xff] %v1309
        %1314 = vst [vmem:[#allocation2 + $0xd0] sm:$0xff] %v1310
        %1315 = vst [vmem:[#allocation2 + $0xd8] sm:$0xff] %v1311
        %1316 = vrot.lane.b32.xlu0 %v713, 120
        %v1317 = vpop.permute.xlu0 %1316
        %1318 = vrot.lane.b32.xlu0 %v714, 120
        %v1319 = vpop.permute.xlu0 %1318
        %1320 = vrot.lane.b32.xlu0 %v715, 120
        %v1321 = vpop.permute.xlu0 %1320
        %1322 = vrot.lane.b32.xlu0 %v716, 120
        %v1323 = vpop.permute.xlu0 %1322
        %vm1324 = vcmask 982016
        %v1325 = vsel %vm1324, %v1317, %v1319
        %v1326 = vsel %vm1324, %v1319, %v1321
        %v1327 = vsel %vm1324, %v1321, %v1323
        %v1333 = vsel %vm1324, %v1323, %v1317
        %s1334 = scalar_lea.vmem [#allocation6], 64
        %v1335 = vld [vmem:[%s1334] ss:$8 sm:$0xf]
        %v1337 = vperm.slane %v1335, 0
        %v1338 = vperm.slane %v1335, 1
        %v1339 = vperm.slane %v1335, 2
        %v1340 = vperm.slane %v1335, 3
        %v1345 = vmul.f32 %v1325, %v1337
        %v1346 = vmul.f32 %v1326, %v1338
        %v1347 = vmul.f32 %v1327, %v1339
        %v1348 = vmul.f32 %v1333, %v1340
        %1349 = vst [vmem:[#allocation2 + $0xe0] sm:$0xff] %v1345
        %1350 = vst [vmem:[#allocation2 + $0xe8] sm:$0xff] %v1346
        %1351 = vst [vmem:[#allocation2 + $0xf0] sm:$0xff] %v1347
        %1352 = vst [vmem:[#allocation2 + $0xf8] sm:$0xff] %v1348
        %1353 = vrot.lane.b32.xlu0 %v713, 119
        %v1354 = vpop.permute.xlu0 %1353
        %1355 = vrot.lane.b32.xlu0 %v714, 119
        %v1356 = vpop.permute.xlu0 %1355
        %1357 = vrot.lane.b32.xlu0 %v715, 119
        %v1358 = vpop.permute.xlu0 %1357
        %1359 = vrot.lane.b32.xlu0 %v716, 119
        %v1360 = vpop.permute.xlu0 %1359
        %vm1361 = vcmask 973824
        %v1362 = vsel %vm1361, %v1354, %v1356
        %v1363 = vsel %vm1361, %v1356, %v1358
        %v1364 = vsel %vm1361, %v1358, %v1360
        %v1370 = vsel %vm1361, %v1360, %v1354
        %s1371 = scalar_lea.vmem [#allocation6], 65
        %v1372 = vld [vmem:[%s1371] ss:$8 sm:$0xf]
        %v1374 = vperm.slane %v1372, 0
        %v1375 = vperm.slane %v1372, 1
        %v1376 = vperm.slane %v1372, 2
        %v1377 = vperm.slane %v1372, 3
        %v1382 = vmul.f32 %v1362, %v1374
        %v1383 = vmul.f32 %v1363, %v1375
        %v1384 = vmul.f32 %v1364, %v1376
        %v1385 = vmul.f32 %v1370, %v1377
        %1386 = vst [vmem:[#allocation2 + $0x100] sm:$0xff] %v1382
        %1387 = vst [vmem:[#allocation2 + $0x108] sm:$0xff] %v1383
        %1388 = vst [vmem:[#allocation2 + $0x110] sm:$0xff] %v1384
        %1389 = vst [vmem:[#allocation2 + $0x118] sm:$0xff] %v1385
        %s1390 = scalar_lea.vmem [#allocation8], 16
        %v1391 = vld [vmem:[%s1390] sm:$0xff]
        %v1392 = vld [vmem:[%s1390 + $0x8] sm:$0xff]
        %v1393 = vld [vmem:[#allocation2] sm:$0xff]
        %v1394 = vld [vmem:[#allocation2 + $0x8] sm:$0xff]
        %v1395 = vld [vmem:[#allocation2 + $0x10] sm:$0xff]
        %v1396 = vld [vmem:[#allocation2 + $0x18] sm:$0xff]
        %v1397 = vld [vmem:[#allocation2 + $0x20] sm:$0xff]
        %v1398 = vld [vmem:[#allocation2 + $0x28] sm:$0xff]
        %v1399 = vld [vmem:[#allocation2 + $0x30] sm:$0xff]
        %v1400 = vld [vmem:[#allocation2 + $0x38] sm:$0xff]
        %v1401 = vld [vmem:[#allocation2 + $0x40] sm:$0xff]
        %v1402 = vld [vmem:[#allocation2 + $0x48] sm:$0xff]
        %v1403 = vld [vmem:[#allocation2 + $0x50] sm:$0xff]
        %v1404 = vld [vmem:[#allocation2 + $0x58] sm:$0xff]
        %v1405 = vld [vmem:[#allocation2 + $0x60] sm:$0xff]
        %v1406 = vld [vmem:[#allocation2 + $0x68] sm:$0xff]
        %v1407 = vld [vmem:[#allocation2 + $0x70] sm:$0xff]
        %v1408 = vld [vmem:[#allocation2 + $0x78] sm:$0xff]
        %v1409 = vld [vmem:[#allocation2 + $0x80] sm:$0xff]
        %v1410 = vld [vmem:[#allocation2 + $0x88] sm:$0xff]
        %v1411 = vld [vmem:[#allocation2 + $0x90] sm:$0xff]
        %v1412 = vld [vmem:[#allocation2 + $0x98] sm:$0xff]
        %v1413 = vld [vmem:[#allocation2 + $0xa0] sm:$0xff]
        %v1414 = vld [vmem:[#allocation2 + $0xa8] sm:$0xff]
        %v1415 = vld [vmem:[#allocation2 + $0xb0] sm:$0xff]
        %v1416 = vld [vmem:[#allocation2 + $0xb8] sm:$0xff]
        %v1417 = vld [vmem:[#allocation2 + $0xc0] sm:$0xff]
        %v1418 = vld [vmem:[#allocation2 + $0xc8] sm:$0xff]
        %v1419 = vld [vmem:[#allocation2 + $0xd0] sm:$0xff]
        %v1420 = vld [vmem:[#allocation2 + $0xd8] sm:$0xff]
        %v1421 = vld [vmem:[#allocation2 + $0xe0] sm:$0xff]
        %v1422 = vld [vmem:[#allocation2 + $0xe8] sm:$0xff]
        %v1423 = vld [vmem:[#allocation2 + $0xf0] sm:$0xff]
        %v1424 = vld [vmem:[#allocation2 + $0xf8] sm:$0xff]
        %v1425 = vld [vmem:[#allocation2 + $0x100] sm:$0xff]
        %v1426 = vld [vmem:[#allocation2 + $0x108] sm:$0xff]
        %v1427 = vld [vmem:[#allocation2 + $0x110] sm:$0xff]
        %v1428 = vld [vmem:[#allocation2 + $0x118] sm:$0xff]
        %v1430 = vsel %vm766, %v1391, 0
        %v1433 = vsel %vm766, %v1392, 0
        %1435 = vmatpush.msra.mxu0 0.0
        %1436 = vmatpush.msra.mxu0 0.0
        %1437 = vmatpush.msra.mxu0 0.0
        %1438 = vmatpush.msra.mxu0 0.0
        %1439 = vmatpush.msra.mxu0 0.0
        %1440 = vmatpush.msra.mxu0 0.0
        %1441 = vmatpush.msra.mxu0 0.0
        %1442 = vmatpush.msra.mxu0 %v1425
        %1443 = vmatpush.msra.mxu0 %v1421
        %1444 = vmatpush.msra.mxu0 %v1417
        %1445 = vmatpush.msra.mxu0 %v1413
        %1446 = vmatpush.msra.mxu0 %v1409
        %1447 = vmatpush.msra.mxu0 %v1405
        %1448 = vmatpush.msra.mxu0 %v1401
        %1449 = vmatpush.msra.mxu0 %v1397
        %1450 = vmatpush.msra.mxu0 %v1393
        %1451 = vmatmul.f32.gmra.mxu0 %v1430
        %v1452 = vpop.f32.mrf.mxu0
        %v1453 = vadd.f32 0.0, %v1452
        %1454 = vmatmul.f32.gmra.mxu0 %v1433
        %v1455 = vpop.f32.mrf.mxu0
        %v1456 = vadd.f32 0.0, %v1455
        %1457 = vdwg.mxu0
        %1458 = vmatpush.msra.mxu0 0.0
        %1459 = vmatpush.msra.mxu0 0.0
        %1460 = vmatpush.msra.mxu0 0.0
        %1461 = vmatpush.msra.mxu0 0.0
        %1462 = vmatpush.msra.mxu0 0.0
        %1463 = vmatpush.msra.mxu0 0.0
        %1464 = vmatpush.msra.mxu0 0.0
        %1465 = vmatpush.msra.mxu0 %v1426
        %1466 = vmatpush.msra.mxu0 %v1422
        %1467 = vmatpush.msra.mxu0 %v1418
        %1468 = vmatpush.msra.mxu0 %v1414
        %1469 = vmatpush.msra.mxu0 %v1410
        %1470 = vmatpush.msra.mxu0 %v1406
        %1471 = vmatpush.msra.mxu0 %v1402
        %1472 = vmatpush.msra.mxu0 %v1398
        %1473 = vmatpush.msra.mxu0 %v1394
        %1474 = vmatmul.f32.gmra.mxu0 %v1430
        %v1475 = vpop.f32.mrf.mxu0
        %v1476 = vadd.f32 0.0, %v1475
        %1477 = vmatmul.f32.gmra.mxu0 %v1433
        %v1478 = vpop.f32.mrf.mxu0
        %v1479 = vadd.f32 0.0, %v1478
        %1480 = vdwg.mxu0
        %1481 = vmatpush.msra.mxu0 0.0
        %1482 = vmatpush.msra.mxu0 0.0
        %1483 = vmatpush.msra.mxu0 0.0
        %1484 = vmatpush.msra.mxu0 0.0
        %1485 = vmatpush.msra.mxu0 0.0
        %1486 = vmatpush.msra.mxu0 0.0
        %1487 = vmatpush.msra.mxu0 0.0
        %1488 = vmatpush.msra.mxu0 %v1427
        %1489 = vmatpush.msra.mxu0 %v1423
        %1490 = vmatpush.msra.mxu0 %v1419
        %1491 = vmatpush.msra.mxu0 %v1415
        %1492 = vmatpush.msra.mxu0 %v1411
        %1493 = vmatpush.msra.mxu0 %v1407
        %1494 = vmatpush.msra.mxu0 %v1403
        %1495 = vmatpush.msra.mxu0 %v1399
        %1496 = vmatpush.msra.mxu0 %v1395
        %1497 = vmatmul.f32.gmra.mxu0 %v1430
        %v1498 = vpop.f32.mrf.mxu0
        %v1499 = vadd.f32 0.0, %v1498
        %1500 = vmatmul.f32.gmra.mxu0 %v1433
        %v1501 = vpop.f32.mrf.mxu0
        %v1502 = vadd.f32 0.0, %v1501
        %1503 = vdwg.mxu0
        %1504 = vmatpush.msra.mxu0 0.0
        %1505 = vmatpush.msra.mxu0 0.0
        %1506 = vmatpush.msra.mxu0 0.0
        %1507 = vmatpush.msra.mxu0 0.0
        %1508 = vmatpush.msra.mxu0 0.0
        %1509 = vmatpush.msra.mxu0 0.0
        %1510 = vmatpush.msra.mxu0 0.0
        %1511 = vmatpush.msra.mxu0 %v1428
        %1512 = vmatpush.msra.mxu0 %v1424
        %1513 = vmatpush.msra.mxu0 %v1420
        %1514 = vmatpush.msra.mxu0 %v1416
        %1515 = vmatpush.msra.mxu0 %v1412
        %1516 = vmatpush.msra.mxu0 %v1408
        %1517 = vmatpush.msra.mxu0 %v1404
        %1518 = vmatpush.msra.mxu0 %v1400
        %1519 = vmatpush.msra.mxu0 %v1396
        %1520 = vmatmul.f32.gmra.mxu0 %v1430
        %v1521 = vpop.f32.mrf.mxu0
        %v1522 = vadd.f32 0.0, %v1521
        %1523 = vmatmul.f32.gmra.mxu0 %v1433
        %v1524 = vpop.f32.mrf.mxu0
        %v1525 = vadd.f32 0.0, %v1524
        %1526 = vdwg.mxu0
        %v1528 = vsel %vm766, %v1053, 0
        %v1531 = vsel %vm766, %v1054, 0
        %1533 = vmatpush.msra.mxu0 0.0
        %1534 = vmatpush.msra.mxu0 0.0
        %1535 = vmatpush.msra.mxu0 0.0
        %1536 = vmatpush.msra.mxu0 0.0
        %1537 = vmatpush.msra.mxu0 0.0
        %1538 = vmatpush.msra.mxu0 0.0
        %1539 = vmatpush.msra.mxu0 0.0
        %1540 = vmatpush.msra.mxu0 %v1087
        %1541 = vmatpush.msra.mxu0 %v1083
        %1542 = vmatpush.msra.mxu0 %v1079
        %1543 = vmatpush.msra.mxu0 %v1075
        %1544 = vmatpush.msra.mxu0 %v1071
        %1545 = vmatpush.msra.mxu0 %v1067
        %1546 = vmatpush.msra.mxu0 %v1063
        %1547 = vmatpush.msra.mxu0 %v1059
        %1548 = vmatpush.msra.mxu0 %v1055
        %1549 = vmatmul.f32.gmra.mxu0 %v1528
        %v1550 = vpop.f32.mrf.mxu0
        %v1551 = vadd.f32 %v1453, %v1550
        %1552 = vmatmul.f32.gmra.mxu0 %v1531
        %v1553 = vpop.f32.mrf.mxu0
        %v1554 = vadd.f32 %v1456, %v1553
        %1555 = vdwg.mxu0
        %1556 = vmatpush.msra.mxu0 0.0
        %1557 = vmatpush.msra.mxu0 0.0
        %1558 = vmatpush.msra.mxu0 0.0
        %1559 = vmatpush.msra.mxu0 0.0
        %1560 = vmatpush.msra.mxu0 0.0
        %1561 = vmatpush.msra.mxu0 0.0
        %1562 = vmatpush.msra.mxu0 0.0
        %1563 = vmatpush.msra.mxu0 %v1088
        %1564 = vmatpush.msra.mxu0 %v1084
        %1565 = vmatpush.msra.mxu0 %v1080
        %1566 = vmatpush.msra.mxu0 %v1076
        %1567 = vmatpush.msra.mxu0 %v1072
        %1568 = vmatpush.msra.mxu0 %v1068
        %1569 = vmatpush.msra.mxu0 %v1064
        %1570 = vmatpush.msra.mxu0 %v1060
        %1571 = vmatpush.msra.mxu0 %v1056
        %1572 = vmatmul.f32.gmra.mxu0 %v1528
        %v1573 = vpop.f32.mrf.mxu0
        %v1574 = vadd.f32 %v1476, %v1573
        %1575 = vmatmul.f32.gmra.mxu0 %v1531
        %v1576 = vpop.f32.mrf.mxu0
        %v1577 = vadd.f32 %v1479, %v1576
        %1578 = vdwg.mxu0
        %1579 = vmatpush.msra.mxu0 0.0
        %1580 = vmatpush.msra.mxu0 0.0
        %1581 = vmatpush.msra.mxu0 0.0
        %1582 = vmatpush.msra.mxu0 0.0
        %1583 = vmatpush.msra.mxu0 0.0
        %1584 = vmatpush.msra.mxu0 0.0
        %1585 = vmatpush.msra.mxu0 0.0
        %1586 = vmatpush.msra.mxu0 %v1089
        %1587 = vmatpush.msra.mxu0 %v1085
        %1588 = vmatpush.msra.mxu0 %v1081
        %1589 = vmatpush.msra.mxu0 %v1077
        %1590 = vmatpush.msra.mxu0 %v1073
        %1591 = vmatpush.msra.mxu0 %v1069
        %1592 = vmatpush.msra.mxu0 %v1065
        %1593 = vmatpush.msra.mxu0 %v1061
        %1594 = vmatpush.msra.mxu0 %v1057
        %1595 = vmatmul.f32.gmra.mxu0 %v1528
        %v1596 = vpop.f32.mrf.mxu0
        %v1597 = vadd.f32 %v1499, %v1596
        %1598 = vmatmul.f32.gmra.mxu0 %v1531
        %v1599 = vpop.f32.mrf.mxu0
        %v1600 = vadd.f32 %v1502, %v1599
        %1601 = vdwg.mxu0
        %1602 = vmatpush.msra.mxu0 0.0
        %1603 = vmatpush.msra.mxu0 0.0
        %1604 = vmatpush.msra.mxu0 0.0
        %1605 = vmatpush.msra.mxu0 0.0
        %1606 = vmatpush.msra.mxu0 0.0
        %1607 = vmatpush.msra.mxu0 0.0
        %1608 = vmatpush.msra.mxu0 0.0
        %1609 = vmatpush.msra.mxu0 %v1090
        %1610 = vmatpush.msra.mxu0 %v1086
        %1611 = vmatpush.msra.mxu0 %v1082
        %1612 = vmatpush.msra.mxu0 %v1078
        %1613 = vmatpush.msra.mxu0 %v1074
        %1614 = vmatpush.msra.mxu0 %v1070
        %1615 = vmatpush.msra.mxu0 %v1066
        %1616 = vmatpush.msra.mxu0 %v1062
        %1617 = vmatpush.msra.mxu0 %v1058
        %1618 = vmatmul.f32.gmra.mxu0 %v1528
        %v1619 = vpop.f32.mrf.mxu0
        %v1620 = vadd.f32 %v1522, %v1619
        %1621 = vmatmul.f32.gmra.mxu0 %v1531
        %v1622 = vpop.f32.mrf.mxu0
        %v1623 = vadd.f32 %v1525, %v1622
        %1624 = vdwg.mxu0
        %s1625 = scalar_lea.vmem [#allocation6], 66
        %v1626 = vld [vmem:[%s1625] ss:$8 sm:$0xf]
        %v1628 = vperm.slane %v1626, 0
        %v1629 = vperm.slane %v1626, 1
        %v1630 = vperm.slane %v1626, 2
        %v1631 = vperm.slane %v1626, 3
        %v1636 = vmul.f32 %v731, %v1628
        %v1637 = vmul.f32 %v732, %v1629
        %v1638 = vmul.f32 %v733, %v1630
        %v1639 = vmul.f32 %v738, %v1631
        %1640 = vst [vmem:[#allocation2] sm:$0xff] %v1636
        %1641 = vst [vmem:[#allocation2 + $0x8] sm:$0xff] %v1637
        %1642 = vst [vmem:[#allocation2 + $0x10] sm:$0xff] %v1638
        %1643 = vst [vmem:[#allocation2 + $0x18] sm:$0xff] %v1639
        %s1644 = scalar_lea.vmem [#allocation6], 67
        %v1645 = vld [vmem:[%s1644] ss:$8 sm:$0xf]
        %v1647 = vperm.slane %v1645, 0
        %v1648 = vperm.slane %v1645, 1
        %v1649 = vperm.slane %v1645, 2
        %v1650 = vperm.slane %v1645, 3
        %v1655 = vmul.f32 %v767, %v1647
        %v1656 = vmul.f32 %v768, %v1648
        %v1657 = vmul.f32 %v769, %v1649
        %v1658 = vmul.f32 %v774, %v1650
        %1659 = vst [vmem:[#allocation2 + $0x20] sm:$0xff] %v1655
        %1660 = vst [vmem:[#allocation2 + $0x28] sm:$0xff] %v1656
        %1661 = vst [vmem:[#allocation2 + $0x30] sm:$0xff] %v1657
        %1662 = vst [vmem:[#allocation2 + $0x38] sm:$0xff] %v1658
        %s1663 = scalar_lea.vmem [#allocation6], 68
        %v1664 = vld [vmem:[%s1663] ss:$8 sm:$0xf]
        %v1666 = vperm.slane %v1664, 0
        %v1667 = vperm.slane %v1664, 1
        %v1668 = vperm.slane %v1664, 2
        %v1669 = vperm.slane %v1664, 3
        %v1674 = vmul.f32 %v804, %v1666
        %v1675 = vmul.f32 %v805, %v1667
        %v1676 = vmul.f32 %v806, %v1668
        %v1677 = vmul.f32 %v811, %v1669
        %1678 = vst [vmem:[#allocation2 + $0x40] sm:$0xff] %v1674
        %1679 = vst [vmem:[#allocation2 + $0x48] sm:$0xff] %v1675
        %1680 = vst [vmem:[#allocation2 + $0x50] sm:$0xff] %v1676
        %1681 = vst [vmem:[#allocation2 + $0x58] sm:$0xff] %v1677
        %s1682 = scalar_lea.vmem [#allocation6], 69
        %v1683 = vld [vmem:[%s1682] ss:$8 sm:$0xf]
        %v1685 = vperm.slane %v1683, 0
        %v1686 = vperm.slane %v1683, 1
        %v1687 = vperm.slane %v1683, 2
        %v1688 = vperm.slane %v1683, 3
        %v1693 = vmul.f32 %v841, %v1685
        %v1694 = vmul.f32 %v842, %v1686
        %v1695 = vmul.f32 %v843, %v1687
        %v1696 = vmul.f32 %v848, %v1688
        %1697 = vst [vmem:[#allocation2 + $0x60] sm:$0xff] %v1693
        %1698 = vst [vmem:[#allocation2 + $0x68] sm:$0xff] %v1694
        %1699 = vst [vmem:[#allocation2 + $0x70] sm:$0xff] %v1695
        %1700 = vst [vmem:[#allocation2 + $0x78] sm:$0xff] %v1696
        %s1701 = scalar_lea.vmem [#allocation6], 70
        %v1702 = vld [vmem:[%s1701] ss:$8 sm:$0xf]
        %v1704 = vperm.slane %v1702, 0
        %v1705 = vperm.slane %v1702, 1
        %v1706 = vperm.slane %v1702, 2
        %v1707 = vperm.slane %v1702, 3
        %v1712 = vmul.f32 %v878, %v1704
        %v1713 = vmul.f32 %v879, %v1705
        %v1714 = vmul.f32 %v880, %v1706
        %v1715 = vmul.f32 %v885, %v1707
        %1716 = vst [vmem:[#allocation2 + $0x80] sm:$0xff] %v1712
        %1717 = vst [vmem:[#allocation2 + $0x88] sm:$0xff] %v1713
        %1718 = vst [vmem:[#allocation2 + $0x90] sm:$0xff] %v1714
        %1719 = vst [vmem:[#allocation2 + $0x98] sm:$0xff] %v1715
        %s1720 = scalar_lea.vmem [#allocation6], 71
        %v1721 = vld [vmem:[%s1720] ss:$8 sm:$0xf]
        %v1723 = vperm.slane %v1721, 0
        %v1724 = vperm.slane %v1721, 1
        %v1725 = vperm.slane %v1721, 2
        %v1726 = vperm.slane %v1721, 3
        %v1731 = vmul.f32 %v915, %v1723
        %v1732 = vmul.f32 %v916, %v1724
        %v1733 = vmul.f32 %v917, %v1725
        %v1734 = vmul.f32 %v922, %v1726
        %1735 = vst [vmem:[#allocation2 + $0xa0] sm:$0xff] %v1731
        %1736 = vst [vmem:[#allocation2 + $0xa8] sm:$0xff] %v1732
        %1737 = vst [vmem:[#allocation2 + $0xb0] sm:$0xff] %v1733
        %1738 = vst [vmem:[#allocation2 + $0xb8] sm:$0xff] %v1734
        %s1739 = scalar_lea.vmem [#allocation6], 96
        %v1740 = vld [vmem:[%s1739] ss:$8 sm:$0xf]
        %v1742 = vperm.slane %v1740, 0
        %v1743 = vperm.slane %v1740, 1
        %v1744 = vperm.slane %v1740, 2
        %v1745 = vperm.slane %v1740, 3
        %v1750 = vmul.f32 %v952, %v1742
        %v1751 = vmul.f32 %v953, %v1743
        %v1752 = vmul.f32 %v954, %v1744
        %v1753 = vmul.f32 %v959, %v1745
        %1754 = vst [vmem:[#allocation2 + $0xc0] sm:$0xff] %v1750
        %1755 = vst [vmem:[#allocation2 + $0xc8] sm:$0xff] %v1751
        %1756 = vst [vmem:[#allocation2 + $0xd0] sm:$0xff] %v1752
        %1757 = vst [vmem:[#allocation2 + $0xd8] sm:$0xff] %v1753
        %s1758 = scalar_lea.vmem [#allocation6], 97
        %v1759 = vld [vmem:[%s1758] ss:$8 sm:$0xf]
        %v1761 = vperm.slane %v1759, 0
        %v1762 = vperm.slane %v1759, 1
        %v1763 = vperm.slane %v1759, 2
        %v1764 = vperm.slane %v1759, 3
        %v1769 = vmul.f32 %v989, %v1761
        %v1770 = vmul.f32 %v990, %v1762
        %v1771 = vmul.f32 %v991, %v1763
        %v1772 = vmul.f32 %v996, %v1764
        %1773 = vst [vmem:[#allocation2 + $0xe0] sm:$0xff] %v1769
        %1774 = vst [vmem:[#allocation2 + $0xe8] sm:$0xff] %v1770
        %1775 = vst [vmem:[#allocation2 + $0xf0] sm:$0xff] %v1771
        %1776 = vst [vmem:[#allocation2 + $0xf8] sm:$0xff] %v1772
        %s1777 = scalar_lea.vmem [#allocation6], 98
        %v1778 = vld [vmem:[%s1777] ss:$8 sm:$0xf]
        %v1780 = vperm.slane %v1778, 0
        %v1781 = vperm.slane %v1778, 1
        %v1782 = vperm.slane %v1778, 2
        %v1783 = vperm.slane %v1778, 3
        %v1788 = vmul.f32 %v1026, %v1780
        %v1789 = vmul.f32 %v1027, %v1781
        %v1790 = vmul.f32 %v1028, %v1782
        %v1791 = vmul.f32 %v1033, %v1783
        %1792 = vst [vmem:[#allocation2 + $0x100] sm:$0xff] %v1788
        %1793 = vst [vmem:[#allocation2 + $0x108] sm:$0xff] %v1789
        %1794 = vst [vmem:[#allocation2 + $0x110] sm:$0xff] %v1790
        %1795 = vst [vmem:[#allocation2 + $0x118] sm:$0xff] %v1791
        %s1796 = scalar_lea.vmem [#allocation8], 32
        %v1797 = vld [vmem:[%s1796] sm:$0xff]
        %v1798 = vld [vmem:[%s1796 + $0x8] sm:$0xff]
        %v1799 = vld [vmem:[#allocation2] sm:$0xff]
        %v1800 = vld [vmem:[#allocation2 + $0x8] sm:$0xff]
        %v1801 = vld [vmem:[#allocation2 + $0x10] sm:$0xff]
        %v1802 = vld [vmem:[#allocation2 + $0x18] sm:$0xff]
        %v1803 = vld [vmem:[#allocation2 + $0x20] sm:$0xff]
        %v1804 = vld [vmem:[#allocation2 + $0x28] sm:$0xff]
        %v1805 = vld [vmem:[#allocation2 + $0x30] sm:$0xff]
        %v1806 = vld [vmem:[#allocation2 + $0x38] sm:$0xff]
        %v1807 = vld [vmem:[#allocation2 + $0x40] sm:$0xff]
        %v1808 = vld [vmem:[#allocation2 + $0x48] sm:$0xff]
        %v1809 = vld [vmem:[#allocation2 + $0x50] sm:$0xff]
        %v1810 = vld [vmem:[#allocation2 + $0x58] sm:$0xff]
        %v1811 = vld [vmem:[#allocation2 + $0x60] sm:$0xff]
        %v1812 = vld [vmem:[#allocation2 + $0x68] sm:$0xff]
        %v1813 = vld [vmem:[#allocation2 + $0x70] sm:$0xff]
        %v1814 = vld [vmem:[#allocation2 + $0x78] sm:$0xff]
        %v1815 = vld [vmem:[#allocation2 + $0x80] sm:$0xff]
        %v1816 = vld [vmem:[#allocation2 + $0x88] sm:$0xff]
        %v1817 = vld [vmem:[#allocation2 + $0x90] sm:$0xff]
        %v1818 = vld [vmem:[#allocation2 + $0x98] sm:$0xff]
        %v1819 = vld [vmem:[#allocation2 + $0xa0] sm:$0xff]
        %v1820 = vld [vmem:[#allocation2 + $0xa8] sm:$0xff]
        %v1821 = vld [vmem:[#allocation2 + $0xb0] sm:$0xff]
        %v1822 = vld [vmem:[#allocation2 + $0xb8] sm:$0xff]
        %v1823 = vld [vmem:[#allocation2 + $0xc0] sm:$0xff]
        %v1824 = vld [vmem:[#allocation2 + $0xc8] sm:$0xff]
        %v1825 = vld [vmem:[#allocation2 + $0xd0] sm:$0xff]
        %v1826 = vld [vmem:[#allocation2 + $0xd8] sm:$0xff]
        %v1827 = vld [vmem:[#allocation2 + $0xe0] sm:$0xff]
        %v1828 = vld [vmem:[#allocation2 + $0xe8] sm:$0xff]
        %v1829 = vld [vmem:[#allocation2 + $0xf0] sm:$0xff]
        %v1830 = vld [vmem:[#allocation2 + $0xf8] sm:$0xff]
        %v1831 = vld [vmem:[#allocation2 + $0x100] sm:$0xff]
        %v1832 = vld [vmem:[#allocation2 + $0x108] sm:$0xff]
        %v1833 = vld [vmem:[#allocation2 + $0x110] sm:$0xff]
        %v1834 = vld [vmem:[#allocation2 + $0x118] sm:$0xff]
        %v1836 = vsel %vm766, %v1797, 0
        %v1839 = vsel %vm766, %v1798, 0
        %1841 = vmatpush.msra.mxu0 0.0
        %1842 = vmatpush.msra.mxu0 0.0
        %1843 = vmatpush.msra.mxu0 0.0
        %1844 = vmatpush.msra.mxu0 0.0
        %1845 = vmatpush.msra.mxu0 0.0
        %1846 = vmatpush.msra.mxu0 0.0
        %1847 = vmatpush.msra.mxu0 0.0
        %1848 = vmatpush.msra.mxu0 %v1831
        %1849 = vmatpush.msra.mxu0 %v1827
        %1850 = vmatpush.msra.mxu0 %v1823
        %1851 = vmatpush.msra.mxu0 %v1819
        %1852 = vmatpush.msra.mxu0 %v1815
        %1853 = vmatpush.msra.mxu0 %v1811
        %1854 = vmatpush.msra.mxu0 %v1807
        %1855 = vmatpush.msra.mxu0 %v1803
        %1856 = vmatpush.msra.mxu0 %v1799
        %1857 = vmatmul.f32.gmra.mxu0 %v1836
        %v1858 = vpop.f32.mrf.mxu0
        %v1859 = vadd.f32 0.0, %v1858
        %1860 = vmatmul.f32.gmra.mxu0 %v1839
        %v1861 = vpop.f32.mrf.mxu0
        %v1862 = vadd.f32 0.0, %v1861
        %1863 = vdwg.mxu0
        %1864 = vmatpush.msra.mxu0 0.0
        %1865 = vmatpush.msra.mxu0 0.0
        %1866 = vmatpush.msra.mxu0 0.0
        %1867 = vmatpush.msra.mxu0 0.0
        %1868 = vmatpush.msra.mxu0 0.0
        %1869 = vmatpush.msra.mxu0 0.0
        %1870 = vmatpush.msra.mxu0 0.0
        %1871 = vmatpush.msra.mxu0 %v1832
        %1872 = vmatpush.msra.mxu0 %v1828
        %1873 = vmatpush.msra.mxu0 %v1824
        %1874 = vmatpush.msra.mxu0 %v1820
        %1875 = vmatpush.msra.mxu0 %v1816
        %1876 = vmatpush.msra.mxu0 %v1812
        %1877 = vmatpush.msra.mxu0 %v1808
        %1878 = vmatpush.msra.mxu0 %v1804
        %1879 = vmatpush.msra.mxu0 %v1800
        %1880 = vmatmul.f32.gmra.mxu0 %v1836
        %v1881 = vpop.f32.mrf.mxu0
        %v1882 = vadd.f32 0.0, %v1881
        %1883 = vmatmul.f32.gmra.mxu0 %v1839
        %v1884 = vpop.f32.mrf.mxu0
        %v1885 = vadd.f32 0.0, %v1884
        %1886 = vdwg.mxu0
        %1887 = vmatpush.msra.mxu0 0.0
        %1888 = vmatpush.msra.mxu0 0.0
        %1889 = vmatpush.msra.mxu0 0.0
        %1890 = vmatpush.msra.mxu0 0.0
        %1891 = vmatpush.msra.mxu0 0.0
        %1892 = vmatpush.msra.mxu0 0.0
        %1893 = vmatpush.msra.mxu0 0.0
        %1894 = vmatpush.msra.mxu0 %v1833
        %1895 = vmatpush.msra.mxu0 %v1829
        %1896 = vmatpush.msra.mxu0 %v1825
        %1897 = vmatpush.msra.mxu0 %v1821
        %1898 = vmatpush.msra.mxu0 %v1817
        %1899 = vmatpush.msra.mxu0 %v1813
        %1900 = vmatpush.msra.mxu0 %v1809
        %1901 = vmatpush.msra.mxu0 %v1805
        %1902 = vmatpush.msra.mxu0 %v1801
        %1903 = vmatmul.f32.gmra.mxu0 %v1836
        %v1904 = vpop.f32.mrf.mxu0
        %v1905 = vadd.f32 0.0, %v1904
        %1906 = vmatmul.f32.gmra.mxu0 %v1839
        %v1907 = vpop.f32.mrf.mxu0
        %v1908 = vadd.f32 0.0, %v1907
        %1909 = vdwg.mxu0
        %1910 = vmatpush.msra.mxu0 0.0
        %1911 = vmatpush.msra.mxu0 0.0
        %1912 = vmatpush.msra.mxu0 0.0
        %1913 = vmatpush.msra.mxu0 0.0
        %1914 = vmatpush.msra.mxu0 0.0
        %1915 = vmatpush.msra.mxu0 0.0
        %1916 = vmatpush.msra.mxu0 0.0
        %1917 = vmatpush.msra.mxu0 %v1834
        %1918 = vmatpush.msra.mxu0 %v1830
        %1919 = vmatpush.msra.mxu0 %v1826
        %1920 = vmatpush.msra.mxu0 %v1822
        %1921 = vmatpush.msra.mxu0 %v1818
        %1922 = vmatpush.msra.mxu0 %v1814
        %1923 = vmatpush.msra.mxu0 %v1810
        %1924 = vmatpush.msra.mxu0 %v1806
        %1925 = vmatpush.msra.mxu0 %v1802
        %1926 = vmatmul.f32.gmra.mxu0 %v1836
        %v1927 = vpop.f32.mrf.mxu0
        %v1928 = vadd.f32 0.0, %v1927
        %1929 = vmatmul.f32.gmra.mxu0 %v1839
        %v1930 = vpop.f32.mrf.mxu0
        %v1931 = vadd.f32 0.0, %v1930
        %1932 = vdwg.mxu0
        %v1933 = vadd.f32 %v1551, %v1859
        %v1934 = vadd.f32 %v1574, %v1882
        %v1935 = vadd.f32 %v1597, %v1905
        %v1936 = vadd.f32 %v1620, %v1928
        %v1937 = vadd.f32 %v1554, %v1862
        %v1938 = vadd.f32 %v1577, %v1885
        %v1939 = vadd.f32 %v1600, %v1908
        %v1940 = vadd.f32 %v1623, %v1931
        %v1941 = vld [vmem:[%s6] sm:$0xff]
        %v1942 = vld [vmem:[%s6 + $0x8] sm:$0xff]
        %1944 = vset.pattern.permute.xlu0 0
        %1945 = vperm.xlu0 %1944, %v1941
        %v1946 = vpop.permute.xlu0 %1945
        %1949 = vset.pattern.permute.xlu0 0
        %1950 = vperm.xlu0 %1949, %v1942
        %v1951 = vpop.permute.xlu0 %1950
        %v1953 = vadd.f32 %v1933, %v1946
        %v1954 = vadd.f32 %v1934, %v1946
        %v1955 = vadd.f32 %v1935, %v1946
        %v1956 = vadd.f32 %v1936, %v1946
        %v1957 = vadd.f32 %v1937, %v1951
        %v1958 = vadd.f32 %v1938, %v1951
        %v1959 = vadd.f32 %v1939, %v1951
        %v1960 = vadd.f32 %v1940, %v1951
        %v1961 = vadd.f32 %v1953, %v1954
        %v1962 = vadd.f32 %v1961, %v1955
        %v1963 = vadd.f32 %v1962, %v1956
        %1964 = vadd.xlane.f32.xlu0 %v1963
        %v1965 = vpop.xlane.xlu0 %1964
        %v1966 = vadd.f32 %v1957, %v1958
        %v1967 = vadd.f32 %v1966, %v1959
        %v1968 = vadd.f32 %v1967, %v1960
        %1969 = vadd.xlane.f32.xlu0 %v1968
        %v1970 = vpop.xlane.xlu0 %1969
        %v1971 = vld [vmem:[%s9] sm:$0xff]
        %v1972 = vld [vmem:[%s9 + $0x8] sm:$0xff]
        %vm1973 = vcmask 130048
        %v1975 = vsel %vm1973, %v1971, 0
        %v1978 = vsel %vm1973, %v1972, 0
        %1980 = vmatpush.msra.mxu0 0.0
        %1981 = vmatpush.msra.mxu0 0.0
        %1982 = vmatpush.msra.mxu0 0.0
        %1983 = vmatpush.msra.mxu0 0.0
        %1984 = vmatpush.msra.mxu0 0.0
        %1985 = vmatpush.msra.mxu0 0.0
        %1986 = vmatpush.msra.mxu0 0.0
        %1987 = vmatpush.msra.mxu0 0.0
        %1988 = vmatpush.msra.mxu0 0.0
        %1989 = vmatpush.msra.mxu0 0.0
        %1990 = vmatpush.msra.mxu0 0.0
        %1991 = vmatpush.msra.mxu0 0.0
        %1992 = vmatpush.msra.mxu0 0.0
        %1993 = vmatpush.msra.mxu0 0.0
        %1994 = vmatpush.msra.mxu0 %v1970
        %1995 = vmatpush.msra.mxu0 %v1965
        %1996 = vmatmul.f32.gmra.mxu0 %v1975
        %v1997 = vpop.f32.mrf.mxu0
        %v1998 = vadd.f32 0.0, %v1997
        %1999 = vmatmul.f32.gmra.mxu0 %v1978
        %v2000 = vpop.f32.mrf.mxu0
        %v2001 = vadd.f32 0.0, %v2000
        %2002 = vdwg.mxu0
        %2004 = vset.pattern.permute.xlu0 0
        %2005 = vperm.xlu0 %2004, %v1998
        %v2006 = vpop.permute.xlu0 %2005
        %2009 = vset.pattern.permute.xlu0 0
        %2010 = vperm.xlu0 %2009, %v2001
        %v2011 = vpop.permute.xlu0 %2010
        %v2013 = vsub.f32 %v1953, %v2006
        %v2014 = vsub.f32 %v1954, %v2006
        %v2015 = vsub.f32 %v1955, %v2006
        %v2016 = vsub.f32 %v1956, %v2006
        %v2017 = vsub.f32 %v1957, %v2011
        %v2018 = vsub.f32 %v1958, %v2011
        %v2019 = vsub.f32 %v1959, %v2011
        %v2020 = vsub.f32 %v1960, %v2011
        %v2021 = vmul.f32 %v2013, %v2013
        %v2022 = vmul.f32 %v2014, %v2014
        %v2023 = vmul.f32 %v2015, %v2015
        %v2024 = vmul.f32 %v2016, %v2016
        %v2025 = vmul.f32 %v2017, %v2017
        %v2026 = vmul.f32 %v2018, %v2018
        %v2027 = vmul.f32 %v2019, %v2019
        %v2028 = vmul.f32 %v2020, %v2020
        %v2029 = vadd.f32 %v2021, %v2022
        %v2030 = vadd.f32 %v2029, %v2023
        %v2031 = vadd.f32 %v2030, %v2024
        %2032 = vadd.xlane.f32.xlu0 %v2031
        %v2033 = vpop.xlane.xlu0 %2032
        %v2034 = vadd.f32 %v2025, %v2026
        %v2035 = vadd.f32 %v2034, %v2027
        %v2036 = vadd.f32 %v2035, %v2028
        %2037 = vadd.xlane.f32.xlu0 %v2036
        %v2038 = vpop.xlane.xlu0 %2037
        %v2039 = vld [vmem:[%s7] sm:$0xff]
        %v2040 = vld [vmem:[%s7 + $0x8] sm:$0xff]
        %2041 = vmatpush.msra.mxu0 0.0
        %2042 = vmatpush.msra.mxu0 0.0
        %2043 = vmatpush.msra.mxu0 0.0
        %2044 = vmatpush.msra.mxu0 0.0
        %2045 = vmatpush.msra.mxu0 0.0
        %2046 = vmatpush.msra.mxu0 0.0
        %2047 = vmatpush.msra.mxu0 0.0
        %2048 = vmatpush.msra.mxu0 0.0
        %2049 = vmatpush.msra.mxu0 0.0
        %2050 = vmatpush.msra.mxu0 0.0
        %2051 = vmatpush.msra.mxu0 0.0
        %2052 = vmatpush.msra.mxu0 0.0
        %2053 = vmatpush.msra.mxu0 0.0
        %2054 = vmatpush.msra.mxu0 0.0
        %2055 = vmatpush.msra.mxu0 %v2038
        %2056 = vmatpush.msra.mxu0 %v2033
        %2057 = vmatmul.f32.gmra.mxu0 %v1975
        %v2058 = vpop.f32.mrf.mxu0
        %v2059 = vadd.f32 1e-05, %v2058
        %2060 = vmatmul.f32.gmra.mxu0 %v1978
        %v2061 = vpop.f32.mrf.mxu0
        %v2062 = vadd.f32 1e-05, %v2061
        %2063 = vdwg.mxu0
        %v2064 = vrsqrt.pop %v2059
        %v2065 = vmul.f32 %v2064, %v2059
        %v2066 = vmul.f32 %v2065, %v2064
        %v2067 = vmul.f32 0.5, %v2066
        %v2068 = vsub.f32 1.5, %v2067
        %v2069 = vmul.f32 %v2064, %v2068
        %vm2070 = vweird.f32 %v2059
        %vm2071 = vweird.f32 %v2064
        %vm2072 = vmor %vm2070, %vm2071
        %v2073 = vsel %vm2072, %v2064, %v2069
        %v2074 = vrsqrt.pop %v2062
        %v2075 = vmul.f32 %v2074, %v2062
        %v2076 = vmul.f32 %v2075, %v2074
        %v2077 = vmul.f32 0.5, %v2076
        %v2078 = vsub.f32 1.5, %v2077
        %v2079 = vmul.f32 %v2074, %v2078
        %vm2080 = vweird.f32 %v2062
        %vm2081 = vweird.f32 %v2074
        %vm2082 = vmor %vm2080, %vm2081
        %v2083 = vsel %vm2082, %v2074, %v2079
        %v2084 = vmul.f32 %v2039, %v2073
        %v2085 = vmul.f32 %v2040, %v2083
        %2087 = vset.pattern.permute.xlu0 0
        %2088 = vperm.xlu0 %2087, %v2084
        %v2089 = vpop.permute.xlu0 %2088
        %2092 = vset.pattern.permute.xlu0 0
        %2093 = vperm.xlu0 %2092, %v2085
        %v2094 = vpop.permute.xlu0 %2093
        %v2096 = vmul.f32 %v2013, %v2089
        %v2097 = vmul.f32 %v2014, %v2089
        %v2098 = vmul.f32 %v2015, %v2089
        %v2099 = vmul.f32 %v2016, %v2089
        %v2100 = vmul.f32 %v2017, %v2094
        %v2101 = vmul.f32 %v2018, %v2094
        %v2102 = vmul.f32 %v2019, %v2094
        %v2103 = vmul.f32 %v2020, %v2094
        %v2104 = vld [vmem:[%s8] sm:$0xff]
        %v2105 = vld [vmem:[%s8 + $0x8] sm:$0xff]
        %2107 = vset.pattern.permute.xlu0 0
        %2108 = vperm.xlu0 %2107, %v2104
        %v2109 = vpop.permute.xlu0 %2108
        %2112 = vset.pattern.permute.xlu0 0
        %2113 = vperm.xlu0 %2112, %v2105
        %v2114 = vpop.permute.xlu0 %2113
        %v2116 = vadd.f32 %v2096, %v2109
        %v2117 = vadd.f32 %v2097, %v2109
        %v2118 = vadd.f32 %v2098, %v2109
        %v2119 = vadd.f32 %v2099, %v2109
        %v2120 = vadd.f32 %v2100, %v2114
        %v2121 = vadd.f32 %v2101, %v2114
        %v2122 = vadd.f32 %v2102, %v2114
        %v2123 = vadd.f32 %v2103, %v2114
        %v2124 = vmul.f32 %v2116, 0.01
        %v2125 = vmul.f32 %v2117, 0.01
        %v2126 = vmul.f32 %v2118, 0.01
        %v2127 = vmul.f32 %v2119, 0.01
        %v2128 = vmul.f32 %v2120, 0.01
        %v2129 = vmul.f32 %v2121, 0.01
        %v2130 = vmul.f32 %v2122, 0.01
        %v2131 = vmul.f32 %v2123, 0.01
        %v2132 = vmax.f32 %v2116, %v2124
        %v2133 = vmax.f32 %v2117, %v2125
        %v2134 = vmax.f32 %v2118, %v2126
        %v2135 = vmax.f32 %v2119, %v2127
        %v2136 = vmax.f32 %v2120, %v2128
        %v2137 = vmax.f32 %v2121, %v2129
        %v2138 = vmax.f32 %v2122, %v2130
        %v2139 = vmax.f32 %v2123, %v2131
        %2142 = vrot.lane.b32.xlu0 %v2135, 73
        %v2143 = vpop.permute.xlu0 %2142
        %2144 = vrot.lane.b32.xlu0 %v2139, 73
        %v2145 = vpop.permute.xlu0 %2144
        %2154 = vrot.lane.b32.xlu0 %v2132, 73
        %v2155 = vpop.permute.xlu0 %2154
        %2156 = vrot.lane.b32.xlu0 %v2133, 73
        %v2157 = vpop.permute.xlu0 %2156
        %2158 = vrot.lane.b32.xlu0 %v2134, 73
        %v2159 = vpop.permute.xlu0 %2158
        %2160 = vrot.lane.b32.xlu0 %v2136, 73
        %v2161 = vpop.permute.xlu0 %2160
        %2162 = vrot.lane.b32.xlu0 %v2137, 73
        %v2163 = vpop.permute.xlu0 %2162
        %2164 = vrot.lane.b32.xlu0 %v2138, 73
        %v2165 = vpop.permute.xlu0 %2164
        %v2166 = vsel %vm730, %v2155, %v2157
        %v2167 = vsel %vm730, %v2157, %v2159
        %v2168 = vsel %vm730, %v2159, %v2143
        %v2169 = vsel %vm730, %v2161, %v2163
        %v2170 = vsel %vm730, %v2163, %v2165
        %v2171 = vsel %vm730, %v2165, %v2145
        %v2180 = vsel %vm730, %v2143, %v2155
        %v2181 = vsel %vm730, %v2145, %v2161
        %v2182 = vld [vmem:[#allocation6] ss:$8 sm:$0xf]
        %v2184 = vperm.slane %v2182, 0
        %v2185 = vperm.slane %v2182, 1
        %v2186 = vperm.slane %v2182, 2
        %v2187 = vperm.slane %v2182, 3
        %v2192 = vmul.f32 %v2180, %v2184
        %v2193 = vmul.f32 %v2166, %v2185
        %v2194 = vmul.f32 %v2167, %v2186
        %v2195 = vmul.f32 %v2168, %v2187
        %v2196 = vmul.f32 %v2181, %v2184
        %v2197 = vmul.f32 %v2169, %v2185
        %v2198 = vmul.f32 %v2170, %v2186
        %v2199 = vmul.f32 %v2171, %v2187
        %2200 = vst [vmem:[#allocation2] sm:$0xff] %v2192
        %2201 = vst [vmem:[#allocation2 + $0x8] sm:$0xff] %v2193
        %2202 = vst [vmem:[#allocation2 + $0x10] sm:$0xff] %v2194
        %2203 = vst [vmem:[#allocation2 + $0x18] sm:$0xff] %v2195
        %2204 = vst [vmem:[#allocation2 + $0x20] sm:$0xff] %v2196
        %2205 = vst [vmem:[#allocation2 + $0x28] sm:$0xff] %v2197
        %2206 = vst [vmem:[#allocation2 + $0x30] sm:$0xff] %v2198
        %2207 = vst [vmem:[#allocation2 + $0x38] sm:$0xff] %v2199
        %2208 = vrot.lane.b32.xlu0 %v2135, 72
        %v2209 = vpop.permute.xlu0 %2208
        %2210 = vrot.lane.b32.xlu0 %v2139, 72
        %v2211 = vpop.permute.xlu0 %2210
        %2214 = vrot.lane.b32.xlu0 %v2132, 72
        %v2215 = vpop.permute.xlu0 %2214
        %2216 = vrot.lane.b32.xlu0 %v2133, 72
        %v2217 = vpop.permute.xlu0 %2216
        %2218 = vrot.lane.b32.xlu0 %v2134, 72
        %v2219 = vpop.permute.xlu0 %2218
        %2220 = vrot.lane.b32.xlu0 %v2136, 72
        %v2221 = vpop.permute.xlu0 %2220
        %2222 = vrot.lane.b32.xlu0 %v2137, 72
        %v2223 = vpop.permute.xlu0 %2222
        %2224 = vrot.lane.b32.xlu0 %v2138, 72
        %v2225 = vpop.permute.xlu0 %2224
        %v2226 = vsel %vm766, %v2215, %v2217
        %v2227 = vsel %vm766, %v2217, %v2219
        %v2228 = vsel %vm766, %v2219, %v2209
        %v2229 = vsel %vm766, %v2221, %v2223
        %v2230 = vsel %vm766, %v2223, %v2225
        %v2231 = vsel %vm766, %v2225, %v2211
        %v2240 = vsel %vm766, %v2209, %v2215
        %v2241 = vsel %vm766, %v2211, %v2221
        %v2242 = vld [vmem:[%s775] ss:$8 sm:$0xf]
        %v2244 = vperm.slane %v2242, 0
        %v2245 = vperm.slane %v2242, 1
        %v2246 = vperm.slane %v2242, 2
        %v2247 = vperm.slane %v2242, 3
        %v2252 = vmul.f32 %v2240, %v2244
        %v2253 = vmul.f32 %v2226, %v2245
        %v2254 = vmul.f32 %v2227, %v2246
        %v2255 = vmul.f32 %v2228, %v2247
        %v2256 = vmul.f32 %v2241, %v2244
        %v2257 = vmul.f32 %v2229, %v2245
        %v2258 = vmul.f32 %v2230, %v2246
        %v2259 = vmul.f32 %v2231, %v2247
        %2260 = vst [vmem:[#allocation2 + $0x40] sm:$0xff] %v2252
        %2261 = vst [vmem:[#allocation2 + $0x48] sm:$0xff] %v2253
        %2262 = vst [vmem:[#allocation2 + $0x50] sm:$0xff] %v2254
        %2263 = vst [vmem:[#allocation2 + $0x58] sm:$0xff] %v2255
        %2264 = vst [vmem:[#allocation2 + $0x60] sm:$0xff] %v2256
        %2265 = vst [vmem:[#allocation2 + $0x68] sm:$0xff] %v2257
        %2266 = vst [vmem:[#allocation2 + $0x70] sm:$0xff] %v2258
        %2267 = vst [vmem:[#allocation2 + $0x78] sm:$0xff] %v2259
        %2268 = vrot.lane.b32.xlu0 %v2135, 71
        %v2269 = vpop.permute.xlu0 %2268
        %2270 = vrot.lane.b32.xlu0 %v2139, 71
        %v2271 = vpop.permute.xlu0 %2270
        %2274 = vrot.lane.b32.xlu0 %v2132, 71
        %v2275 = vpop.permute.xlu0 %2274
        %2276 = vrot.lane.b32.xlu0 %v2133, 71
        %v2277 = vpop.permute.xlu0 %2276
        %2278 = vrot.lane.b32.xlu0 %v2134, 71
        %v2279 = vpop.permute.xlu0 %2278
        %2280 = vrot.lane.b32.xlu0 %v2136, 71
        %v2281 = vpop.permute.xlu0 %2280
        %2282 = vrot.lane.b32.xlu0 %v2137, 71
        %v2283 = vpop.permute.xlu0 %2282
        %2284 = vrot.lane.b32.xlu0 %v2138, 71
        %v2285 = vpop.permute.xlu0 %2284
        %v2286 = vsel %vm803, %v2275, %v2277
        %v2287 = vsel %vm803, %v2277, %v2279
        %v2288 = vsel %vm803, %v2279, %v2269
        %v2289 = vsel %vm803, %v2281, %v2283
        %v2290 = vsel %vm803, %v2283, %v2285
        %v2291 = vsel %vm803, %v2285, %v2271
        %v2300 = vsel %vm803, %v2269, %v2275
        %v2301 = vsel %vm803, %v2271, %v2281
        %v2302 = vld [vmem:[%s812] ss:$8 sm:$0xf]
        %v2304 = vperm.slane %v2302, 0
        %v2305 = vperm.slane %v2302, 1
        %v2306 = vperm.slane %v2302, 2
        %v2307 = vperm.slane %v2302, 3
        %v2312 = vmul.f32 %v2300, %v2304
        %v2313 = vmul.f32 %v2286, %v2305
        %v2314 = vmul.f32 %v2287, %v2306
        %v2315 = vmul.f32 %v2288, %v2307
        %v2316 = vmul.f32 %v2301, %v2304
        %v2317 = vmul.f32 %v2289, %v2305
        %v2318 = vmul.f32 %v2290, %v2306
        %v2319 = vmul.f32 %v2291, %v2307
        %2320 = vst [vmem:[#allocation2 + $0x80] sm:$0xff] %v2312
        %2321 = vst [vmem:[#allocation2 + $0x88] sm:$0xff] %v2313
        %2322 = vst [vmem:[#allocation2 + $0x90] sm:$0xff] %v2314
        %2323 = vst [vmem:[#allocation2 + $0x98] sm:$0xff] %v2315
        %2324 = vst [vmem:[#allocation2 + $0xa0] sm:$0xff] %v2316
        %2325 = vst [vmem:[#allocation2 + $0xa8] sm:$0xff] %v2317
        %2326 = vst [vmem:[#allocation2 + $0xb0] sm:$0xff] %v2318
        %2327 = vst [vmem:[#allocation2 + $0xb8] sm:$0xff] %v2319
        %2328 = vrot.lane.b32.xlu0 %v2135, 65
        %v2329 = vpop.permute.xlu0 %2328
        %2330 = vrot.lane.b32.xlu0 %v2139, 65
        %v2331 = vpop.permute.xlu0 %2330
        %2334 = vrot.lane.b32.xlu0 %v2132, 65
        %v2335 = vpop.permute.xlu0 %2334
        %2336 = vrot.lane.b32.xlu0 %v2133, 65
        %v2337 = vpop.permute.xlu0 %2336
        %2338 = vrot.lane.b32.xlu0 %v2134, 65
        %v2339 = vpop.permute.xlu0 %2338
        %2340 = vrot.lane.b32.xlu0 %v2136, 65
        %v2341 = vpop.permute.xlu0 %2340
        %2342 = vrot.lane.b32.xlu0 %v2137, 65
        %v2343 = vpop.permute.xlu0 %2342
        %2344 = vrot.lane.b32.xlu0 %v2138, 65
        %v2345 = vpop.permute.xlu0 %2344
        %v2346 = vsel %vm840, %v2335, %v2337
        %v2347 = vsel %vm840, %v2337, %v2339
        %v2348 = vsel %vm840, %v2339, %v2329
        %v2349 = vsel %vm840, %v2341, %v2343
        %v2350 = vsel %vm840, %v2343, %v2345
        %v2351 = vsel %vm840, %v2345, %v2331
        %v2360 = vsel %vm840, %v2329, %v2335
        %v2361 = vsel %vm840, %v2331, %v2341
        %v2362 = vld [vmem:[%s849] ss:$8 sm:$0xf]
        %v2364 = vperm.slane %v2362, 0
        %v2365 = vperm.slane %v2362, 1
        %v2366 = vperm.slane %v2362, 2
        %v2367 = vperm.slane %v2362, 3
        %v2372 = vmul.f32 %v2360, %v2364
        %v2373 = vmul.f32 %v2346, %v2365
        %v2374 = vmul.f32 %v2347, %v2366
        %v2375 = vmul.f32 %v2348, %v2367
        %v2376 = vmul.f32 %v2361, %v2364
        %v2377 = vmul.f32 %v2349, %v2365
        %v2378 = vmul.f32 %v2350, %v2366
        %v2379 = vmul.f32 %v2351, %v2367
        %2380 = vst [vmem:[#allocation2 + $0xc0] sm:$0xff] %v2372
        %2381 = vst [vmem:[#allocation2 + $0xc8] sm:$0xff] %v2373
        %2382 = vst [vmem:[#allocation2 + $0xd0] sm:$0xff] %v2374
        %2383 = vst [vmem:[#allocation2 + $0xd8] sm:$0xff] %v2375
        %2384 = vst [vmem:[#allocation2 + $0xe0] sm:$0xff] %v2376
        %2385 = vst [vmem:[#allocation2 + $0xe8] sm:$0xff] %v2377
        %2386 = vst [vmem:[#allocation2 + $0xf0] sm:$0xff] %v2378
        %2387 = vst [vmem:[#allocation2 + $0xf8] sm:$0xff] %v2379
        %2388 = vrot.lane.b32.xlu0 %v2135, 64
        %v2389 = vpop.permute.xlu0 %2388
        %2390 = vrot.lane.b32.xlu0 %v2139, 64
        %v2391 = vpop.permute.xlu0 %2390
        %2394 = vrot.lane.b32.xlu0 %v2132, 64
        %v2395 = vpop.permute.xlu0 %2394
        %2396 = vrot.lane.b32.xlu0 %v2133, 64
        %v2397 = vpop.permute.xlu0 %2396
        %2398 = vrot.lane.b32.xlu0 %v2134, 64
        %v2399 = vpop.permute.xlu0 %2398
        %2400 = vrot.lane.b32.xlu0 %v2136, 64
        %v2401 = vpop.permute.xlu0 %2400
        %2402 = vrot.lane.b32.xlu0 %v2137, 64
        %v2403 = vpop.permute.xlu0 %2402
        %2404 = vrot.lane.b32.xlu0 %v2138, 64
        %v2405 = vpop.permute.xlu0 %2404
        %v2406 = vsel %vm877, %v2395, %v2397
        %v2407 = vsel %vm877, %v2397, %v2399
        %v2408 = vsel %vm877, %v2399, %v2389
        %v2409 = vsel %vm877, %v2401, %v2403
        %v2410 = vsel %vm877, %v2403, %v2405
        %v2411 = vsel %vm877, %v2405, %v2391
        %v2420 = vsel %vm877, %v2389, %v2395
        %v2421 = vsel %vm877, %v2391, %v2401
        %v2422 = vld [vmem:[%s886] ss:$8 sm:$0xf]
        %v2424 = vperm.slane %v2422, 0
        %v2425 = vperm.slane %v2422, 1
        %v2426 = vperm.slane %v2422, 2
        %v2427 = vperm.slane %v2422, 3
        %v2432 = vmul.f32 %v2420, %v2424
        %v2433 = vmul.f32 %v2406, %v2425
        %v2434 = vmul.f32 %v2407, %v2426
        %v2435 = vmul.f32 %v2408, %v2427
        %v2436 = vmul.f32 %v2421, %v2424
        %v2437 = vmul.f32 %v2409, %v2425
        %v2438 = vmul.f32 %v2410, %v2426
        %v2439 = vmul.f32 %v2411, %v2427
        %2440 = vst [vmem:[#allocation2 + $0x100] sm:$0xff] %v2432
        %2441 = vst [vmem:[#allocation2 + $0x108] sm:$0xff] %v2433
        %2442 = vst [vmem:[#allocation2 + $0x110] sm:$0xff] %v2434
        %2443 = vst [vmem:[#allocation2 + $0x118] sm:$0xff] %v2435
        %2444 = vst [vmem:[#allocation2 + $0x120] sm:$0xff] %v2436
        %2445 = vst [vmem:[#allocation2 + $0x128] sm:$0xff] %v2437
        %2446 = vst [vmem:[#allocation2 + $0x130] sm:$0xff] %v2438
        %2447 = vst [vmem:[#allocation2 + $0x138] sm:$0xff] %v2439
        %2448 = vrot.lane.b32.xlu0 %v2135, 63
        %v2449 = vpop.permute.xlu0 %2448
        %2450 = vrot.lane.b32.xlu0 %v2139, 63
        %v2451 = vpop.permute.xlu0 %2450
        %2454 = vrot.lane.b32.xlu0 %v2132, 63
        %v2455 = vpop.permute.xlu0 %2454
        %2456 = vrot.lane.b32.xlu0 %v2133, 63
        %v2457 = vpop.permute.xlu0 %2456
        %2458 = vrot.lane.b32.xlu0 %v2134, 63
        %v2459 = vpop.permute.xlu0 %2458
        %2460 = vrot.lane.b32.xlu0 %v2136, 63
        %v2461 = vpop.permute.xlu0 %2460
        %2462 = vrot.lane.b32.xlu0 %v2137, 63
        %v2463 = vpop.permute.xlu0 %2462
        %2464 = vrot.lane.b32.xlu0 %v2138, 63
        %v2465 = vpop.permute.xlu0 %2464
        %v2466 = vsel %vm914, %v2455, %v2457
        %v2467 = vsel %vm914, %v2457, %v2459
        %v2468 = vsel %vm914, %v2459, %v2449
        %v2469 = vsel %vm914, %v2461, %v2463
        %v2470 = vsel %vm914, %v2463, %v2465
        %v2471 = vsel %vm914, %v2465, %v2451
        %v2480 = vsel %vm914, %v2449, %v2455
        %v2481 = vsel %vm914, %v2451, %v2461
        %v2482 = vld [vmem:[%s923] ss:$8 sm:$0xf]
        %v2484 = vperm.slane %v2482, 0
        %v2485 = vperm.slane %v2482, 1
        %v2486 = vperm.slane %v2482, 2
        %v2487 = vperm.slane %v2482, 3
        %v2492 = vmul.f32 %v2480, %v2484
        %v2493 = vmul.f32 %v2466, %v2485
        %v2494 = vmul.f32 %v2467, %v2486
        %v2495 = vmul.f32 %v2468, %v2487
        %v2496 = vmul.f32 %v2481, %v2484
        %v2497 = vmul.f32 %v2469, %v2485
        %v2498 = vmul.f32 %v2470, %v2486
        %v2499 = vmul.f32 %v2471, %v2487
        %2500 = vst [vmem:[#allocation2 + $0x140] sm:$0xff] %v2492
        %2501 = vst [vmem:[#allocation2 + $0x148] sm:$0xff] %v2493
        %2502 = vst [vmem:[#allocation2 + $0x150] sm:$0xff] %v2494
        %2503 = vst [vmem:[#allocation2 + $0x158] sm:$0xff] %v2495
        %2504 = vst [vmem:[#allocation2 + $0x160] sm:$0xff] %v2496
        %2505 = vst [vmem:[#allocation2 + $0x168] sm:$0xff] %v2497
        %2506 = vst [vmem:[#allocation2 + $0x170] sm:$0xff] %v2498
        %2507 = vst [vmem:[#allocation2 + $0x178] sm:$0xff] %v2499
        %2508 = vrot.lane.b32.xlu0 %v2135, 57
        %v2509 = vpop.permute.xlu0 %2508
        %2510 = vrot.lane.b32.xlu0 %v2139, 57
        %v2511 = vpop.permute.xlu0 %2510
        %2514 = vrot.lane.b32.xlu0 %v2132, 57
        %v2515 = vpop.permute.xlu0 %2514
        %2516 = vrot.lane.b32.xlu0 %v2133, 57
        %v2517 = vpop.permute.xlu0 %2516
        %2518 = vrot.lane.b32.xlu0 %v2134, 57
        %v2519 = vpop.permute.xlu0 %2518
        %2520 = vrot.lane.b32.xlu0 %v2136, 57
        %v2521 = vpop.permute.xlu0 %2520
        %2522 = vrot.lane.b32.xlu0 %v2137, 57
        %v2523 = vpop.permute.xlu0 %2522
        %2524 = vrot.lane.b32.xlu0 %v2138, 57
        %v2525 = vpop.permute.xlu0 %2524
        %v2526 = vsel %vm951, %v2515, %v2517
        %v2527 = vsel %vm951, %v2517, %v2519
        %v2528 = vsel %vm951, %v2519, %v2509
        %v2529 = vsel %vm951, %v2521, %v2523
        %v2530 = vsel %vm951, %v2523, %v2525
        %v2531 = vsel %vm951, %v2525, %v2511
        %v2540 = vsel %vm951, %v2509, %v2515
        %v2541 = vsel %vm951, %v2511, %v2521
        %v2542 = vld [vmem:[%s960] ss:$8 sm:$0xf]
        %v2544 = vperm.slane %v2542, 0
        %v2545 = vperm.slane %v2542, 1
        %v2546 = vperm.slane %v2542, 2
        %v2547 = vperm.slane %v2542, 3
        %v2552 = vmul.f32 %v2540, %v2544
        %v2553 = vmul.f32 %v2526, %v2545
        %v2554 = vmul.f32 %v2527, %v2546
        %v2555 = vmul.f32 %v2528, %v2547
        %v2556 = vmul.f32 %v2541, %v2544
        %v2557 = vmul.f32 %v2529, %v2545
        %v2558 = vmul.f32 %v2530, %v2546
        %v2559 = vmul.f32 %v2531, %v2547
        %2560 = vst [vmem:[#allocation2 + $0x180] sm:$0xff] %v2552
        %2561 = vst [vmem:[#allocation2 + $0x188] sm:$0xff] %v2553
        %2562 = vst [vmem:[#allocation2 + $0x190] sm:$0xff] %v2554
        %2563 = vst [vmem:[#allocation2 + $0x198] sm:$0xff] %v2555
        %2564 = vst [vmem:[#allocation2 + $0x1a0] sm:$0xff] %v2556
        %2565 = vst [vmem:[#allocation2 + $0x1a8] sm:$0xff] %v2557
        %2566 = vst [vmem:[#allocation2 + $0x1b0] sm:$0xff] %v2558
        %2567 = vst [vmem:[#allocation2 + $0x1b8] sm:$0xff] %v2559
        %2568 = vrot.lane.b32.xlu0 %v2135, 56
        %v2569 = vpop.permute.xlu0 %2568
        %2570 = vrot.lane.b32.xlu0 %v2139, 56
        %v2571 = vpop.permute.xlu0 %2570
        %2574 = vrot.lane.b32.xlu0 %v2132, 56
        %v2575 = vpop.permute.xlu0 %2574
        %2576 = vrot.lane.b32.xlu0 %v2133, 56
        %v2577 = vpop.permute.xlu0 %2576
        %2578 = vrot.lane.b32.xlu0 %v2134, 56
        %v2579 = vpop.permute.xlu0 %2578
        %2580 = vrot.lane.b32.xlu0 %v2136, 56
        %v2581 = vpop.permute.xlu0 %2580
        %2582 = vrot.lane.b32.xlu0 %v2137, 56
        %v2583 = vpop.permute.xlu0 %2582
        %2584 = vrot.lane.b32.xlu0 %v2138, 56
        %v2585 = vpop.permute.xlu0 %2584
        %v2586 = vsel %vm988, %v2575, %v2577
        %v2587 = vsel %vm988, %v2577, %v2579
        %v2588 = vsel %vm988, %v2579, %v2569
        %v2589 = vsel %vm988, %v2581, %v2583
        %v2590 = vsel %vm988, %v2583, %v2585
        %v2591 = vsel %vm988, %v2585, %v2571
        %v2600 = vsel %vm988, %v2569, %v2575
        %v2601 = vsel %vm988, %v2571, %v2581
        %v2602 = vld [vmem:[%s997] ss:$8 sm:$0xf]
        %v2604 = vperm.slane %v2602, 0
        %v2605 = vperm.slane %v2602, 1
        %v2606 = vperm.slane %v2602, 2
        %v2607 = vperm.slane %v2602, 3
        %v2612 = vmul.f32 %v2600, %v2604
        %v2613 = vmul.f32 %v2586, %v2605
        %v2614 = vmul.f32 %v2587, %v2606
        %v2615 = vmul.f32 %v2588, %v2607
        %v2616 = vmul.f32 %v2601, %v2604
        %v2617 = vmul.f32 %v2589, %v2605
        %v2618 = vmul.f32 %v2590, %v2606
        %v2619 = vmul.f32 %v2591, %v2607
        %2620 = vst [vmem:[#allocation2 + $0x1c0] sm:$0xff] %v2612
        %2621 = vst [vmem:[#allocation2 + $0x1c8] sm:$0xff] %v2613
        %2622 = vst [vmem:[#allocation2 + $0x1d0] sm:$0xff] %v2614
        %2623 = vst [vmem:[#allocation2 + $0x1d8] sm:$0xff] %v2615
        %2624 = vst [vmem:[#allocation2 + $0x1e0] sm:$0xff] %v2616
        %2625 = vst [vmem:[#allocation2 + $0x1e8] sm:$0xff] %v2617
        %2626 = vst [vmem:[#allocation2 + $0x1f0] sm:$0xff] %v2618
        %2627 = vst [vmem:[#allocation2 + $0x1f8] sm:$0xff] %v2619
        %2628 = vrot.lane.b32.xlu0 %v2135, 55
        %v2629 = vpop.permute.xlu0 %2628
        %2630 = vrot.lane.b32.xlu0 %v2139, 55
        %v2631 = vpop.permute.xlu0 %2630
        %2634 = vrot.lane.b32.xlu0 %v2132, 55
        %v2635 = vpop.permute.xlu0 %2634
        %2636 = vrot.lane.b32.xlu0 %v2133, 55
        %v2637 = vpop.permute.xlu0 %2636
        %2638 = vrot.lane.b32.xlu0 %v2134, 55
        %v2639 = vpop.permute.xlu0 %2638
        %2640 = vrot.lane.b32.xlu0 %v2136, 55
        %v2641 = vpop.permute.xlu0 %2640
        %2642 = vrot.lane.b32.xlu0 %v2137, 55
        %v2643 = vpop.permute.xlu0 %2642
        %2644 = vrot.lane.b32.xlu0 %v2138, 55
        %v2645 = vpop.permute.xlu0 %2644
        %v2646 = vsel %vm1025, %v2635, %v2637
        %v2647 = vsel %vm1025, %v2637, %v2639
        %v2648 = vsel %vm1025, %v2639, %v2629
        %v2649 = vsel %vm1025, %v2641, %v2643
        %v2650 = vsel %vm1025, %v2643, %v2645
        %v2651 = vsel %vm1025, %v2645, %v2631
        %v2660 = vsel %vm1025, %v2629, %v2635
        %v2661 = vsel %vm1025, %v2631, %v2641
        %v2662 = vld [vmem:[%s1034] ss:$8 sm:$0xf]
        %v2664 = vperm.slane %v2662, 0
        %v2665 = vperm.slane %v2662, 1
        %v2666 = vperm.slane %v2662, 2
        %v2667 = vperm.slane %v2662, 3
        %v2672 = vmul.f32 %v2660, %v2664
        %v2673 = vmul.f32 %v2646, %v2665
        %v2674 = vmul.f32 %v2647, %v2666
        %v2675 = vmul.f32 %v2648, %v2667
        %v2676 = vmul.f32 %v2661, %v2664
        %v2677 = vmul.f32 %v2649, %v2665
        %v2678 = vmul.f32 %v2650, %v2666
        %v2679 = vmul.f32 %v2651, %v2667
        %2680 = vst [vmem:[#allocation2 + $0x200] sm:$0xff] %v2672
        %2681 = vst [vmem:[#allocation2 + $0x208] sm:$0xff] %v2673
        %2682 = vst [vmem:[#allocation2 + $0x210] sm:$0xff] %v2674
        %2683 = vst [vmem:[#allocation2 + $0x218] sm:$0xff] %v2675
        %2684 = vst [vmem:[#allocation2 + $0x220] sm:$0xff] %v2676
        %2685 = vst [vmem:[#allocation2 + $0x228] sm:$0xff] %v2677
        %2686 = vst [vmem:[#allocation2 + $0x230] sm:$0xff] %v2678
        %2687 = vst [vmem:[#allocation2 + $0x238] sm:$0xff] %v2679
        %v2688 = vld [vmem:[#allocation9] sm:$0xff]
        %v2689 = vld [vmem:[#allocation9 + $0x8] sm:$0xff]
        %v2690 = vld [vmem:[#allocation9 + $0x10] sm:$0xff]
        %v2691 = vld [vmem:[#allocation9 + $0x18] sm:$0xff]
        %v2692 = vld [vmem:[#allocation2] sm:$0xff]
        %v2693 = vld [vmem:[#allocation2 + $0x8] sm:$0xff]
        %v2694 = vld [vmem:[#allocation2 + $0x10] sm:$0xff]
        %v2695 = vld [vmem:[#allocation2 + $0x18] sm:$0xff]
        %v2696 = vld [vmem:[#allocation2 + $0x20] sm:$0xff]
        %v2697 = vld [vmem:[#allocation2 + $0x28] sm:$0xff]
        %v2698 = vld [vmem:[#allocation2 + $0x30] sm:$0xff]
        %v2699 = vld [vmem:[#allocation2 + $0x38] sm:$0xff]
        %v2700 = vld [vmem:[#allocation2 + $0x40] sm:$0xff]
        %v2701 = vld [vmem:[#allocation2 + $0x48] sm:$0xff]
        %v2702 = vld [vmem:[#allocation2 + $0x50] sm:$0xff]
        %v2703 = vld [vmem:[#allocation2 + $0x58] sm:$0xff]
        %v2704 = vld [vmem:[#allocation2 + $0x60] sm:$0xff]
        %v2705 = vld [vmem:[#allocation2 + $0x68] sm:$0xff]
        %v2706 = vld [vmem:[#allocation2 + $0x70] sm:$0xff]
        %v2707 = vld [vmem:[#allocation2 + $0x78] sm:$0xff]
        %v2708 = vld [vmem:[#allocation2 + $0x80] sm:$0xff]
        %v2709 = vld [vmem:[#allocation2 + $0x88] sm:$0xff]
        %v2710 = vld [vmem:[#allocation2 + $0x90] sm:$0xff]
        %v2711 = vld [vmem:[#allocation2 + $0x98] sm:$0xff]
        %v2712 = vld [vmem:[#allocation2 + $0xa0] sm:$0xff]
        %v2713 = vld [vmem:[#allocation2 + $0xa8] sm:$0xff]
        %v2714 = vld [vmem:[#allocation2 + $0xb0] sm:$0xff]
        %v2715 = vld [vmem:[#allocation2 + $0xb8] sm:$0xff]
        %v2716 = vld [vmem:[#allocation2 + $0xc0] sm:$0xff]
        %v2717 = vld [vmem:[#allocation2 + $0xc8] sm:$0xff]
        %v2718 = vld [vmem:[#allocation2 + $0xd0] sm:$0xff]
        %v2719 = vld [vmem:[#allocation2 + $0xd8] sm:$0xff]
        %v2720 = vld [vmem:[#allocation2 + $0xe0] sm:$0xff]
        %v2721 = vld [vmem:[#allocation2 + $0xe8] sm:$0xff]
        %v2722 = vld [vmem:[#allocation2 + $0xf0] sm:$0xff]
        %v2723 = vld [vmem:[#allocation2 + $0xf8] sm:$0xff]
        %v2724 = vld [vmem:[#allocation2 + $0x100] sm:$0xff]
        %v2725 = vld [vmem:[#allocation2 + $0x108] sm:$0xff]
        %v2726 = vld [vmem:[#allocation2 + $0x110] sm:$0xff]
        %v2727 = vld [vmem:[#allocation2 + $0x118] sm:$0xff]
        %v2728 = vld [vmem:[#allocation2 + $0x120] sm:$0xff]
        %v2729 = vld [vmem:[#allocation2 + $0x128] sm:$0xff]
        %v2730 = vld [vmem:[#allocation2 + $0x130] sm:$0xff]
        %v2731 = vld [vmem:[#allocation2 + $0x138] sm:$0xff]
        %v2732 = vld [vmem:[#allocation2 + $0x140] sm:$0xff]
        %v2733 = vld [vmem:[#allocation2 + $0x148] sm:$0xff]
        %v2734 = vld [vmem:[#allocation2 + $0x150] sm:$0xff]
        %v2735 = vld [vmem:[#allocation2 + $0x158] sm:$0xff]
        %v2736 = vld [vmem:[#allocation2 + $0x160] sm:$0xff]
        %v2737 = vld [vmem:[#allocation2 + $0x168] sm:$0xff]
        %v2738 = vld [vmem:[#allocation2 + $0x170] sm:$0xff]
        %v2739 = vld [vmem:[#allocation2 + $0x178] sm:$0xff]
        %v2740 = vld [vmem:[#allocation2 + $0x180] sm:$0xff]
        %v2741 = vld [vmem:[#allocation2 + $0x188] sm:$0xff]
        %v2742 = vld [vmem:[#allocation2 + $0x190] sm:$0xff]
        %v2743 = vld [vmem:[#allocation2 + $0x198] sm:$0xff]
        %v2744 = vld [vmem:[#allocation2 + $0x1a0] sm:$0xff]
        %v2745 = vld [vmem:[#allocation2 + $0x1a8] sm:$0xff]
        %v2746 = vld [vmem:[#allocation2 + $0x1b0] sm:$0xff]
        %v2747 = vld [vmem:[#allocation2 + $0x1b8] sm:$0xff]
        %v2748 = vld [vmem:[#allocation2 + $0x1c0] sm:$0xff]
        %v2749 = vld [vmem:[#allocation2 + $0x1c8] sm:$0xff]
        %v2750 = vld [vmem:[#allocation2 + $0x1d0] sm:$0xff]
        %v2751 = vld [vmem:[#allocation2 + $0x1d8] sm:$0xff]
        %v2752 = vld [vmem:[#allocation2 + $0x1e0] sm:$0xff]
        %v2753 = vld [vmem:[#allocation2 + $0x1e8] sm:$0xff]
        %v2754 = vld [vmem:[#allocation2 + $0x1f0] sm:$0xff]
        %v2755 = vld [vmem:[#allocation2 + $0x1f8] sm:$0xff]
        %v2756 = vld [vmem:[#allocation2 + $0x200] sm:$0xff]
        %v2757 = vld [vmem:[#allocation2 + $0x208] sm:$0xff]
        %v2758 = vld [vmem:[#allocation2 + $0x210] sm:$0xff]
        %v2759 = vld [vmem:[#allocation2 + $0x218] sm:$0xff]
        %v2760 = vld [vmem:[#allocation2 + $0x220] sm:$0xff]
        %v2761 = vld [vmem:[#allocation2 + $0x228] sm:$0xff]
        %v2762 = vld [vmem:[#allocation2 + $0x230] sm:$0xff]
        %v2763 = vld [vmem:[#allocation2 + $0x238] sm:$0xff]
        %2764 = vrot.lane.b32.xlu0 %v2135, 9
        %v2765 = vpop.permute.xlu0 %2764
        %2766 = vrot.lane.b32.xlu0 %v2139, 9
        %v2767 = vpop.permute.xlu0 %2766
        %2770 = vrot.lane.b32.xlu0 %v2132, 9
        %v2771 = vpop.permute.xlu0 %2770
        %2772 = vrot.lane.b32.xlu0 %v2133, 9
        %v2773 = vpop.permute.xlu0 %2772
        %2774 = vrot.lane.b32.xlu0 %v2134, 9
        %v2775 = vpop.permute.xlu0 %2774
        %2776 = vrot.lane.b32.xlu0 %v2136, 9
        %v2777 = vpop.permute.xlu0 %2776
        %2778 = vrot.lane.b32.xlu0 %v2137, 9
        %v2779 = vpop.permute.xlu0 %2778
        %2780 = vrot.lane.b32.xlu0 %v2138, 9
        %v2781 = vpop.permute.xlu0 %2780
        %v2782 = vsel %vm1100, %v2771, %v2773
        %v2783 = vsel %vm1100, %v2773, %v2775
        %v2784 = vsel %vm1100, %v2775, %v2765
        %v2785 = vsel %vm1100, %v2777, %v2779
        %v2786 = vsel %vm1100, %v2779, %v2781
        %v2787 = vsel %vm1100, %v2781, %v2767
        %v2796 = vsel %vm1100, %v2765, %v2771
        %v2797 = vsel %vm1100, %v2767, %v2777
        %v2798 = vld [vmem:[%s1109] ss:$8 sm:$0xf]
        %v2800 = vperm.slane %v2798, 0
        %v2801 = vperm.slane %v2798, 1
        %v2802 = vperm.slane %v2798, 2
        %v2803 = vperm.slane %v2798, 3
        %v2808 = vmul.f32 %v2796, %v2800
        %v2809 = vmul.f32 %v2782, %v2801
        %v2810 = vmul.f32 %v2783, %v2802
        %v2811 = vmul.f32 %v2784, %v2803
        %v2812 = vmul.f32 %v2797, %v2800
        %v2813 = vmul.f32 %v2785, %v2801
        %v2814 = vmul.f32 %v2786, %v2802
        %v2815 = vmul.f32 %v2787, %v2803
        %2816 = vst [vmem:[#allocation2] sm:$0xff] %v2808
        %2817 = vst [vmem:[#allocation2 + $0x8] sm:$0xff] %v2809
        %2818 = vst [vmem:[#allocation2 + $0x10] sm:$0xff] %v2810
        %2819 = vst [vmem:[#allocation2 + $0x18] sm:$0xff] %v2811
        %2820 = vst [vmem:[#allocation2 + $0x20] sm:$0xff] %v2812
        %2821 = vst [vmem:[#allocation2 + $0x28] sm:$0xff] %v2813
        %2822 = vst [vmem:[#allocation2 + $0x30] sm:$0xff] %v2814
        %2823 = vst [vmem:[#allocation2 + $0x38] sm:$0xff] %v2815
        %2824 = vrot.lane.b32.xlu0 %v2135, 8
        %v2825 = vpop.permute.xlu0 %2824
        %2826 = vrot.lane.b32.xlu0 %v2139, 8
        %v2827 = vpop.permute.xlu0 %2826
        %2830 = vrot.lane.b32.xlu0 %v2132, 8
        %v2831 = vpop.permute.xlu0 %2830
        %2832 = vrot.lane.b32.xlu0 %v2133, 8
        %v2833 = vpop.permute.xlu0 %2832
        %2834 = vrot.lane.b32.xlu0 %v2134, 8
        %v2835 = vpop.permute.xlu0 %2834
        %2836 = vrot.lane.b32.xlu0 %v2136, 8
        %v2837 = vpop.permute.xlu0 %2836
        %2838 = vrot.lane.b32.xlu0 %v2137, 8
        %v2839 = vpop.permute.xlu0 %2838
        %2840 = vrot.lane.b32.xlu0 %v2138, 8
        %v2841 = vpop.permute.xlu0 %2840
        %v2842 = vsel %vm616, %v2831, %v2833
        %v2843 = vsel %vm616, %v2833, %v2835
        %v2844 = vsel %vm616, %v2835, %v2825
        %v2845 = vsel %vm616, %v2837, %v2839
        %v2846 = vsel %vm616, %v2839, %v2841
        %v2847 = vsel %vm616, %v2841, %v2827
        %v2856 = vsel %vm616, %v2825, %v2831
        %v2857 = vsel %vm616, %v2827, %v2837
        %v2858 = vld [vmem:[%s1145] ss:$8 sm:$0xf]
        %v2860 = vperm.slane %v2858, 0
        %v2861 = vperm.slane %v2858, 1
        %v2862 = vperm.slane %v2858, 2
        %v2863 = vperm.slane %v2858, 3
        %v2868 = vmul.f32 %v2856, %v2860
        %v2869 = vmul.f32 %v2842, %v2861
        %v2870 = vmul.f32 %v2843, %v2862
        %v2871 = vmul.f32 %v2844, %v2863
        %v2872 = vmul.f32 %v2857, %v2860
        %v2873 = vmul.f32 %v2845, %v2861
        %v2874 = vmul.f32 %v2846, %v2862
        %v2875 = vmul.f32 %v2847, %v2863
        %2876 = vst [vmem:[#allocation2 + $0x40] sm:$0xff] %v2868
        %2877 = vst [vmem:[#allocation2 + $0x48] sm:$0xff] %v2869
        %2878 = vst [vmem:[#allocation2 + $0x50] sm:$0xff] %v2870
        %2879 = vst [vmem:[#allocation2 + $0x58] sm:$0xff] %v2871
        %2880 = vst [vmem:[#allocation2 + $0x60] sm:$0xff] %v2872
        %2881 = vst [vmem:[#allocation2 + $0x68] sm:$0xff] %v2873
        %2882 = vst [vmem:[#allocation2 + $0x70] sm:$0xff] %v2874
        %2883 = vst [vmem:[#allocation2 + $0x78] sm:$0xff] %v2875
        %2884 = vrot.lane.b32.xlu0 %v2135, 7
        %v2885 = vpop.permute.xlu0 %2884
        %2886 = vrot.lane.b32.xlu0 %v2139, 7
        %v2887 = vpop.permute.xlu0 %2886
        %2890 = vrot.lane.b32.xlu0 %v2132, 7
        %v2891 = vpop.permute.xlu0 %2890
        %2892 = vrot.lane.b32.xlu0 %v2133, 7
        %v2893 = vpop.permute.xlu0 %2892
        %2894 = vrot.lane.b32.xlu0 %v2134, 7
        %v2895 = vpop.permute.xlu0 %2894
        %2896 = vrot.lane.b32.xlu0 %v2136, 7
        %v2897 = vpop.permute.xlu0 %2896
        %2898 = vrot.lane.b32.xlu0 %v2137, 7
        %v2899 = vpop.permute.xlu0 %2898
        %2900 = vrot.lane.b32.xlu0 %v2138, 7
        %v2901 = vpop.permute.xlu0 %2900
        %v2902 = vsel %vm1173, %v2891, %v2893
        %v2903 = vsel %vm1173, %v2893, %v2895
        %v2904 = vsel %vm1173, %v2895, %v2885
        %v2905 = vsel %vm1173, %v2897, %v2899
        %v2906 = vsel %vm1173, %v2899, %v2901
        %v2907 = vsel %vm1173, %v2901, %v2887
        %v2916 = vsel %vm1173, %v2885, %v2891
        %v2917 = vsel %vm1173, %v2887, %v2897
        %v2918 = vld [vmem:[%s1182] ss:$8 sm:$0xf]
        %v2920 = vperm.slane %v2918, 0
        %v2921 = vperm.slane %v2918, 1
        %v2922 = vperm.slane %v2918, 2
        %v2923 = vperm.slane %v2918, 3
        %v2928 = vmul.f32 %v2916, %v2920
        %v2929 = vmul.f32 %v2902, %v2921
        %v2930 = vmul.f32 %v2903, %v2922
        %v2931 = vmul.f32 %v2904, %v2923
        %v2932 = vmul.f32 %v2917, %v2920
        %v2933 = vmul.f32 %v2905, %v2921
        %v2934 = vmul.f32 %v2906, %v2922
        %v2935 = vmul.f32 %v2907, %v2923
        %2936 = vst [vmem:[#allocation2 + $0x80] sm:$0xff] %v2928
        %2937 = vst [vmem:[#allocation2 + $0x88] sm:$0xff] %v2929
        %2938 = vst [vmem:[#allocation2 + $0x90] sm:$0xff] %v2930
        %2939 = vst [vmem:[#allocation2 + $0x98] sm:$0xff] %v2931
        %2940 = vst [vmem:[#allocation2 + $0xa0] sm:$0xff] %v2932
        %2941 = vst [vmem:[#allocation2 + $0xa8] sm:$0xff] %v2933
        %2942 = vst [vmem:[#allocation2 + $0xb0] sm:$0xff] %v2934
        %2943 = vst [vmem:[#allocation2 + $0xb8] sm:$0xff] %v2935
        %2944 = vrot.lane.b32.xlu0 %v2135, 1
        %v2945 = vpop.permute.xlu0 %2944
        %2946 = vrot.lane.b32.xlu0 %v2139, 1
        %v2947 = vpop.permute.xlu0 %2946
        %2950 = vrot.lane.b32.xlu0 %v2132, 1
        %v2951 = vpop.permute.xlu0 %2950
        %2952 = vrot.lane.b32.xlu0 %v2133, 1
        %v2953 = vpop.permute.xlu0 %2952
        %2954 = vrot.lane.b32.xlu0 %v2134, 1
        %v2955 = vpop.permute.xlu0 %2954
        %2956 = vrot.lane.b32.xlu0 %v2136, 1
        %v2957 = vpop.permute.xlu0 %2956
        %2958 = vrot.lane.b32.xlu0 %v2137, 1
        %v2959 = vpop.permute.xlu0 %2958
        %2960 = vrot.lane.b32.xlu0 %v2138, 1
        %v2961 = vpop.permute.xlu0 %2960
        %v2962 = vsel %vm1210, %v2951, %v2953
        %v2963 = vsel %vm1210, %v2953, %v2955
        %v2964 = vsel %vm1210, %v2955, %v2945
        %v2965 = vsel %vm1210, %v2957, %v2959
        %v2966 = vsel %vm1210, %v2959, %v2961
        %v2967 = vsel %vm1210, %v2961, %v2947
        %v2976 = vsel %vm1210, %v2945, %v2951
        %v2977 = vsel %vm1210, %v2947, %v2957
        %v2978 = vld [vmem:[%s1219] ss:$8 sm:$0xf]
        %v2980 = vperm.slane %v2978, 0
        %v2981 = vperm.slane %v2978, 1
        %v2982 = vperm.slane %v2978, 2
        %v2983 = vperm.slane %v2978, 3
        %v2988 = vmul.f32 %v2976, %v2980
        %v2989 = vmul.f32 %v2962, %v2981
        %v2990 = vmul.f32 %v2963, %v2982
        %v2991 = vmul.f32 %v2964, %v2983
        %v2992 = vmul.f32 %v2977, %v2980
        %v2993 = vmul.f32 %v2965, %v2981
        %v2994 = vmul.f32 %v2966, %v2982
        %v2995 = vmul.f32 %v2967, %v2983
        %2996 = vst [vmem:[#allocation2 + $0xc0] sm:$0xff] %v2988
        %2997 = vst [vmem:[#allocation2 + $0xc8] sm:$0xff] %v2989
        %2998 = vst [vmem:[#allocation2 + $0xd0] sm:$0xff] %v2990
        %2999 = vst [vmem:[#allocation2 + $0xd8] sm:$0xff] %v2991
        %3000 = vst [vmem:[#allocation2 + $0xe0] sm:$0xff] %v2992
        %3001 = vst [vmem:[#allocation2 + $0xe8] sm:$0xff] %v2993
        %3002 = vst [vmem:[#allocation2 + $0xf0] sm:$0xff] %v2994
        %3003 = vst [vmem:[#allocation2 + $0xf8] sm:$0xff] %v2995
        %3004 = vst [vmem:[#allocation2 + $0x100] sm:$0xff] %v2132
        %3005 = vst [vmem:[#allocation2 + $0x108] sm:$0xff] %v2133
        %3006 = vst [vmem:[#allocation2 + $0x110] sm:$0xff] %v2134
        %3007 = vst [vmem:[#allocation2 + $0x118] sm:$0xff] %v2135
        %3008 = vst [vmem:[#allocation2 + $0x120] sm:$0xff] %v2136
        %3009 = vst [vmem:[#allocation2 + $0x128] sm:$0xff] %v2137
        %3010 = vst [vmem:[#allocation2 + $0x130] sm:$0xff] %v2138
        %3011 = vst [vmem:[#allocation2 + $0x138] sm:$0xff] %v2139
        %3012 = vrot.lane.b32.xlu0 %v2132, 127
        %v3013 = vpop.permute.xlu0 %3012
        %3014 = vrot.lane.b32.xlu0 %v2133, 127
        %v3015 = vpop.permute.xlu0 %3014
        %3016 = vrot.lane.b32.xlu0 %v2134, 127
        %v3017 = vpop.permute.xlu0 %3016
        %3018 = vrot.lane.b32.xlu0 %v2135, 127
        %v3019 = vpop.permute.xlu0 %3018
        %3020 = vrot.lane.b32.xlu0 %v2136, 127
        %v3021 = vpop.permute.xlu0 %3020
        %3022 = vrot.lane.b32.xlu0 %v2137, 127
        %v3023 = vpop.permute.xlu0 %3022
        %3024 = vrot.lane.b32.xlu0 %v2138, 127
        %v3025 = vpop.permute.xlu0 %3024
        %3026 = vrot.lane.b32.xlu0 %v2139, 127
        %v3027 = vpop.permute.xlu0 %3026
        %v3028 = vsel %vm1250, %v3013, %v3015
        %v3029 = vsel %vm1250, %v3015, %v3017
        %v3030 = vsel %vm1250, %v3017, %v3019
        %v3031 = vsel %vm1250, %v3021, %v3023
        %v3032 = vsel %vm1250, %v3023, %v3025
        %v3033 = vsel %vm1250, %v3025, %v3027
        %v3044 = vsel %vm1250, %v3019, %v3013
        %v3045 = vsel %vm1250, %v3027, %v3021
        %v3046 = vld [vmem:[%s1260] ss:$8 sm:$0xf]
        %v3048 = vperm.slane %v3046, 0
        %v3049 = vperm.slane %v3046, 1
        %v3050 = vperm.slane %v3046, 2
        %v3051 = vperm.slane %v3046, 3
        %v3056 = vmul.f32 %v3028, %v3048
        %v3057 = vmul.f32 %v3029, %v3049
        %v3058 = vmul.f32 %v3030, %v3050
        %v3059 = vmul.f32 %v3044, %v3051
        %v3060 = vmul.f32 %v3031, %v3048
        %v3061 = vmul.f32 %v3032, %v3049
        %v3062 = vmul.f32 %v3033, %v3050
        %v3063 = vmul.f32 %v3045, %v3051
        %3064 = vst [vmem:[#allocation2 + $0x140] sm:$0xff] %v3056
        %3065 = vst [vmem:[#allocation2 + $0x148] sm:$0xff] %v3057
        %3066 = vst [vmem:[#allocation2 + $0x150] sm:$0xff] %v3058
        %3067 = vst [vmem:[#allocation2 + $0x158] sm:$0xff] %v3059
        %3068 = vst [vmem:[#allocation2 + $0x160] sm:$0xff] %v3060
        %3069 = vst [vmem:[#allocation2 + $0x168] sm:$0xff] %v3061
        %3070 = vst [vmem:[#allocation2 + $0x170] sm:$0xff] %v3062
        %3071 = vst [vmem:[#allocation2 + $0x178] sm:$0xff] %v3063
        %3072 = vrot.lane.b32.xlu0 %v2132, 121
        %v3073 = vpop.permute.xlu0 %3072
        %3074 = vrot.lane.b32.xlu0 %v2133, 121
        %v3075 = vpop.permute.xlu0 %3074
        %3076 = vrot.lane.b32.xlu0 %v2134, 121
        %v3077 = vpop.permute.xlu0 %3076
        %3078 = vrot.lane.b32.xlu0 %v2135, 121
        %v3079 = vpop.permute.xlu0 %3078
        %3080 = vrot.lane.b32.xlu0 %v2136, 121
        %v3081 = vpop.permute.xlu0 %3080
        %3082 = vrot.lane.b32.xlu0 %v2137, 121
        %v3083 = vpop.permute.xlu0 %3082
        %3084 = vrot.lane.b32.xlu0 %v2138, 121
        %v3085 = vpop.permute.xlu0 %3084
        %3086 = vrot.lane.b32.xlu0 %v2139, 121
        %v3087 = vpop.permute.xlu0 %3086
        %v3088 = vsel %vm1287, %v3073, %v3075
        %v3089 = vsel %vm1287, %v3075, %v3077
        %v3090 = vsel %vm1287, %v3077, %v3079
        %v3091 = vsel %vm1287, %v3081, %v3083
        %v3092 = vsel %vm1287, %v3083, %v3085
        %v3093 = vsel %vm1287, %v3085, %v3087
        %v3104 = vsel %vm1287, %v3079, %v3073
        %v3105 = vsel %vm1287, %v3087, %v3081
        %v3106 = vld [vmem:[%s1297] ss:$8 sm:$0xf]
        %v3108 = vperm.slane %v3106, 0
        %v3109 = vperm.slane %v3106, 1
        %v3110 = vperm.slane %v3106, 2
        %v3111 = vperm.slane %v3106, 3
        %v3116 = vmul.f32 %v3088, %v3108
        %v3117 = vmul.f32 %v3089, %v3109
        %v3118 = vmul.f32 %v3090, %v3110
        %v3119 = vmul.f32 %v3104, %v3111
        %v3120 = vmul.f32 %v3091, %v3108
        %v3121 = vmul.f32 %v3092, %v3109
        %v3122 = vmul.f32 %v3093, %v3110
        %v3123 = vmul.f32 %v3105, %v3111
        %3124 = vst [vmem:[#allocation2 + $0x180] sm:$0xff] %v3116
        %3125 = vst [vmem:[#allocation2 + $0x188] sm:$0xff] %v3117
        %3126 = vst [vmem:[#allocation2 + $0x190] sm:$0xff] %v3118
        %3127 = vst [vmem:[#allocation2 + $0x198] sm:$0xff] %v3119
        %3128 = vst [vmem:[#allocation2 + $0x1a0] sm:$0xff] %v3120
        %3129 = vst [vmem:[#allocation2 + $0x1a8] sm:$0xff] %v3121
        %3130 = vst [vmem:[#allocation2 + $0x1b0] sm:$0xff] %v3122
        %3131 = vst [vmem:[#allocation2 + $0x1b8] sm:$0xff] %v3123
        %3132 = vrot.lane.b32.xlu0 %v2132, 120
        %v3133 = vpop.permute.xlu0 %3132
        %3134 = vrot.lane.b32.xlu0 %v2133, 120
        %v3135 = vpop.permute.xlu0 %3134
        %3136 = vrot.lane.b32.xlu0 %v2134, 120
        %v3137 = vpop.permute.xlu0 %3136
        %3138 = vrot.lane.b32.xlu0 %v2135, 120
        %v3139 = vpop.permute.xlu0 %3138
        %3140 = vrot.lane.b32.xlu0 %v2136, 120
        %v3141 = vpop.permute.xlu0 %3140
        %3142 = vrot.lane.b32.xlu0 %v2137, 120
        %v3143 = vpop.permute.xlu0 %3142
        %3144 = vrot.lane.b32.xlu0 %v2138, 120
        %v3145 = vpop.permute.xlu0 %3144
        %3146 = vrot.lane.b32.xlu0 %v2139, 120
        %v3147 = vpop.permute.xlu0 %3146
        %v3148 = vsel %vm1324, %v3133, %v3135
        %v3149 = vsel %vm1324, %v3135, %v3137
        %v3150 = vsel %vm1324, %v3137, %v3139
        %v3151 = vsel %vm1324, %v3141, %v3143
        %v3152 = vsel %vm1324, %v3143, %v3145
        %v3153 = vsel %vm1324, %v3145, %v3147
        %v3164 = vsel %vm1324, %v3139, %v3133
        %v3165 = vsel %vm1324, %v3147, %v3141
        %v3166 = vld [vmem:[%s1334] ss:$8 sm:$0xf]
        %v3168 = vperm.slane %v3166, 0
        %v3169 = vperm.slane %v3166, 1
        %v3170 = vperm.slane %v3166, 2
        %v3171 = vperm.slane %v3166, 3
        %v3176 = vmul.f32 %v3148, %v3168
        %v3177 = vmul.f32 %v3149, %v3169
        %v3178 = vmul.f32 %v3150, %v3170
        %v3179 = vmul.f32 %v3164, %v3171
        %v3180 = vmul.f32 %v3151, %v3168
        %v3181 = vmul.f32 %v3152, %v3169
        %v3182 = vmul.f32 %v3153, %v3170
        %v3183 = vmul.f32 %v3165, %v3171
        %3184 = vst [vmem:[#allocation2 + $0x1c0] sm:$0xff] %v3176
        %3185 = vst [vmem:[#allocation2 + $0x1c8] sm:$0xff] %v3177
        %3186 = vst [vmem:[#allocation2 + $0x1d0] sm:$0xff] %v3178
        %3187 = vst [vmem:[#allocation2 + $0x1d8] sm:$0xff] %v3179
        %3188 = vst [vmem:[#allocation2 + $0x1e0] sm:$0xff] %v3180
        %3189 = vst [vmem:[#allocation2 + $0x1e8] sm:$0xff] %v3181
        %3190 = vst [vmem:[#allocation2 + $0x1f0] sm:$0xff] %v3182
        %3191 = vst [vmem:[#allocation2 + $0x1f8] sm:$0xff] %v3183
        %3192 = vrot.lane.b32.xlu0 %v2132, 119
        %v3193 = vpop.permute.xlu0 %3192
        %3194 = vrot.lane.b32.xlu0 %v2133, 119
        %v3195 = vpop.permute.xlu0 %3194
        %3196 = vrot.lane.b32.xlu0 %v2134, 119
        %v3197 = vpop.permute.xlu0 %3196
        %3198 = vrot.lane.b32.xlu0 %v2135, 119
        %v3199 = vpop.permute.xlu0 %3198
        %3200 = vrot.lane.b32.xlu0 %v2136, 119
        %v3201 = vpop.permute.xlu0 %3200
        %3202 = vrot.lane.b32.xlu0 %v2137, 119
        %v3203 = vpop.permute.xlu0 %3202
        %3204 = vrot.lane.b32.xlu0 %v2138, 119
        %v3205 = vpop.permute.xlu0 %3204
        %3206 = vrot.lane.b32.xlu0 %v2139, 119
        %v3207 = vpop.permute.xlu0 %3206
        %v3208 = vsel %vm1361, %v3193, %v3195
        %v3209 = vsel %vm1361, %v3195, %v3197
        %v3210 = vsel %vm1361, %v3197, %v3199
        %v3211 = vsel %vm1361, %v3201, %v3203
        %v3212 = vsel %vm1361, %v3203, %v3205
        %v3213 = vsel %vm1361, %v3205, %v3207
        %v3224 = vsel %vm1361, %v3199, %v3193
        %v3225 = vsel %vm1361, %v3207, %v3201
        %v3226 = vld [vmem:[%s1371] ss:$8 sm:$0xf]
        %v3228 = vperm.slane %v3226, 0
        %v3229 = vperm.slane %v3226, 1
        %v3230 = vperm.slane %v3226, 2
        %v3231 = vperm.slane %v3226, 3
        %v3236 = vmul.f32 %v3208, %v3228
        %v3237 = vmul.f32 %v3209, %v3229
        %v3238 = vmul.f32 %v3210, %v3230
        %v3239 = vmul.f32 %v3224, %v3231
        %v3240 = vmul.f32 %v3211, %v3228
        %v3241 = vmul.f32 %v3212, %v3229
        %v3242 = vmul.f32 %v3213, %v3230
        %v3243 = vmul.f32 %v3225, %v3231
        %3244 = vst [vmem:[#allocation2 + $0x200] sm:$0xff] %v3236
        %3245 = vst [vmem:[#allocation2 + $0x208] sm:$0xff] %v3237
        %3246 = vst [vmem:[#allocation2 + $0x210] sm:$0xff] %v3238
        %3247 = vst [vmem:[#allocation2 + $0x218] sm:$0xff] %v3239
        %3248 = vst [vmem:[#allocation2 + $0x220] sm:$0xff] %v3240
        %3249 = vst [vmem:[#allocation2 + $0x228] sm:$0xff] %v3241
        %3250 = vst [vmem:[#allocation2 + $0x230] sm:$0xff] %v3242
        %3251 = vst [vmem:[#allocation2 + $0x238] sm:$0xff] %v3243
        %s3252 = scalar_lea.vmem [#allocation9], 32
        %v3253 = vld [vmem:[%s3252] sm:$0xff]
        %v3254 = vld [vmem:[%s3252 + $0x8] sm:$0xff]
        %v3255 = vld [vmem:[%s3252 + $0x10] sm:$0xff]
        %v3256 = vld [vmem:[%s3252 + $0x18] sm:$0xff]
        %v3257 = vld [vmem:[#allocation2] sm:$0xff]
        %v3258 = vld [vmem:[#allocation2 + $0x8] sm:$0xff]
        %v3259 = vld [vmem:[#allocation2 + $0x10] sm:$0xff]
        %v3260 = vld [vmem:[#allocation2 + $0x18] sm:$0xff]
        %v3261 = vld [vmem:[#allocation2 + $0x20] sm:$0xff]
        %v3262 = vld [vmem:[#allocation2 + $0x28] sm:$0xff]
        %v3263 = vld [vmem:[#allocation2 + $0x30] sm:$0xff]
        %v3264 = vld [vmem:[#allocation2 + $0x38] sm:$0xff]
        %v3265 = vld [vmem:[#allocation2 + $0x40] sm:$0xff]
        %v3266 = vld [vmem:[#allocation2 + $0x48] sm:$0xff]
        %v3267 = vld [vmem:[#allocation2 + $0x50] sm:$0xff]
        %v3268 = vld [vmem:[#allocation2 + $0x58] sm:$0xff]
        %v3269 = vld [vmem:[#allocation2 + $0x60] sm:$0xff]
        %v3270 = vld [vmem:[#allocation2 + $0x68] sm:$0xff]
        %v3271 = vld [vmem:[#allocation2 + $0x70] sm:$0xff]
        %v3272 = vld [vmem:[#allocation2 + $0x78] sm:$0xff]
        %v3273 = vld [vmem:[#allocation2 + $0x80] sm:$0xff]
        %v3274 = vld [vmem:[#allocation2 + $0x88] sm:$0xff]
        %v3275 = vld [vmem:[#allocation2 + $0x90] sm:$0xff]
        %v3276 = vld [vmem:[#allocation2 + $0x98] sm:$0xff]
        %v3277 = vld [vmem:[#allocation2 + $0xa0] sm:$0xff]
        %v3278 = vld [vmem:[#allocation2 + $0xa8] sm:$0xff]
        %v3279 = vld [vmem:[#allocation2 + $0xb0] sm:$0xff]
        %v3280 = vld [vmem:[#allocation2 + $0xb8] sm:$0xff]
        %v3281 = vld [vmem:[#allocation2 + $0xc0] sm:$0xff]
        %v3282 = vld [vmem:[#allocation2 + $0xc8] sm:$0xff]
        %v3283 = vld [vmem:[#allocation2 + $0xd0] sm:$0xff]
        %v3284 = vld [vmem:[#allocation2 + $0xd8] sm:$0xff]
        %v3285 = vld [vmem:[#allocation2 + $0xe0] sm:$0xff]
        %v3286 = vld [vmem:[#allocation2 + $0xe8] sm:$0xff]
        %v3287 = vld [vmem:[#allocation2 + $0xf0] sm:$0xff]
        %v3288 = vld [vmem:[#allocation2 + $0xf8] sm:$0xff]
        %v3289 = vld [vmem:[#allocation2 + $0x100] sm:$0xff]
        %v3290 = vld [vmem:[#allocation2 + $0x108] sm:$0xff]
        %v3291 = vld [vmem:[#allocation2 + $0x110] sm:$0xff]
        %v3292 = vld [vmem:[#allocation2 + $0x118] sm:$0xff]
        %v3293 = vld [vmem:[#allocation2 + $0x120] sm:$0xff]
        %v3294 = vld [vmem:[#allocation2 + $0x128] sm:$0xff]
        %v3295 = vld [vmem:[#allocation2 + $0x130] sm:$0xff]
        %v3296 = vld [vmem:[#allocation2 + $0x138] sm:$0xff]
        %v3297 = vld [vmem:[#allocation2 + $0x140] sm:$0xff]
        %v3298 = vld [vmem:[#allocation2 + $0x148] sm:$0xff]
        %v3299 = vld [vmem:[#allocation2 + $0x150] sm:$0xff]
        %v3300 = vld [vmem:[#allocation2 + $0x158] sm:$0xff]
        %v3301 = vld [vmem:[#allocation2 + $0x160] sm:$0xff]
        %v3302 = vld [vmem:[#allocation2 + $0x168] sm:$0xff]
        %v3303 = vld [vmem:[#allocation2 + $0x170] sm:$0xff]
        %v3304 = vld [vmem:[#allocation2 + $0x178] sm:$0xff]
        %v3305 = vld [vmem:[#allocation2 + $0x180] sm:$0xff]
        %v3306 = vld [vmem:[#allocation2 + $0x188] sm:$0xff]
        %v3307 = vld [vmem:[#allocation2 + $0x190] sm:$0xff]
        %v3308 = vld [vmem:[#allocation2 + $0x198] sm:$0xff]
        %v3309 = vld [vmem:[#allocation2 + $0x1a0] sm:$0xff]
        %v3310 = vld [vmem:[#allocation2 + $0x1a8] sm:$0xff]
        %v3311 = vld [vmem:[#allocation2 + $0x1b0] sm:$0xff]
        %v3312 = vld [vmem:[#allocation2 + $0x1b8] sm:$0xff]
        %v3313 = vld [vmem:[#allocation2 + $0x1c0] sm:$0xff]
        %v3314 = vld [vmem:[#allocation2 + $0x1c8] sm:$0xff]
        %v3315 = vld [vmem:[#allocation2 + $0x1d0] sm:$0xff]
        %v3316 = vld [vmem:[#allocation2 + $0x1d8] sm:$0xff]
        %v3317 = vld [vmem:[#allocation2 + $0x1e0] sm:$0xff]
        %v3318 = vld [vmem:[#allocation2 + $0x1e8] sm:$0xff]
        %v3319 = vld [vmem:[#allocation2 + $0x1f0] sm:$0xff]
        %v3320 = vld [vmem:[#allocation2 + $0x1f8] sm:$0xff]
        %v3321 = vld [vmem:[#allocation2 + $0x200] sm:$0xff]
        %v3322 = vld [vmem:[#allocation2 + $0x208] sm:$0xff]
        %v3323 = vld [vmem:[#allocation2 + $0x210] sm:$0xff]
        %v3324 = vld [vmem:[#allocation2 + $0x218] sm:$0xff]
        %v3325 = vld [vmem:[#allocation2 + $0x220] sm:$0xff]
        %v3326 = vld [vmem:[#allocation2 + $0x228] sm:$0xff]
        %v3327 = vld [vmem:[#allocation2 + $0x230] sm:$0xff]
        %v3328 = vld [vmem:[#allocation2 + $0x238] sm:$0xff]
        %v3330 = vsel %vm1973, %v3254, 0
        %v3333 = vsel %vm1973, %v3256, 0
        %3335 = vmatpush.msra.mxu0 %v3317
        %3336 = vmatpush.msra.mxu0 %v3313
        %3337 = vmatpush.msra.mxu0 %v3309
        %3338 = vmatpush.msra.mxu0 %v3305
        %3339 = vmatpush.msra.mxu0 %v3301
        %3340 = vmatpush.msra.mxu0 %v3297
        %3341 = vmatpush.msra.mxu0 %v3293
        %3342 = vmatpush.msra.mxu0 %v3289
        %3343 = vmatpush.msra.mxu0 %v3285
        %3344 = vmatpush.msra.mxu0 %v3281
        %3345 = vmatpush.msra.mxu0 %v3277
        %3346 = vmatpush.msra.mxu0 %v3273
        %3347 = vmatpush.msra.mxu0 %v3269
        %3348 = vmatpush.msra.mxu0 %v3265
        %3349 = vmatpush.msra.mxu0 %v3261
        %3350 = vmatpush.msra.mxu0 %v3257
        %3351 = vmatmul.f32.gmra.mxu0 %v3253
        %v3352 = vpop.f32.mrf.mxu0
        %v3353 = vadd.f32 0.0, %v3352
        %3354 = vmatmul.f32.gmra.mxu0 %v3255
        %v3355 = vpop.f32.mrf.mxu0
        %v3356 = vadd.f32 0.0, %v3355
        %3357 = vdwg.mxu0
        %3358 = vmatpush.msra.mxu0 0.0
        %3359 = vmatpush.msra.mxu0 0.0
        %3360 = vmatpush.msra.mxu0 0.0
        %3361 = vmatpush.msra.mxu0 0.0
        %3362 = vmatpush.msra.mxu0 0.0
        %3363 = vmatpush.msra.mxu0 0.0
        %3364 = vmatpush.msra.mxu0 0.0
        %3365 = vmatpush.msra.mxu0 0.0
        %3366 = vmatpush.msra.mxu0 0.0
        %3367 = vmatpush.msra.mxu0 0.0
        %3368 = vmatpush.msra.mxu0 0.0
        %3369 = vmatpush.msra.mxu0 0.0
        %3370 = vmatpush.msra.mxu0 0.0
        %3371 = vmatpush.msra.mxu0 0.0
        %3372 = vmatpush.msra.mxu0 %v3325
        %3373 = vmatpush.msra.mxu0 %v3321
        %3374 = vmatmul.f32.gmra.mxu0 %v3330
        %v3375 = vpop.f32.mrf.mxu0
        %v3376 = vadd.f32 %v3353, %v3375
        %3377 = vmatmul.f32.gmra.mxu0 %v3333
        %v3378 = vpop.f32.mrf.mxu0
        %v3379 = vadd.f32 %v3356, %v3378
        %3380 = vdwg.mxu0
        %3381 = vmatpush.msra.mxu0 %v3318
        %3382 = vmatpush.msra.mxu0 %v3314
        %3383 = vmatpush.msra.mxu0 %v3310
        %3384 = vmatpush.msra.mxu0 %v3306
        %3385 = vmatpush.msra.mxu0 %v3302
        %3386 = vmatpush.msra.mxu0 %v3298
        %3387 = vmatpush.msra.mxu0 %v3294
        %3388 = vmatpush.msra.mxu0 %v3290
        %3389 = vmatpush.msra.mxu0 %v3286
        %3390 = vmatpush.msra.mxu0 %v3282
        %3391 = vmatpush.msra.mxu0 %v3278
        %3392 = vmatpush.msra.mxu0 %v3274
        %3393 = vmatpush.msra.mxu0 %v3270
        %3394 = vmatpush.msra.mxu0 %v3266
        %3395 = vmatpush.msra.mxu0 %v3262
        %3396 = vmatpush.msra.mxu0 %v3258
        %3397 = vmatmul.f32.gmra.mxu0 %v3253
        %v3398 = vpop.f32.mrf.mxu0
        %v3399 = vadd.f32 0.0, %v3398
        %3400 = vmatmul.f32.gmra.mxu0 %v3255
        %v3401 = vpop.f32.mrf.mxu0
        %v3402 = vadd.f32 0.0, %v3401
        %3403 = vdwg.mxu0
        %3404 = vmatpush.msra.mxu0 0.0
        %3405 = vmatpush.msra.mxu0 0.0
        %3406 = vmatpush.msra.mxu0 0.0
        %3407 = vmatpush.msra.mxu0 0.0
        %3408 = vmatpush.msra.mxu0 0.0
        %3409 = vmatpush.msra.mxu0 0.0
        %3410 = vmatpush.msra.mxu0 0.0
        %3411 = vmatpush.msra.mxu0 0.0
        %3412 = vmatpush.msra.mxu0 0.0
        %3413 = vmatpush.msra.mxu0 0.0
        %3414 = vmatpush.msra.mxu0 0.0
        %3415 = vmatpush.msra.mxu0 0.0
        %3416 = vmatpush.msra.mxu0 0.0
        %3417 = vmatpush.msra.mxu0 0.0
        %3418 = vmatpush.msra.mxu0 %v3326
        %3419 = vmatpush.msra.mxu0 %v3322
        %3420 = vmatmul.f32.gmra.mxu0 %v3330
        %v3421 = vpop.f32.mrf.mxu0
        %v3422 = vadd.f32 %v3399, %v3421
        %3423 = vmatmul.f32.gmra.mxu0 %v3333
        %v3424 = vpop.f32.mrf.mxu0
        %v3425 = vadd.f32 %v3402, %v3424
        %3426 = vdwg.mxu0
        %3427 = vmatpush.msra.mxu0 %v3319
        %3428 = vmatpush.msra.mxu0 %v3315
        %3429 = vmatpush.msra.mxu0 %v3311
        %3430 = vmatpush.msra.mxu0 %v3307
        %3431 = vmatpush.msra.mxu0 %v3303
        %3432 = vmatpush.msra.mxu0 %v3299
        %3433 = vmatpush.msra.mxu0 %v3295
        %3434 = vmatpush.msra.mxu0 %v3291
        %3435 = vmatpush.msra.mxu0 %v3287
        %3436 = vmatpush.msra.mxu0 %v3283
        %3437 = vmatpush.msra.mxu0 %v3279
        %3438 = vmatpush.msra.mxu0 %v3275
        %3439 = vmatpush.msra.mxu0 %v3271
        %3440 = vmatpush.msra.mxu0 %v3267
        %3441 = vmatpush.msra.mxu0 %v3263
        %3442 = vmatpush.msra.mxu0 %v3259
        %3443 = vmatmul.f32.gmra.mxu0 %v3253
        %v3444 = vpop.f32.mrf.mxu0
        %v3445 = vadd.f32 0.0, %v3444
        %3446 = vmatmul.f32.gmra.mxu0 %v3255
        %v3447 = vpop.f32.mrf.mxu0
        %v3448 = vadd.f32 0.0, %v3447
        %3449 = vdwg.mxu0
        %3450 = vmatpush.msra.mxu0 0.0
        %3451 = vmatpush.msra.mxu0 0.0
        %3452 = vmatpush.msra.mxu0 0.0
        %3453 = vmatpush.msra.mxu0 0.0
        %3454 = vmatpush.msra.mxu0 0.0
        %3455 = vmatpush.msra.mxu0 0.0
        %3456 = vmatpush.msra.mxu0 0.0
        %3457 = vmatpush.msra.mxu0 0.0
        %3458 = vmatpush.msra.mxu0 0.0
        %3459 = vmatpush.msra.mxu0 0.0
        %3460 = vmatpush.msra.mxu0 0.0
        %3461 = vmatpush.msra.mxu0 0.0
        %3462 = vmatpush.msra.mxu0 0.0
        %3463 = vmatpush.msra.mxu0 0.0
        %3464 = vmatpush.msra.mxu0 %v3327
        %3465 = vmatpush.msra.mxu0 %v3323
        %3466 = vmatmul.f32.gmra.mxu0 %v3330
        %v3467 = vpop.f32.mrf.mxu0
        %v3468 = vadd.f32 %v3445, %v3467
        %3469 = vmatmul.f32.gmra.mxu0 %v3333
        %v3470 = vpop.f32.mrf.mxu0
        %v3471 = vadd.f32 %v3448, %v3470
        %3472 = vdwg.mxu0
        %3473 = vmatpush.msra.mxu0 %v3320
        %3474 = vmatpush.msra.mxu0 %v3316
        %3475 = vmatpush.msra.mxu0 %v3312
        %3476 = vmatpush.msra.mxu0 %v3308
        %3477 = vmatpush.msra.mxu0 %v3304
        %3478 = vmatpush.msra.mxu0 %v3300
        %3479 = vmatpush.msra.mxu0 %v3296
        %3480 = vmatpush.msra.mxu0 %v3292
        %3481 = vmatpush.msra.mxu0 %v3288
        %3482 = vmatpush.msra.mxu0 %v3284
        %3483 = vmatpush.msra.mxu0 %v3280
        %3484 = vmatpush.msra.mxu0 %v3276
        %3485 = vmatpush.msra.mxu0 %v3272
        %3486 = vmatpush.msra.mxu0 %v3268
        %3487 = vmatpush.msra.mxu0 %v3264
        %3488 = vmatpush.msra.mxu0 %v3260
        %3489 = vmatmul.f32.gmra.mxu0 %v3253
        %v3490 = vpop.f32.mrf.mxu0
        %v3491 = vadd.f32 0.0, %v3490
        %3492 = vmatmul.f32.gmra.mxu0 %v3255
        %v3493 = vpop.f32.mrf.mxu0
        %v3494 = vadd.f32 0.0, %v3493
        %3495 = vdwg.mxu0
        %3496 = vmatpush.msra.mxu0 0.0
        %3497 = vmatpush.msra.mxu0 0.0
        %3498 = vmatpush.msra.mxu0 0.0
        %3499 = vmatpush.msra.mxu0 0.0
        %3500 = vmatpush.msra.mxu0 0.0
        %3501 = vmatpush.msra.mxu0 0.0
        %3502 = vmatpush.msra.mxu0 0.0
        %3503 = vmatpush.msra.mxu0 0.0
        %3504 = vmatpush.msra.mxu0 0.0
        %3505 = vmatpush.msra.mxu0 0.0
        %3506 = vmatpush.msra.mxu0 0.0
        %3507 = vmatpush.msra.mxu0 0.0
        %3508 = vmatpush.msra.mxu0 0.0
        %3509 = vmatpush.msra.mxu0 0.0
        %3510 = vmatpush.msra.mxu0 %v3328
        %3511 = vmatpush.msra.mxu0 %v3324
        %3512 = vmatmul.f32.gmra.mxu0 %v3330
        %v3513 = vpop.f32.mrf.mxu0
        %v3514 = vadd.f32 %v3491, %v3513
        %3515 = vmatmul.f32.gmra.mxu0 %v3333
        %v3516 = vpop.f32.mrf.mxu0
        %v3517 = vadd.f32 %v3494, %v3516
        %3518 = vdwg.mxu0
        %v3520 = vsel %vm1973, %v2689, 0
        %v3523 = vsel %vm1973, %v2691, 0
        %3525 = vmatpush.msra.mxu0 %v2752
        %3526 = vmatpush.msra.mxu0 %v2748
        %3527 = vmatpush.msra.mxu0 %v2744
        %3528 = vmatpush.msra.mxu0 %v2740
        %3529 = vmatpush.msra.mxu0 %v2736
        %3530 = vmatpush.msra.mxu0 %v2732
        %3531 = vmatpush.msra.mxu0 %v2728
        %3532 = vmatpush.msra.mxu0 %v2724
        %3533 = vmatpush.msra.mxu0 %v2720
        %3534 = vmatpush.msra.mxu0 %v2716
        %3535 = vmatpush.msra.mxu0 %v2712
        %3536 = vmatpush.msra.mxu0 %v2708
        %3537 = vmatpush.msra.mxu0 %v2704
        %3538 = vmatpush.msra.mxu0 %v2700
        %3539 = vmatpush.msra.mxu0 %v2696
        %3540 = vmatpush.msra.mxu0 %v2692
        %3541 = vmatmul.f32.gmra.mxu0 %v2688
        %v3542 = vpop.f32.mrf.mxu0
        %v3543 = vadd.f32 %v3376, %v3542
        %3544 = vmatmul.f32.gmra.mxu0 %v2690
        %v3545 = vpop.f32.mrf.mxu0
        %v3546 = vadd.f32 %v3379, %v3545
        %3547 = vdwg.mxu0
        %3548 = vmatpush.msra.mxu0 0.0
        %3549 = vmatpush.msra.mxu0 0.0
        %3550 = vmatpush.msra.mxu0 0.0
        %3551 = vmatpush.msra.mxu0 0.0
        %3552 = vmatpush.msra.mxu0 0.0
        %3553 = vmatpush.msra.mxu0 0.0
        %3554 = vmatpush.msra.mxu0 0.0
        %3555 = vmatpush.msra.mxu0 0.0
        %3556 = vmatpush.msra.mxu0 0.0
        %3557 = vmatpush.msra.mxu0 0.0
        %3558 = vmatpush.msra.mxu0 0.0
        %3559 = vmatpush.msra.mxu0 0.0
        %3560 = vmatpush.msra.mxu0 0.0
        %3561 = vmatpush.msra.mxu0 0.0
        %3562 = vmatpush.msra.mxu0 %v2760
        %3563 = vmatpush.msra.mxu0 %v2756
        %3564 = vmatmul.f32.gmra.mxu0 %v3520
        %v3565 = vpop.f32.mrf.mxu0
        %v3566 = vadd.f32 %v3543, %v3565
        %3567 = vmatmul.f32.gmra.mxu0 %v3523
        %v3568 = vpop.f32.mrf.mxu0
        %v3569 = vadd.f32 %v3546, %v3568
        %3570 = vdwg.mxu0
        %3571 = vmatpush.msra.mxu0 %v2753
        %3572 = vmatpush.msra.mxu0 %v2749
        %3573 = vmatpush.msra.mxu0 %v2745
        %3574 = vmatpush.msra.mxu0 %v2741
        %3575 = vmatpush.msra.mxu0 %v2737
        %3576 = vmatpush.msra.mxu0 %v2733
        %3577 = vmatpush.msra.mxu0 %v2729
        %3578 = vmatpush.msra.mxu0 %v2725
        %3579 = vmatpush.msra.mxu0 %v2721
        %3580 = vmatpush.msra.mxu0 %v2717
        %3581 = vmatpush.msra.mxu0 %v2713
        %3582 = vmatpush.msra.mxu0 %v2709
        %3583 = vmatpush.msra.mxu0 %v2705
        %3584 = vmatpush.msra.mxu0 %v2701
        %3585 = vmatpush.msra.mxu0 %v2697
        %3586 = vmatpush.msra.mxu0 %v2693
        %3587 = vmatmul.f32.gmra.mxu0 %v2688
        %v3588 = vpop.f32.mrf.mxu0
        %v3589 = vadd.f32 %v3422, %v3588
        %3590 = vmatmul.f32.gmra.mxu0 %v2690
        %v3591 = vpop.f32.mrf.mxu0
        %v3592 = vadd.f32 %v3425, %v3591
        %3593 = vdwg.mxu0
        %3594 = vmatpush.msra.mxu0 0.0
        %3595 = vmatpush.msra.mxu0 0.0
        %3596 = vmatpush.msra.mxu0 0.0
        %3597 = vmatpush.msra.mxu0 0.0
        %3598 = vmatpush.msra.mxu0 0.0
        %3599 = vmatpush.msra.mxu0 0.0
        %3600 = vmatpush.msra.mxu0 0.0
        %3601 = vmatpush.msra.mxu0 0.0
        %3602 = vmatpush.msra.mxu0 0.0
        %3603 = vmatpush.msra.mxu0 0.0
        %3604 = vmatpush.msra.mxu0 0.0
        %3605 = vmatpush.msra.mxu0 0.0
        %3606 = vmatpush.msra.mxu0 0.0
        %3607 = vmatpush.msra.mxu0 0.0
        %3608 = vmatpush.msra.mxu0 %v2761
        %3609 = vmatpush.msra.mxu0 %v2757
        %3610 = vmatmul.f32.gmra.mxu0 %v3520
        %v3611 = vpop.f32.mrf.mxu0
        %v3612 = vadd.f32 %v3589, %v3611
        %3613 = vmatmul.f32.gmra.mxu0 %v3523
        %v3614 = vpop.f32.mrf.mxu0
        %v3615 = vadd.f32 %v3592, %v3614
        %3616 = vdwg.mxu0
        %3617 = vmatpush.msra.mxu0 %v2754
        %3618 = vmatpush.msra.mxu0 %v2750
        %3619 = vmatpush.msra.mxu0 %v2746
        %3620 = vmatpush.msra.mxu0 %v2742
        %3621 = vmatpush.msra.mxu0 %v2738
        %3622 = vmatpush.msra.mxu0 %v2734
        %3623 = vmatpush.msra.mxu0 %v2730
        %3624 = vmatpush.msra.mxu0 %v2726
        %3625 = vmatpush.msra.mxu0 %v2722
        %3626 = vmatpush.msra.mxu0 %v2718
        %3627 = vmatpush.msra.mxu0 %v2714
        %3628 = vmatpush.msra.mxu0 %v2710
        %3629 = vmatpush.msra.mxu0 %v2706
        %3630 = vmatpush.msra.mxu0 %v2702
        %3631 = vmatpush.msra.mxu0 %v2698
        %3632 = vmatpush.msra.mxu0 %v2694
        %3633 = vmatmul.f32.gmra.mxu0 %v2688
        %v3634 = vpop.f32.mrf.mxu0
        %v3635 = vadd.f32 %v3468, %v3634
        %3636 = vmatmul.f32.gmra.mxu0 %v2690
        %v3637 = vpop.f32.mrf.mxu0
        %v3638 = vadd.f32 %v3471, %v3637
        %3639 = vdwg.mxu0
        %3640 = vmatpush.msra.mxu0 0.0
        %3641 = vmatpush.msra.mxu0 0.0
        %3642 = vmatpush.msra.mxu0 0.0
        %3643 = vmatpush.msra.mxu0 0.0
        %3644 = vmatpush.msra.mxu0 0.0
        %3645 = vmatpush.msra.mxu0 0.0
        %3646 = vmatpush.msra.mxu0 0.0
        %3647 = vmatpush.msra.mxu0 0.0
        %3648 = vmatpush.msra.mxu0 0.0
        %3649 = vmatpush.msra.mxu0 0.0
        %3650 = vmatpush.msra.mxu0 0.0
        %3651 = vmatpush.msra.mxu0 0.0
        %3652 = vmatpush.msra.mxu0 0.0
        %3653 = vmatpush.msra.mxu0 0.0
        %3654 = vmatpush.msra.mxu0 %v2762
        %3655 = vmatpush.msra.mxu0 %v2758
        %3656 = vmatmul.f32.gmra.mxu0 %v3520
        %v3657 = vpop.f32.mrf.mxu0
        %v3658 = vadd.f32 %v3635, %v3657
        %3659 = vmatmul.f32.gmra.mxu0 %v3523
        %v3660 = vpop.f32.mrf.mxu0
        %v3661 = vadd.f32 %v3638, %v3660
        %3662 = vdwg.mxu0
        %3663 = vmatpush.msra.mxu0 %v2755
        %3664 = vmatpush.msra.mxu0 %v2751
        %3665 = vmatpush.msra.mxu0 %v2747
        %3666 = vmatpush.msra.mxu0 %v2743
        %3667 = vmatpush.msra.mxu0 %v2739
        %3668 = vmatpush.msra.mxu0 %v2735
        %3669 = vmatpush.msra.mxu0 %v2731
        %3670 = vmatpush.msra.mxu0 %v2727
        %3671 = vmatpush.msra.mxu0 %v2723
        %3672 = vmatpush.msra.mxu0 %v2719
        %3673 = vmatpush.msra.mxu0 %v2715
        %3674 = vmatpush.msra.mxu0 %v2711
        %3675 = vmatpush.msra.mxu0 %v2707
        %3676 = vmatpush.msra.mxu0 %v2703
        %3677 = vmatpush.msra.mxu0 %v2699
        %3678 = vmatpush.msra.mxu0 %v2695
        %3679 = vmatmul.f32.gmra.mxu0 %v2688
        %v3680 = vpop.f32.mrf.mxu0
        %v3681 = vadd.f32 %v3514, %v3680
        %3682 = vmatmul.f32.gmra.mxu0 %v2690
        %v3683 = vpop.f32.mrf.mxu0
        %v3684 = vadd.f32 %v3517, %v3683
        %3685 = vdwg.mxu0
        %3686 = vmatpush.msra.mxu0 0.0
        %3687 = vmatpush.msra.mxu0 0.0
        %3688 = vmatpush.msra.mxu0 0.0
        %3689 = vmatpush.msra.mxu0 0.0
        %3690 = vmatpush.msra.mxu0 0.0
        %3691 = vmatpush.msra.mxu0 0.0
        %3692 = vmatpush.msra.mxu0 0.0
        %3693 = vmatpush.msra.mxu0 0.0
        %3694 = vmatpush.msra.mxu0 0.0
        %3695 = vmatpush.msra.mxu0 0.0
        %3696 = vmatpush.msra.mxu0 0.0
        %3697 = vmatpush.msra.mxu0 0.0
        %3698 = vmatpush.msra.mxu0 0.0
        %3699 = vmatpush.msra.mxu0 0.0
        %3700 = vmatpush.msra.mxu0 %v2763
        %3701 = vmatpush.msra.mxu0 %v2759
        %3702 = vmatmul.f32.gmra.mxu0 %v3520
        %v3703 = vpop.f32.mrf.mxu0
        %v3704 = vadd.f32 %v3681, %v3703
        %3705 = vmatmul.f32.gmra.mxu0 %v3523
        %v3706 = vpop.f32.mrf.mxu0
        %v3707 = vadd.f32 %v3684, %v3706
        %3708 = vdwg.mxu0
        %v3709 = vld [vmem:[%s1625] ss:$8 sm:$0xf]
        %v3711 = vperm.slane %v3709, 0
        %v3712 = vperm.slane %v3709, 1
        %v3713 = vperm.slane %v3709, 2
        %v3714 = vperm.slane %v3709, 3
        %v3719 = vmul.f32 %v2166, %v3711
        %v3720 = vmul.f32 %v2167, %v3712
        %v3721 = vmul.f32 %v2168, %v3713
        %v3722 = vmul.f32 %v2180, %v3714
        %v3723 = vmul.f32 %v2169, %v3711
        %v3724 = vmul.f32 %v2170, %v3712
        %v3725 = vmul.f32 %v2171, %v3713
        %v3726 = vmul.f32 %v2181, %v3714
        %3727 = vst [vmem:[#allocation2] sm:$0xff] %v3719
        %3728 = vst [vmem:[#allocation2 + $0x8] sm:$0xff] %v3720
        %3729 = vst [vmem:[#allocation2 + $0x10] sm:$0xff] %v3721
        %3730 = vst [vmem:[#allocation2 + $0x18] sm:$0xff] %v3722
        %3731 = vst [vmem:[#allocation2 + $0x20] sm:$0xff] %v3723
        %3732 = vst [vmem:[#allocation2 + $0x28] sm:$0xff] %v3724
        %3733 = vst [vmem:[#allocation2 + $0x30] sm:$0xff] %v3725
        %3734 = vst [vmem:[#allocation2 + $0x38] sm:$0xff] %v3726
        %v3735 = vld [vmem:[%s1644] ss:$8 sm:$0xf]
        %v3737 = vperm.slane %v3735, 0
        %v3738 = vperm.slane %v3735, 1
        %v3739 = vperm.slane %v3735, 2
        %v3740 = vperm.slane %v3735, 3
        %v3745 = vmul.f32 %v2226, %v3737
        %v3746 = vmul.f32 %v2227, %v3738
        %v3747 = vmul.f32 %v2228, %v3739
        %v3748 = vmul.f32 %v2240, %v3740
        %v3749 = vmul.f32 %v2229, %v3737
        %v3750 = vmul.f32 %v2230, %v3738
        %v3751 = vmul.f32 %v2231, %v3739
        %v3752 = vmul.f32 %v2241, %v3740
        %3753 = vst [vmem:[#allocation2 + $0x40] sm:$0xff] %v3745
        %3754 = vst [vmem:[#allocation2 + $0x48] sm:$0xff] %v3746
        %3755 = vst [vmem:[#allocation2 + $0x50] sm:$0xff] %v3747
        %3756 = vst [vmem:[#allocation2 + $0x58] sm:$0xff] %v3748
        %3757 = vst [vmem:[#allocation2 + $0x60] sm:$0xff] %v3749
        %3758 = vst [vmem:[#allocation2 + $0x68] sm:$0xff] %v3750
        %3759 = vst [vmem:[#allocation2 + $0x70] sm:$0xff] %v3751
        %3760 = vst [vmem:[#allocation2 + $0x78] sm:$0xff] %v3752
        %v3761 = vld [vmem:[%s1663] ss:$8 sm:$0xf]
        %v3763 = vperm.slane %v3761, 0
        %v3764 = vperm.slane %v3761, 1
        %v3765 = vperm.slane %v3761, 2
        %v3766 = vperm.slane %v3761, 3
        %v3771 = vmul.f32 %v2286, %v3763
        %v3772 = vmul.f32 %v2287, %v3764
        %v3773 = vmul.f32 %v2288, %v3765
        %v3774 = vmul.f32 %v2300, %v3766
        %v3775 = vmul.f32 %v2289, %v3763
        %v3776 = vmul.f32 %v2290, %v3764
        %v3777 = vmul.f32 %v2291, %v3765
        %v3778 = vmul.f32 %v2301, %v3766
        %3779 = vst [vmem:[#allocation2 + $0x80] sm:$0xff] %v3771
        %3780 = vst [vmem:[#allocation2 + $0x88] sm:$0xff] %v3772
        %3781 = vst [vmem:[#allocation2 + $0x90] sm:$0xff] %v3773
        %3782 = vst [vmem:[#allocation2 + $0x98] sm:$0xff] %v3774
        %3783 = vst [vmem:[#allocation2 + $0xa0] sm:$0xff] %v3775
        %3784 = vst [vmem:[#allocation2 + $0xa8] sm:$0xff] %v3776
        %3785 = vst [vmem:[#allocation2 + $0xb0] sm:$0xff] %v3777
        %3786 = vst [vmem:[#allocation2 + $0xb8] sm:$0xff] %v3778
        %v3787 = vld [vmem:[%s1682] ss:$8 sm:$0xf]
        %v3789 = vperm.slane %v3787, 0
        %v3790 = vperm.slane %v3787, 1
        %v3791 = vperm.slane %v3787, 2
        %v3792 = vperm.slane %v3787, 3
        %v3797 = vmul.f32 %v2346, %v3789
        %v3798 = vmul.f32 %v2347, %v3790
        %v3799 = vmul.f32 %v2348, %v3791
        %v3800 = vmul.f32 %v2360, %v3792
        %v3801 = vmul.f32 %v2349, %v3789
        %v3802 = vmul.f32 %v2350, %v3790
        %v3803 = vmul.f32 %v2351, %v3791
        %v3804 = vmul.f32 %v2361, %v3792
        %3805 = vst [vmem:[#allocation2 + $0xc0] sm:$0xff] %v3797
        %3806 = vst [vmem:[#allocation2 + $0xc8] sm:$0xff] %v3798
        %3807 = vst [vmem:[#allocation2 + $0xd0] sm:$0xff] %v3799
        %3808 = vst [vmem:[#allocation2 + $0xd8] sm:$0xff] %v3800
        %3809 = vst [vmem:[#allocation2 + $0xe0] sm:$0xff] %v3801
        %3810 = vst [vmem:[#allocation2 + $0xe8] sm:$0xff] %v3802
        %3811 = vst [vmem:[#allocation2 + $0xf0] sm:$0xff] %v3803
        %3812 = vst [vmem:[#allocation2 + $0xf8] sm:$0xff] %v3804
        %v3813 = vld [vmem:[%s1701] ss:$8 sm:$0xf]
        %v3815 = vperm.slane %v3813, 0
        %v3816 = vperm.slane %v3813, 1
        %v3817 = vperm.slane %v3813, 2
        %v3818 = vperm.slane %v3813, 3
        %v3823 = vmul.f32 %v2406, %v3815
        %v3824 = vmul.f32 %v2407, %v3816
        %v3825 = vmul.f32 %v2408, %v3817
        %v3826 = vmul.f32 %v2420, %v3818
        %v3827 = vmul.f32 %v2409, %v3815
        %v3828 = vmul.f32 %v2410, %v3816
        %v3829 = vmul.f32 %v2411, %v3817
        %v3830 = vmul.f32 %v2421, %v3818
        %3831 = vst [vmem:[#allocation2 + $0x100] sm:$0xff] %v3823
        %3832 = vst [vmem:[#allocation2 + $0x108] sm:$0xff] %v3824
        %3833 = vst [vmem:[#allocation2 + $0x110] sm:$0xff] %v3825
        %3834 = vst [vmem:[#allocation2 + $0x118] sm:$0xff] %v3826
        %3835 = vst [vmem:[#allocation2 + $0x120] sm:$0xff] %v3827
        %3836 = vst [vmem:[#allocation2 + $0x128] sm:$0xff] %v3828
        %3837 = vst [vmem:[#allocation2 + $0x130] sm:$0xff] %v3829
        %3838 = vst [vmem:[#allocation2 + $0x138] sm:$0xff] %v3830
        %v3839 = vld [vmem:[%s1720] ss:$8 sm:$0xf]
        %v3841 = vperm.slane %v3839, 0
        %v3842 = vperm.slane %v3839, 1
        %v3843 = vperm.slane %v3839, 2
        %v3844 = vperm.slane %v3839, 3
        %v3849 = vmul.f32 %v2466, %v3841
        %v3850 = vmul.f32 %v2467, %v3842
        %v3851 = vmul.f32 %v2468, %v3843
        %v3852 = vmul.f32 %v2480, %v3844
        %v3853 = vmul.f32 %v2469, %v3841
        %v3854 = vmul.f32 %v2470, %v3842
        %v3855 = vmul.f32 %v2471, %v3843
        %v3856 = vmul.f32 %v2481, %v3844
        %3857 = vst [vmem:[#allocation2 + $0x140] sm:$0xff] %v3849
        %3858 = vst [vmem:[#allocation2 + $0x148] sm:$0xff] %v3850
        %3859 = vst [vmem:[#allocation2 + $0x150] sm:$0xff] %v3851
        %3860 = vst [vmem:[#allocation2 + $0x158] sm:$0xff] %v3852
        %3861 = vst [vmem:[#allocation2 + $0x160] sm:$0xff] %v3853
        %3862 = vst [vmem:[#allocation2 + $0x168] sm:$0xff] %v3854
        %3863 = vst [vmem:[#allocation2 + $0x170] sm:$0xff] %v3855
        %3864 = vst [vmem:[#allocation2 + $0x178] sm:$0xff] %v3856
        %v3865 = vld [vmem:[%s1739] ss:$8 sm:$0xf]
        %v3867 = vperm.slane %v3865, 0
        %v3868 = vperm.slane %v3865, 1
        %v3869 = vperm.slane %v3865, 2
        %v3870 = vperm.slane %v3865, 3
        %v3875 = vmul.f32 %v2526, %v3867
        %v3876 = vmul.f32 %v2527, %v3868
        %v3877 = vmul.f32 %v2528, %v3869
        %v3878 = vmul.f32 %v2540, %v3870
        %v3879 = vmul.f32 %v2529, %v3867
        %v3880 = vmul.f32 %v2530, %v3868
        %v3881 = vmul.f32 %v2531, %v3869
        %v3882 = vmul.f32 %v2541, %v3870
        %3883 = vst [vmem:[#allocation2 + $0x180] sm:$0xff] %v3875
        %3884 = vst [vmem:[#allocation2 + $0x188] sm:$0xff] %v3876
        %3885 = vst [vmem:[#allocation2 + $0x190] sm:$0xff] %v3877
        %3886 = vst [vmem:[#allocation2 + $0x198] sm:$0xff] %v3878
        %3887 = vst [vmem:[#allocation2 + $0x1a0] sm:$0xff] %v3879
        %3888 = vst [vmem:[#allocation2 + $0x1a8] sm:$0xff] %v3880
        %3889 = vst [vmem:[#allocation2 + $0x1b0] sm:$0xff] %v3881
        %3890 = vst [vmem:[#allocation2 + $0x1b8] sm:$0xff] %v3882
        %v3891 = vld [vmem:[%s1758] ss:$8 sm:$0xf]
        %v3893 = vperm.slane %v3891, 0
        %v3894 = vperm.slane %v3891, 1
        %v3895 = vperm.slane %v3891, 2
        %v3896 = vperm.slane %v3891, 3
        %v3901 = vmul.f32 %v2586, %v3893
        %v3902 = vmul.f32 %v2587, %v3894
        %v3903 = vmul.f32 %v2588, %v3895
        %v3904 = vmul.f32 %v2600, %v3896
        %v3905 = vmul.f32 %v2589, %v3893
        %v3906 = vmul.f32 %v2590, %v3894
        %v3907 = vmul.f32 %v2591, %v3895
        %v3908 = vmul.f32 %v2601, %v3896
        %3909 = vst [vmem:[#allocation2 + $0x1c0] sm:$0xff] %v3901
        %3910 = vst [vmem:[#allocation2 + $0x1c8] sm:$0xff] %v3902
        %3911 = vst [vmem:[#allocation2 + $0x1d0] sm:$0xff] %v3903
        %3912 = vst [vmem:[#allocation2 + $0x1d8] sm:$0xff] %v3904
        %3913 = vst [vmem:[#allocation2 + $0x1e0] sm:$0xff] %v3905
        %3914 = vst [vmem:[#allocation2 + $0x1e8] sm:$0xff] %v3906
        %3915 = vst [vmem:[#allocation2 + $0x1f0] sm:$0xff] %v3907
        %3916 = vst [vmem:[#allocation2 + $0x1f8] sm:$0xff] %v3908
        %v3917 = vld [vmem:[%s1777] ss:$8 sm:$0xf]
        %v3919 = vperm.slane %v3917, 0
        %v3920 = vperm.slane %v3917, 1
        %v3921 = vperm.slane %v3917, 2
        %v3922 = vperm.slane %v3917, 3
        %v3927 = vmul.f32 %v2646, %v3919
        %v3928 = vmul.f32 %v2647, %v3920
        %v3929 = vmul.f32 %v2648, %v3921
        %v3930 = vmul.f32 %v2660, %v3922
        %v3931 = vmul.f32 %v2649, %v3919
        %v3932 = vmul.f32 %v2650, %v3920
        %v3933 = vmul.f32 %v2651, %v3921
        %v3934 = vmul.f32 %v2661, %v3922
        %3935 = vst [vmem:[#allocation2 + $0x200] sm:$0xff] %v3927
        %3936 = vst [vmem:[#allocation2 + $0x208] sm:$0xff] %v3928
        %3937 = vst [vmem:[#allocation2 + $0x210] sm:$0xff] %v3929
        %3938 = vst [vmem:[#allocation2 + $0x218] sm:$0xff] %v3930
        %3939 = vst [vmem:[#allocation2 + $0x220] sm:$0xff] %v3931
        %3940 = vst [vmem:[#allocation2 + $0x228] sm:$0xff] %v3932
        %3941 = vst [vmem:[#allocation2 + $0x230] sm:$0xff] %v3933
        %3942 = vst [vmem:[#allocation2 + $0x238] sm:$0xff] %v3934
        %s3943 = scalar_lea.vmem [#allocation9], 64
        %v3944 = vld [vmem:[%s3943] sm:$0xff]
        %v3945 = vld [vmem:[%s3943 + $0x8] sm:$0xff]
        %v3946 = vld [vmem:[%s3943 + $0x10] sm:$0xff]
        %v3947 = vld [vmem:[%s3943 + $0x18] sm:$0xff]
        %v3948 = vld [vmem:[#allocation2] sm:$0xff]
        %v3949 = vld [vmem:[#allocation2 + $0x8] sm:$0xff]
        %v3950 = vld [vmem:[#allocation2 + $0x10] sm:$0xff]
        %v3951 = vld [vmem:[#allocation2 + $0x18] sm:$0xff]
        %v3952 = vld [vmem:[#allocation2 + $0x20] sm:$0xff]
        %v3953 = vld [vmem:[#allocation2 + $0x28] sm:$0xff]
        %v3954 = vld [vmem:[#allocation2 + $0x30] sm:$0xff]
        %v3955 = vld [vmem:[#allocation2 + $0x38] sm:$0xff]
        %v3956 = vld [vmem:[#allocation2 + $0x40] sm:$0xff]
        %v3957 = vld [vmem:[#allocation2 + $0x48] sm:$0xff]
        %v3958 = vld [vmem:[#allocation2 + $0x50] sm:$0xff]
        %v3959 = vld [vmem:[#allocation2 + $0x58] sm:$0xff]
        %v3960 = vld [vmem:[#allocation2 + $0x60] sm:$0xff]
        %v3961 = vld [vmem:[#allocation2 + $0x68] sm:$0xff]
        %v3962 = vld [vmem:[#allocation2 + $0x70] sm:$0xff]
        %v3963 = vld [vmem:[#allocation2 + $0x78] sm:$0xff]
        %v3964 = vld [vmem:[#allocation2 + $0x80] sm:$0xff]
        %v3965 = vld [vmem:[#allocation2 + $0x88] sm:$0xff]
        %v3966 = vld [vmem:[#allocation2 + $0x90] sm:$0xff]
        %v3967 = vld [vmem:[#allocation2 + $0x98] sm:$0xff]
        %v3968 = vld [vmem:[#allocation2 + $0xa0] sm:$0xff]
        %v3969 = vld [vmem:[#allocation2 + $0xa8] sm:$0xff]
        %v3970 = vld [vmem:[#allocation2 + $0xb0] sm:$0xff]
        %v3971 = vld [vmem:[#allocation2 + $0xb8] sm:$0xff]
        %v3972 = vld [vmem:[#allocation2 + $0xc0] sm:$0xff]
        %v3973 = vld [vmem:[#allocation2 + $0xc8] sm:$0xff]
        %v3974 = vld [vmem:[#allocation2 + $0xd0] sm:$0xff]
        %v3975 = vld [vmem:[#allocation2 + $0xd8] sm:$0xff]
        %v3976 = vld [vmem:[#allocation2 + $0xe0] sm:$0xff]
        %v3977 = vld [vmem:[#allocation2 + $0xe8] sm:$0xff]
        %v3978 = vld [vmem:[#allocation2 + $0xf0] sm:$0xff]
        %v3979 = vld [vmem:[#allocation2 + $0xf8] sm:$0xff]
        %v3980 = vld [vmem:[#allocation2 + $0x100] sm:$0xff]
        %v3981 = vld [vmem:[#allocation2 + $0x108] sm:$0xff]
        %v3982 = vld [vmem:[#allocation2 + $0x110] sm:$0xff]
        %v3983 = vld [vmem:[#allocation2 + $0x118] sm:$0xff]
        %v3984 = vld [vmem:[#allocation2 + $0x120] sm:$0xff]
        %v3985 = vld [vmem:[#allocation2 + $0x128] sm:$0xff]
        %v3986 = vld [vmem:[#allocation2 + $0x130] sm:$0xff]
        %v3987 = vld [vmem:[#allocation2 + $0x138] sm:$0xff]
        %v3988 = vld [vmem:[#allocation2 + $0x140] sm:$0xff]
        %v3989 = vld [vmem:[#allocation2 + $0x148] sm:$0xff]
        %v3990 = vld [vmem:[#allocation2 + $0x150] sm:$0xff]
        %v3991 = vld [vmem:[#allocation2 + $0x158] sm:$0xff]
        %v3992 = vld [vmem:[#allocation2 + $0x160] sm:$0xff]
        %v3993 = vld [vmem:[#allocation2 + $0x168] sm:$0xff]
        %v3994 = vld [vmem:[#allocation2 + $0x170] sm:$0xff]
        %v3995 = vld [vmem:[#allocation2 + $0x178] sm:$0xff]
        %v3996 = vld [vmem:[#allocation2 + $0x180] sm:$0xff]
        %v3997 = vld [vmem:[#allocation2 + $0x188] sm:$0xff]
        %v3998 = vld [vmem:[#allocation2 + $0x190] sm:$0xff]
        %v3999 = vld [vmem:[#allocation2 + $0x198] sm:$0xff]
        %v4000 = vld [vmem:[#allocation2 + $0x1a0] sm:$0xff]
        %v4001 = vld [vmem:[#allocation2 + $0x1a8] sm:$0xff]
        %v4002 = vld [vmem:[#allocation2 + $0x1b0] sm:$0xff]
        %v4003 = vld [vmem:[#allocation2 + $0x1b8] sm:$0xff]
        %v4004 = vld [vmem:[#allocation2 + $0x1c0] sm:$0xff]
        %v4005 = vld [vmem:[#allocation2 + $0x1c8] sm:$0xff]
        %v4006 = vld [vmem:[#allocation2 + $0x1d0] sm:$0xff]
        %v4007 = vld [vmem:[#allocation2 + $0x1d8] sm:$0xff]
        %v4008 = vld [vmem:[#allocation2 + $0x1e0] sm:$0xff]
        %v4009 = vld [vmem:[#allocation2 + $0x1e8] sm:$0xff]
        %v4010 = vld [vmem:[#allocation2 + $0x1f0] sm:$0xff]
        %v4011 = vld [vmem:[#allocation2 + $0x1f8] sm:$0xff]
        %v4012 = vld [vmem:[#allocation2 + $0x200] sm:$0xff]
        %v4013 = vld [vmem:[#allocation2 + $0x208] sm:$0xff]
        %v4014 = vld [vmem:[#allocation2 + $0x210] sm:$0xff]
        %v4015 = vld [vmem:[#allocation2 + $0x218] sm:$0xff]
        %v4016 = vld [vmem:[#allocation2 + $0x220] sm:$0xff]
        %v4017 = vld [vmem:[#allocation2 + $0x228] sm:$0xff]
        %v4018 = vld [vmem:[#allocation2 + $0x230] sm:$0xff]
        %v4019 = vld [vmem:[#allocation2 + $0x238] sm:$0xff]
        %v4021 = vsel %vm1973, %v3945, 0
        %v4024 = vsel %vm1973, %v3947, 0
        %4026 = vmatpush.msra.mxu0 %v4008
        %4027 = vmatpush.msra.mxu0 %v4004
        %4028 = vmatpush.msra.mxu0 %v4000
        %4029 = vmatpush.msra.mxu0 %v3996
        %4030 = vmatpush.msra.mxu0 %v3992
        %4031 = vmatpush.msra.mxu0 %v3988
        %4032 = vmatpush.msra.mxu0 %v3984
        %4033 = vmatpush.msra.mxu0 %v3980
        %4034 = vmatpush.msra.mxu0 %v3976
        %4035 = vmatpush.msra.mxu0 %v3972
        %4036 = vmatpush.msra.mxu0 %v3968
        %4037 = vmatpush.msra.mxu0 %v3964
        %4038 = vmatpush.msra.mxu0 %v3960
        %4039 = vmatpush.msra.mxu0 %v3956
        %4040 = vmatpush.msra.mxu0 %v3952
        %4041 = vmatpush.msra.mxu0 %v3948
        %4042 = vmatmul.f32.gmra.mxu0 %v3944
        %v4043 = vpop.f32.mrf.mxu0
        %v4044 = vadd.f32 0.0, %v4043
        %4045 = vmatmul.f32.gmra.mxu0 %v3946
        %v4046 = vpop.f32.mrf.mxu0
        %v4047 = vadd.f32 0.0, %v4046
        %4048 = vdwg.mxu0
        %4049 = vmatpush.msra.mxu0 0.0
        %4050 = vmatpush.msra.mxu0 0.0
        %4051 = vmatpush.msra.mxu0 0.0
        %4052 = vmatpush.msra.mxu0 0.0
        %4053 = vmatpush.msra.mxu0 0.0
        %4054 = vmatpush.msra.mxu0 0.0
        %4055 = vmatpush.msra.mxu0 0.0
        %4056 = vmatpush.msra.mxu0 0.0
        %4057 = vmatpush.msra.mxu0 0.0
        %4058 = vmatpush.msra.mxu0 0.0
        %4059 = vmatpush.msra.mxu0 0.0
        %4060 = vmatpush.msra.mxu0 0.0
        %4061 = vmatpush.msra.mxu0 0.0
        %4062 = vmatpush.msra.mxu0 0.0
        %4063 = vmatpush.msra.mxu0 %v4016
        %4064 = vmatpush.msra.mxu0 %v4012
        %4065 = vmatmul.f32.gmra.mxu0 %v4021
        %v4066 = vpop.f32.mrf.mxu0
        %v4067 = vadd.f32 %v4044, %v4066
        %4068 = vmatmul.f32.gmra.mxu0 %v4024
        %v4069 = vpop.f32.mrf.mxu0
        %v4070 = vadd.f32 %v4047, %v4069
        %4071 = vdwg.mxu0
        %4072 = vmatpush.msra.mxu0 %v4009
        %4073 = vmatpush.msra.mxu0 %v4005
        %4074 = vmatpush.msra.mxu0 %v4001
        %4075 = vmatpush.msra.mxu0 %v3997
        %4076 = vmatpush.msra.mxu0 %v3993
        %4077 = vmatpush.msra.mxu0 %v3989
        %4078 = vmatpush.msra.mxu0 %v3985
        %4079 = vmatpush.msra.mxu0 %v3981
        %4080 = vmatpush.msra.mxu0 %v3977
        %4081 = vmatpush.msra.mxu0 %v3973
        %4082 = vmatpush.msra.mxu0 %v3969
        %4083 = vmatpush.msra.mxu0 %v3965
        %4084 = vmatpush.msra.mxu0 %v3961
        %4085 = vmatpush.msra.mxu0 %v3957
        %4086 = vmatpush.msra.mxu0 %v3953
        %4087 = vmatpush.msra.mxu0 %v3949
        %4088 = vmatmul.f32.gmra.mxu0 %v3944
        %v4089 = vpop.f32.mrf.mxu0
        %v4090 = vadd.f32 0.0, %v4089
        %4091 = vmatmul.f32.gmra.mxu0 %v3946
        %v4092 = vpop.f32.mrf.mxu0
        %v4093 = vadd.f32 0.0, %v4092
        %4094 = vdwg.mxu0
        %4095 = vmatpush.msra.mxu0 0.0
        %4096 = vmatpush.msra.mxu0 0.0
        %4097 = vmatpush.msra.mxu0 0.0
        %4098 = vmatpush.msra.mxu0 0.0
        %4099 = vmatpush.msra.mxu0 0.0
        %4100 = vmatpush.msra.mxu0 0.0
        %4101 = vmatpush.msra.mxu0 0.0
        %4102 = vmatpush.msra.mxu0 0.0
        %4103 = vmatpush.msra.mxu0 0.0
        %4104 = vmatpush.msra.mxu0 0.0
        %4105 = vmatpush.msra.mxu0 0.0
        %4106 = vmatpush.msra.mxu0 0.0
        %4107 = vmatpush.msra.mxu0 0.0
        %4108 = vmatpush.msra.mxu0 0.0
        %4109 = vmatpush.msra.mxu0 %v4017
        %4110 = vmatpush.msra.mxu0 %v4013
        %4111 = vmatmul.f32.gmra.mxu0 %v4021
        %v4112 = vpop.f32.mrf.mxu0
        %v4113 = vadd.f32 %v4090, %v4112
        %4114 = vmatmul.f32.gmra.mxu0 %v4024
        %v4115 = vpop.f32.mrf.mxu0
        %v4116 = vadd.f32 %v4093, %v4115
        %4117 = vdwg.mxu0
        %4118 = vmatpush.msra.mxu0 %v4010
        %4119 = vmatpush.msra.mxu0 %v4006
        %4120 = vmatpush.msra.mxu0 %v4002
        %4121 = vmatpush.msra.mxu0 %v3998
        %4122 = vmatpush.msra.mxu0 %v3994
        %4123 = vmatpush.msra.mxu0 %v3990
        %4124 = vmatpush.msra.mxu0 %v3986
        %4125 = vmatpush.msra.mxu0 %v3982
        %4126 = vmatpush.msra.mxu0 %v3978
        %4127 = vmatpush.msra.mxu0 %v3974
        %4128 = vmatpush.msra.mxu0 %v3970
        %4129 = vmatpush.msra.mxu0 %v3966
        %4130 = vmatpush.msra.mxu0 %v3962
        %4131 = vmatpush.msra.mxu0 %v3958
        %4132 = vmatpush.msra.mxu0 %v3954
        %4133 = vmatpush.msra.mxu0 %v3950
        %4134 = vmatmul.f32.gmra.mxu0 %v3944
        %v4135 = vpop.f32.mrf.mxu0
        %v4136 = vadd.f32 0.0, %v4135
        %4137 = vmatmul.f32.gmra.mxu0 %v3946
        %v4138 = vpop.f32.mrf.mxu0
        %v4139 = vadd.f32 0.0, %v4138
        %4140 = vdwg.mxu0
        %4141 = vmatpush.msra.mxu0 0.0
        %4142 = vmatpush.msra.mxu0 0.0
        %4143 = vmatpush.msra.mxu0 0.0
        %4144 = vmatpush.msra.mxu0 0.0
        %4145 = vmatpush.msra.mxu0 0.0
        %4146 = vmatpush.msra.mxu0 0.0
        %4147 = vmatpush.msra.mxu0 0.0
        %4148 = vmatpush.msra.mxu0 0.0
        %4149 = vmatpush.msra.mxu0 0.0
        %4150 = vmatpush.msra.mxu0 0.0
        %4151 = vmatpush.msra.mxu0 0.0
        %4152 = vmatpush.msra.mxu0 0.0
        %4153 = vmatpush.msra.mxu0 0.0
        %4154 = vmatpush.msra.mxu0 0.0
        %4155 = vmatpush.msra.mxu0 %v4018
        %4156 = vmatpush.msra.mxu0 %v4014
        %4157 = vmatmul.f32.gmra.mxu0 %v4021
        %v4158 = vpop.f32.mrf.mxu0
        %v4159 = vadd.f32 %v4136, %v4158
        %4160 = vmatmul.f32.gmra.mxu0 %v4024
        %v4161 = vpop.f32.mrf.mxu0
        %v4162 = vadd.f32 %v4139, %v4161
        %4163 = vdwg.mxu0
        %4164 = vmatpush.msra.mxu0 %v4011
        %4165 = vmatpush.msra.mxu0 %v4007
        %4166 = vmatpush.msra.mxu0 %v4003
        %4167 = vmatpush.msra.mxu0 %v3999
        %4168 = vmatpush.msra.mxu0 %v3995
        %4169 = vmatpush.msra.mxu0 %v3991
        %4170 = vmatpush.msra.mxu0 %v3987
        %4171 = vmatpush.msra.mxu0 %v3983
        %4172 = vmatpush.msra.mxu0 %v3979
        %4173 = vmatpush.msra.mxu0 %v3975
        %4174 = vmatpush.msra.mxu0 %v3971
        %4175 = vmatpush.msra.mxu0 %v3967
        %4176 = vmatpush.msra.mxu0 %v3963
        %4177 = vmatpush.msra.mxu0 %v3959
        %4178 = vmatpush.msra.mxu0 %v3955
        %4179 = vmatpush.msra.mxu0 %v3951
        %4180 = vmatmul.f32.gmra.mxu0 %v3944
        %v4181 = vpop.f32.mrf.mxu0
        %v4182 = vadd.f32 0.0, %v4181
        %4183 = vmatmul.f32.gmra.mxu0 %v3946
        %v4184 = vpop.f32.mrf.mxu0
        %v4185 = vadd.f32 0.0, %v4184
        %4186 = vdwg.mxu0
        %4187 = vmatpush.msra.mxu0 0.0
        %4188 = vmatpush.msra.mxu0 0.0
        %4189 = vmatpush.msra.mxu0 0.0
        %4190 = vmatpush.msra.mxu0 0.0
        %4191 = vmatpush.msra.mxu0 0.0
        %4192 = vmatpush.msra.mxu0 0.0
        %4193 = vmatpush.msra.mxu0 0.0
        %4194 = vmatpush.msra.mxu0 0.0
        %4195 = vmatpush.msra.mxu0 0.0
        %4196 = vmatpush.msra.mxu0 0.0
        %4197 = vmatpush.msra.mxu0 0.0
        %4198 = vmatpush.msra.mxu0 0.0
        %4199 = vmatpush.msra.mxu0 0.0
        %4200 = vmatpush.msra.mxu0 0.0
        %4201 = vmatpush.msra.mxu0 %v4019
        %4202 = vmatpush.msra.mxu0 %v4015
        %4203 = vmatmul.f32.gmra.mxu0 %v4021
        %v4204 = vpop.f32.mrf.mxu0
        %v4205 = vadd.f32 %v4182, %v4204
        %4206 = vmatmul.f32.gmra.mxu0 %v4024
        %v4207 = vpop.f32.mrf.mxu0
        %v4208 = vadd.f32 %v4185, %v4207
        %4209 = vdwg.mxu0
        %v4210 = vadd.f32 %v3566, %v4067
        %v4211 = vadd.f32 %v3612, %v4113
        %v4212 = vadd.f32 %v3658, %v4159
        %v4213 = vadd.f32 %v3704, %v4205
        %v4214 = vadd.f32 %v3569, %v4070
        %v4215 = vadd.f32 %v3615, %v4116
        %v4216 = vadd.f32 %v3661, %v4162
        %v4217 = vadd.f32 %v3707, %v4208
        %v4218 = vld [vmem:[%s11] sm:$0xff]
        %v4219 = vld [vmem:[%s11 + $0x8] sm:$0xff]
        %4221 = vset.pattern.permute.xlu0 0
        %4222 = vperm.xlu0 %4221, %v4218
        %v4223 = vpop.permute.xlu0 %4222
        %4226 = vset.pattern.permute.xlu0 0
        %4227 = vperm.xlu0 %4226, %v4219
        %v4228 = vpop.permute.xlu0 %4227
        %v4230 = vadd.f32 %v4210, %v4223
        %v4231 = vadd.f32 %v4211, %v4223
        %v4232 = vadd.f32 %v4212, %v4223
        %v4233 = vadd.f32 %v4213, %v4223
        %v4234 = vadd.f32 %v4214, %v4228
        %v4235 = vadd.f32 %v4215, %v4228
        %v4236 = vadd.f32 %v4216, %v4228
        %v4237 = vadd.f32 %v4217, %v4228
        %4239 = vrot.lane.b32.xlu0 %v609, 73
        %v4240 = vpop.permute.xlu0 %4239
        %4245 = vrot.lane.b32.xlu0 %v606, 73
        %v4246 = vpop.permute.xlu0 %4245
        %4247 = vrot.lane.b32.xlu0 %v607, 73
        %v4248 = vpop.permute.xlu0 %4247
        %4249 = vrot.lane.b32.xlu0 %v608, 73
        %v4250 = vpop.permute.xlu0 %4249
        %v4251 = vsel %vm730, %v4246, %v4248
        %v4252 = vsel %vm730, %v4248, %v4250
        %v4253 = vsel %vm730, %v4250, %v4240
        %v4258 = vsel %vm730, %v4240, %v4246
        %v4259 = vld [vmem:[#allocation6] ss:$8 sm:$0xf]
        %v4261 = vperm.slane %v4259, 0
        %v4262 = vperm.slane %v4259, 1
        %v4263 = vperm.slane %v4259, 2
        %v4264 = vperm.slane %v4259, 3
        %v4269 = vmul.f32 %v4258, %v4261
        %v4270 = vmul.f32 %v4251, %v4262
        %v4271 = vmul.f32 %v4252, %v4263
        %v4272 = vmul.f32 %v4253, %v4264
        %4273 = vst [vmem:[#allocation2] sm:$0xff] %v4269
        %4274 = vst [vmem:[#allocation2 + $0x8] sm:$0xff] %v4270
        %4275 = vst [vmem:[#allocation2 + $0x10] sm:$0xff] %v4271
        %4276 = vst [vmem:[#allocation2 + $0x18] sm:$0xff] %v4272
        %4277 = vrot.lane.b32.xlu0 %v609, 72
        %v4278 = vpop.permute.xlu0 %4277
        %4280 = vrot.lane.b32.xlu0 %v606, 72
        %v4281 = vpop.permute.xlu0 %4280
        %4282 = vrot.lane.b32.xlu0 %v607, 72
        %v4283 = vpop.permute.xlu0 %4282
        %4284 = vrot.lane.b32.xlu0 %v608, 72
        %v4285 = vpop.permute.xlu0 %4284
        %v4286 = vsel %vm766, %v4281, %v4283
        %v4287 = vsel %vm766, %v4283, %v4285
        %v4288 = vsel %vm766, %v4285, %v4278
        %v4293 = vsel %vm766, %v4278, %v4281
        %v4294 = vld [vmem:[%s775] ss:$8 sm:$0xf]
        %v4296 = vperm.slane %v4294, 0
        %v4297 = vperm.slane %v4294, 1
        %v4298 = vperm.slane %v4294, 2
        %v4299 = vperm.slane %v4294, 3
        %v4304 = vmul.f32 %v4293, %v4296
        %v4305 = vmul.f32 %v4286, %v4297
        %v4306 = vmul.f32 %v4287, %v4298
        %v4307 = vmul.f32 %v4288, %v4299
        %4308 = vst [vmem:[#allocation2 + $0x20] sm:$0xff] %v4304
        %4309 = vst [vmem:[#allocation2 + $0x28] sm:$0xff] %v4305
        %4310 = vst [vmem:[#allocation2 + $0x30] sm:$0xff] %v4306
        %4311 = vst [vmem:[#allocation2 + $0x38] sm:$0xff] %v4307
        %4312 = vrot.lane.b32.xlu0 %v609, 71
        %v4313 = vpop.permute.xlu0 %4312
        %4315 = vrot.lane.b32.xlu0 %v606, 71
        %v4316 = vpop.permute.xlu0 %4315
        %4317 = vrot.lane.b32.xlu0 %v607, 71
        %v4318 = vpop.permute.xlu0 %4317
        %4319 = vrot.lane.b32.xlu0 %v608, 71
        %v4320 = vpop.permute.xlu0 %4319
        %v4321 = vsel %vm803, %v4316, %v4318
        %v4322 = vsel %vm803, %v4318, %v4320
        %v4323 = vsel %vm803, %v4320, %v4313
        %v4328 = vsel %vm803, %v4313, %v4316
        %v4329 = vld [vmem:[%s812] ss:$8 sm:$0xf]
        %v4331 = vperm.slane %v4329, 0
        %v4332 = vperm.slane %v4329, 1
        %v4333 = vperm.slane %v4329, 2
        %v4334 = vperm.slane %v4329, 3
        %v4339 = vmul.f32 %v4328, %v4331
        %v4340 = vmul.f32 %v4321, %v4332
        %v4341 = vmul.f32 %v4322, %v4333
        %v4342 = vmul.f32 %v4323, %v4334
        %4343 = vst [vmem:[#allocation2 + $0x40] sm:$0xff] %v4339
        %4344 = vst [vmem:[#allocation2 + $0x48] sm:$0xff] %v4340
        %4345 = vst [vmem:[#allocation2 + $0x50] sm:$0xff] %v4341
        %4346 = vst [vmem:[#allocation2 + $0x58] sm:$0xff] %v4342
        %4347 = vrot.lane.b32.xlu0 %v609, 65
        %v4348 = vpop.permute.xlu0 %4347
        %4350 = vrot.lane.b32.xlu0 %v606, 65
        %v4351 = vpop.permute.xlu0 %4350
        %4352 = vrot.lane.b32.xlu0 %v607, 65
        %v4353 = vpop.permute.xlu0 %4352
        %4354 = vrot.lane.b32.xlu0 %v608, 65
        %v4355 = vpop.permute.xlu0 %4354
        %v4356 = vsel %vm840, %v4351, %v4353
        %v4357 = vsel %vm840, %v4353, %v4355
        %v4358 = vsel %vm840, %v4355, %v4348
        %v4363 = vsel %vm840, %v4348, %v4351
        %v4364 = vld [vmem:[%s849] ss:$8 sm:$0xf]
        %v4366 = vperm.slane %v4364, 0
        %v4367 = vperm.slane %v4364, 1
        %v4368 = vperm.slane %v4364, 2
        %v4369 = vperm.slane %v4364, 3
        %v4374 = vmul.f32 %v4363, %v4366
        %v4375 = vmul.f32 %v4356, %v4367
        %v4376 = vmul.f32 %v4357, %v4368
        %v4377 = vmul.f32 %v4358, %v4369
        %4378 = vst [vmem:[#allocation2 + $0x60] sm:$0xff] %v4374
        %4379 = vst [vmem:[#allocation2 + $0x68] sm:$0xff] %v4375
        %4380 = vst [vmem:[#allocation2 + $0x70] sm:$0xff] %v4376
        %4381 = vst [vmem:[#allocation2 + $0x78] sm:$0xff] %v4377
        %4382 = vrot.lane.b32.xlu0 %v609, 64
        %v4383 = vpop.permute.xlu0 %4382
        %4385 = vrot.lane.b32.xlu0 %v606, 64
        %v4386 = vpop.permute.xlu0 %4385
        %4387 = vrot.lane.b32.xlu0 %v607, 64
        %v4388 = vpop.permute.xlu0 %4387
        %4389 = vrot.lane.b32.xlu0 %v608, 64
        %v4390 = vpop.permute.xlu0 %4389
        %v4391 = vsel %vm877, %v4386, %v4388
        %v4392 = vsel %vm877, %v4388, %v4390
        %v4393 = vsel %vm877, %v4390, %v4383
        %v4398 = vsel %vm877, %v4383, %v4386
        %v4399 = vld [vmem:[%s886] ss:$8 sm:$0xf]
        %v4401 = vperm.slane %v4399, 0
        %v4402 = vperm.slane %v4399, 1
        %v4403 = vperm.slane %v4399, 2
        %v4404 = vperm.slane %v4399, 3
        %v4409 = vmul.f32 %v4398, %v4401
        %v4410 = vmul.f32 %v4391, %v4402
        %v4411 = vmul.f32 %v4392, %v4403
        %v4412 = vmul.f32 %v4393, %v4404
        %4413 = vst [vmem:[#allocation2 + $0x80] sm:$0xff] %v4409
        %4414 = vst [vmem:[#allocation2 + $0x88] sm:$0xff] %v4410
        %4415 = vst [vmem:[#allocation2 + $0x90] sm:$0xff] %v4411
        %4416 = vst [vmem:[#allocation2 + $0x98] sm:$0xff] %v4412
        %4417 = vrot.lane.b32.xlu0 %v609, 63
        %v4418 = vpop.permute.xlu0 %4417
        %4420 = vrot.lane.b32.xlu0 %v606, 63
        %v4421 = vpop.permute.xlu0 %4420
        %4422 = vrot.lane.b32.xlu0 %v607, 63
        %v4423 = vpop.permute.xlu0 %4422
        %4424 = vrot.lane.b32.xlu0 %v608, 63
        %v4425 = vpop.permute.xlu0 %4424
        %v4426 = vsel %vm914, %v4421, %v4423
        %v4427 = vsel %vm914, %v4423, %v4425
        %v4428 = vsel %vm914, %v4425, %v4418
        %v4433 = vsel %vm914, %v4418, %v4421
        %v4434 = vld [vmem:[%s923] ss:$8 sm:$0xf]
        %v4436 = vperm.slane %v4434, 0
        %v4437 = vperm.slane %v4434, 1
        %v4438 = vperm.slane %v4434, 2
        %v4439 = vperm.slane %v4434, 3
        %v4444 = vmul.f32 %v4433, %v4436
        %v4445 = vmul.f32 %v4426, %v4437
        %v4446 = vmul.f32 %v4427, %v4438
        %v4447 = vmul.f32 %v4428, %v4439
        %4448 = vst [vmem:[#allocation2 + $0xa0] sm:$0xff] %v4444
        %4449 = vst [vmem:[#allocation2 + $0xa8] sm:$0xff] %v4445
        %4450 = vst [vmem:[#allocation2 + $0xb0] sm:$0xff] %v4446
        %4451 = vst [vmem:[#allocation2 + $0xb8] sm:$0xff] %v4447
        %4452 = vrot.lane.b32.xlu0 %v609, 57
        %v4453 = vpop.permute.xlu0 %4452
        %4455 = vrot.lane.b32.xlu0 %v606, 57
        %v4456 = vpop.permute.xlu0 %4455
        %4457 = vrot.lane.b32.xlu0 %v607, 57
        %v4458 = vpop.permute.xlu0 %4457
        %4459 = vrot.lane.b32.xlu0 %v608, 57
        %v4460 = vpop.permute.xlu0 %4459
        %v4461 = vsel %vm951, %v4456, %v4458
        %v4462 = vsel %vm951, %v4458, %v4460
        %v4463 = vsel %vm951, %v4460, %v4453
        %v4468 = vsel %vm951, %v4453, %v4456
        %v4469 = vld [vmem:[%s960] ss:$8 sm:$0xf]
        %v4471 = vperm.slane %v4469, 0
        %v4472 = vperm.slane %v4469, 1
        %v4473 = vperm.slane %v4469, 2
        %v4474 = vperm.slane %v4469, 3
        %v4479 = vmul.f32 %v4468, %v4471
        %v4480 = vmul.f32 %v4461, %v4472
        %v4481 = vmul.f32 %v4462, %v4473
        %v4482 = vmul.f32 %v4463, %v4474
        %4483 = vst [vmem:[#allocation2 + $0xc0] sm:$0xff] %v4479
        %4484 = vst [vmem:[#allocation2 + $0xc8] sm:$0xff] %v4480
        %4485 = vst [vmem:[#allocation2 + $0xd0] sm:$0xff] %v4481
        %4486 = vst [vmem:[#allocation2 + $0xd8] sm:$0xff] %v4482
        %4487 = vrot.lane.b32.xlu0 %v609, 56
        %v4488 = vpop.permute.xlu0 %4487
        %4490 = vrot.lane.b32.xlu0 %v606, 56
        %v4491 = vpop.permute.xlu0 %4490
        %4492 = vrot.lane.b32.xlu0 %v607, 56
        %v4493 = vpop.permute.xlu0 %4492
        %4494 = vrot.lane.b32.xlu0 %v608, 56
        %v4495 = vpop.permute.xlu0 %4494
        %v4496 = vsel %vm988, %v4491, %v4493
        %v4497 = vsel %vm988, %v4493, %v4495
        %v4498 = vsel %vm988, %v4495, %v4488
        %v4503 = vsel %vm988, %v4488, %v4491
        %v4504 = vld [vmem:[%s997] ss:$8 sm:$0xf]
        %v4506 = vperm.slane %v4504, 0
        %v4507 = vperm.slane %v4504, 1
        %v4508 = vperm.slane %v4504, 2
        %v4509 = vperm.slane %v4504, 3
        %v4514 = vmul.f32 %v4503, %v4506
        %v4515 = vmul.f32 %v4496, %v4507
        %v4516 = vmul.f32 %v4497, %v4508
        %v4517 = vmul.f32 %v4498, %v4509
        %4518 = vst [vmem:[#allocation2 + $0xe0] sm:$0xff] %v4514
        %4519 = vst [vmem:[#allocation2 + $0xe8] sm:$0xff] %v4515
        %4520 = vst [vmem:[#allocation2 + $0xf0] sm:$0xff] %v4516
        %4521 = vst [vmem:[#allocation2 + $0xf8] sm:$0xff] %v4517
        %4522 = vrot.lane.b32.xlu0 %v609, 55
        %v4523 = vpop.permute.xlu0 %4522
        %4525 = vrot.lane.b32.xlu0 %v606, 55
        %v4526 = vpop.permute.xlu0 %4525
        %4527 = vrot.lane.b32.xlu0 %v607, 55
        %v4528 = vpop.permute.xlu0 %4527
        %4529 = vrot.lane.b32.xlu0 %v608, 55
        %v4530 = vpop.permute.xlu0 %4529
        %v4531 = vsel %vm1025, %v4526, %v4528
        %v4532 = vsel %vm1025, %v4528, %v4530
        %v4533 = vsel %vm1025, %v4530, %v4523
        %v4538 = vsel %vm1025, %v4523, %v4526
        %v4539 = vld [vmem:[%s1034] ss:$8 sm:$0xf]
        %v4541 = vperm.slane %v4539, 0
        %v4542 = vperm.slane %v4539, 1
        %v4543 = vperm.slane %v4539, 2
        %v4544 = vperm.slane %v4539, 3
        %v4549 = vmul.f32 %v4538, %v4541
        %v4550 = vmul.f32 %v4531, %v4542
        %v4551 = vmul.f32 %v4532, %v4543
        %v4552 = vmul.f32 %v4533, %v4544
        %4553 = vst [vmem:[#allocation2 + $0x100] sm:$0xff] %v4549
        %4554 = vst [vmem:[#allocation2 + $0x108] sm:$0xff] %v4550
        %4555 = vst [vmem:[#allocation2 + $0x110] sm:$0xff] %v4551
        %4556 = vst [vmem:[#allocation2 + $0x118] sm:$0xff] %v4552
        %v4557 = vld [vmem:[#allocation11] sm:$0xff]
        %v4558 = vld [vmem:[#allocation11 + $0x8] sm:$0xff]
        %v4559 = vld [vmem:[#allocation2] sm:$0xff]
        %v4560 = vld [vmem:[#allocation2 + $0x8] sm:$0xff]
        %v4561 = vld [vmem:[#allocation2 + $0x10] sm:$0xff]
        %v4562 = vld [vmem:[#allocation2 + $0x18] sm:$0xff]
        %v4563 = vld [vmem:[#allocation2 + $0x20] sm:$0xff]
        %v4564 = vld [vmem:[#allocation2 + $0x28] sm:$0xff]
        %v4565 = vld [vmem:[#allocation2 + $0x30] sm:$0xff]
        %v4566 = vld [vmem:[#allocation2 + $0x38] sm:$0xff]
        %v4567 = vld [vmem:[#allocation2 + $0x40] sm:$0xff]
        %v4568 = vld [vmem:[#allocation2 + $0x48] sm:$0xff]
        %v4569 = vld [vmem:[#allocation2 + $0x50] sm:$0xff]
        %v4570 = vld [vmem:[#allocation2 + $0x58] sm:$0xff]
        %v4571 = vld [vmem:[#allocation2 + $0x60] sm:$0xff]
        %v4572 = vld [vmem:[#allocation2 + $0x68] sm:$0xff]
        %v4573 = vld [vmem:[#allocation2 + $0x70] sm:$0xff]
        %v4574 = vld [vmem:[#allocation2 + $0x78] sm:$0xff]
        %v4575 = vld [vmem:[#allocation2 + $0x80] sm:$0xff]
        %v4576 = vld [vmem:[#allocation2 + $0x88] sm:$0xff]
        %v4577 = vld [vmem:[#allocation2 + $0x90] sm:$0xff]
        %v4578 = vld [vmem:[#allocation2 + $0x98] sm:$0xff]
        %v4579 = vld [vmem:[#allocation2 + $0xa0] sm:$0xff]
        %v4580 = vld [vmem:[#allocation2 + $0xa8] sm:$0xff]
        %v4581 = vld [vmem:[#allocation2 + $0xb0] sm:$0xff]
        %v4582 = vld [vmem:[#allocation2 + $0xb8] sm:$0xff]
        %v4583 = vld [vmem:[#allocation2 + $0xc0] sm:$0xff]
        %v4584 = vld [vmem:[#allocation2 + $0xc8] sm:$0xff]
        %v4585 = vld [vmem:[#allocation2 + $0xd0] sm:$0xff]
        %v4586 = vld [vmem:[#allocation2 + $0xd8] sm:$0xff]
        %v4587 = vld [vmem:[#allocation2 + $0xe0] sm:$0xff]
        %v4588 = vld [vmem:[#allocation2 + $0xe8] sm:$0xff]
        %v4589 = vld [vmem:[#allocation2 + $0xf0] sm:$0xff]
        %v4590 = vld [vmem:[#allocation2 + $0xf8] sm:$0xff]
        %v4591 = vld [vmem:[#allocation2 + $0x100] sm:$0xff]
        %v4592 = vld [vmem:[#allocation2 + $0x108] sm:$0xff]
        %v4593 = vld [vmem:[#allocation2 + $0x110] sm:$0xff]
        %v4594 = vld [vmem:[#allocation2 + $0x118] sm:$0xff]
        %4595 = vrot.lane.b32.xlu0 %v609, 9
        %v4596 = vpop.permute.xlu0 %4595
        %4598 = vrot.lane.b32.xlu0 %v606, 9
        %v4599 = vpop.permute.xlu0 %4598
        %4600 = vrot.lane.b32.xlu0 %v607, 9
        %v4601 = vpop.permute.xlu0 %4600
        %4602 = vrot.lane.b32.xlu0 %v608, 9
        %v4603 = vpop.permute.xlu0 %4602
        %v4604 = vsel %vm1100, %v4599, %v4601
        %v4605 = vsel %vm1100, %v4601, %v4603
        %v4606 = vsel %vm1100, %v4603, %v4596
        %v4611 = vsel %vm1100, %v4596, %v4599
        %v4612 = vld [vmem:[%s1109] ss:$8 sm:$0xf]
        %v4614 = vperm.slane %v4612, 0
        %v4615 = vperm.slane %v4612, 1
        %v4616 = vperm.slane %v4612, 2
        %v4617 = vperm.slane %v4612, 3
        %v4622 = vmul.f32 %v4611, %v4614
        %v4623 = vmul.f32 %v4604, %v4615
        %v4624 = vmul.f32 %v4605, %v4616
        %v4625 = vmul.f32 %v4606, %v4617
        %4626 = vst [vmem:[#allocation2] sm:$0xff] %v4622
        %4627 = vst [vmem:[#allocation2 + $0x8] sm:$0xff] %v4623
        %4628 = vst [vmem:[#allocation2 + $0x10] sm:$0xff] %v4624
        %4629 = vst [vmem:[#allocation2 + $0x18] sm:$0xff] %v4625
        %4630 = vrot.lane.b32.xlu0 %v609, 8
        %v4631 = vpop.permute.xlu0 %4630
        %4633 = vrot.lane.b32.xlu0 %v606, 8
        %v4634 = vpop.permute.xlu0 %4633
        %4635 = vrot.lane.b32.xlu0 %v607, 8
        %v4636 = vpop.permute.xlu0 %4635
        %4637 = vrot.lane.b32.xlu0 %v608, 8
        %v4638 = vpop.permute.xlu0 %4637
        %v4639 = vsel %vm616, %v4634, %v4636
        %v4640 = vsel %vm616, %v4636, %v4638
        %v4641 = vsel %vm616, %v4638, %v4631
        %v4646 = vsel %vm616, %v4631, %v4634
        %v4647 = vld [vmem:[%s1145] ss:$8 sm:$0xf]
        %v4649 = vperm.slane %v4647, 0
        %v4650 = vperm.slane %v4647, 1
        %v4651 = vperm.slane %v4647, 2
        %v4652 = vperm.slane %v4647, 3
        %v4657 = vmul.f32 %v4646, %v4649
        %v4658 = vmul.f32 %v4639, %v4650
        %v4659 = vmul.f32 %v4640, %v4651
        %v4660 = vmul.f32 %v4641, %v4652
        %4661 = vst [vmem:[#allocation2 + $0x20] sm:$0xff] %v4657
        %4662 = vst [vmem:[#allocation2 + $0x28] sm:$0xff] %v4658
        %4663 = vst [vmem:[#allocation2 + $0x30] sm:$0xff] %v4659
        %4664 = vst [vmem:[#allocation2 + $0x38] sm:$0xff] %v4660
        %4665 = vrot.lane.b32.xlu0 %v609, 7
        %v4666 = vpop.permute.xlu0 %4665
        %4668 = vrot.lane.b32.xlu0 %v606, 7
        %v4669 = vpop.permute.xlu0 %4668
        %4670 = vrot.lane.b32.xlu0 %v607, 7
        %v4671 = vpop.permute.xlu0 %4670
        %4672 = vrot.lane.b32.xlu0 %v608, 7
        %v4673 = vpop.permute.xlu0 %4672
        %v4674 = vsel %vm1173, %v4669, %v4671
        %v4675 = vsel %vm1173, %v4671, %v4673
        %v4676 = vsel %vm1173, %v4673, %v4666
        %v4681 = vsel %vm1173, %v4666, %v4669
        %v4682 = vld [vmem:[%s1182] ss:$8 sm:$0xf]
        %v4684 = vperm.slane %v4682, 0
        %v4685 = vperm.slane %v4682, 1
        %v4686 = vperm.slane %v4682, 2
        %v4687 = vperm.slane %v4682, 3
        %v4692 = vmul.f32 %v4681, %v4684
        %v4693 = vmul.f32 %v4674, %v4685
        %v4694 = vmul.f32 %v4675, %v4686
        %v4695 = vmul.f32 %v4676, %v4687
        %4696 = vst [vmem:[#allocation2 + $0x40] sm:$0xff] %v4692
        %4697 = vst [vmem:[#allocation2 + $0x48] sm:$0xff] %v4693
        %4698 = vst [vmem:[#allocation2 + $0x50] sm:$0xff] %v4694
        %4699 = vst [vmem:[#allocation2 + $0x58] sm:$0xff] %v4695
        %4700 = vrot.lane.b32.xlu0 %v609, 1
        %v4701 = vpop.permute.xlu0 %4700
        %4703 = vrot.lane.b32.xlu0 %v606, 1
        %v4704 = vpop.permute.xlu0 %4703
        %4705 = vrot.lane.b32.xlu0 %v607, 1
        %v4706 = vpop.permute.xlu0 %4705
        %4707 = vrot.lane.b32.xlu0 %v608, 1
        %v4708 = vpop.permute.xlu0 %4707
        %v4709 = vsel %vm1210, %v4704, %v4706
        %v4710 = vsel %vm1210, %v4706, %v4708
        %v4711 = vsel %vm1210, %v4708, %v4701
        %v4716 = vsel %vm1210, %v4701, %v4704
        %v4717 = vld [vmem:[%s1219] ss:$8 sm:$0xf]
        %v4719 = vperm.slane %v4717, 0
        %v4720 = vperm.slane %v4717, 1
        %v4721 = vperm.slane %v4717, 2
        %v4722 = vperm.slane %v4717, 3
        %v4727 = vmul.f32 %v4716, %v4719
        %v4728 = vmul.f32 %v4709, %v4720
        %v4729 = vmul.f32 %v4710, %v4721
        %v4730 = vmul.f32 %v4711, %v4722
        %4731 = vst [vmem:[#allocation2 + $0x60] sm:$0xff] %v4727
        %4732 = vst [vmem:[#allocation2 + $0x68] sm:$0xff] %v4728
        %4733 = vst [vmem:[#allocation2 + $0x70] sm:$0xff] %v4729
        %4734 = vst [vmem:[#allocation2 + $0x78] sm:$0xff] %v4730
        %4735 = vst [vmem:[#allocation2 + $0x80] sm:$0xff] %v606
        %4736 = vst [vmem:[#allocation2 + $0x88] sm:$0xff] %v607
        %4737 = vst [vmem:[#allocation2 + $0x90] sm:$0xff] %v608
        %4738 = vst [vmem:[#allocation2 + $0x98] sm:$0xff] %v609
        %4739 = vrot.lane.b32.xlu0 %v606, 127
        %v4740 = vpop.permute.xlu0 %4739
        %4741 = vrot.lane.b32.xlu0 %v607, 127
        %v4742 = vpop.permute.xlu0 %4741
        %4743 = vrot.lane.b32.xlu0 %v608, 127
        %v4744 = vpop.permute.xlu0 %4743
        %4745 = vrot.lane.b32.xlu0 %v609, 127
        %v4746 = vpop.permute.xlu0 %4745
        %v4747 = vsel %vm1250, %v4740, %v4742
        %v4748 = vsel %vm1250, %v4742, %v4744
        %v4749 = vsel %vm1250, %v4744, %v4746
        %v4755 = vsel %vm1250, %v4746, %v4740
        %v4756 = vld [vmem:[%s1260] ss:$8 sm:$0xf]
        %v4758 = vperm.slane %v4756, 0
        %v4759 = vperm.slane %v4756, 1
        %v4760 = vperm.slane %v4756, 2
        %v4761 = vperm.slane %v4756, 3
        %v4766 = vmul.f32 %v4747, %v4758
        %v4767 = vmul.f32 %v4748, %v4759
        %v4768 = vmul.f32 %v4749, %v4760
        %v4769 = vmul.f32 %v4755, %v4761
        %4770 = vst [vmem:[#allocation2 + $0xa0] sm:$0xff] %v4766
        %4771 = vst [vmem:[#allocation2 + $0xa8] sm:$0xff] %v4767
        %4772 = vst [vmem:[#allocation2 + $0xb0] sm:$0xff] %v4768
        %4773 = vst [vmem:[#allocation2 + $0xb8] sm:$0xff] %v4769
        %4774 = vrot.lane.b32.xlu0 %v606, 121
        %v4775 = vpop.permute.xlu0 %4774
        %4776 = vrot.lane.b32.xlu0 %v607, 121
        %v4777 = vpop.permute.xlu0 %4776
        %4778 = vrot.lane.b32.xlu0 %v608, 121
        %v4779 = vpop.permute.xlu0 %4778
        %4780 = vrot.lane.b32.xlu0 %v609, 121
        %v4781 = vpop.permute.xlu0 %4780
        %v4782 = vsel %vm1287, %v4775, %v4777
        %v4783 = vsel %vm1287, %v4777, %v4779
        %v4784 = vsel %vm1287, %v4779, %v4781
        %v4790 = vsel %vm1287, %v4781, %v4775
        %v4791 = vld [vmem:[%s1297] ss:$8 sm:$0xf]
        %v4793 = vperm.slane %v4791, 0
        %v4794 = vperm.slane %v4791, 1
        %v4795 = vperm.slane %v4791, 2
        %v4796 = vperm.slane %v4791, 3
        %v4801 = vmul.f32 %v4782, %v4793
        %v4802 = vmul.f32 %v4783, %v4794
        %v4803 = vmul.f32 %v4784, %v4795
        %v4804 = vmul.f32 %v4790, %v4796
        %4805 = vst [vmem:[#allocation2 + $0xc0] sm:$0xff] %v4801
        %4806 = vst [vmem:[#allocation2 + $0xc8] sm:$0xff] %v4802
        %4807 = vst [vmem:[#allocation2 + $0xd0] sm:$0xff] %v4803
        %4808 = vst [vmem:[#allocation2 + $0xd8] sm:$0xff] %v4804
        %4809 = vrot.lane.b32.xlu0 %v606, 120
        %v4810 = vpop.permute.xlu0 %4809
        %4811 = vrot.lane.b32.xlu0 %v607, 120
        %v4812 = vpop.permute.xlu0 %4811
        %4813 = vrot.lane.b32.xlu0 %v608, 120
        %v4814 = vpop.permute.xlu0 %4813
        %4815 = vrot.lane.b32.xlu0 %v609, 120
        %v4816 = vpop.permute.xlu0 %4815
        %v4817 = vsel %vm1324, %v4810, %v4812
        %v4818 = vsel %vm1324, %v4812, %v4814
        %v4819 = vsel %vm1324, %v4814, %v4816
        %v4825 = vsel %vm1324, %v4816, %v4810
        %v4826 = vld [vmem:[%s1334] ss:$8 sm:$0xf]
        %v4828 = vperm.slane %v4826, 0
        %v4829 = vperm.slane %v4826, 1
        %v4830 = vperm.slane %v4826, 2
        %v4831 = vperm.slane %v4826, 3
        %v4836 = vmul.f32 %v4817, %v4828
        %v4837 = vmul.f32 %v4818, %v4829
        %v4838 = vmul.f32 %v4819, %v4830
        %v4839 = vmul.f32 %v4825, %v4831
        %4840 = vst [vmem:[#allocation2 + $0xe0] sm:$0xff] %v4836
        %4841 = vst [vmem:[#allocation2 + $0xe8] sm:$0xff] %v4837
        %4842 = vst [vmem:[#allocation2 + $0xf0] sm:$0xff] %v4838
        %4843 = vst [vmem:[#allocation2 + $0xf8] sm:$0xff] %v4839
        %4844 = vrot.lane.b32.xlu0 %v606, 119
        %v4845 = vpop.permute.xlu0 %4844
        %4846 = vrot.lane.b32.xlu0 %v607, 119
        %v4847 = vpop.permute.xlu0 %4846
        %4848 = vrot.lane.b32.xlu0 %v608, 119
        %v4849 = vpop.permute.xlu0 %4848
        %4850 = vrot.lane.b32.xlu0 %v609, 119
        %v4851 = vpop.permute.xlu0 %4850
        %v4852 = vsel %vm1361, %v4845, %v4847
        %v4853 = vsel %vm1361, %v4847, %v4849
        %v4854 = vsel %vm1361, %v4849, %v4851
        %v4860 = vsel %vm1361, %v4851, %v4845
        %v4861 = vld [vmem:[%s1371] ss:$8 sm:$0xf]
        %v4863 = vperm.slane %v4861, 0
        %v4864 = vperm.slane %v4861, 1
        %v4865 = vperm.slane %v4861, 2
        %v4866 = vperm.slane %v4861, 3
        %v4871 = vmul.f32 %v4852, %v4863
        %v4872 = vmul.f32 %v4853, %v4864
        %v4873 = vmul.f32 %v4854, %v4865
        %v4874 = vmul.f32 %v4860, %v4866
        %4875 = vst [vmem:[#allocation2 + $0x100] sm:$0xff] %v4871
        %4876 = vst [vmem:[#allocation2 + $0x108] sm:$0xff] %v4872
        %4877 = vst [vmem:[#allocation2 + $0x110] sm:$0xff] %v4873
        %4878 = vst [vmem:[#allocation2 + $0x118] sm:$0xff] %v4874
        %s4879 = scalar_lea.vmem [#allocation11], 16
        %v4880 = vld [vmem:[%s4879] sm:$0xff]
        %v4881 = vld [vmem:[%s4879 + $0x8] sm:$0xff]
        %v4882 = vld [vmem:[#allocation2] sm:$0xff]
        %v4883 = vld [vmem:[#allocation2 + $0x8] sm:$0xff]
        %v4884 = vld [vmem:[#allocation2 + $0x10] sm:$0xff]
        %v4885 = vld [vmem:[#allocation2 + $0x18] sm:$0xff]
        %v4886 = vld [vmem:[#allocation2 + $0x20] sm:$0xff]
        %v4887 = vld [vmem:[#allocation2 + $0x28] sm:$0xff]
        %v4888 = vld [vmem:[#allocation2 + $0x30] sm:$0xff]
        %v4889 = vld [vmem:[#allocation2 + $0x38] sm:$0xff]
        %v4890 = vld [vmem:[#allocation2 + $0x40] sm:$0xff]
        %v4891 = vld [vmem:[#allocation2 + $0x48] sm:$0xff]
        %v4892 = vld [vmem:[#allocation2 + $0x50] sm:$0xff]
        %v4893 = vld [vmem:[#allocation2 + $0x58] sm:$0xff]
        %v4894 = vld [vmem:[#allocation2 + $0x60] sm:$0xff]
        %v4895 = vld [vmem:[#allocation2 + $0x68] sm:$0xff]
        %v4896 = vld [vmem:[#allocation2 + $0x70] sm:$0xff]
        %v4897 = vld [vmem:[#allocation2 + $0x78] sm:$0xff]
        %v4898 = vld [vmem:[#allocation2 + $0x80] sm:$0xff]
        %v4899 = vld [vmem:[#allocation2 + $0x88] sm:$0xff]
        %v4900 = vld [vmem:[#allocation2 + $0x90] sm:$0xff]
        %v4901 = vld [vmem:[#allocation2 + $0x98] sm:$0xff]
        %v4902 = vld [vmem:[#allocation2 + $0xa0] sm:$0xff]
        %v4903 = vld [vmem:[#allocation2 + $0xa8] sm:$0xff]
        %v4904 = vld [vmem:[#allocation2 + $0xb0] sm:$0xff]
        %v4905 = vld [vmem:[#allocation2 + $0xb8] sm:$0xff]
        %v4906 = vld [vmem:[#allocation2 + $0xc0] sm:$0xff]
        %v4907 = vld [vmem:[#allocation2 + $0xc8] sm:$0xff]
        %v4908 = vld [vmem:[#allocation2 + $0xd0] sm:$0xff]
        %v4909 = vld [vmem:[#allocation2 + $0xd8] sm:$0xff]
        %v4910 = vld [vmem:[#allocation2 + $0xe0] sm:$0xff]
        %v4911 = vld [vmem:[#allocation2 + $0xe8] sm:$0xff]
        %v4912 = vld [vmem:[#allocation2 + $0xf0] sm:$0xff]
        %v4913 = vld [vmem:[#allocation2 + $0xf8] sm:$0xff]
        %v4914 = vld [vmem:[#allocation2 + $0x100] sm:$0xff]
        %v4915 = vld [vmem:[#allocation2 + $0x108] sm:$0xff]
        %v4916 = vld [vmem:[#allocation2 + $0x110] sm:$0xff]
        %v4917 = vld [vmem:[#allocation2 + $0x118] sm:$0xff]
        %v4919 = vsel %vm766, %v4880, 0
        %v4922 = vsel %vm766, %v4881, 0
        %4924 = vmatpush.msra.mxu0 0.0
        %4925 = vmatpush.msra.mxu0 0.0
        %4926 = vmatpush.msra.mxu0 0.0
        %4927 = vmatpush.msra.mxu0 0.0
        %4928 = vmatpush.msra.mxu0 0.0
        %4929 = vmatpush.msra.mxu0 0.0
        %4930 = vmatpush.msra.mxu0 0.0
        %4931 = vmatpush.msra.mxu0 %v4914
        %4932 = vmatpush.msra.mxu0 %v4910
        %4933 = vmatpush.msra.mxu0 %v4906
        %4934 = vmatpush.msra.mxu0 %v4902
        %4935 = vmatpush.msra.mxu0 %v4898
        %4936 = vmatpush.msra.mxu0 %v4894
        %4937 = vmatpush.msra.mxu0 %v4890
        %4938 = vmatpush.msra.mxu0 %v4886
        %4939 = vmatpush.msra.mxu0 %v4882
        %4940 = vmatmul.f32.gmra.mxu0 %v4919
        %v4941 = vpop.f32.mrf.mxu0
        %v4942 = vadd.f32 0.0, %v4941
        %4943 = vmatmul.f32.gmra.mxu0 %v4922
        %v4944 = vpop.f32.mrf.mxu0
        %v4945 = vadd.f32 0.0, %v4944
        %4946 = vdwg.mxu0
        %4947 = vmatpush.msra.mxu0 0.0
        %4948 = vmatpush.msra.mxu0 0.0
        %4949 = vmatpush.msra.mxu0 0.0
        %4950 = vmatpush.msra.mxu0 0.0
        %4951 = vmatpush.msra.mxu0 0.0
        %4952 = vmatpush.msra.mxu0 0.0
        %4953 = vmatpush.msra.mxu0 0.0
        %4954 = vmatpush.msra.mxu0 %v4915
        %4955 = vmatpush.msra.mxu0 %v4911
        %4956 = vmatpush.msra.mxu0 %v4907
        %4957 = vmatpush.msra.mxu0 %v4903
        %4958 = vmatpush.msra.mxu0 %v4899
        %4959 = vmatpush.msra.mxu0 %v4895
        %4960 = vmatpush.msra.mxu0 %v4891
        %4961 = vmatpush.msra.mxu0 %v4887
        %4962 = vmatpush.msra.mxu0 %v4883
        %4963 = vmatmul.f32.gmra.mxu0 %v4919
        %v4964 = vpop.f32.mrf.mxu0
        %v4965 = vadd.f32 0.0, %v4964
        %4966 = vmatmul.f32.gmra.mxu0 %v4922
        %v4967 = vpop.f32.mrf.mxu0
        %v4968 = vadd.f32 0.0, %v4967
        %4969 = vdwg.mxu0
        %4970 = vmatpush.msra.mxu0 0.0
        %4971 = vmatpush.msra.mxu0 0.0
        %4972 = vmatpush.msra.mxu0 0.0
        %4973 = vmatpush.msra.mxu0 0.0
        %4974 = vmatpush.msra.mxu0 0.0
        %4975 = vmatpush.msra.mxu0 0.0
        %4976 = vmatpush.msra.mxu0 0.0
        %4977 = vmatpush.msra.mxu0 %v4916
        %4978 = vmatpush.msra.mxu0 %v4912
        %4979 = vmatpush.msra.mxu0 %v4908
        %4980 = vmatpush.msra.mxu0 %v4904
        %4981 = vmatpush.msra.mxu0 %v4900
        %4982 = vmatpush.msra.mxu0 %v4896
        %4983 = vmatpush.msra.mxu0 %v4892
        %4984 = vmatpush.msra.mxu0 %v4888
        %4985 = vmatpush.msra.mxu0 %v4884
        %4986 = vmatmul.f32.gmra.mxu0 %v4919
        %v4987 = vpop.f32.mrf.mxu0
        %v4988 = vadd.f32 0.0, %v4987
        %4989 = vmatmul.f32.gmra.mxu0 %v4922
        %v4990 = vpop.f32.mrf.mxu0
        %v4991 = vadd.f32 0.0, %v4990
        %4992 = vdwg.mxu0
        %4993 = vmatpush.msra.mxu0 0.0
        %4994 = vmatpush.msra.mxu0 0.0
        %4995 = vmatpush.msra.mxu0 0.0
        %4996 = vmatpush.msra.mxu0 0.0
        %4997 = vmatpush.msra.mxu0 0.0
        %4998 = vmatpush.msra.mxu0 0.0
        %4999 = vmatpush.msra.mxu0 0.0
        %5000 = vmatpush.msra.mxu0 %v4917
        %5001 = vmatpush.msra.mxu0 %v4913
        %5002 = vmatpush.msra.mxu0 %v4909
        %5003 = vmatpush.msra.mxu0 %v4905
        %5004 = vmatpush.msra.mxu0 %v4901
        %5005 = vmatpush.msra.mxu0 %v4897
        %5006 = vmatpush.msra.mxu0 %v4893
        %5007 = vmatpush.msra.mxu0 %v4889
        %5008 = vmatpush.msra.mxu0 %v4885
        %5009 = vmatmul.f32.gmra.mxu0 %v4919
        %v5010 = vpop.f32.mrf.mxu0
        %v5011 = vadd.f32 0.0, %v5010
        %5012 = vmatmul.f32.gmra.mxu0 %v4922
        %v5013 = vpop.f32.mrf.mxu0
        %v5014 = vadd.f32 0.0, %v5013
        %5015 = vdwg.mxu0
        %v5017 = vsel %vm766, %v4557, 0
        %v5020 = vsel %vm766, %v4558, 0
        %5022 = vmatpush.msra.mxu0 0.0
        %5023 = vmatpush.msra.mxu0 0.0
        %5024 = vmatpush.msra.mxu0 0.0
        %5025 = vmatpush.msra.mxu0 0.0
        %5026 = vmatpush.msra.mxu0 0.0
        %5027 = vmatpush.msra.mxu0 0.0
        %5028 = vmatpush.msra.mxu0 0.0
        %5029 = vmatpush.msra.mxu0 %v4591
        %5030 = vmatpush.msra.mxu0 %v4587
        %5031 = vmatpush.msra.mxu0 %v4583
        %5032 = vmatpush.msra.mxu0 %v4579
        %5033 = vmatpush.msra.mxu0 %v4575
        %5034 = vmatpush.msra.mxu0 %v4571
        %5035 = vmatpush.msra.mxu0 %v4567
        %5036 = vmatpush.msra.mxu0 %v4563
        %5037 = vmatpush.msra.mxu0 %v4559
        %5038 = vmatmul.f32.gmra.mxu0 %v5017
        %v5039 = vpop.f32.mrf.mxu0
        %v5040 = vadd.f32 %v4942, %v5039
        %5041 = vmatmul.f32.gmra.mxu0 %v5020
        %v5042 = vpop.f32.mrf.mxu0
        %v5043 = vadd.f32 %v4945, %v5042
        %5044 = vdwg.mxu0
        %5045 = vmatpush.msra.mxu0 0.0
        %5046 = vmatpush.msra.mxu0 0.0
        %5047 = vmatpush.msra.mxu0 0.0
        %5048 = vmatpush.msra.mxu0 0.0
        %5049 = vmatpush.msra.mxu0 0.0
        %5050 = vmatpush.msra.mxu0 0.0
        %5051 = vmatpush.msra.mxu0 0.0
        %5052 = vmatpush.msra.mxu0 %v4592
        %5053 = vmatpush.msra.mxu0 %v4588
        %5054 = vmatpush.msra.mxu0 %v4584
        %5055 = vmatpush.msra.mxu0 %v4580
        %5056 = vmatpush.msra.mxu0 %v4576
        %5057 = vmatpush.msra.mxu0 %v4572
        %5058 = vmatpush.msra.mxu0 %v4568
        %5059 = vmatpush.msra.mxu0 %v4564
        %5060 = vmatpush.msra.mxu0 %v4560
        %5061 = vmatmul.f32.gmra.mxu0 %v5017
        %v5062 = vpop.f32.mrf.mxu0
        %v5063 = vadd.f32 %v4965, %v5062
        %5064 = vmatmul.f32.gmra.mxu0 %v5020
        %v5065 = vpop.f32.mrf.mxu0
        %v5066 = vadd.f32 %v4968, %v5065
        %5067 = vdwg.mxu0
        %5068 = vmatpush.msra.mxu0 0.0
        %5069 = vmatpush.msra.mxu0 0.0
        %5070 = vmatpush.msra.mxu0 0.0
        %5071 = vmatpush.msra.mxu0 0.0
        %5072 = vmatpush.msra.mxu0 0.0
        %5073 = vmatpush.msra.mxu0 0.0
        %5074 = vmatpush.msra.mxu0 0.0
        %5075 = vmatpush.msra.mxu0 %v4593
        %5076 = vmatpush.msra.mxu0 %v4589
        %5077 = vmatpush.msra.mxu0 %v4585
        %5078 = vmatpush.msra.mxu0 %v4581
        %5079 = vmatpush.msra.mxu0 %v4577
        %5080 = vmatpush.msra.mxu0 %v4573
        %5081 = vmatpush.msra.mxu0 %v4569
        %5082 = vmatpush.msra.mxu0 %v4565
        %5083 = vmatpush.msra.mxu0 %v4561
        %5084 = vmatmul.f32.gmra.mxu0 %v5017
        %v5085 = vpop.f32.mrf.mxu0
        %v5086 = vadd.f32 %v4988, %v5085
        %5087 = vmatmul.f32.gmra.mxu0 %v5020
        %v5088 = vpop.f32.mrf.mxu0
        %v5089 = vadd.f32 %v4991, %v5088
        %5090 = vdwg.mxu0
        %5091 = vmatpush.msra.mxu0 0.0
        %5092 = vmatpush.msra.mxu0 0.0
        %5093 = vmatpush.msra.mxu0 0.0
        %5094 = vmatpush.msra.mxu0 0.0
        %5095 = vmatpush.msra.mxu0 0.0
        %5096 = vmatpush.msra.mxu0 0.0
        %5097 = vmatpush.msra.mxu0 0.0
        %5098 = vmatpush.msra.mxu0 %v4594
        %5099 = vmatpush.msra.mxu0 %v4590
        %5100 = vmatpush.msra.mxu0 %v4586
        %5101 = vmatpush.msra.mxu0 %v4582
        %5102 = vmatpush.msra.mxu0 %v4578
        %5103 = vmatpush.msra.mxu0 %v4574
        %5104 = vmatpush.msra.mxu0 %v4570
        %5105 = vmatpush.msra.mxu0 %v4566
        %5106 = vmatpush.msra.mxu0 %v4562
        %5107 = vmatmul.f32.gmra.mxu0 %v5017
        %v5108 = vpop.f32.mrf.mxu0
        %v5109 = vadd.f32 %v5011, %v5108
        %5110 = vmatmul.f32.gmra.mxu0 %v5020
        %v5111 = vpop.f32.mrf.mxu0
        %v5112 = vadd.f32 %v5014, %v5111
        %5113 = vdwg.mxu0
        %v5114 = vld [vmem:[%s1625] ss:$8 sm:$0xf]
        %v5116 = vperm.slane %v5114, 0
        %v5117 = vperm.slane %v5114, 1
        %v5118 = vperm.slane %v5114, 2
        %v5119 = vperm.slane %v5114, 3
        %v5124 = vmul.f32 %v4251, %v5116
        %v5125 = vmul.f32 %v4252, %v5117
        %v5126 = vmul.f32 %v4253, %v5118
        %v5127 = vmul.f32 %v4258, %v5119
        %5128 = vst [vmem:[#allocation2] sm:$0xff] %v5124
        %5129 = vst [vmem:[#allocation2 + $0x8] sm:$0xff] %v5125
        %5130 = vst [vmem:[#allocation2 + $0x10] sm:$0xff] %v5126
        %5131 = vst [vmem:[#allocation2 + $0x18] sm:$0xff] %v5127
        %v5132 = vld [vmem:[%s1644] ss:$8 sm:$0xf]
        %v5134 = vperm.slane %v5132, 0
        %v5135 = vperm.slane %v5132, 1
        %v5136 = vperm.slane %v5132, 2
        %v5137 = vperm.slane %v5132, 3
        %v5142 = vmul.f32 %v4286, %v5134
        %v5143 = vmul.f32 %v4287, %v5135
        %v5144 = vmul.f32 %v4288, %v5136
        %v5145 = vmul.f32 %v4293, %v5137
        %5146 = vst [vmem:[#allocation2 + $0x20] sm:$0xff] %v5142
        %5147 = vst [vmem:[#allocation2 + $0x28] sm:$0xff] %v5143
        %5148 = vst [vmem:[#allocation2 + $0x30] sm:$0xff] %v5144
        %5149 = vst [vmem:[#allocation2 + $0x38] sm:$0xff] %v5145
        %v5150 = vld [vmem:[%s1663] ss:$8 sm:$0xf]
        %v5152 = vperm.slane %v5150, 0
        %v5153 = vperm.slane %v5150, 1
        %v5154 = vperm.slane %v5150, 2
        %v5155 = vperm.slane %v5150, 3
        %v5160 = vmul.f32 %v4321, %v5152
        %v5161 = vmul.f32 %v4322, %v5153
        %v5162 = vmul.f32 %v4323, %v5154
        %v5163 = vmul.f32 %v4328, %v5155
        %5164 = vst [vmem:[#allocation2 + $0x40] sm:$0xff] %v5160
        %5165 = vst [vmem:[#allocation2 + $0x48] sm:$0xff] %v5161
        %5166 = vst [vmem:[#allocation2 + $0x50] sm:$0xff] %v5162
        %5167 = vst [vmem:[#allocation2 + $0x58] sm:$0xff] %v5163
        %v5168 = vld [vmem:[%s1682] ss:$8 sm:$0xf]
        %v5170 = vperm.slane %v5168, 0
        %v5171 = vperm.slane %v5168, 1
        %v5172 = vperm.slane %v5168, 2
        %v5173 = vperm.slane %v5168, 3
        %v5178 = vmul.f32 %v4356, %v5170
        %v5179 = vmul.f32 %v4357, %v5171
        %v5180 = vmul.f32 %v4358, %v5172
        %v5181 = vmul.f32 %v4363, %v5173
        %5182 = vst [vmem:[#allocation2 + $0x60] sm:$0xff] %v5178
        %5183 = vst [vmem:[#allocation2 + $0x68] sm:$0xff] %v5179
        %5184 = vst [vmem:[#allocation2 + $0x70] sm:$0xff] %v5180
        %5185 = vst [vmem:[#allocation2 + $0x78] sm:$0xff] %v5181
        %v5186 = vld [vmem:[%s1701] ss:$8 sm:$0xf]
        %v5188 = vperm.slane %v5186, 0
        %v5189 = vperm.slane %v5186, 1
        %v5190 = vperm.slane %v5186, 2
        %v5191 = vperm.slane %v5186, 3
        %v5196 = vmul.f32 %v4391, %v5188
        %v5197 = vmul.f32 %v4392, %v5189
        %v5198 = vmul.f32 %v4393, %v5190
        %v5199 = vmul.f32 %v4398, %v5191
        %5200 = vst [vmem:[#allocation2 + $0x80] sm:$0xff] %v5196
        %5201 = vst [vmem:[#allocation2 + $0x88] sm:$0xff] %v5197
        %5202 = vst [vmem:[#allocation2 + $0x90] sm:$0xff] %v5198
        %5203 = vst [vmem:[#allocation2 + $0x98] sm:$0xff] %v5199
        %v5204 = vld [vmem:[%s1720] ss:$8 sm:$0xf]
        %v5206 = vperm.slane %v5204, 0
        %v5207 = vperm.slane %v5204, 1
        %v5208 = vperm.slane %v5204, 2
        %v5209 = vperm.slane %v5204, 3
        %v5214 = vmul.f32 %v4426, %v5206
        %v5215 = vmul.f32 %v4427, %v5207
        %v5216 = vmul.f32 %v4428, %v5208
        %v5217 = vmul.f32 %v4433, %v5209
        %5218 = vst [vmem:[#allocation2 + $0xa0] sm:$0xff] %v5214
        %5219 = vst [vmem:[#allocation2 + $0xa8] sm:$0xff] %v5215
        %5220 = vst [vmem:[#allocation2 + $0xb0] sm:$0xff] %v5216
        %5221 = vst [vmem:[#allocation2 + $0xb8] sm:$0xff] %v5217
        %v5222 = vld [vmem:[%s1739] ss:$8 sm:$0xf]
        %v5224 = vperm.slane %v5222, 0
        %v5225 = vperm.slane %v5222, 1
        %v5226 = vperm.slane %v5222, 2
        %v5227 = vperm.slane %v5222, 3
        %v5232 = vmul.f32 %v4461, %v5224
        %v5233 = vmul.f32 %v4462, %v5225
        %v5234 = vmul.f32 %v4463, %v5226
        %v5235 = vmul.f32 %v4468, %v5227
        %5236 = vst [vmem:[#allocation2 + $0xc0] sm:$0xff] %v5232
        %5237 = vst [vmem:[#allocation2 + $0xc8] sm:$0xff] %v5233
        %5238 = vst [vmem:[#allocation2 + $0xd0] sm:$0xff] %v5234
        %5239 = vst [vmem:[#allocation2 + $0xd8] sm:$0xff] %v5235
        %v5240 = vld [vmem:[%s1758] ss:$8 sm:$0xf]
        %v5242 = vperm.slane %v5240, 0
        %v5243 = vperm.slane %v5240, 1
        %v5244 = vperm.slane %v5240, 2
        %v5245 = vperm.slane %v5240, 3
        %v5250 = vmul.f32 %v4496, %v5242
        %v5251 = vmul.f32 %v4497, %v5243
        %v5252 = vmul.f32 %v4498, %v5244
        %v5253 = vmul.f32 %v4503, %v5245
        %5254 = vst [vmem:[#allocation2 + $0xe0] sm:$0xff] %v5250
        %5255 = vst [vmem:[#allocation2 + $0xe8] sm:$0xff] %v5251
        %5256 = vst [vmem:[#allocation2 + $0xf0] sm:$0xff] %v5252
        %5257 = vst [vmem:[#allocation2 + $0xf8] sm:$0xff] %v5253
        %v5258 = vld [vmem:[%s1777] ss:$8 sm:$0xf]
        %v5260 = vperm.slane %v5258, 0
        %v5261 = vperm.slane %v5258, 1
        %v5262 = vperm.slane %v5258, 2
        %v5263 = vperm.slane %v5258, 3
        %v5268 = vmul.f32 %v4531, %v5260
        %v5269 = vmul.f32 %v4532, %v5261
        %v5270 = vmul.f32 %v4533, %v5262
        %v5271 = vmul.f32 %v4538, %v5263
        %5272 = vst [vmem:[#allocation2 + $0x100] sm:$0xff] %v5268
        %5273 = vst [vmem:[#allocation2 + $0x108] sm:$0xff] %v5269
        %5274 = vst [vmem:[#allocation2 + $0x110] sm:$0xff] %v5270
        %5275 = vst [vmem:[#allocation2 + $0x118] sm:$0xff] %v5271
        %s5276 = scalar_lea.vmem [#allocation11], 32
        %v5277 = vld [vmem:[%s5276] sm:$0xff]
        %v5278 = vld [vmem:[%s5276 + $0x8] sm:$0xff]
        %v5279 = vld [vmem:[#allocation2] sm:$0xff]
        %v5280 = vld [vmem:[#allocation2 + $0x8] sm:$0xff]
        %v5281 = vld [vmem:[#allocation2 + $0x10] sm:$0xff]
        %v5282 = vld [vmem:[#allocation2 + $0x18] sm:$0xff]
        %v5283 = vld [vmem:[#allocation2 + $0x20] sm:$0xff]
        %v5284 = vld [vmem:[#allocation2 + $0x28] sm:$0xff]
        %v5285 = vld [vmem:[#allocation2 + $0x30] sm:$0xff]
        %v5286 = vld [vmem:[#allocation2 + $0x38] sm:$0xff]
        %v5287 = vld [vmem:[#allocation2 + $0x40] sm:$0xff]
        %v5288 = vld [vmem:[#allocation2 + $0x48] sm:$0xff]
        %v5289 = vld [vmem:[#allocation2 + $0x50] sm:$0xff]
        %v5290 = vld [vmem:[#allocation2 + $0x58] sm:$0xff]
        %v5291 = vld [vmem:[#allocation2 + $0x60] sm:$0xff]
        %v5292 = vld [vmem:[#allocation2 + $0x68] sm:$0xff]
        %v5293 = vld [vmem:[#allocation2 + $0x70] sm:$0xff]
        %v5294 = vld [vmem:[#allocation2 + $0x78] sm:$0xff]
        %v5295 = vld [vmem:[#allocation2 + $0x80] sm:$0xff]
        %v5296 = vld [vmem:[#allocation2 + $0x88] sm:$0xff]
        %v5297 = vld [vmem:[#allocation2 + $0x90] sm:$0xff]
        %v5298 = vld [vmem:[#allocation2 + $0x98] sm:$0xff]
        %v5299 = vld [vmem:[#allocation2 + $0xa0] sm:$0xff]
        %v5300 = vld [vmem:[#allocation2 + $0xa8] sm:$0xff]
        %v5301 = vld [vmem:[#allocation2 + $0xb0] sm:$0xff]
        %v5302 = vld [vmem:[#allocation2 + $0xb8] sm:$0xff]
        %v5303 = vld [vmem:[#allocation2 + $0xc0] sm:$0xff]
        %v5304 = vld [vmem:[#allocation2 + $0xc8] sm:$0xff]
        %v5305 = vld [vmem:[#allocation2 + $0xd0] sm:$0xff]
        %v5306 = vld [vmem:[#allocation2 + $0xd8] sm:$0xff]
        %v5307 = vld [vmem:[#allocation2 + $0xe0] sm:$0xff]
        %v5308 = vld [vmem:[#allocation2 + $0xe8] sm:$0xff]
        %v5309 = vld [vmem:[#allocation2 + $0xf0] sm:$0xff]
        %v5310 = vld [vmem:[#allocation2 + $0xf8] sm:$0xff]
        %v5311 = vld [vmem:[#allocation2 + $0x100] sm:$0xff]
        %v5312 = vld [vmem:[#allocation2 + $0x108] sm:$0xff]
        %v5313 = vld [vmem:[#allocation2 + $0x110] sm:$0xff]
        %v5314 = vld [vmem:[#allocation2 + $0x118] sm:$0xff]
        %v5316 = vsel %vm766, %v5277, 0
        %v5319 = vsel %vm766, %v5278, 0
        %5321 = vmatpush.msra.mxu0 0.0
        %5322 = vmatpush.msra.mxu0 0.0
        %5323 = vmatpush.msra.mxu0 0.0
        %5324 = vmatpush.msra.mxu0 0.0
        %5325 = vmatpush.msra.mxu0 0.0
        %5326 = vmatpush.msra.mxu0 0.0
        %5327 = vmatpush.msra.mxu0 0.0
        %5328 = vmatpush.msra.mxu0 %v5311
        %5329 = vmatpush.msra.mxu0 %v5307
        %5330 = vmatpush.msra.mxu0 %v5303
        %5331 = vmatpush.msra.mxu0 %v5299
        %5332 = vmatpush.msra.mxu0 %v5295
        %5333 = vmatpush.msra.mxu0 %v5291
        %5334 = vmatpush.msra.mxu0 %v5287
        %5335 = vmatpush.msra.mxu0 %v5283
        %5336 = vmatpush.msra.mxu0 %v5279
        %5337 = vmatmul.f32.gmra.mxu0 %v5316
        %v5338 = vpop.f32.mrf.mxu0
        %v5339 = vadd.f32 0.0, %v5338
        %5340 = vmatmul.f32.gmra.mxu0 %v5319
        %v5341 = vpop.f32.mrf.mxu0
        %v5342 = vadd.f32 0.0, %v5341
        %5343 = vdwg.mxu0
        %5344 = vmatpush.msra.mxu0 0.0
        %5345 = vmatpush.msra.mxu0 0.0
        %5346 = vmatpush.msra.mxu0 0.0
        %5347 = vmatpush.msra.mxu0 0.0
        %5348 = vmatpush.msra.mxu0 0.0
        %5349 = vmatpush.msra.mxu0 0.0
        %5350 = vmatpush.msra.mxu0 0.0
        %5351 = vmatpush.msra.mxu0 %v5312
        %5352 = vmatpush.msra.mxu0 %v5308
        %5353 = vmatpush.msra.mxu0 %v5304
        %5354 = vmatpush.msra.mxu0 %v5300
        %5355 = vmatpush.msra.mxu0 %v5296
        %5356 = vmatpush.msra.mxu0 %v5292
        %5357 = vmatpush.msra.mxu0 %v5288
        %5358 = vmatpush.msra.mxu0 %v5284
        %5359 = vmatpush.msra.mxu0 %v5280
        %5360 = vmatmul.f32.gmra.mxu0 %v5316
        %v5361 = vpop.f32.mrf.mxu0
        %v5362 = vadd.f32 0.0, %v5361
        %5363 = vmatmul.f32.gmra.mxu0 %v5319
        %v5364 = vpop.f32.mrf.mxu0
        %v5365 = vadd.f32 0.0, %v5364
        %5366 = vdwg.mxu0
        %5367 = vmatpush.msra.mxu0 0.0
        %5368 = vmatpush.msra.mxu0 0.0
        %5369 = vmatpush.msra.mxu0 0.0
        %5370 = vmatpush.msra.mxu0 0.0
        %5371 = vmatpush.msra.mxu0 0.0
        %5372 = vmatpush.msra.mxu0 0.0
        %5373 = vmatpush.msra.mxu0 0.0
        %5374 = vmatpush.msra.mxu0 %v5313
        %5375 = vmatpush.msra.mxu0 %v5309
        %5376 = vmatpush.msra.mxu0 %v5305
        %5377 = vmatpush.msra.mxu0 %v5301
        %5378 = vmatpush.msra.mxu0 %v5297
        %5379 = vmatpush.msra.mxu0 %v5293
        %5380 = vmatpush.msra.mxu0 %v5289
        %5381 = vmatpush.msra.mxu0 %v5285
        %5382 = vmatpush.msra.mxu0 %v5281
        %5383 = vmatmul.f32.gmra.mxu0 %v5316
        %v5384 = vpop.f32.mrf.mxu0
        %v5385 = vadd.f32 0.0, %v5384
        %5386 = vmatmul.f32.gmra.mxu0 %v5319
        %v5387 = vpop.f32.mrf.mxu0
        %v5388 = vadd.f32 0.0, %v5387
        %5389 = vdwg.mxu0
        %5390 = vmatpush.msra.mxu0 0.0
        %5391 = vmatpush.msra.mxu0 0.0
        %5392 = vmatpush.msra.mxu0 0.0
        %5393 = vmatpush.msra.mxu0 0.0
        %5394 = vmatpush.msra.mxu0 0.0
        %5395 = vmatpush.msra.mxu0 0.0
        %5396 = vmatpush.msra.mxu0 0.0
        %5397 = vmatpush.msra.mxu0 %v5314
        %5398 = vmatpush.msra.mxu0 %v5310
        %5399 = vmatpush.msra.mxu0 %v5306
        %5400 = vmatpush.msra.mxu0 %v5302
        %5401 = vmatpush.msra.mxu0 %v5298
        %5402 = vmatpush.msra.mxu0 %v5294
        %5403 = vmatpush.msra.mxu0 %v5290
        %5404 = vmatpush.msra.mxu0 %v5286
        %5405 = vmatpush.msra.mxu0 %v5282
        %5406 = vmatmul.f32.gmra.mxu0 %v5316
        %v5407 = vpop.f32.mrf.mxu0
        %v5408 = vadd.f32 0.0, %v5407
        %5409 = vmatmul.f32.gmra.mxu0 %v5319
        %v5410 = vpop.f32.mrf.mxu0
        %v5411 = vadd.f32 0.0, %v5410
        %5412 = vdwg.mxu0
        %v5413 = vadd.f32 %v5040, %v5339
        %v5414 = vadd.f32 %v5063, %v5362
        %v5415 = vadd.f32 %v5086, %v5385
        %v5416 = vadd.f32 %v5109, %v5408
        %v5417 = vadd.f32 %v5043, %v5342
        %v5418 = vadd.f32 %v5066, %v5365
        %v5419 = vadd.f32 %v5089, %v5388
        %v5420 = vadd.f32 %v5112, %v5411
        %v5421 = vld [vmem:[%s13] sm:$0xff]
        %v5422 = vld [vmem:[%s13 + $0x8] sm:$0xff]
        %5424 = vset.pattern.permute.xlu0 0
        %5425 = vperm.xlu0 %5424, %v5421
        %v5426 = vpop.permute.xlu0 %5425
        %5429 = vset.pattern.permute.xlu0 0
        %5430 = vperm.xlu0 %5429, %v5422
        %v5431 = vpop.permute.xlu0 %5430
        %v5433 = vadd.f32 %v5413, %v5426
        %v5434 = vadd.f32 %v5414, %v5426
        %v5435 = vadd.f32 %v5415, %v5426
        %v5436 = vadd.f32 %v5416, %v5426
        %v5437 = vadd.f32 %v5417, %v5431
        %v5438 = vadd.f32 %v5418, %v5431
        %v5439 = vadd.f32 %v5419, %v5431
        %v5440 = vadd.f32 %v5420, %v5431
        %v5441 = vadd.f32 %v5433, %v5434
        %v5442 = vadd.f32 %v5441, %v5435
        %v5443 = vadd.f32 %v5442, %v5436
        %5444 = vadd.xlane.f32.xlu0 %v5443
        %v5445 = vpop.xlane.xlu0 %5444
        %v5446 = vadd.f32 %v5437, %v5438
        %v5447 = vadd.f32 %v5446, %v5439
        %v5448 = vadd.f32 %v5447, %v5440
        %5449 = vadd.xlane.f32.xlu0 %v5448
        %v5450 = vpop.xlane.xlu0 %5449
        %v5451 = vld [vmem:[%s9] sm:$0xff]
        %v5452 = vld [vmem:[%s9 + $0x8] sm:$0xff]
        %v5454 = vsel %vm1973, %v5451, 0
        %v5457 = vsel %vm1973, %v5452, 0
        %5459 = vmatpush.msra.mxu0 0.0
        %5460 = vmatpush.msra.mxu0 0.0
        %5461 = vmatpush.msra.mxu0 0.0
        %5462 = vmatpush.msra.mxu0 0.0
        %5463 = vmatpush.msra.mxu0 0.0
        %5464 = vmatpush.msra.mxu0 0.0
        %5465 = vmatpush.msra.mxu0 0.0
        %5466 = vmatpush.msra.mxu0 0.0
        %5467 = vmatpush.msra.mxu0 0.0
        %5468 = vmatpush.msra.mxu0 0.0
        %5469 = vmatpush.msra.mxu0 0.0
        %5470 = vmatpush.msra.mxu0 0.0
        %5471 = vmatpush.msra.mxu0 0.0
        %5472 = vmatpush.msra.mxu0 0.0
        %5473 = vmatpush.msra.mxu0 %v5450
        %5474 = vmatpush.msra.mxu0 %v5445
        %5475 = vmatmul.f32.gmra.mxu0 %v5454
        %v5476 = vpop.f32.mrf.mxu0
        %v5477 = vadd.f32 0.0, %v5476
        %5478 = vmatmul.f32.gmra.mxu0 %v5457
        %v5479 = vpop.f32.mrf.mxu0
        %v5480 = vadd.f32 0.0, %v5479
        %5481 = vdwg.mxu0
        %5483 = vset.pattern.permute.xlu0 0
        %5484 = vperm.xlu0 %5483, %v5477
        %v5485 = vpop.permute.xlu0 %5484
        %5488 = vset.pattern.permute.xlu0 0
        %5489 = vperm.xlu0 %5488, %v5480
        %v5490 = vpop.permute.xlu0 %5489
        %v5492 = vsub.f32 %v5433, %v5485
        %v5493 = vsub.f32 %v5434, %v5485
        %v5494 = vsub.f32 %v5435, %v5485
        %v5495 = vsub.f32 %v5436, %v5485
        %v5496 = vsub.f32 %v5437, %v5490
        %v5497 = vsub.f32 %v5438, %v5490
        %v5498 = vsub.f32 %v5439, %v5490
        %v5499 = vsub.f32 %v5440, %v5490
        %v5500 = vmul.f32 %v5492, %v5492
        %v5501 = vmul.f32 %v5493, %v5493
        %v5502 = vmul.f32 %v5494, %v5494
        %v5503 = vmul.f32 %v5495, %v5495
        %v5504 = vmul.f32 %v5496, %v5496
        %v5505 = vmul.f32 %v5497, %v5497
        %v5506 = vmul.f32 %v5498, %v5498
        %v5507 = vmul.f32 %v5499, %v5499
        %v5508 = vadd.f32 %v5500, %v5501
        %v5509 = vadd.f32 %v5508, %v5502
        %v5510 = vadd.f32 %v5509, %v5503
        %5511 = vadd.xlane.f32.xlu0 %v5510
        %v5512 = vpop.xlane.xlu0 %5511
        %v5513 = vadd.f32 %v5504, %v5505
        %v5514 = vadd.f32 %v5513, %v5506
        %v5515 = vadd.f32 %v5514, %v5507
        %5516 = vadd.xlane.f32.xlu0 %v5515
        %v5517 = vpop.xlane.xlu0 %5516
        %v5518 = vld [vmem:[%s14] sm:$0xff]
        %v5519 = vld [vmem:[%s14 + $0x8] sm:$0xff]
        %5520 = vmatpush.msra.mxu0 0.0
        %5521 = vmatpush.msra.mxu0 0.0
        %5522 = vmatpush.msra.mxu0 0.0
        %5523 = vmatpush.msra.mxu0 0.0
        %5524 = vmatpush.msra.mxu0 0.0
        %5525 = vmatpush.msra.mxu0 0.0
        %5526 = vmatpush.msra.mxu0 0.0
        %5527 = vmatpush.msra.mxu0 0.0
        %5528 = vmatpush.msra.mxu0 0.0
        %5529 = vmatpush.msra.mxu0 0.0
        %5530 = vmatpush.msra.mxu0 0.0
        %5531 = vmatpush.msra.mxu0 0.0
        %5532 = vmatpush.msra.mxu0 0.0
        %5533 = vmatpush.msra.mxu0 0.0
        %5534 = vmatpush.msra.mxu0 %v5517
        %5535 = vmatpush.msra.mxu0 %v5512
        %5536 = vmatmul.f32.gmra.mxu0 %v5454
        %v5537 = vpop.f32.mrf.mxu0
        %v5538 = vadd.f32 1e-05, %v5537
        %5539 = vmatmul.f32.gmra.mxu0 %v5457
        %v5540 = vpop.f32.mrf.mxu0
        %v5541 = vadd.f32 1e-05, %v5540
        %5542 = vdwg.mxu0
        %v5543 = vrsqrt.pop %v5538
        %v5544 = vmul.f32 %v5543, %v5538
        %v5545 = vmul.f32 %v5544, %v5543
        %v5546 = vmul.f32 0.5, %v5545
        %v5547 = vsub.f32 1.5, %v5546
        %v5548 = vmul.f32 %v5543, %v5547
        %vm5549 = vweird.f32 %v5538
        %vm5550 = vweird.f32 %v5543
        %vm5551 = vmor %vm5549, %vm5550
        %v5552 = vsel %vm5551, %v5543, %v5548
        %v5553 = vrsqrt.pop %v5541
        %v5554 = vmul.f32 %v5553, %v5541
        %v5555 = vmul.f32 %v5554, %v5553
        %v5556 = vmul.f32 0.5, %v5555
        %v5557 = vsub.f32 1.5, %v5556
        %v5558 = vmul.f32 %v5553, %v5557
        %vm5559 = vweird.f32 %v5541
        %vm5560 = vweird.f32 %v5553
        %vm5561 = vmor %vm5559, %vm5560
        %v5562 = vsel %vm5561, %v5553, %v5558
        %v5563 = vmul.f32 %v5518, %v5552
        %v5564 = vmul.f32 %v5519, %v5562
        %5566 = vset.pattern.permute.xlu0 0
        %5567 = vperm.xlu0 %5566, %v5563
        %v5568 = vpop.permute.xlu0 %5567
        %5571 = vset.pattern.permute.xlu0 0
        %5572 = vperm.xlu0 %5571, %v5564
        %v5573 = vpop.permute.xlu0 %5572
        %v5575 = vmul.f32 %v5492, %v5568
        %v5576 = vmul.f32 %v5493, %v5568
        %v5577 = vmul.f32 %v5494, %v5568
        %v5578 = vmul.f32 %v5495, %v5568
        %v5579 = vmul.f32 %v5496, %v5573
        %v5580 = vmul.f32 %v5497, %v5573
        %v5581 = vmul.f32 %v5498, %v5573
        %v5582 = vmul.f32 %v5499, %v5573
        %v5583 = vld [vmem:[%s15] sm:$0xff]
        %v5584 = vld [vmem:[%s15 + $0x8] sm:$0xff]
        %5586 = vset.pattern.permute.xlu0 0
        %5587 = vperm.xlu0 %5586, %v5583
        %v5588 = vpop.permute.xlu0 %5587
        %5591 = vset.pattern.permute.xlu0 0
        %5592 = vperm.xlu0 %5591, %v5584
        %v5593 = vpop.permute.xlu0 %5592
        %v5595 = vadd.f32 %v5575, %v5588
        %v5596 = vadd.f32 %v5576, %v5588
        %v5597 = vadd.f32 %v5577, %v5588
        %v5598 = vadd.f32 %v5578, %v5588
        %v5599 = vadd.f32 %v5579, %v5593
        %v5600 = vadd.f32 %v5580, %v5593
        %v5601 = vadd.f32 %v5581, %v5593
        %v5602 = vadd.f32 %v5582, %v5593
        %v5603 = vadd.f32 %v4230, %v5595
        %v5604 = vadd.f32 %v4231, %v5596
        %v5605 = vadd.f32 %v4232, %v5597
        %v5606 = vadd.f32 %v4233, %v5598
        %v5607 = vadd.f32 %v4234, %v5599
        %v5608 = vadd.f32 %v4235, %v5600
        %v5609 = vadd.f32 %v4236, %v5601
        %v5610 = vadd.f32 %v4237, %v5602
        %5611 = vst [vmem:[%s605] sm:$0xff] %v5603
        %5612 = vst [vmem:[%s605 + $0x8] sm:$0xff] %v5604
        %5613 = vst [vmem:[%s605 + $0x10] sm:$0xff] %v5605
        %5614 = vst [vmem:[%s605 + $0x18] sm:$0xff] %v5606
        %5615 = vst [vmem:[%s605 + $0x20] sm:$0xff] %v5607
        %5616 = vst [vmem:[%s605 + $0x28] sm:$0xff] %v5608
        %5617 = vst [vmem:[%s605 + $0x30] sm:$0xff] %v5609
        %5618 = vst [vmem:[%s605 + $0x38] sm:$0xff] %v5610
        %s5619 = sand.u32 %s384, 1
        %s5620 = scalar_lea.sflag [#allocation5], %s5619
        %s5621 = sand.u32 %s384, 1
        %s5622 = smul.addr %s5621, 64
        %s5623 = scalar_lea.vmem [#allocation12], %s5622
        // Predicated region
        $region105: #{tpu_custom_call.1} parent=83 // pred_check
          %p5624 = pneg %p394
        $region106: #{tpu_custom_call.1} parent=83 // pred_check_branch
          %5626 = sbr.rel (%p5624) target = $region108
        $region107: #{tpu_custom_call.1} parent=83 // pred_region
          %5628 = vsyncadd %s5620, 0
          %s5629 = smul.addr %s35, 8
          %s5630 = smul.addr %s5629, 8
          %s5631 = scalar_lea.hbm %s16, %s5630
          %s5632 = sshll.u32 %s5623, 4
          %s5633 = int_to_ptr.vmem [resolvable:$true] %s5632
          %s5634 = sshll.u32 %s5631, 4
          %s5635 = int_to_ptr.hbm [resolvable:$true] %s5634
          %5640 = dma.vmem_to_hbm [thread:$0]  %s5633, 1024, %s5635, %s5620, 512, 512, 32
        $region108: #{tpu_custom_call.1} parent=83 // pred_fallthru
          _
      $region84: #{tpu_custom_call.1} parent=5 // pred_fallthru
        _
      %p5641 = scmp.le.s32.totalorder 2, %s30
      // Predicated region
      $region109: #{tpu_custom_call.1} parent=5 // pred_check
        %p5642 = pneg %p5641
      $region110: #{tpu_custom_call.1} parent=5 // pred_check_branch
        %5644 = sbr.rel (%p5642) target = $region112
      $region111: #{tpu_custom_call.1} parent=5 // pred_region
        %s5645 = ssub.s32 %s30, 2
        // Predicated region
        $region113: #{tpu_custom_call.1} parent=111 // pred_check
          %p5646 = pneg %p400
        $region114: #{tpu_custom_call.1} parent=111 // pred_check_branch
          %5648 = sbr.rel (%p5646) target = $region116
        $region115: #{tpu_custom_call.1} parent=111 // pred_region
          %s5649 = sand.u32 %s385, 1
          %s5650 = scalar_lea.sflag [#allocation5], %s5649
          %s5651 = sand.u32 %s385, 1
          %s5652 = smul.addr %s5651, 64
          %s5653 = scalar_lea.vmem [#allocation12], %s5652
          %5655 = dma.done %s5650, 1024
        $region116: #{tpu_custom_call.1} parent=111 // pred_fallthru
          _
      $region112: #{tpu_custom_call.1} parent=5 // pred_fallthru
        _
    $region6: #{tpu_custom_call.1} parent=1 // loop_footer
      %s34 = sadd.s32 1, %s30
    $region7: #{tpu_custom_call.1} parent=1 // loop_footer_branch
      %29 = sbr.rel target = $region3
    $region8: #{tpu_custom_call.1} parent=1 // loop_exit
      _
    %5656 = vsyncpa [#allocation4], 1
    %s5657 = scalar_lea.sflag [#allocation4], 1
    %5658 = vsyncpa %s5657, 1
    %5659 = vsyncpa [#allocation7], 1
    %5660 = vsyncpa [#allocation10], 1
    %5661 = vsyncpa [#allocation5], 1
    %s5662 = scalar_lea.sflag [#allocation5], 1
    %5663 = vsyncpa %s5662, 1

</llo_original>
